<compile_context>
chip_gen: v6e
topology: v6e:2x2x1
jax: 0.10.0
libtpu: 0.0.40
codegen_flags: <defaults>
</compile_context>

<pallas_src>
import functools

import jax
import jax.numpy as jnp
from jax.experimental import pallas as pl
from jax.experimental.pallas import tpu as pltpu

_BF16 = jnp.bfloat16
_TM_CAP = 512                       # rows per M-tile (~85%+ of HBM roofline)
_VMEM_LIMIT = 32 * 1024 * 1024      # safe on v5e/v6e and v7x (64 MiB physical)


def _compiler_params(n_grid_axes):
    return pltpu.CompilerParams(
        dimension_semantics=("parallel",) * n_grid_axes,
        vmem_limit_bytes=_VMEM_LIMIT,
    )


def _choose_tm(m):
    """Row tile: full M when small (satisfies full-dim rule), else 512 (mult. of 8)."""
    return m if m <= _TM_CAP else _TM_CAP


def _apply_act(x, act):
    if act == "silu":
        return x * pl.reciprocal(1.0 + jnp.exp(-x), approx=True)
    if act == "sigmoid":
        return pl.reciprocal(1.0 + jnp.exp(-x), approx=True)
    return x


# ----------------------------------------------------------------------------
# Pallas kernels
# ----------------------------------------------------------------------------
def _mm_kernel(x_ref, w_ref, b_ref, o_ref, *, act):
    """o = act(x @ w + b) on one (TM, K) x (K, N) tile; f32 accumulation."""
    acc = jnp.dot(x_ref[...], w_ref[...], preferred_element_type=jnp.float32)
    acc = acc + b_ref[...]
    o_ref[...] = _apply_act(acc, act).astype(o_ref.dtype)


def _mm_proj_kernel(x_ref, w_ref, b_ref, wp_ref, bp_ref, h_ref, p_ref, *, act):
    """h = act(x @ w + b); p = h @ wp + bp   (fused 1x1 out_proj epilogue)."""
    acc = jnp.dot(x_ref[...], w_ref[...], preferred_element_type=jnp.float32)
    h = _apply_act(acc + b_ref[...], act)
    h_ref[...] = h.astype(h_ref.dtype)
    p = jnp.dot(h.astype(_BF16), wp_ref[...], preferred_element_type=jnp.float32)
    p_ref[...] = (p + bp_ref[...]).astype(p_ref.dtype)


def _gate_blocks0_kernel(x_ref, g_ref, w_ref, b_ref, wp_ref, bp_ref,
                         h_ref, p_ref, *, num_groups):
    """Fused GateModule multiply + blocks_0 (1x1 conv + SiLU) + zero out_proj_0.

    x_ref: (G, TM, C) f32 backbone features (grouped layout)
    g_ref: (TM, G)    f32 per-cond sigmoid gate
    w_ref: (G, C, N)  bf16 blocks_0 weight split per group
    """
    acc = jnp.zeros(h_ref.shape, jnp.float32)
    for g in range(num_groups):          # static unroll (G is small)
        xg = x_ref[g] * g_ref[:, g:g + 1]            # gate multiply in f32
        acc = acc + jnp.dot(xg.astype(_BF16), w_ref[g],
                            preferred_element_type=jnp.float32)
    h = _apply_act(acc + b_ref[...], "silu")
    h_ref[...] = h.astype(h_ref.dtype)
    p = jnp.dot(h.astype(_BF16), wp_ref[...], preferred_element_type=jnp.float32)
    p_ref[...] = (p + bp_ref[...]).astype(p_ref.dtype)


# ----------------------------------------------------------------------------
# Pallas-call wrappers (tiled over M; group axis fused into the grid)
# ----------------------------------------------------------------------------
def matmul_bias_act(x, w, b, act=None):
    """x:(M,K) bf16, w:(K,N), b:(N,) -> f32 (M,N); grid tiled over M."""
    M, K = x.shape
    N = w.shape[1]
    TM = _choose_tm(M)
    cost = pl.CostEstimate(
        flops=int(2 * M * K * N),
        transcendentals=int(M * N if act else 0),
        bytes_accessed=int(2 * (M * K + K * N) + 4 * (N + M * N)))
    return pl.pallas_call(
        functools.partial(_mm_kernel, act=act),
        grid=(pl.cdiv(M, TM),),
        in_specs=[
            pl.BlockSpec((TM, K), lambda i: (i, 0)),
            pl.BlockSpec((K, N), lambda i: (0, 0)),
            pl.BlockSpec((1, N), lambda i: (0, 0)),
        ],
        out_specs=pl.BlockSpec((TM, N), lambda i: (i, 0)),
        out_shape=jax.ShapeDtypeStruct((M, N), jnp.float32),
        compiler_params=_compiler_params(1),
        cost_estimate=cost,
    )(x.astype(_BF16), w.astype(_BF16), b.reshape(1, N).astype(jnp.float32))


def grouped_matmul_bias_act(x, w, b, act=None):
    """x:(G,M,K), w:(G,K,N), b:(G,N) -> f32 (G,M,N); one call, grid=(G, M-tiles)."""
    G, M, K = x.shape
    N = w.shape[-1]
    TM = _choose_tm(M)
    cost = pl.CostEstimate(
        flops=int(2 * G * M * K * N),
        transcendentals=int(G * M * N if act else 0),
        bytes_accessed=int(2 * G * (M * K + K * N) + 4 * G * (N + M * N)))
    return pl.pallas_call(
        functools.partial(_mm_kernel, act=act),
        grid=(G, pl.cdiv(M, TM)),
        in_specs=[
            pl.BlockSpec((None, TM, K), lambda g, i: (g, i, 0)),
            pl.BlockSpec((None, K, N), lambda g, i: (g, 0, 0)),
            pl.BlockSpec((None, 1, N), lambda g, i: (g, 0, 0)),
        ],
        out_specs=pl.BlockSpec((None, TM, N), lambda g, i: (g, i, 0)),
        out_shape=jax.ShapeDtypeStruct((G, M, N), jnp.float32),
        compiler_params=_compiler_params(2),
        cost_estimate=cost,
    )(x.astype(_BF16), w.astype(_BF16), b.reshape(G, 1, N).astype(jnp.float32))


def matmul_bias_act_with_proj(x, w, b, wp, bp, act="silu"):
    M, K = x.shape
    N = w.shape[1]
    TM = _choose_tm(M)
    cost = pl.CostEstimate(
        flops=int(2 * M * N * (K + N)),
        transcendentals=int(M * N),
        bytes_accessed=int(2 * (M * K + K * N + N * N) + 4 * (2 * N + 2 * M * N)))
    return pl.pallas_call(
        functools.partial(_mm_proj_kernel, act=act),
        grid=(pl.cdiv(M, TM),),
        in_specs=[
            pl.BlockSpec((TM, K), lambda i: (i, 0)),
            pl.BlockSpec((K, N), lambda i: (0, 0)),
            pl.BlockSpec((1, N), lambda i: (0, 0)),
            pl.BlockSpec((N, N), lambda i: (0, 0)),
            pl.BlockSpec((1, N), lambda i: (0, 0)),
        ],
        out_specs=[
            pl.BlockSpec((TM, N), lambda i: (i, 0)),
            pl.BlockSpec((TM, N), lambda i: (i, 0)),
        ],
        out_shape=(jax.ShapeDtypeStruct((M, N), jnp.float32),
                   jax.ShapeDtypeStruct((M, N), jnp.float32)),
        compiler_params=_compiler_params(1),
        cost_estimate=cost,
    )(x.astype(_BF16), w.astype(_BF16), b.reshape(1, N).astype(jnp.float32),
      wp.astype(_BF16), bp.reshape(1, N).astype(jnp.float32))


def gated_blocks0_with_proj(cond_g, gate, w0, b0, wp, bp):
    """cond_g:(G,M,C) f32, gate:(M,G) f32, w0:(G,C,N) -> (h:(M,N), proj:(M,N))."""
    G, M, C = cond_g.shape
    N = w0.shape[-1]
    TM = _choose_tm(M)
    cost = pl.CostEstimate(
        flops=int(2 * M * N * (G * C + N) + 2 * M * G * C),
        transcendentals=int(M * N),
        bytes_accessed=int(4 * (G * M * C + M * G + 2 * M * N)
                           + 2 * (G * C * N + N * N)))
    return pl.pallas_call(
        functools.partial(_gate_blocks0_kernel, num_groups=G),
        grid=(pl.cdiv(M, TM),),
        in_specs=[
            pl.BlockSpec((G, TM, C), lambda i: (0, i, 0)),
            pl.BlockSpec((TM, G), lambda i: (i, 0)),
            pl.BlockSpec((G, C, N), lambda i: (0, 0, 0)),
            pl.BlockSpec((1, N), lambda i: (0, 0)),
            pl.BlockSpec((N, N), lambda i: (0, 0)),
            pl.BlockSpec((1, N), lambda i: (0, 0)),
        ],
        out_specs=[
            pl.BlockSpec((TM, N), lambda i: (i, 0)),
            pl.BlockSpec((TM, N), lambda i: (i, 0)),
        ],
        out_shape=(jax.ShapeDtypeStruct((M, N), jnp.float32),
                   jax.ShapeDtypeStruct((M, N), jnp.float32)),
        compiler_params=_compiler_params(1),
        cost_estimate=cost,
    )(cond_g.astype(jnp.float32), gate.astype(jnp.float32),
      w0.astype(_BF16), b0.reshape(1, N).astype(jnp.float32),
      wp.astype(_BF16), bp.reshape(1, N).astype(jnp.float32))


# ----------------------------------------------------------------------------
# Conv2d = im2col (JAX glue, bf16 patches) + Pallas matmul kernel
# ----------------------------------------------------------------------------
def _im2col(x_nhwc, kh, kw, stride, pad):
    x = x_nhwc.astype(_BF16)
    B, H, W, C = x.shape
    xp = jnp.pad(x, ((0, 0), (pad, pad), (pad, pad), (0, 0)))
    Ho = (H + 2 * pad - kh) // stride + 1
    Wo = (W + 2 * pad - kw) // stride + 1
    cols = []
    for i in range(kh):
        for j in range(kw):
            cols.append(xp[:, i:i + stride * Ho:stride, j:j + stride * Wo:stride, :])
    patches = jnp.concatenate(cols, axis=-1)
    return patches.reshape(B * Ho * Wo, kh * kw * C), (B, Ho, Wo)


def _im2col_grouped(x_g, kh, kw, stride, pad):
    x = x_g.astype(_BF16)
    G, B, H, W, C = x.shape
    xp = jnp.pad(x, ((0, 0), (0, 0), (pad, pad), (pad, pad), (0, 0)))
    Ho = (H + 2 * pad - kh) // stride + 1
    Wo = (W + 2 * pad - kw) // stride + 1
    cols = []
    for i in range(kh):
        for j in range(kw):
            cols.append(xp[:, :, i:i + stride * Ho:stride, j:j + stride * Wo:stride, :])
    patches = jnp.concatenate(cols, axis=-1)
    return patches.reshape(G, B * Ho * Wo, kh * kw * C), (B, Ho, Wo)


def conv2d(x_nhwc, w, b, *, stride=1, pad=0, act=None):
    KH, KW, Cin, Cout = w.shape
    patches, (B, Ho, Wo) = _im2col(x_nhwc, KH, KW, stride, pad)
    y = matmul_bias_act(patches, w.reshape(KH * KW * Cin, Cout), b, act=act)
    return y.reshape(B, Ho, Wo, Cout)


def grouped_conv2d(x_g, w, b, *, stride=1, pad=1, act="silu"):
    G, KH, KW, Cin_g, Cout_g = w.shape
    patches, (B, Ho, Wo) = _im2col_grouped(x_g, KH, KW, stride, pad)
    y = grouped_matmul_bias_act(patches, w.reshape(G, KH * KW * Cin_g, Cout_g),
                                b, act=act)
    return y.reshape(G, B, Ho, Wo, Cout_g)


def conv2d_with_proj(x_nhwc, w, b, wp, bp, *, stride=1, pad=1, act="silu"):
    KH, KW, Cin, Cout = w.shape
    patches, (B, Ho, Wo) = _im2col(x_nhwc, KH, KW, stride, pad)
    h, p = matmul_bias_act_with_proj(patches, w.reshape(KH * KW * Cin, Cout),
                                     b, wp, bp, act=act)
    return h.reshape(B, Ho, Wo, Cout), p.reshape(B, Ho, Wo, Cout)


# ----------------------------------------------------------------------------
# Deterministic parameter initialization (synthetic weights)
# ----------------------------------------------------------------------------
def _init_conv(key, kh, kw, cin, cout, scale=0.05):
    k1, k2 = jax.random.split(key)
    w = scale * jax.random.normal(k1, (kh, kw, cin, cout), jnp.float32)
    b = scale * jax.random.normal(k2, (cout,), jnp.float32)
    return w, b


def _init_grouped_conv(key, groups, kh, kw, cin_g, cout_g, scale=0.05):
    k1, k2 = jax.random.split(key)
    w = scale * jax.random.normal(k1, (groups, kh, kw, cin_g, cout_g), jnp.float32)
    b = scale * jax.random.normal(k2, (groups, cout_g), jnp.float32)
    return w, b


def init_pose_guider_params(key, conditioning_channels, backbone_channels,
                            out_channels, num_conds):
    params = {}
    ki = iter(jax.random.split(key, 64))
    # MultiCondBackbone (grouped convs)
    params["conv_in"] = _init_grouped_conv(next(ki), num_conds, 3, 3,
                                           conditioning_channels,
                                           backbone_channels[0])
    bb = []
    for i in range(len(backbone_channels) - 1):
        cin, cout = backbone_channels[i], backbone_channels[i + 1]
        bb.append(_init_grouped_conv(next(ki), num_conds, 3, 3, cin, cin))   # s=1
        bb.append(_init_grouped_conv(next(ki), num_conds, 3, 3, cin, cout))  # s=2
    params["backbone_blocks"] = bb
    # GateModule
    C = backbone_channels[-1]
    params["gate1"] = _init_conv(next(ki), 3, 3, C * num_conds, C // 2)
    params["gate2"] = _init_conv(next(ki), 7, 7, C // 2, num_conds)
    # blocks_0: 1x1 conv over G*C channels, stored per-group (G, C, N0)
    k1, k2 = jax.random.split(next(ki))
    N0 = out_channels[0]
    params["blocks_0"] = (0.05 * jax.random.normal(k1, (num_conds, C, N0), jnp.float32),
                          0.05 * jax.random.normal(k2, (N0,), jnp.float32))
    params["out_proj_0"] = (jnp.zeros((N0, N0), jnp.float32),
                            jnp.zeros((N0,), jnp.float32))          # zero_module
    for i in range(1, len(out_channels)):
        params[f"blocks_{i}_a"] = _init_conv(next(ki), 3, 3,
                                             out_channels[i - 1], out_channels[i])
        params[f"blocks_{i}_b"] = _init_conv(next(ki), 3, 3,
                                             out_channels[i], out_channels[i])
        params[f"out_proj_{i}"] = (jnp.zeros((out_channels[i], out_channels[i]), jnp.float32),
                                   jnp.zeros((out_channels[i],), jnp.float32))
    return params


# ----------------------------------------------------------------------------
# PoseGuider forward
# ----------------------------------------------------------------------------
def pose_guider_forward(params, dwpose, hamer, smpl, *,
                        backbone_channels, out_channels, num_conds):
    to_nhwc = lambda x: jnp.transpose(x, (0, 2, 3, 1))
    to_nchw = lambda x: jnp.transpose(x, (0, 3, 1, 2))

    # cond = cat((dwpose, hamer, smpl), dim=1) -> grouped layout (G, B, H, W, Cc)
    if hamer is not None:
        conds = [to_nhwc(dwpose), to_nhwc(hamer), to_nhwc(smpl)]
    else:
        conds = [to_nhwc(dwpose)]
    cond_g = jnp.stack(conds, axis=0)

    # MultiCondBackbone: every grouped conv is one pallas_call (group axis parallel)
    w, b = params["conv_in"]
    cond_g = grouped_conv2d(cond_g, w, b, stride=1, pad=1, act="silu")
    for idx, (w, b) in enumerate(params["backbone_blocks"]):
        s = 2 if idx % 2 == 1 else 1
        cond_g = grouped_conv2d(cond_g, w, b, stride=s, pad=1, act="silu")

    # GateModule: gate weights from the full-channel feature map
    G, B, Hb, Wb, C = cond_g.shape
    cond_full = jnp.transpose(cond_g, (1, 2, 3, 0, 4)).reshape(B, Hb, Wb, G * C)
    w, b = params["gate1"]
    g1 = conv2d(cond_full, w, b, stride=1, pad=1, act="silu")
    w, b = params["gate2"]
    gate = conv2d(g1, w, b, stride=1, pad=3, act="sigmoid")        # (B, Hb, Wb, G)

    # Fused: per-cond gate multiply + blocks_0 (1x1 + SiLU) + zero out_proj_0
    w0, b0 = params["blocks_0"]
    wp0, bp0 = params["out_proj_0"]
    h, p0 = gated_blocks0_with_proj(cond_g.reshape(G, B * Hb * Wb, C),
                                    gate.reshape(B * Hb * Wb, G),
                                    w0, b0, wp0, bp0)
    N0 = out_channels[0]
    cond = h.reshape(B, Hb, Wb, N0)
    outs = [to_nchw(p0.reshape(B, Hb, Wb, N0))]

    n = len(out_channels)
    for i in range(1, n):
        s = 2 if i < n - 1 else 1
        wa, ba = params[f"blocks_{i}_a"]
        cond = conv2d(cond, wa, ba, stride=s, pad=1, act="silu")
        wb_, bb_ = params[f"blocks_{i}_b"]
        wp, bp = params[f"out_proj_{i}"]
        cond, proj = conv2d_with_proj(cond, wb_, bb_, wp, bp,
                                      stride=1, pad=1, act="silu")
        outs.append(to_nchw(proj))
    return tuple(outs)


# ----------------------------------------------------------------------------
if __name__ == "__main__":
    key = jax.random.PRNGKey(0)
    B, H, W = 2, 32, 32
    conditioning_channels = 3
    num_conds = 3                        # dwpose + hamer + smpl
    backbone_channels = (8, 16, 16, 32)  # scaled-down (16, 32, 96, 256)
    out_channels = (16, 16, 32, 32, 32)  # scaled-down (320, 320, 640, 1280, 1280)

    kp, kd, khm, ks = jax.random.split(key, 4)
    params = init_pose_guider_params(kp, conditioning_channels,
                                     backbone_channels, out_channels, num_conds)
    dwpose = jax.random.normal(kd, (B, conditioning_channels, H, W), jnp.float32)
    hamer = jax.random.normal(khm, (B, conditioning_channels, H, W), jnp.float32)
    smpl = jax.random.normal(ks, (B, conditioning_channels, H, W), jnp.float32)

    fwd = jax.jit(functools.partial(pose_guider_forward,
                                    backbone_channels=backbone_channels,
                                    out_channels=out_channels,
                                    num_conds=num_conds))
    outs = fwd(params, dwpose, hamer, smpl)
    for o in outs:
        jax.block_until_ready(o)
    # expected shapes (NCHW): (2,16,4,4) (2,16,2,2) (2,32,1,1) (2,32,1,1) (2,32,1,1)
    print("KERNEL_OK")
</pallas_src>

<mosaic_0001>
module attributes {stable_mosaic.version = 11 : i64} {
  func.func @_mm_kernel(%arg0: i32, %arg1: i32, %arg2: memref<1x512x27xbf16, #tpu.memory_space<vmem>>, %arg3: memref<1x27x8xbf16, #tpu.memory_space<vmem>>, %arg4: memref<1x1x8xf32, #tpu.memory_space<vmem>>, %arg5: memref<1x512x8xf32, #tpu.memory_space<vmem>>) attributes {dimension_semantics = [#tpu.dimension_semantics<parallel>, #tpu.dimension_semantics<parallel>], iteration_bounds = array<i64: 3, 4>, scalar_prefetch = 0 : i64, scratch_operands = 0 : i64, tpu.core_type = #tpu.core_type<tc>, window_params = [{transform_indices = @transform_0, window_bounds = array<i64: 1, 512, 27>}, {transform_indices = @transform_1, window_bounds = array<i64: 1, 27, 8>}, {transform_indices = @transform_2, window_bounds = array<i64: 1, 1, 8>}, {transform_indices = @transform_3, window_bounds = array<i64: 1, 512, 8>}]} {
    %c0 = arith.constant 0 : index
    %c0_0 = arith.constant 0 : index
    %c0_1 = arith.constant 0 : index
    %0 = vector.load %arg2[%c0, %c0_0, %c0_1] : memref<1x512x27xbf16, #tpu.memory_space<vmem>>, vector<1x512x27xbf16>
    %1 = vector.shape_cast %0 : vector<1x512x27xbf16> to vector<512x27xbf16>
    %c0_2 = arith.constant 0 : index
    %c0_3 = arith.constant 0 : index
    %c0_4 = arith.constant 0 : index
    %2 = vector.load %arg3[%c0_2, %c0_3, %c0_4] : memref<1x27x8xbf16, #tpu.memory_space<vmem>>, vector<1x27x8xbf16>
    %3 = vector.shape_cast %2 : vector<1x27x8xbf16> to vector<27x8xbf16>
    %cst = arith.constant dense<0.000000e+00> : vector<512x8xf32>
    %4 = tpu.matmul %1, %3, %cst {dimension_numbers = #tpu.dot_dimension_numbers<[1], [0], [0], [1], [0, 0, 1, 1], [], []>} : vector<512x27xbf16>, vector<27x8xbf16>, vector<512x8xf32> -> vector<512x8xf32>
    %c0_5 = arith.constant 0 : index
    %c0_6 = arith.constant 0 : index
    %c0_7 = arith.constant 0 : index
    %5 = vector.load %arg4[%c0_5, %c0_6, %c0_7] : memref<1x1x8xf32, #tpu.memory_space<vmem>>, vector<1x1x8xf32>
    %6 = vector.shape_cast %5 : vector<1x1x8xf32> to vector<1x8xf32>
    %7 = vector.broadcast %6 : vector<1x8xf32> to vector<512x8xf32>
    %8 = arith.addf %4, %7 : vector<512x8xf32>
    %cst_8 = arith.constant 0.000000e+00 : f32
    %9 = vector.broadcast %cst_8 : f32 to vector<512x8xf32>
    %10 = arith.subf %9, %8 : vector<512x8xf32>
    %11 = math.exp %10 : vector<512x8xf32>
    %cst_9 = arith.constant 1.000000e+00 : f32
    %12 = vector.broadcast %cst_9 : f32 to vector<512x8xf32>
    %13 = arith.addf %12, %11 : vector<512x8xf32>
    %14 = tpu.reciprocal %13 {approx = true} : vector<512x8xf32> -> vector<512x8xf32>
    %15 = arith.mulf %8, %14 : vector<512x8xf32>
    %c0_10 = arith.constant 0 : index
    %c0_11 = arith.constant 0 : index
    %c0_12 = arith.constant 0 : index
    %16 = vector.load %arg5[%c0_10, %c0_11, %c0_12] : memref<1x512x8xf32, #tpu.memory_space<vmem>>, vector<1x512x8xf32>
    %17 = vector.shape_cast %16 : vector<1x512x8xf32> to vector<512x8xf32>
    %18 = vector.shape_cast %15 : vector<512x8xf32> to vector<1x512x8xf32>
    tpu.vector_store %arg5[%c0_10, %c0_11, %c0_12], %18 {strides = array<i32>} : memref<1x512x8xf32, #tpu.memory_space<vmem>>, vector<1x512x8xf32>,
    return
  }
  func.func @transform_0(%arg0: i32, %arg1: i32) -> (i32, i32, i32) {
    %c0_i32 = arith.constant 0 : i32
    %c0_i32_0 = arith.constant 0 : i32
    return %arg0, %arg1, %c0_i32 : i32, i32, i32
  }
  func.func @transform_1(%arg0: i32, %arg1: i32) -> (i32, i32, i32) {
    %c0_i32 = arith.constant 0 : i32
    %c0_i32_0 = arith.constant 0 : i32
    %c0_i32_1 = arith.constant 0 : i32
    return %arg0, %c0_i32, %c0_i32_0 : i32, i32, i32
  }
  func.func @transform_2(%arg0: i32, %arg1: i32) -> (i32, i32, i32) {
    %c0_i32 = arith.constant 0 : i32
    %c0_i32_0 = arith.constant 0 : i32
    %c0_i32_1 = arith.constant 0 : i32
    return %arg0, %c0_i32, %c0_i32_0 : i32, i32, i32
  }
  func.func @transform_3(%arg0: i32, %arg1: i32) -> (i32, i32, i32) {
    %c0_i32 = arith.constant 0 : i32
    %c0_i32_0 = arith.constant 0 : i32
    return %arg0, %arg1, %c0_i32 : i32, i32, i32
  }
}

module attributes {stable_mosaic.version = 11 : i64} {
  func.func @_mm_kernel(%arg0: i32, %arg1: i32, %arg2: memref<1x512x72xbf16, #tpu.memory_space<vmem>>, %arg3: memref<1x72x8xbf16, #tpu.memory_space<vmem>>, %arg4: memref<1x1x8xf32, #tpu.memory_space<vmem>>, %arg5: memref<1x512x8xf32, #tpu.memory_space<vmem>>) attributes {dimension_semantics = [#tpu.dimension_semantics<parallel>, #tpu.dimension_semantics<parallel>], iteration_bounds = array<i64: 3, 4>, scalar_prefetch = 0 : i64, scratch_operands = 0 : i64, tpu.core_type = #tpu.core_type<tc>, window_params = [{transform_indices = @transform_0, window_bounds = array<i64: 1, 512, 72>}, {transform_indices = @transform_1, window_bounds = array<i64: 1, 72, 8>}, {transform_indices = @transform_2, window_bounds = array<i64: 1, 1, 8>}, {transform_indices = @transform_3, window_bounds = array<i64: 1, 512, 8>}]} {
    %c0 = arith.constant 0 : index
    %c0_0 = arith.constant 0 : index
    %c0_1 = arith.constant 0 : index
    %0 = vector.load %arg2[%c0, %c0_0, %c0_1] : memref<1x512x72xbf16, #tpu.memory_space<vmem>>, vector<1x512x72xbf16>
    %1 = vector.shape_cast %0 : vector<1x512x72xbf16> to vector<512x72xbf16>
    %c0_2 = arith.constant 0 : index
    %c0_3 = arith.constant 0 : index
    %c0_4 = arith.constant 0 : index
    %2 = vector.load %arg3[%c0_2, %c0_3, %c0_4] : memref<1x72x8xbf16, #tpu.memory_space<vmem>>, vector<1x72x8xbf16>
    %3 = vector.shape_cast %2 : vector<1x72x8xbf16> to vector<72x8xbf16>
    %cst = arith.constant dense<0.000000e+00> : vector<512x8xf32>
    %4 = tpu.matmul %1, %3, %cst {dimension_numbers = #tpu.dot_dimension_numbers<[1], [0], [0], [1], [0, 0, 1, 1], [], []>} : vector<512x72xbf16>, vector<72x8xbf16>, vector<512x8xf32> -> vector<512x8xf32>
    %c0_5 = arith.constant 0 : index
    %c0_6 = arith.constant 0 : index
    %c0_7 = arith.constant 0 : index
    %5 = vector.load %arg4[%c0_5, %c0_6, %c0_7] : memref<1x1x8xf32, #tpu.memory_space<vmem>>, vector<1x1x8xf32>
    %6 = vector.shape_cast %5 : vector<1x1x8xf32> to vector<1x8xf32>
    %7 = vector.broadcast %6 : vector<1x8xf32> to vector<512x8xf32>
    %8 = arith.addf %4, %7 : vector<512x8xf32>
    %cst_8 = arith.constant 0.000000e+00 : f32
    %9 = vector.broadcast %cst_8 : f32 to vector<512x8xf32>
    %10 = arith.subf %9, %8 : vector<512x8xf32>
    %11 = math.exp %10 : vector<512x8xf32>
    %cst_9 = arith.constant 1.000000e+00 : f32
    %12 = vector.broadcast %cst_9 : f32 to vector<512x8xf32>
    %13 = arith.addf %12, %11 : vector<512x8xf32>
    %14 = tpu.reciprocal %13 {approx = true} : vector<512x8xf32> -> vector<512x8xf32>
    %15 = arith.mulf %8, %14 : vector<512x8xf32>
    %c0_10 = arith.constant 0 : index
    %c0_11 = arith.constant 0 : index
    %c0_12 = arith.constant 0 : index
    %16 = vector.load %arg5[%c0_10, %c0_11, %c0_12] : memref<1x512x8xf32, #tpu.memory_space<vmem>>, vector<1x512x8xf32>
    %17 = vector.shape_cast %16 : vector<1x512x8xf32> to vector<512x8xf32>
    %18 = vector.shape_cast %15 : vector<512x8xf32> to vector<1x512x8xf32>
    tpu.vector_store %arg5[%c0_10, %c0_11, %c0_12], %18 {strides = array<i32>} : memref<1x512x8xf32, #tpu.memory_space<vmem>>, vector<1x512x8xf32>,
    return
  }
  func.func @transform_0(%arg0: i32, %arg1: i32) -> (i32, i32, i32) {
    %c0_i32 = arith.constant 0 : i32
    %c0_i32_0 = arith.constant 0 : i32
    return %arg0, %arg1, %c0_i32 : i32, i32, i32
  }
  func.func @transform_1(%arg0: i32, %arg1: i32) -> (i32, i32, i32) {
    %c0_i32 = arith.constant 0 : i32
    %c0_i32_0 = arith.constant 0 : i32
    %c0_i32_1 = arith.constant 0 : i32
    return %arg0, %c0_i32, %c0_i32_0 : i32, i32, i32
  }
  func.func @transform_2(%arg0: i32, %arg1: i32) -> (i32, i32, i32) {
    %c0_i32 = arith.constant 0 : i32
    %c0_i32_0 = arith.constant 0 : i32
    %c0_i32_1 = arith.constant 0 : i32
    return %arg0, %c0_i32, %c0_i32_0 : i32, i32, i32
  }
  func.func @transform_3(%arg0: i32, %arg1: i32) -> (i32, i32, i32) {
    %c0_i32 = arith.constant 0 : i32
    %c0_i32_0 = arith.constant 0 : i32
    return %arg0, %arg1, %c0_i32 : i32, i32, i32
  }
}

module attributes {stable_mosaic.version = 11 : i64} {
  func.func @_mm_kernel(%arg0: i32, %arg1: i32, %arg2: memref<1x512x72xbf16, #tpu.memory_space<vmem>>, %arg3: memref<1x72x16xbf16, #tpu.memory_space<vmem>>, %arg4: memref<1x1x16xf32, #tpu.memory_space<vmem>>, %arg5: memref<1x512x16xf32, #tpu.memory_space<vmem>>) attributes {dimension_semantics = [#tpu.dimension_semantics<parallel>, #tpu.dimension_semantics<parallel>], iteration_bounds = array<i64: 3, 1>, scalar_prefetch = 0 : i64, scratch_operands = 0 : i64, tpu.core_type = #tpu.core_type<tc>, window_params = [{transform_indices = @transform_0, window_bounds = array<i64: 1, 512, 72>}, {transform_indices = @transform_1, window_bounds = array<i64: 1, 72, 16>}, {transform_indices = @transform_2, window_bounds = array<i64: 1, 1, 16>}, {transform_indices = @transform_3, window_bounds = array<i64: 1, 512, 16>}]} {
    %c0 = arith.constant 0 : index
    %c0_0 = arith.constant 0 : index
    %c0_1 = arith.constant 0 : index
    %0 = vector.load %arg2[%c0, %c0_0, %c0_1] : memref<1x512x72xbf16, #tpu.memory_space<vmem>>, vector<1x512x72xbf16>
    %1 = vector.shape_cast %0 : vector<1x512x72xbf16> to vector<512x72xbf16>
    %c0_2 = arith.constant 0 : index
    %c0_3 = arith.constant 0 : index
    %c0_4 = arith.constant 0 : index
    %2 = vector.load %arg3[%c0_2, %c0_3, %c0_4] : memref<1x72x16xbf16, #tpu.memory_space<vmem>>, vector<1x72x16xbf16>
    %3 = vector.shape_cast %2 : vector<1x72x16xbf16> to vector<72x16xbf16>
    %cst = arith.constant dense<0.000000e+00> : vector<512x16xf32>
    %4 = tpu.matmul %1, %3, %cst {dimension_numbers = #tpu.dot_dimension_numbers<[1], [0], [0], [1], [0, 0, 1, 1], [], []>} : vector<512x72xbf16>, vector<72x16xbf16>, vector<512x16xf32> -> vector<512x16xf32>
    %c0_5 = arith.constant 0 : index
    %c0_6 = arith.constant 0 : index
    %c0_7 = arith.constant 0 : index
    %5 = vector.load %arg4[%c0_5, %c0_6, %c0_7] : memref<1x1x16xf32, #tpu.memory_space<vmem>>, vector<1x1x16xf32>
    %6 = vector.shape_cast %5 : vector<1x1x16xf32> to vector<1x16xf32>
    %7 = vector.broadcast %6 : vector<1x16xf32> to vector<512x16xf32>
    %8 = arith.addf %4, %7 : vector<512x16xf32>
    %cst_8 = arith.constant 0.000000e+00 : f32
    %9 = vector.broadcast %cst_8 : f32 to vector<512x16xf32>
    %10 = arith.subf %9, %8 : vector<512x16xf32>
    %11 = math.exp %10 : vector<512x16xf32>
    %cst_9 = arith.constant 1.000000e+00 : f32
    %12 = vector.broadcast %cst_9 : f32 to vector<512x16xf32>
    %13 = arith.addf %12, %11 : vector<512x16xf32>
    %14 = tpu.reciprocal %13 {approx = true} : vector<512x16xf32> -> vector<512x16xf32>
    %15 = arith.mulf %8, %14 : vector<512x16xf32>
    %c0_10 = arith.constant 0 : index
    %c0_11 = arith.constant 0 : index
    %c0_12 = arith.constant 0 : index
    %16 = vector.load %arg5[%c0_10, %c0_11, %c0_12] : memref<1x512x16xf32, #tpu.memory_space<vmem>>, vector<1x512x16xf32>
    %17 = vector.shape_cast %16 : vector<1x512x16xf32> to vector<512x16xf32>
    %18 = vector.shape_cast %15 : vector<512x16xf32> to vector<1x512x16xf32>
    tpu.vector_store %arg5[%c0_10, %c0_11, %c0_12], %18 {strides = array<i32>} : memref<1x512x16xf32, #tpu.memory_space<vmem>>, vector<1x512x16xf32>,
    return
  }
  func.func @transform_0(%arg0: i32, %arg1: i32) -> (i32, i32, i32) {
    %c0_i32 = arith.constant 0 : i32
    %c0_i32_0 = arith.constant 0 : i32
    return %arg0, %arg1, %c0_i32 : i32, i32, i32
  }
  func.func @transform_1(%arg0: i32, %arg1: i32) -> (i32, i32, i32) {
    %c0_i32 = arith.constant 0 : i32
    %c0_i32_0 = arith.constant 0 : i32
    %c0_i32_1 = arith.constant 0 : i32
    return %arg0, %c0_i32, %c0_i32_0 : i32, i32, i32
  }
  func.func @transform_2(%arg0: i32, %arg1: i32) -> (i32, i32, i32) {
    %c0_i32 = arith.constant 0 : i32
    %c0_i32_0 = arith.constant 0 : i32
    %c0_i32_1 = arith.constant 0 : i32
    return %arg0, %c0_i32, %c0_i32_0 : i32, i32, i32
  }
  func.func @transform_3(%arg0: i32, %arg1: i32) -> (i32, i32, i32) {
    %c0_i32 = arith.constant 0 : i32
    %c0_i32_0 = arith.constant 0 : i32
    return %arg0, %arg1, %c0_i32 : i32, i32, i32
  }
}

module attributes {stable_mosaic.version = 11 : i64} {
  func.func @_mm_kernel(%arg0: i32, %arg1: i32, %arg2: memref<1x512x144xbf16, #tpu.memory_space<vmem>>, %arg3: memref<1x144x16xbf16, #tpu.memory_space<vmem>>, %arg4: memref<1x1x16xf32, #tpu.memory_space<vmem>>, %arg5: memref<1x512x16xf32, #tpu.memory_space<vmem>>) attributes {dimension_semantics = [#tpu.dimension_semantics<parallel>, #tpu.dimension_semantics<parallel>], iteration_bounds = array<i64: 3, 1>, scalar_prefetch = 0 : i64, scratch_operands = 0 : i64, tpu.core_type = #tpu.core_type<tc>, window_params = [{transform_indices = @transform_0, window_bounds = array<i64: 1, 512, 144>}, {transform_indices = @transform_1, window_bounds = array<i64: 1, 144, 16>}, {transform_indices = @transform_2, window_bounds = array<i64: 1, 1, 16>}, {transform_indices = @transform_3, window_bounds = array<i64: 1, 512, 16>}]} {
    %c0 = arith.constant 0 : index
    %c0_0 = arith.constant 0 : index
    %c0_1 = arith.constant 0 : index
    %0 = vector.load %arg2[%c0, %c0_0, %c0_1] : memref<1x512x144xbf16, #tpu.memory_space<vmem>>, vector<1x512x144xbf16>
    %1 = vector.shape_cast %0 : vector<1x512x144xbf16> to vector<512x144xbf16>
    %c0_2 = arith.constant 0 : index
    %c0_3 = arith.constant 0 : index
    %c0_4 = arith.constant 0 : index
    %2 = vector.load %arg3[%c0_2, %c0_3, %c0_4] : memref<1x144x16xbf16, #tpu.memory_space<vmem>>, vector<1x144x16xbf16>
    %3 = vector.shape_cast %2 : vector<1x144x16xbf16> to vector<144x16xbf16>
    %cst = arith.constant dense<0.000000e+00> : vector<512x16xf32>
    %4 = tpu.matmul %1, %3, %cst {dimension_numbers = #tpu.dot_dimension_numbers<[1], [0], [0], [1], [0, 0, 1, 1], [], []>} : vector<512x144xbf16>, vector<144x16xbf16>, vector<512x16xf32> -> vector<512x16xf32>
    %c0_5 = arith.constant 0 : index
    %c0_6 = arith.constant 0 : index
    %c0_7 = arith.constant 0 : index
    %5 = vector.load %arg4[%c0_5, %c0_6, %c0_7] : memref<1x1x16xf32, #tpu.memory_space<vmem>>, vector<1x1x16xf32>
    %6 = vector.shape_cast %5 : vector<1x1x16xf32> to vector<1x16xf32>
    %7 = vector.broadcast %6 : vector<1x16xf32> to vector<512x16xf32>
    %8 = arith.addf %4, %7 : vector<512x16xf32>
    %cst_8 = arith.constant 0.000000e+00 : f32
    %9 = vector.broadcast %cst_8 : f32 to vector<512x16xf32>
    %10 = arith.subf %9, %8 : vector<512x16xf32>
    %11 = math.exp %10 : vector<512x16xf32>
    %cst_9 = arith.constant 1.000000e+00 : f32
    %12 = vector.broadcast %cst_9 : f32 to vector<512x16xf32>
    %13 = arith.addf %12, %11 : vector<512x16xf32>
    %14 = tpu.reciprocal %13 {approx = true} : vector<512x16xf32> -> vector<512x16xf32>
    %15 = arith.mulf %8, %14 : vector<512x16xf32>
    %c0_10 = arith.constant 0 : index
    %c0_11 = arith.constant 0 : index
    %c0_12 = arith.constant 0 : index
    %16 = vector.load %arg5[%c0_10, %c0_11, %c0_12] : memref<1x512x16xf32, #tpu.memory_space<vmem>>, vector<1x512x16xf32>
    %17 = vector.shape_cast %16 : vector<1x512x16xf32> to vector<512x16xf32>
    %18 = vector.shape_cast %15 : vector<512x16xf32> to vector<1x512x16xf32>
    tpu.vector_store %arg5[%c0_10, %c0_11, %c0_12], %18 {strides = array<i32>} : memref<1x512x16xf32, #tpu.memory_space<vmem>>, vector<1x512x16xf32>,
    return
  }
  func.func @transform_0(%arg0: i32, %arg1: i32) -> (i32, i32, i32) {
    %c0_i32 = arith.constant 0 : i32
    %c0_i32_0 = arith.constant 0 : i32
    return %arg0, %arg1, %c0_i32 : i32, i32, i32
  }
  func.func @transform_1(%arg0: i32, %arg1: i32) -> (i32, i32, i32) {
    %c0_i32 = arith.constant 0 : i32
    %c0_i32_0 = arith.constant 0 : i32
    %c0_i32_1 = arith.constant 0 : i32
    return %arg0, %c0_i32, %c0_i32_0 : i32, i32, i32
  }
  func.func @transform_2(%arg0: i32, %arg1: i32) -> (i32, i32, i32) {
    %c0_i32 = arith.constant 0 : i32
    %c0_i32_0 = arith.constant 0 : i32
    %c0_i32_1 = arith.constant 0 : i32
    return %arg0, %c0_i32, %c0_i32_0 : i32, i32, i32
  }
  func.func @transform_3(%arg0: i32, %arg1: i32) -> (i32, i32, i32) {
    %c0_i32 = arith.constant 0 : i32
    %c0_i32_0 = arith.constant 0 : i32
    return %arg0, %arg1, %c0_i32 : i32, i32, i32
  }
}

module attributes {stable_mosaic.version = 11 : i64} {
  func.func @_mm_kernel(%arg0: i32, %arg1: i32, %arg2: memref<1x128x144xbf16, #tpu.memory_space<vmem>>, %arg3: memref<1x144x16xbf16, #tpu.memory_space<vmem>>, %arg4: memref<1x1x16xf32, #tpu.memory_space<vmem>>, %arg5: memref<1x128x16xf32, #tpu.memory_space<vmem>>) attributes {dimension_semantics = [#tpu.dimension_semantics<parallel>, #tpu.dimension_semantics<parallel>], iteration_bounds = array<i64: 3, 1>, scalar_prefetch = 0 : i64, scratch_operands = 0 : i64, tpu.core_type = #tpu.core_type<tc>, window_params = [{transform_indices = @transform_0, window_bounds = array<i64: 1, 128, 144>}, {transform_indices = @transform_1, window_bounds = array<i64: 1, 144, 16>}, {transform_indices = @transform_2, window_bounds = array<i64: 1, 1, 16>}, {transform_indices = @transform_3, window_bounds = array<i64: 1, 128, 16>}]} {
    %c0 = arith.constant 0 : index
    %c0_0 = arith.constant 0 : index
    %c0_1 = arith.constant 0 : index
    %0 = vector.load %arg2[%c0, %c0_0, %c0_1] : memref<1x128x144xbf16, #tpu.memory_space<vmem>>, vector<1x128x144xbf16>
    %1 = vector.shape_cast %0 : vector<1x128x144xbf16> to vector<128x144xbf16>
    %c0_2 = arith.constant 0 : index
    %c0_3 = arith.constant 0 : index
    %c0_4 = arith.constant 0 : index
    %2 = vector.load %arg3[%c0_2, %c0_3, %c0_4] : memref<1x144x16xbf16, #tpu.memory_space<vmem>>, vector<1x144x16xbf16>
    %3 = vector.shape_cast %2 : vector<1x144x16xbf16> to vector<144x16xbf16>
    %cst = arith.constant dense<0.000000e+00> : vector<128x16xf32>
    %4 = tpu.matmul %1, %3, %cst {dimension_numbers = #tpu.dot_dimension_numbers<[1], [0], [0], [1], [0, 0, 1, 1], [], []>} : vector<128x144xbf16>, vector<144x16xbf16>, vector<128x16xf32> -> vector<128x16xf32>
    %c0_5 = arith.constant 0 : index
    %c0_6 = arith.constant 0 : index
    %c0_7 = arith.constant 0 : index
    %5 = vector.load %arg4[%c0_5, %c0_6, %c0_7] : memref<1x1x16xf32, #tpu.memory_space<vmem>>, vector<1x1x16xf32>
    %6 = vector.shape_cast %5 : vector<1x1x16xf32> to vector<1x16xf32>
    %7 = vector.broadcast %6 : vector<1x16xf32> to vector<128x16xf32>
    %8 = arith.addf %4, %7 : vector<128x16xf32>
    %cst_8 = arith.constant 0.000000e+00 : f32
    %9 = vector.broadcast %cst_8 : f32 to vector<128x16xf32>
    %10 = arith.subf %9, %8 : vector<128x16xf32>
    %11 = math.exp %10 : vector<128x16xf32>
    %cst_9 = arith.constant 1.000000e+00 : f32
    %12 = vector.broadcast %cst_9 : f32 to vector<128x16xf32>
    %13 = arith.addf %12, %11 : vector<128x16xf32>
    %14 = tpu.reciprocal %13 {approx = true} : vector<128x16xf32> -> vector<128x16xf32>
    %15 = arith.mulf %8, %14 : vector<128x16xf32>
    %c0_10 = arith.constant 0 : index
    %c0_11 = arith.constant 0 : index
    %c0_12 = arith.constant 0 : index
    %16 = vector.load %arg5[%c0_10, %c0_11, %c0_12] : memref<1x128x16xf32, #tpu.memory_space<vmem>>, vector<1x128x16xf32>
    %17 = vector.shape_cast %16 : vector<1x128x16xf32> to vector<128x16xf32>
    %18 = vector.shape_cast %15 : vector<128x16xf32> to vector<1x128x16xf32>
    tpu.vector_store %arg5[%c0_10, %c0_11, %c0_12], %18 {strides = array<i32>} : memref<1x128x16xf32, #tpu.memory_space<vmem>>, vector<1x128x16xf32>,
    return
  }
  func.func @transform_0(%arg0: i32, %arg1: i32) -> (i32, i32, i32) {
    %c0_i32 = arith.constant 0 : i32
    %c0_i32_0 = arith.constant 0 : i32
    return %arg0, %arg1, %c0_i32 : i32, i32, i32
  }
  func.func @transform_1(%arg0: i32, %arg1: i32) -> (i32, i32, i32) {
    %c0_i32 = arith.constant 0 : i32
    %c0_i32_0 = arith.constant 0 : i32
    %c0_i32_1 = arith.constant 0 : i32
    return %arg0, %c0_i32, %c0_i32_0 : i32, i32, i32
  }
  func.func @transform_2(%arg0: i32, %arg1: i32) -> (i32, i32, i32) {
    %c0_i32 = arith.constant 0 : i32
    %c0_i32_0 = arith.constant 0 : i32
    %c0_i32_1 = arith.constant 0 : i32
    return %arg0, %c0_i32, %c0_i32_0 : i32, i32, i32
  }
  func.func @transform_3(%arg0: i32, %arg1: i32) -> (i32, i32, i32) {
    %c0_i32 = arith.constant 0 : i32
    %c0_i32_0 = arith.constant 0 : i32
    return %arg0, %arg1, %c0_i32 : i32, i32, i32
  }
}

module attributes {stable_mosaic.version = 11 : i64} {
  func.func @_mm_kernel(%arg0: i32, %arg1: i32, %arg2: memref<1x32x144xbf16, #tpu.memory_space<vmem>>, %arg3: memref<1x144x32xbf16, #tpu.memory_space<vmem>>, %arg4: memref<1x1x32xf32, #tpu.memory_space<vmem>>, %arg5: memref<1x32x32xf32, #tpu.memory_space<vmem>>) attributes {dimension_semantics = [#tpu.dimension_semantics<parallel>, #tpu.dimension_semantics<parallel>], iteration_bounds = array<i64: 3, 1>, scalar_prefetch = 0 : i64, scratch_operands = 0 : i64, tpu.core_type = #tpu.core_type<tc>, window_params = [{transform_indices = @transform_0, window_bounds = array<i64: 1, 32, 144>}, {transform_indices = @transform_1, window_bounds = array<i64: 1, 144, 32>}, {transform_indices = @transform_2, window_bounds = array<i64: 1, 1, 32>}, {transform_indices = @transform_3, window_bounds = array<i64: 1, 32, 32>}]} {
    %c0 = arith.constant 0 : index
    %c0_0 = arith.constant 0 : index
    %c0_1 = arith.constant 0 : index
    %0 = vector.load %arg2[%c0, %c0_0, %c0_1] : memref<1x32x144xbf16, #tpu.memory_space<vmem>>, vector<1x32x144xbf16>
    %1 = vector.shape_cast %0 : vector<1x32x144xbf16> to vector<32x144xbf16>
    %c0_2 = arith.constant 0 : index
    %c0_3 = arith.constant 0 : index
    %c0_4 = arith.constant 0 : index
    %2 = vector.load %arg3[%c0_2, %c0_3, %c0_4] : memref<1x144x32xbf16, #tpu.memory_space<vmem>>, vector<1x144x32xbf16>
    %3 = vector.shape_cast %2 : vector<1x144x32xbf16> to vector<144x32xbf16>
    %cst = arith.constant dense<0.000000e+00> : vector<32x32xf32>
    %4 = tpu.matmul %1, %3, %cst {dimension_numbers = #tpu.dot_dimension_numbers<[1], [0], [0], [1], [0, 0, 1, 1], [], []>} : vector<32x144xbf16>, vector<144x32xbf16>, vector<32x32xf32> -> vector<32x32xf32>
    %c0_5 = arith.constant 0 : index
    %c0_6 = arith.constant 0 : index
    %c0_7 = arith.constant 0 : index
    %5 = vector.load %arg4[%c0_5, %c0_6, %c0_7] : memref<1x1x32xf32, #tpu.memory_space<vmem>>, vector<1x1x32xf32>
    %6 = vector.shape_cast %5 : vector<1x1x32xf32> to vector<1x32xf32>
    %7 = vector.broadcast %6 : vector<1x32xf32> to vector<32x32xf32>
    %8 = arith.addf %4, %7 : vector<32x32xf32>
    %cst_8 = arith.constant 0.000000e+00 : f32
    %9 = vector.broadcast %cst_8 : f32 to vector<32x32xf32>
    %10 = arith.subf %9, %8 : vector<32x32xf32>
    %11 = math.exp %10 : vector<32x32xf32>
    %cst_9 = arith.constant 1.000000e+00 : f32
    %12 = vector.broadcast %cst_9 : f32 to vector<32x32xf32>
    %13 = arith.addf %12, %11 : vector<32x32xf32>
    %14 = tpu.reciprocal %13 {approx = true} : vector<32x32xf32> -> vector<32x32xf32>
    %15 = arith.mulf %8, %14 : vector<32x32xf32>
    %c0_10 = arith.constant 0 : index
    %c0_11 = arith.constant 0 : index
    %c0_12 = arith.constant 0 : index
    %16 = vector.load %arg5[%c0_10, %c0_11, %c0_12] : memref<1x32x32xf32, #tpu.memory_space<vmem>>, vector<1x32x32xf32>
    %17 = vector.shape_cast %16 : vector<1x32x32xf32> to vector<32x32xf32>
    %18 = vector.shape_cast %15 : vector<32x32xf32> to vector<1x32x32xf32>
    tpu.vector_store %arg5[%c0_10, %c0_11, %c0_12], %18 {strides = array<i32>} : memref<1x32x32xf32, #tpu.memory_space<vmem>>, vector<1x32x32xf32>,
    return
  }
  func.func @transform_0(%arg0: i32, %arg1: i32) -> (i32, i32, i32) {
    %c0_i32 = arith.constant 0 : i32
    %c0_i32_0 = arith.constant 0 : i32
    return %arg0, %arg1, %c0_i32 : i32, i32, i32
  }
  func.func @transform_1(%arg0: i32, %arg1: i32) -> (i32, i32, i32) {
    %c0_i32 = arith.constant 0 : i32
    %c0_i32_0 = arith.constant 0 : i32
    %c0_i32_1 = arith.constant 0 : i32
    return %arg0, %c0_i32, %c0_i32_0 : i32, i32, i32
  }
  func.func @transform_2(%arg0: i32, %arg1: i32) -> (i32, i32, i32) {
    %c0_i32 = arith.constant 0 : i32
    %c0_i32_0 = arith.constant 0 : i32
    %c0_i32_1 = arith.constant 0 : i32
    return %arg0, %c0_i32, %c0_i32_0 : i32, i32, i32
  }
  func.func @transform_3(%arg0: i32, %arg1: i32) -> (i32, i32, i32) {
    %c0_i32 = arith.constant 0 : i32
    %c0_i32_0 = arith.constant 0 : i32
    return %arg0, %arg1, %c0_i32 : i32, i32, i32
  }
}

module attributes {stable_mosaic.version = 11 : i64} {
  func.func @_mm_kernel(%arg0: i32, %arg1: memref<32x864xbf16, #tpu.memory_space<vmem>>, %arg2: memref<864x16xbf16, #tpu.memory_space<vmem>>, %arg3: memref<1x16xf32, #tpu.memory_space<vmem>>, %arg4: memref<32x16xf32, #tpu.memory_space<vmem>>) attributes {dimension_semantics = [#tpu.dimension_semantics<parallel>], iteration_bounds = array<i64: 1>, scalar_prefetch = 0 : i64, scratch_operands = 0 : i64, tpu.core_type = #tpu.core_type<tc>, window_params = [{transform_indices = @transform_0, window_bounds = array<i64: 32, 864>}, {pipeline_mode = #tpu.pipeline_mode<synchronous>, transform_indices = @transform_1, window_bounds = array<i64: 864, 16>}, {pipeline_mode = #tpu.pipeline_mode<synchronous>, transform_indices = @transform_2, window_bounds = array<i64: 1, 16>}, {transform_indices = @transform_3, window_bounds = array<i64: 32, 16>}]} {
    %c0 = arith.constant 0 : index
    %c0_0 = arith.constant 0 : index
    %0 = vector.load %arg1[%c0, %c0_0] : memref<32x864xbf16, #tpu.memory_space<vmem>>, vector<32x864xbf16>
    %c0_1 = arith.constant 0 : index
    %c0_2 = arith.constant 0 : index
    %1 = vector.load %arg2[%c0_1, %c0_2] : memref<864x16xbf16, #tpu.memory_space<vmem>>, vector<864x16xbf16>
    %cst = arith.constant dense<0.000000e+00> : vector<32x16xf32>
    %2 = tpu.matmul %0, %1, %cst {dimension_numbers = #tpu.dot_dimension_numbers<[1], [0], [0], [1], [0, 0, 1, 1], [], []>} : vector<32x864xbf16>, vector<864x16xbf16>, vector<32x16xf32> -> vector<32x16xf32>
    %c0_3 = arith.constant 0 : index
    %c0_4 = arith.constant 0 : index
    %3 = vector.load %arg3[%c0_3, %c0_4] : memref<1x16xf32, #tpu.memory_space<vmem>>, vector<1x16xf32>
    %4 = vector.broadcast %3 : vector<1x16xf32> to vector<32x16xf32>
    %5 = arith.addf %2, %4 : vector<32x16xf32>
    %cst_5 = arith.constant 0.000000e+00 : f32
    %6 = vector.broadcast %cst_5 : f32 to vector<32x16xf32>
    %7 = arith.subf %6, %5 : vector<32x16xf32>
    %8 = math.exp %7 : vector<32x16xf32>
    %cst_6 = arith.constant 1.000000e+00 : f32
    %9 = vector.broadcast %cst_6 : f32 to vector<32x16xf32>
    %10 = arith.addf %9, %8 : vector<32x16xf32>
    %11 = tpu.reciprocal %10 {approx = true} : vector<32x16xf32> -> vector<32x16xf32>
    %12 = arith.mulf %5, %11 : vector<32x16xf32>
    %c0_7 = arith.constant 0 : index
    %c0_8 = arith.constant 0 : index
    %13 = vector.load %arg4[%c0_7, %c0_8] : memref<32x16xf32, #tpu.memory_space<vmem>>, vector<32x16xf32>
    tpu.vector_store %arg4[%c0_7, %c0_8], %12 {strides = array<i32>} : memref<32x16xf32, #tpu.memory_space<vmem>>, vector<32x16xf32>,
    return
  }
  func.func @transform_0(%arg0: i32) -> (i32, i32) {
    %c0_i32 = arith.constant 0 : i32
    %c0_i32_0 = arith.constant 0 : i32
    return %arg0, %c0_i32 : i32, i32
  }
  func.func @transform_1(%arg0: i32) -> (i32, i32) {
    %c0_i32 = arith.constant 0 : i32
    %c0_i32_0 = arith.constant 0 : i32
    %c0_i32_1 = arith.constant 0 : i32
    return %c0_i32, %c0_i32_0 : i32, i32
  }
  func.func @transform_2(%arg0: i32) -> (i32, i32) {
    %c0_i32 = arith.constant 0 : i32
    %c0_i32_0 = arith.constant 0 : i32
    %c0_i32_1 = arith.constant 0 : i32
    return %c0_i32, %c0_i32_0 : i32, i32
  }
  func.func @transform_3(%arg0: i32) -> (i32, i32) {
    %c0_i32 = arith.constant 0 : i32
    %c0_i32_0 = arith.constant 0 : i32
    return %arg0, %c0_i32 : i32, i32
  }
}

module attributes {stable_mosaic.version = 11 : i64} {
  func.func @_mm_kernel(%arg0: i32, %arg1: memref<32x784xbf16, #tpu.memory_space<vmem>>, %arg2: memref<784x3xbf16, #tpu.memory_space<vmem>>, %arg3: memref<1x3xf32, #tpu.memory_space<vmem>>, %arg4: memref<32x3xf32, #tpu.memory_space<vmem>>) attributes {dimension_semantics = [#tpu.dimension_semantics<parallel>], iteration_bounds = array<i64: 1>, scalar_prefetch = 0 : i64, scratch_operands = 0 : i64, tpu.core_type = #tpu.core_type<tc>, window_params = [{transform_indices = @transform_0, window_bounds = array<i64: 32, 784>}, {pipeline_mode = #tpu.pipeline_mode<synchronous>, transform_indices = @transform_1, window_bounds = array<i64: 784, 3>}, {pipeline_mode = #tpu.pipeline_mode<synchronous>, transform_indices = @transform_2, window_bounds = array<i64: 1, 3>}, {transform_indices = @transform_3, window_bounds = array<i64: 32, 3>}]} {
    %c0 = arith.constant 0 : index
    %c0_0 = arith.constant 0 : index
    %0 = vector.load %arg1[%c0, %c0_0] : memref<32x784xbf16, #tpu.memory_space<vmem>>, vector<32x784xbf16>
    %c0_1 = arith.constant 0 : index
    %c0_2 = arith.constant 0 : index
    %1 = vector.load %arg2[%c0_1, %c0_2] : memref<784x3xbf16, #tpu.memory_space<vmem>>, vector<784x3xbf16>
    %cst = arith.constant dense<0.000000e+00> : vector<32x3xf32>
    %2 = tpu.matmul %0, %1, %cst {dimension_numbers = #tpu.dot_dimension_numbers<[1], [0], [0], [1], [0, 0, 1, 1], [], []>} : vector<32x784xbf16>, vector<784x3xbf16>, vector<32x3xf32> -> vector<32x3xf32>
    %c0_3 = arith.constant 0 : index
    %c0_4 = arith.constant 0 : index
    %3 = vector.load %arg3[%c0_3, %c0_4] : memref<1x3xf32, #tpu.memory_space<vmem>>, vector<1x3xf32>
    %4 = vector.broadcast %3 : vector<1x3xf32> to vector<32x3xf32>
    %5 = arith.addf %2, %4 : vector<32x3xf32>
    %cst_5 = arith.constant 0.000000e+00 : f32
    %6 = vector.broadcast %cst_5 : f32 to vector<32x3xf32>
    %7 = arith.subf %6, %5 : vector<32x3xf32>
    %8 = math.exp %7 : vector<32x3xf32>
    %cst_6 = arith.constant 1.000000e+00 : f32
    %9 = vector.broadcast %cst_6 : f32 to vector<32x3xf32>
    %10 = arith.addf %9, %8 : vector<32x3xf32>
    %11 = tpu.reciprocal %10 {approx = true} : vector<32x3xf32> -> vector<32x3xf32>
    %c0_7 = arith.constant 0 : index
    %c0_8 = arith.constant 0 : index
    %12 = vector.load %arg4[%c0_7, %c0_8] : memref<32x3xf32, #tpu.memory_space<vmem>>, vector<32x3xf32>
    tpu.vector_store %arg4[%c0_7, %c0_8], %11 {strides = array<i32>} : memref<32x3xf32, #tpu.memory_space<vmem>>, vector<32x3xf32>,
    return
  }
  func.func @transform_0(%arg0: i32) -> (i32, i32) {
    %c0_i32 = arith.constant 0 : i32
    %c0_i32_0 = arith.constant 0 : i32
    return %arg0, %c0_i32 : i32, i32
  }
  func.func @transform_1(%arg0: i32) -> (i32, i32) {
    %c0_i32 = arith.constant 0 : i32
    %c0_i32_0 = arith.constant 0 : i32
    %c0_i32_1 = arith.constant 0 : i32
    return %c0_i32, %c0_i32_0 : i32, i32
  }
  func.func @transform_2(%arg0: i32) -> (i32, i32) {
    %c0_i32 = arith.constant 0 : i32
    %c0_i32_0 = arith.constant 0 : i32
    %c0_i32_1 = arith.constant 0 : i32
    return %c0_i32, %c0_i32_0 : i32, i32
  }
  func.func @transform_3(%arg0: i32) -> (i32, i32) {
    %c0_i32 = arith.constant 0 : i32
    %c0_i32_0 = arith.constant 0 : i32
    return %arg0, %c0_i32 : i32, i32
  }
}

module attributes {stable_mosaic.version = 11 : i64} {
  func.func @_gate_blocks0_kernel(%arg0: i32, %arg1: memref<3x32x32xf32, #tpu.memory_space<vmem>>, %arg2: memref<32x3xf32, #tpu.memory_space<vmem>>, %arg3: memref<3x32x16xbf16, #tpu.memory_space<vmem>>, %arg4: memref<1x16xf32, #tpu.memory_space<vmem>>, %arg5: memref<16x16xbf16, #tpu.memory_space<vmem>>, %arg6: memref<1x16xf32, #tpu.memory_space<vmem>>, %arg7: memref<32x16xf32, #tpu.memory_space<vmem>>, %arg8: memref<32x16xf32, #tpu.memory_space<vmem>>) attributes {dimension_semantics = [#tpu.dimension_semantics<parallel>], iteration_bounds = array<i64: 1>, scalar_prefetch = 0 : i64, scratch_operands = 0 : i64, tpu.core_type = #tpu.core_type<tc>, window_params = [{transform_indices = @transform_0, window_bounds = array<i64: 3, 32, 32>}, {transform_indices = @transform_1, window_bounds = array<i64: 32, 3>}, {pipeline_mode = #tpu.pipeline_mode<synchronous>, transform_indices = @transform_2, window_bounds = array<i64: 3, 32, 16>}, {pipeline_mode = #tpu.pipeline_mode<synchronous>, transform_indices = @transform_3, window_bounds = array<i64: 1, 16>}, {pipeline_mode = #tpu.pipeline_mode<synchronous>, transform_indices = @transform_4, window_bounds = array<i64: 16, 16>}, {pipeline_mode = #tpu.pipeline_mode<synchronous>, transform_indices = @transform_5, window_bounds = array<i64: 1, 16>}, {transform_indices = @transform_6, window_bounds = array<i64: 32, 16>}, {transform_indices = @transform_7, window_bounds = array<i64: 32, 16>}]} {
    %cst = arith.constant 0.000000e+00 : f32
    %0 = vector.broadcast %cst : f32 to vector<32x16xf32>
    %c0 = arith.constant 0 : index
    %c0_0 = arith.constant 0 : index
    %c0_1 = arith.constant 0 : index
    %1 = vector.load %arg1[%c0, %c0_0, %c0_1] : memref<3x32x32xf32, #tpu.memory_space<vmem>>, vector<1x32x32xf32>
    %2 = vector.shape_cast %1 : vector<1x32x32xf32> to vector<32x32xf32>
    %c0_2 = arith.constant 0 : index
    %c0_3 = arith.constant 0 : index
    %3 = vector.load %arg2[%c0_2, %c0_3] : memref<32x3xf32, #tpu.memory_space<vmem>>, vector<32x1xf32>
    %4 = vector.broadcast %3 : vector<32x1xf32> to vector<32x32xf32>
    %5 = arith.mulf %2, %4 : vector<32x32xf32>
    %6 = arith.truncf %5 : vector<32x32xf32> to vector<32x32xbf16>
    %c0_4 = arith.constant 0 : index
    %c0_5 = arith.constant 0 : index
    %c0_6 = arith.constant 0 : index
    %7 = vector.load %arg3[%c0_4, %c0_5, %c0_6] : memref<3x32x16xbf16, #tpu.memory_space<vmem>>, vector<1x32x16xbf16>
    %8 = vector.shape_cast %7 : vector<1x32x16xbf16> to vector<32x16xbf16>
    %cst_7 = arith.constant dense<0.000000e+00> : vector<32x16xf32>
    %9 = tpu.matmul %6, %8, %cst_7 {dimension_numbers = #tpu.dot_dimension_numbers<[1], [0], [0], [1], [0, 0, 1, 1], [], []>} : vector<32x32xbf16>, vector<32x16xbf16>, vector<32x16xf32> -> vector<32x16xf32>
    %10 = arith.addf %0, %9 : vector<32x16xf32>
    %c1 = arith.constant 1 : index
    %c0_8 = arith.constant 0 : index
    %c0_9 = arith.constant 0 : index
    %11 = vector.load %arg1[%c1, %c0_8, %c0_9] : memref<3x32x32xf32, #tpu.memory_space<vmem>>, vector<1x32x32xf32>
    %12 = vector.shape_cast %11 : vector<1x32x32xf32> to vector<32x32xf32>
    %c0_10 = arith.constant 0 : index
    %c1_11 = arith.constant 1 : index
    %13 = vector.load %arg2[%c0_10, %c1_11] : memref<32x3xf32, #tpu.memory_space<vmem>>, vector<32x1xf32>
    %14 = vector.broadcast %13 : vector<32x1xf32> to vector<32x32xf32>
    %15 = arith.mulf %12, %14 : vector<32x32xf32>
    %16 = arith.truncf %15 : vector<32x32xf32> to vector<32x32xbf16>
    %c1_12 = arith.constant 1 : index
    %c0_13 = arith.constant 0 : index
    %c0_14 = arith.constant 0 : index
    %17 = vector.load %arg3[%c1_12, %c0_13, %c0_14] : memref<3x32x16xbf16, #tpu.memory_space<vmem>>, vector<1x32x16xbf16>
    %18 = vector.shape_cast %17 : vector<1x32x16xbf16> to vector<32x16xbf16>
    %cst_15 = arith.constant dense<0.000000e+00> : vector<32x16xf32>
    %19 = tpu.matmul %16, %18, %cst_15 {dimension_numbers = #tpu.dot_dimension_numbers<[1], [0], [0], [1], [0, 0, 1, 1], [], []>} : vector<32x32xbf16>, vector<32x16xbf16>, vector<32x16xf32> -> vector<32x16xf32>
    %20 = arith.addf %10, %19 : vector<32x16xf32>
    %c2 = arith.constant 2 : index
    %c0_16 = arith.constant 0 : index
    %c0_17 = arith.constant 0 : index
    %21 = vector.load %arg1[%c2, %c0_16, %c0_17] : memref<3x32x32xf32, #tpu.memory_space<vmem>>, vector<1x32x32xf32>
    %22 = vector.shape_cast %21 : vector<1x32x32xf32> to vector<32x32xf32>
    %c0_18 = arith.constant 0 : index
    %c2_19 = arith.constant 2 : index
    %23 = vector.load %arg2[%c0_18, %c2_19] : memref<32x3xf32, #tpu.memory_space<vmem>>, vector<32x1xf32>
    %24 = vector.broadcast %23 : vector<32x1xf32> to vector<32x32xf32>
    %25 = arith.mulf %22, %24 : vector<32x32xf32>
    %26 = arith.truncf %25 : vector<32x32xf32> to vector<32x32xbf16>
    %c2_20 = arith.constant 2 : index
    %c0_21 = arith.constant 0 : index
    %c0_22 = arith.constant 0 : index
    %27 = vector.load %arg3[%c2_20, %c0_21, %c0_22] : memref<3x32x16xbf16, #tpu.memory_space<vmem>>, vector<1x32x16xbf16>
    %28 = vector.shape_cast %27 : vector<1x32x16xbf16> to vector<32x16xbf16>
    %cst_23 = arith.constant dense<0.000000e+00> : vector<32x16xf32>
    %29 = tpu.matmul %26, %28, %cst_23 {dimension_numbers = #tpu.dot_dimension_numbers<[1], [0], [0], [1], [0, 0, 1, 1], [], []>} : vector<32x32xbf16>, vector<32x16xbf16>, vector<32x16xf32> -> vector<32x16xf32>
    %30 = arith.addf %20, %29 : vector<32x16xf32>
    %c0_24 = arith.constant 0 : index
    %c0_25 = arith.constant 0 : index
    %31 = vector.load %arg4[%c0_24, %c0_25] : memref<1x16xf32, #tpu.memory_space<vmem>>, vector<1x16xf32>
    %32 = vector.broadcast %31 : vector<1x16xf32> to vector<32x16xf32>
    %33 = arith.addf %30, %32 : vector<32x16xf32>
    %cst_26 = arith.constant 0.000000e+00 : f32
    %34 = vector.broadcast %cst_26 : f32 to vector<32x16xf32>
    %35 = arith.subf %34, %33 : vector<32x16xf32>
    %36 = math.exp %35 : vector<32x16xf32>
    %cst_27 = arith.constant 1.000000e+00 : f32
    %37 = vector.broadcast %cst_27 : f32 to vector<32x16xf32>
    %38 = arith.addf %37, %36 : vector<32x16xf32>
    %39 = tpu.reciprocal %38 {approx = true} : vector<32x16xf32> -> vector<32x16xf32>
    %40 = arith.mulf %33, %39 : vector<32x16xf32>
    %c0_28 = arith.constant 0 : index
    %c0_29 = arith.constant 0 : index
    %41 = vector.load %arg7[%c0_28, %c0_29] : memref<32x16xf32, #tpu.memory_space<vmem>>, vector<32x16xf32>
    tpu.vector_store %arg7[%c0_28, %c0_29], %40 {strides = array<i32>} : memref<32x16xf32, #tpu.memory_space<vmem>>, vector<32x16xf32>,
    %42 = arith.truncf %40 : vector<32x16xf32> to vector<32x16xbf16>
    %c0_30 = arith.constant 0 : index
    %c0_31 = arith.constant 0 : index
    %43 = vector.load %arg5[%c0_30, %c0_31] : memref<16x16xbf16, #tpu.memory_space<vmem>>, vector<16x16xbf16>
    %cst_32 = arith.constant dense<0.000000e+00> : vector<32x16xf32>
    %44 = tpu.matmul %42, %43, %cst_32 {dimension_numbers = #tpu.dot_dimension_numbers<[1], [0], [0], [1], [0, 0, 1, 1], [], []>} : vector<32x16xbf16>, vector<16x16xbf16>, vector<32x16xf32> -> vector<32x16xf32>
    %c0_33 = arith.constant 0 : index
    %c0_34 = arith.constant 0 : index
    %45 = vector.load %arg6[%c0_33, %c0_34] : memref<1x16xf32, #tpu.memory_space<vmem>>, vector<1x16xf32>
    %46 = vector.broadcast %45 : vector<1x16xf32> to vector<32x16xf32>
    %47 = arith.addf %44, %46 : vector<32x16xf32>
    %c0_35 = arith.constant 0 : index
    %c0_36 = arith.constant 0 : index
    %48 = vector.load %arg8[%c0_35, %c0_36] : memref<32x16xf32, #tpu.memory_space<vmem>>, vector<32x16xf32>
    tpu.vector_store %arg8[%c0_35, %c0_36], %47 {strides = array<i32>} : memref<32x16xf32, #tpu.memory_space<vmem>>, vector<32x16xf32>,
    return
  }
  func.func @transform_0(%arg0: i32) -> (i32, i32, i32) {
    %c0_i32 = arith.constant 0 : i32
    %c0_i32_0 = arith.constant 0 : i32
    %c0_i32_1 = arith.constant 0 : i32
    return %c0_i32, %arg0, %c0_i32_0 : i32, i32, i32
  }
  func.func @transform_1(%arg0: i32) -> (i32, i32) {
    %c0_i32 = arith.constant 0 : i32
    %c0_i32_0 = arith.constant 0 : i32
    return %arg0, %c0_i32 : i32, i32
  }
  func.func @transform_2(%arg0: i32) -> (i32, i32, i32) {
    %c0_i32 = arith.constant 0 : i32
    %c0_i32_0 = arith.constant 0 : i32
    %c0_i32_1 = arith.constant 0 : i32
    %c0_i32_2 = arith.constant 0 : i32
    return %c0_i32, %c0_i32_0, %c0_i32_1 : i32, i32, i32
  }
  func.func @transform_3(%arg0: i32) -> (i32, i32) {
    %c0_i32 = arith.constant 0 : i32
    %c0_i32_0 = arith.constant 0 : i32
    %c0_i32_1 = arith.constant 0 : i32
    return %c0_i32, %c0_i32_0 : i32, i32
  }
  func.func @transform_4(%arg0: i32) -> (i32, i32) {
    %c0_i32 = arith.constant 0 : i32
    %c0_i32_0 = arith.constant 0 : i32
    %c0_i32_1 = arith.constant 0 : i32
    return %c0_i32, %c0_i32_0 : i32, i32
  }
  func.func @transform_5(%arg0: i32) -> (i32, i32) {
    %c0_i32 = arith.constant 0 : i32
    %c0_i32_0 = arith.constant 0 : i32
    %c0_i32_1 = arith.constant 0 : i32
    return %c0_i32, %c0_i32_0 : i32, i32
  }
  func.func @transform_6(%arg0: i32) -> (i32, i32) {
    %c0_i32 = arith.constant 0 : i32
    %c0_i32_0 = arith.constant 0 : i32
    return %arg0, %c0_i32 : i32, i32
  }
  func.func @transform_7(%arg0: i32) -> (i32, i32) {
    %c0_i32 = arith.constant 0 : i32
    %c0_i32_0 = arith.constant 0 : i32
    return %arg0, %c0_i32 : i32, i32
  }
}

module attributes {stable_mosaic.version = 11 : i64} {
  func.func @_mm_kernel(%arg0: i32, %arg1: memref<8x144xbf16, #tpu.memory_space<vmem>>, %arg2: memref<144x16xbf16, #tpu.memory_space<vmem>>, %arg3: memref<1x16xf32, #tpu.memory_space<vmem>>, %arg4: memref<8x16xf32, #tpu.memory_space<vmem>>) attributes {dimension_semantics = [#tpu.dimension_semantics<parallel>], iteration_bounds = array<i64: 1>, scalar_prefetch = 0 : i64, scratch_operands = 0 : i64, tpu.core_type = #tpu.core_type<tc>, window_params = [{transform_indices = @transform_0, window_bounds = array<i64: 8, 144>}, {pipeline_mode = #tpu.pipeline_mode<synchronous>, transform_indices = @transform_1, window_bounds = array<i64: 144, 16>}, {pipeline_mode = #tpu.pipeline_mode<synchronous>, transform_indices = @transform_2, window_bounds = array<i64: 1, 16>}, {transform_indices = @transform_3, window_bounds = array<i64: 8, 16>}]} {
    %c0 = arith.constant 0 : index
    %c0_0 = arith.constant 0 : index
    %0 = vector.load %arg1[%c0, %c0_0] : memref<8x144xbf16, #tpu.memory_space<vmem>>, vector<8x144xbf16>
    %c0_1 = arith.constant 0 : index
    %c0_2 = arith.constant 0 : index
    %1 = vector.load %arg2[%c0_1, %c0_2] : memref<144x16xbf16, #tpu.memory_space<vmem>>, vector<144x16xbf16>
    %cst = arith.constant dense<0.000000e+00> : vector<8x16xf32>
    %2 = tpu.matmul %0, %1, %cst {dimension_numbers = #tpu.dot_dimension_numbers<[1], [0], [0], [1], [0, 0, 1, 1], [], []>} : vector<8x144xbf16>, vector<144x16xbf16>, vector<8x16xf32> -> vector<8x16xf32>
    %c0_3 = arith.constant 0 : index
    %c0_4 = arith.constant 0 : index
    %3 = vector.load %arg3[%c0_3, %c0_4] : memref<1x16xf32, #tpu.memory_space<vmem>>, vector<1x16xf32>
    %4 = vector.broadcast %3 : vector<1x16xf32> to vector<8x16xf32>
    %5 = arith.addf %2, %4 : vector<8x16xf32>
    %cst_5 = arith.constant 0.000000e+00 : f32
    %6 = vector.broadcast %cst_5 : f32 to vector<8x16xf32>
    %7 = arith.subf %6, %5 : vector<8x16xf32>
    %8 = math.exp %7 : vector<8x16xf32>
    %cst_6 = arith.constant 1.000000e+00 : f32
    %9 = vector.broadcast %cst_6 : f32 to vector<8x16xf32>
    %10 = arith.addf %9, %8 : vector<8x16xf32>
    %11 = tpu.reciprocal %10 {approx = true} : vector<8x16xf32> -> vector<8x16xf32>
    %12 = arith.mulf %5, %11 : vector<8x16xf32>
    %c0_7 = arith.constant 0 : index
    %c0_8 = arith.constant 0 : index
    %13 = vector.load %arg4[%c0_7, %c0_8] : memref<8x16xf32, #tpu.memory_space<vmem>>, vector<8x16xf32>
    tpu.vector_store %arg4[%c0_7, %c0_8], %12 {strides = array<i32>} : memref<8x16xf32, #tpu.memory_space<vmem>>, vector<8x16xf32>,
    return
  }
  func.func @transform_0(%arg0: i32) -> (i32, i32) {
    %c0_i32 = arith.constant 0 : i32
    %c0_i32_0 = arith.constant 0 : i32
    return %arg0, %c0_i32 : i32, i32
  }
  func.func @transform_1(%arg0: i32) -> (i32, i32) {
    %c0_i32 = arith.constant 0 : i32
    %c0_i32_0 = arith.constant 0 : i32
    %c0_i32_1 = arith.constant 0 : i32
    return %c0_i32, %c0_i32_0 : i32, i32
  }
  func.func @transform_2(%arg0: i32) -> (i32, i32) {
    %c0_i32 = arith.constant 0 : i32
    %c0_i32_0 = arith.constant 0 : i32
    %c0_i32_1 = arith.constant 0 : i32
    return %c0_i32, %c0_i32_0 : i32, i32
  }
  func.func @transform_3(%arg0: i32) -> (i32, i32) {
    %c0_i32 = arith.constant 0 : i32
    %c0_i32_0 = arith.constant 0 : i32
    return %arg0, %c0_i32 : i32, i32
  }
}

module attributes {stable_mosaic.version = 11 : i64} {
  func.func @_mm_proj_kernel(%arg0: i32, %arg1: memref<8x144xbf16, #tpu.memory_space<vmem>>, %arg2: memref<144x16xbf16, #tpu.memory_space<vmem>>, %arg3: memref<1x16xf32, #tpu.memory_space<vmem>>, %arg4: memref<16x16xbf16, #tpu.memory_space<vmem>>, %arg5: memref<1x16xf32, #tpu.memory_space<vmem>>, %arg6: memref<8x16xf32, #tpu.memory_space<vmem>>, %arg7: memref<8x16xf32, #tpu.memory_space<vmem>>) attributes {dimension_semantics = [#tpu.dimension_semantics<parallel>], iteration_bounds = array<i64: 1>, scalar_prefetch = 0 : i64, scratch_operands = 0 : i64, tpu.core_type = #tpu.core_type<tc>, window_params = [{transform_indices = @transform_0, window_bounds = array<i64: 8, 144>}, {pipeline_mode = #tpu.pipeline_mode<synchronous>, transform_indices = @transform_1, window_bounds = array<i64: 144, 16>}, {pipeline_mode = #tpu.pipeline_mode<synchronous>, transform_indices = @transform_2, window_bounds = array<i64: 1, 16>}, {pipeline_mode = #tpu.pipeline_mode<synchronous>, transform_indices = @transform_3, window_bounds = array<i64: 16, 16>}, {pipeline_mode = #tpu.pipeline_mode<synchronous>, transform_indices = @transform_4, window_bounds = array<i64: 1, 16>}, {transform_indices = @transform_5, window_bounds = array<i64: 8, 16>}, {transform_indices = @transform_6, window_bounds = array<i64: 8, 16>}]} {
    %c0 = arith.constant 0 : index
    %c0_0 = arith.constant 0 : index
    %0 = vector.load %arg1[%c0, %c0_0] : memref<8x144xbf16, #tpu.memory_space<vmem>>, vector<8x144xbf16>
    %c0_1 = arith.constant 0 : index
    %c0_2 = arith.constant 0 : index
    %1 = vector.load %arg2[%c0_1, %c0_2] : memref<144x16xbf16, #tpu.memory_space<vmem>>, vector<144x16xbf16>
    %cst = arith.constant dense<0.000000e+00> : vector<8x16xf32>
    %2 = tpu.matmul %0, %1, %cst {dimension_numbers = #tpu.dot_dimension_numbers<[1], [0], [0], [1], [0, 0, 1, 1], [], []>} : vector<8x144xbf16>, vector<144x16xbf16>, vector<8x16xf32> -> vector<8x16xf32>
    %c0_3 = arith.constant 0 : index
    %c0_4 = arith.constant 0 : index
    %3 = vector.load %arg3[%c0_3, %c0_4] : memref<1x16xf32, #tpu.memory_space<vmem>>, vector<1x16xf32>
    %4 = vector.broadcast %3 : vector<1x16xf32> to vector<8x16xf32>
    %5 = arith.addf %2, %4 : vector<8x16xf32>
    %cst_5 = arith.constant 0.000000e+00 : f32
    %6 = vector.broadcast %cst_5 : f32 to vector<8x16xf32>
    %7 = arith.subf %6, %5 : vector<8x16xf32>
    %8 = math.exp %7 : vector<8x16xf32>
    %cst_6 = arith.constant 1.000000e+00 : f32
    %9 = vector.broadcast %cst_6 : f32 to vector<8x16xf32>
    %10 = arith.addf %9, %8 : vector<8x16xf32>
    %11 = tpu.reciprocal %10 {approx = true} : vector<8x16xf32> -> vector<8x16xf32>
    %12 = arith.mulf %5, %11 : vector<8x16xf32>
    %c0_7 = arith.constant 0 : index
    %c0_8 = arith.constant 0 : index
    %13 = vector.load %arg6[%c0_7, %c0_8] : memref<8x16xf32, #tpu.memory_space<vmem>>, vector<8x16xf32>
    tpu.vector_store %arg6[%c0_7, %c0_8], %12 {strides = array<i32>} : memref<8x16xf32, #tpu.memory_space<vmem>>, vector<8x16xf32>,
    %14 = arith.truncf %12 : vector<8x16xf32> to vector<8x16xbf16>
    %c0_9 = arith.constant 0 : index
    %c0_10 = arith.constant 0 : index
    %15 = vector.load %arg4[%c0_9, %c0_10] : memref<16x16xbf16, #tpu.memory_space<vmem>>, vector<16x16xbf16>
    %cst_11 = arith.constant dense<0.000000e+00> : vector<8x16xf32>
    %16 = tpu.matmul %14, %15, %cst_11 {dimension_numbers = #tpu.dot_dimension_numbers<[1], [0], [0], [1], [0, 0, 1, 1], [], []>} : vector<8x16xbf16>, vector<16x16xbf16>, vector<8x16xf32> -> vector<8x16xf32>
    %c0_12 = arith.constant 0 : index
    %c0_13 = arith.constant 0 : index
    %17 = vector.load %arg5[%c0_12, %c0_13] : memref<1x16xf32, #tpu.memory_space<vmem>>, vector<1x16xf32>
    %18 = vector.broadcast %17 : vector<1x16xf32> to vector<8x16xf32>
    %19 = arith.addf %16, %18 : vector<8x16xf32>
    %c0_14 = arith.constant 0 : index
    %c0_15 = arith.constant 0 : index
    %20 = vector.load %arg7[%c0_14, %c0_15] : memref<8x16xf32, #tpu.memory_space<vmem>>, vector<8x16xf32>
    tpu.vector_store %arg7[%c0_14, %c0_15], %19 {strides = array<i32>} : memref<8x16xf32, #tpu.memory_space<vmem>>, vector<8x16xf32>,
    return
  }
  func.func @transform_0(%arg0: i32) -> (i32, i32) {
    %c0_i32 = arith.constant 0 : i32
    %c0_i32_0 = arith.constant 0 : i32
    return %arg0, %c0_i32 : i32, i32
  }
  func.func @transform_1(%arg0: i32) -> (i32, i32) {
    %c0_i32 = arith.constant 0 : i32
    %c0_i32_0 = arith.constant 0 : i32
    %c0_i32_1 = arith.constant 0 : i32
    return %c0_i32, %c0_i32_0 : i32, i32
  }
  func.func @transform_2(%arg0: i32) -> (i32, i32) {
    %c0_i32 = arith.constant 0 : i32
    %c0_i32_0 = arith.constant 0 : i32
    %c0_i32_1 = arith.constant 0 : i32
    return %c0_i32, %c0_i32_0 : i32, i32
  }
  func.func @transform_3(%arg0: i32) -> (i32, i32) {
    %c0_i32 = arith.constant 0 : i32
    %c0_i32_0 = arith.constant 0 : i32
    %c0_i32_1 = arith.constant 0 : i32
    return %c0_i32, %c0_i32_0 : i32, i32
  }
  func.func @transform_4(%arg0: i32) -> (i32, i32) {
    %c0_i32 = arith.constant 0 : i32
    %c0_i32_0 = arith.constant 0 : i32
    %c0_i32_1 = arith.constant 0 : i32
    return %c0_i32, %c0_i32_0 : i32, i32
  }
  func.func @transform_5(%arg0: i32) -> (i32, i32) {
    %c0_i32 = arith.constant 0 : i32
    %c0_i32_0 = arith.constant 0 : i32
    return %arg0, %c0_i32 : i32, i32
  }
  func.func @transform_6(%arg0: i32) -> (i32, i32) {
    %c0_i32 = arith.constant 0 : i32
    %c0_i32_0 = arith.constant 0 : i32
    return %arg0, %c0_i32 : i32, i32
  }
}

module attributes {stable_mosaic.version = 11 : i64} {
  func.func @_mm_kernel(%arg0: i32, %arg1: memref<2x144xbf16, #tpu.memory_space<vmem>>, %arg2: memref<144x32xbf16, #tpu.memory_space<vmem>>, %arg3: memref<1x32xf32, #tpu.memory_space<vmem>>, %arg4: memref<2x32xf32, #tpu.memory_space<vmem>>) attributes {dimension_semantics = [#tpu.dimension_semantics<parallel>], iteration_bounds = array<i64: 1>, scalar_prefetch = 0 : i64, scratch_operands = 0 : i64, tpu.core_type = #tpu.core_type<tc>, window_params = [{transform_indices = @transform_0, window_bounds = array<i64: 2, 144>}, {pipeline_mode = #tpu.pipeline_mode<synchronous>, transform_indices = @transform_1, window_bounds = array<i64: 144, 32>}, {pipeline_mode = #tpu.pipeline_mode<synchronous>, transform_indices = @transform_2, window_bounds = array<i64: 1, 32>}, {transform_indices = @transform_3, window_bounds = array<i64: 2, 32>}]} {
    %c0 = arith.constant 0 : index
    %c0_0 = arith.constant 0 : index
    %0 = vector.load %arg1[%c0, %c0_0] : memref<2x144xbf16, #tpu.memory_space<vmem>>, vector<2x144xbf16>
    %c0_1 = arith.constant 0 : index
    %c0_2 = arith.constant 0 : index
    %1 = vector.load %arg2[%c0_1, %c0_2] : memref<144x32xbf16, #tpu.memory_space<vmem>>, vector<144x32xbf16>
    %cst = arith.constant dense<0.000000e+00> : vector<2x32xf32>
    %2 = tpu.matmul %0, %1, %cst {dimension_numbers = #tpu.dot_dimension_numbers<[1], [0], [0], [1], [0, 0, 1, 1], [], []>} : vector<2x144xbf16>, vector<144x32xbf16>, vector<2x32xf32> -> vector<2x32xf32>
    %c0_3 = arith.constant 0 : index
    %c0_4 = arith.constant 0 : index
    %3 = vector.load %arg3[%c0_3, %c0_4] : memref<1x32xf32, #tpu.memory_space<vmem>>, vector<1x32xf32>
    %4 = vector.broadcast %3 : vector<1x32xf32> to vector<2x32xf32>
    %5 = arith.addf %2, %4 : vector<2x32xf32>
    %cst_5 = arith.constant 0.000000e+00 : f32
    %6 = vector.broadcast %cst_5 : f32 to vector<2x32xf32>
    %7 = arith.subf %6, %5 : vector<2x32xf32>
    %8 = math.exp %7 : vector<2x32xf32>
    %cst_6 = arith.constant 1.000000e+00 : f32
    %9 = vector.broadcast %cst_6 : f32 to vector<2x32xf32>
    %10 = arith.addf %9, %8 : vector<2x32xf32>
    %11 = tpu.reciprocal %10 {approx = true} : vector<2x32xf32> -> vector<2x32xf32>
    %12 = arith.mulf %5, %11 : vector<2x32xf32>
    %c0_7 = arith.constant 0 : index
    %c0_8 = arith.constant 0 : index
    %13 = vector.load %arg4[%c0_7, %c0_8] : memref<2x32xf32, #tpu.memory_space<vmem>>, vector<2x32xf32>
    tpu.vector_store %arg4[%c0_7, %c0_8], %12 {strides = array<i32>} : memref<2x32xf32, #tpu.memory_space<vmem>>, vector<2x32xf32>,
    return
  }
  func.func @transform_0(%arg0: i32) -> (i32, i32) {
    %c0_i32 = arith.constant 0 : i32
    %c0_i32_0 = arith.constant 0 : i32
    return %arg0, %c0_i32 : i32, i32
  }
  func.func @transform_1(%arg0: i32) -> (i32, i32) {
    %c0_i32 = arith.constant 0 : i32
    %c0_i32_0 = arith.constant 0 : i32
    %c0_i32_1 = arith.constant 0 : i32
    return %c0_i32, %c0_i32_0 : i32, i32
  }
  func.func @transform_2(%arg0: i32) -> (i32, i32) {
    %c0_i32 = arith.constant 0 : i32
    %c0_i32_0 = arith.constant 0 : i32
    %c0_i32_1 = arith.constant 0 : i32
    return %c0_i32, %c0_i32_0 : i32, i32
  }
  func.func @transform_3(%arg0: i32) -> (i32, i32) {
    %c0_i32 = arith.constant 0 : i32
    %c0_i32_0 = arith.constant 0 : i32
    return %arg0, %c0_i32 : i32, i32
  }
}

module attributes {stable_mosaic.version = 11 : i64} {
  func.func @_mm_proj_kernel(%arg0: i32, %arg1: memref<2x288xbf16, #tpu.memory_space<vmem>>, %arg2: memref<288x32xbf16, #tpu.memory_space<vmem>>, %arg3: memref<1x32xf32, #tpu.memory_space<vmem>>, %arg4: memref<32x32xbf16, #tpu.memory_space<vmem>>, %arg5: memref<1x32xf32, #tpu.memory_space<vmem>>, %arg6: memref<2x32xf32, #tpu.memory_space<vmem>>, %arg7: memref<2x32xf32, #tpu.memory_space<vmem>>) attributes {dimension_semantics = [#tpu.dimension_semantics<parallel>], iteration_bounds = array<i64: 1>, scalar_prefetch = 0 : i64, scratch_operands = 0 : i64, tpu.core_type = #tpu.core_type<tc>, window_params = [{transform_indices = @transform_0, window_bounds = array<i64: 2, 288>}, {pipeline_mode = #tpu.pipeline_mode<synchronous>, transform_indices = @transform_1, window_bounds = array<i64: 288, 32>}, {pipeline_mode = #tpu.pipeline_mode<synchronous>, transform_indices = @transform_2, window_bounds = array<i64: 1, 32>}, {pipeline_mode = #tpu.pipeline_mode<synchronous>, transform_indices = @transform_3, window_bounds = array<i64: 32, 32>}, {pipeline_mode = #tpu.pipeline_mode<synchronous>, transform_indices = @transform_4, window_bounds = array<i64: 1, 32>}, {transform_indices = @transform_5, window_bounds = array<i64: 2, 32>}, {transform_indices = @transform_6, window_bounds = array<i64: 2, 32>}]} {
    %c0 = arith.constant 0 : index
    %c0_0 = arith.constant 0 : index
    %0 = vector.load %arg1[%c0, %c0_0] : memref<2x288xbf16, #tpu.memory_space<vmem>>, vector<2x288xbf16>
    %c0_1 = arith.constant 0 : index
    %c0_2 = arith.constant 0 : index
    %1 = vector.load %arg2[%c0_1, %c0_2] : memref<288x32xbf16, #tpu.memory_space<vmem>>, vector<288x32xbf16>
    %cst = arith.constant dense<0.000000e+00> : vector<2x32xf32>
    %2 = tpu.matmul %0, %1, %cst {dimension_numbers = #tpu.dot_dimension_numbers<[1], [0], [0], [1], [0, 0, 1, 1], [], []>} : vector<2x288xbf16>, vector<288x32xbf16>, vector<2x32xf32> -> vector<2x32xf32>
    %c0_3 = arith.constant 0 : index
    %c0_4 = arith.constant 0 : index
    %3 = vector.load %arg3[%c0_3, %c0_4] : memref<1x32xf32, #tpu.memory_space<vmem>>, vector<1x32xf32>
    %4 = vector.broadcast %3 : vector<1x32xf32> to vector<2x32xf32>
    %5 = arith.addf %2, %4 : vector<2x32xf32>
    %cst_5 = arith.constant 0.000000e+00 : f32
    %6 = vector.broadcast %cst_5 : f32 to vector<2x32xf32>
    %7 = arith.subf %6, %5 : vector<2x32xf32>
    %8 = math.exp %7 : vector<2x32xf32>
    %cst_6 = arith.constant 1.000000e+00 : f32
    %9 = vector.broadcast %cst_6 : f32 to vector<2x32xf32>
    %10 = arith.addf %9, %8 : vector<2x32xf32>
    %11 = tpu.reciprocal %10 {approx = true} : vector<2x32xf32> -> vector<2x32xf32>
    %12 = arith.mulf %5, %11 : vector<2x32xf32>
    %c0_7 = arith.constant 0 : index
    %c0_8 = arith.constant 0 : index
    %13 = vector.load %arg6[%c0_7, %c0_8] : memref<2x32xf32, #tpu.memory_space<vmem>>, vector<2x32xf32>
    tpu.vector_store %arg6[%c0_7, %c0_8], %12 {strides = array<i32>} : memref<2x32xf32, #tpu.memory_space<vmem>>, vector<2x32xf32>,
    %14 = arith.truncf %12 : vector<2x32xf32> to vector<2x32xbf16>
    %c0_9 = arith.constant 0 : index
    %c0_10 = arith.constant 0 : index
    %15 = vector.load %arg4[%c0_9, %c0_10] : memref<32x32xbf16, #tpu.memory_space<vmem>>, vector<32x32xbf16>
    %cst_11 = arith.constant dense<0.000000e+00> : vector<2x32xf32>
    %16 = tpu.matmul %14, %15, %cst_11 {dimension_numbers = #tpu.dot_dimension_numbers<[1], [0], [0], [1], [0, 0, 1, 1], [], []>} : vector<2x32xbf16>, vector<32x32xbf16>, vector<2x32xf32> -> vector<2x32xf32>
    %c0_12 = arith.constant 0 : index
    %c0_13 = arith.constant 0 : index
    %17 = vector.load %arg5[%c0_12, %c0_13] : memref<1x32xf32, #tpu.memory_space<vmem>>, vector<1x32xf32>
    %18 = vector.broadcast %17 : vector<1x32xf32> to vector<2x32xf32>
    %19 = arith.addf %16, %18 : vector<2x32xf32>
    %c0_14 = arith.constant 0 : index
    %c0_15 = arith.constant 0 : index
    %20 = vector.load %arg7[%c0_14, %c0_15] : memref<2x32xf32, #tpu.memory_space<vmem>>, vector<2x32xf32>
    tpu.vector_store %arg7[%c0_14, %c0_15], %19 {strides = array<i32>} : memref<2x32xf32, #tpu.memory_space<vmem>>, vector<2x32xf32>,
    return
  }
  func.func @transform_0(%arg0: i32) -> (i32, i32) {
    %c0_i32 = arith.constant 0 : i32
    %c0_i32_0 = arith.constant 0 : i32
    return %arg0, %c0_i32 : i32, i32
  }
  func.func @transform_1(%arg0: i32) -> (i32, i32) {
    %c0_i32 = arith.constant 0 : i32
    %c0_i32_0 = arith.constant 0 : i32
    %c0_i32_1 = arith.constant 0 : i32
    return %c0_i32, %c0_i32_0 : i32, i32
  }
  func.func @transform_2(%arg0: i32) -> (i32, i32) {
    %c0_i32 = arith.constant 0 : i32
    %c0_i32_0 = arith.constant 0 : i32
    %c0_i32_1 = arith.constant 0 : i32
    return %c0_i32, %c0_i32_0 : i32, i32
  }
  func.func @transform_3(%arg0: i32) -> (i32, i32) {
    %c0_i32 = arith.constant 0 : i32
    %c0_i32_0 = arith.constant 0 : i32
    %c0_i32_1 = arith.constant 0 : i32
    return %c0_i32, %c0_i32_0 : i32, i32
  }
  func.func @transform_4(%arg0: i32) -> (i32, i32) {
    %c0_i32 = arith.constant 0 : i32
    %c0_i32_0 = arith.constant 0 : i32
    %c0_i32_1 = arith.constant 0 : i32
    return %c0_i32, %c0_i32_0 : i32, i32
  }
  func.func @transform_5(%arg0: i32) -> (i32, i32) {
    %c0_i32 = arith.constant 0 : i32
    %c0_i32_0 = arith.constant 0 : i32
    return %arg0, %c0_i32 : i32, i32
  }
  func.func @transform_6(%arg0: i32) -> (i32, i32) {
    %c0_i32 = arith.constant 0 : i32
    %c0_i32_0 = arith.constant 0 : i32
    return %arg0, %c0_i32 : i32, i32
  }
}

module attributes {stable_mosaic.version = 11 : i64} {
  func.func @_mm_kernel(%arg0: i32, %arg1: memref<2x288xbf16, #tpu.memory_space<vmem>>, %arg2: memref<288x32xbf16, #tpu.memory_space<vmem>>, %arg3: memref<1x32xf32, #tpu.memory_space<vmem>>, %arg4: memref<2x32xf32, #tpu.memory_space<vmem>>) attributes {dimension_semantics = [#tpu.dimension_semantics<parallel>], iteration_bounds = array<i64: 1>, scalar_prefetch = 0 : i64, scratch_operands = 0 : i64, tpu.core_type = #tpu.core_type<tc>, window_params = [{transform_indices = @transform_0, window_bounds = array<i64: 2, 288>}, {pipeline_mode = #tpu.pipeline_mode<synchronous>, transform_indices = @transform_1, window_bounds = array<i64: 288, 32>}, {pipeline_mode = #tpu.pipeline_mode<synchronous>, transform_indices = @transform_2, window_bounds = array<i64: 1, 32>}, {transform_indices = @transform_3, window_bounds = array<i64: 2, 32>}]} {
    %c0 = arith.constant 0 : index
    %c0_0 = arith.constant 0 : index
    %0 = vector.load %arg1[%c0, %c0_0] : memref<2x288xbf16, #tpu.memory_space<vmem>>, vector<2x288xbf16>
    %c0_1 = arith.constant 0 : index
    %c0_2 = arith.constant 0 : index
    %1 = vector.load %arg2[%c0_1, %c0_2] : memref<288x32xbf16, #tpu.memory_space<vmem>>, vector<288x32xbf16>
    %cst = arith.constant dense<0.000000e+00> : vector<2x32xf32>
    %2 = tpu.matmul %0, %1, %cst {dimension_numbers = #tpu.dot_dimension_numbers<[1], [0], [0], [1], [0, 0, 1, 1], [], []>} : vector<2x288xbf16>, vector<288x32xbf16>, vector<2x32xf32> -> vector<2x32xf32>
    %c0_3 = arith.constant 0 : index
    %c0_4 = arith.constant 0 : index
    %3 = vector.load %arg3[%c0_3, %c0_4] : memref<1x32xf32, #tpu.memory_space<vmem>>, vector<1x32xf32>
    %4 = vector.broadcast %3 : vector<1x32xf32> to vector<2x32xf32>
    %5 = arith.addf %2, %4 : vector<2x32xf32>
    %cst_5 = arith.constant 0.000000e+00 : f32
    %6 = vector.broadcast %cst_5 : f32 to vector<2x32xf32>
    %7 = arith.subf %6, %5 : vector<2x32xf32>
    %8 = math.exp %7 : vector<2x32xf32>
    %cst_6 = arith.constant 1.000000e+00 : f32
    %9 = vector.broadcast %cst_6 : f32 to vector<2x32xf32>
    %10 = arith.addf %9, %8 : vector<2x32xf32>
    %11 = tpu.reciprocal %10 {approx = true} : vector<2x32xf32> -> vector<2x32xf32>
    %12 = arith.mulf %5, %11 : vector<2x32xf32>
    %c0_7 = arith.constant 0 : index
    %c0_8 = arith.constant 0 : index
    %13 = vector.load %arg4[%c0_7, %c0_8] : memref<2x32xf32, #tpu.memory_space<vmem>>, vector<2x32xf32>
    tpu.vector_store %arg4[%c0_7, %c0_8], %12 {strides = array<i32>} : memref<2x32xf32, #tpu.memory_space<vmem>>, vector<2x32xf32>,
    return
  }
  func.func @transform_0(%arg0: i32) -> (i32, i32) {
    %c0_i32 = arith.constant 0 : i32
    %c0_i32_0 = arith.constant 0 : i32
    return %arg0, %c0_i32 : i32, i32
  }
  func.func @transform_1(%arg0: i32) -> (i32, i32) {
    %c0_i32 = arith.constant 0 : i32
    %c0_i32_0 = arith.constant 0 : i32
    %c0_i32_1 = arith.constant 0 : i32
    return %c0_i32, %c0_i32_0 : i32, i32
  }
  func.func @transform_2(%arg0: i32) -> (i32, i32) {
    %c0_i32 = arith.constant 0 : i32
    %c0_i32_0 = arith.constant 0 : i32
    %c0_i32_1 = arith.constant 0 : i32
    return %c0_i32, %c0_i32_0 : i32, i32
  }
  func.func @transform_3(%arg0: i32) -> (i32, i32) {
    %c0_i32 = arith.constant 0 : i32
    %c0_i32_0 = arith.constant 0 : i32
    return %arg0, %c0_i32 : i32, i32
  }
}

module attributes {stable_mosaic.version = 11 : i64} {
  func.func @_mm_proj_kernel(%arg0: i32, %arg1: memref<2x288xbf16, #tpu.memory_space<vmem>>, %arg2: memref<288x32xbf16, #tpu.memory_space<vmem>>, %arg3: memref<1x32xf32, #tpu.memory_space<vmem>>, %arg4: memref<32x32xbf16, #tpu.memory_space<vmem>>, %arg5: memref<1x32xf32, #tpu.memory_space<vmem>>, %arg6: memref<2x32xf32, #tpu.memory_space<vmem>>, %arg7: memref<2x32xf32, #tpu.memory_space<vmem>>) attributes {dimension_semantics = [#tpu.dimension_semantics<parallel>], iteration_bounds = array<i64: 1>, scalar_prefetch = 0 : i64, scratch_operands = 0 : i64, tpu.core_type = #tpu.core_type<tc>, window_params = [{transform_indices = @transform_0, window_bounds = array<i64: 2, 288>}, {pipeline_mode = #tpu.pipeline_mode<synchronous>, transform_indices = @transform_1, window_bounds = array<i64: 288, 32>}, {pipeline_mode = #tpu.pipeline_mode<synchronous>, transform_indices = @transform_2, window_bounds = array<i64: 1, 32>}, {pipeline_mode = #tpu.pipeline_mode<synchronous>, transform_indices = @transform_3, window_bounds = array<i64: 32, 32>}, {pipeline_mode = #tpu.pipeline_mode<synchronous>, transform_indices = @transform_4, window_bounds = array<i64: 1, 32>}, {transform_indices = @transform_5, window_bounds = array<i64: 2, 32>}, {transform_indices = @transform_6, window_bounds = array<i64: 2, 32>}]} {
    %c0 = arith.constant 0 : index
    %c0_0 = arith.constant 0 : index
    %0 = vector.load %arg1[%c0, %c0_0] : memref<2x288xbf16, #tpu.memory_space<vmem>>, vector<2x288xbf16>
    %c0_1 = arith.constant 0 : index
    %c0_2 = arith.constant 0 : index
    %1 = vector.load %arg2[%c0_1, %c0_2] : memref<288x32xbf16, #tpu.memory_space<vmem>>, vector<288x32xbf16>
    %cst = arith.constant dense<0.000000e+00> : vector<2x32xf32>
    %2 = tpu.matmul %0, %1, %cst {dimension_numbers = #tpu.dot_dimension_numbers<[1], [0], [0], [1], [0, 0, 1, 1], [], []>} : vector<2x288xbf16>, vector<288x32xbf16>, vector<2x32xf32> -> vector<2x32xf32>
    %c0_3 = arith.constant 0 : index
    %c0_4 = arith.constant 0 : index
    %3 = vector.load %arg3[%c0_3, %c0_4] : memref<1x32xf32, #tpu.memory_space<vmem>>, vector<1x32xf32>
    %4 = vector.broadcast %3 : vector<1x32xf32> to vector<2x32xf32>
    %5 = arith.addf %2, %4 : vector<2x32xf32>
    %cst_5 = arith.constant 0.000000e+00 : f32
    %6 = vector.broadcast %cst_5 : f32 to vector<2x32xf32>
    %7 = arith.subf %6, %5 : vector<2x32xf32>
    %8 = math.exp %7 : vector<2x32xf32>
    %cst_6 = arith.constant 1.000000e+00 : f32
    %9 = vector.broadcast %cst_6 : f32 to vector<2x32xf32>
    %10 = arith.addf %9, %8 : vector<2x32xf32>
    %11 = tpu.reciprocal %10 {approx = true} : vector<2x32xf32> -> vector<2x32xf32>
    %12 = arith.mulf %5, %11 : vector<2x32xf32>
    %c0_7 = arith.constant 0 : index
    %c0_8 = arith.constant 0 : index
    %13 = vector.load %arg6[%c0_7, %c0_8] : memref<2x32xf32, #tpu.memory_space<vmem>>, vector<2x32xf32>
    tpu.vector_store %arg6[%c0_7, %c0_8], %12 {strides = array<i32>} : memref<2x32xf32, #tpu.memory_space<vmem>>, vector<2x32xf32>,
    %14 = arith.truncf %12 : vector<2x32xf32> to vector<2x32xbf16>
    %c0_9 = arith.constant 0 : index
    %c0_10 = arith.constant 0 : index
    %15 = vector.load %arg4[%c0_9, %c0_10] : memref<32x32xbf16, #tpu.memory_space<vmem>>, vector<32x32xbf16>
    %cst_11 = arith.constant dense<0.000000e+00> : vector<2x32xf32>
    %16 = tpu.matmul %14, %15, %cst_11 {dimension_numbers = #tpu.dot_dimension_numbers<[1], [0], [0], [1], [0, 0, 1, 1], [], []>} : vector<2x32xbf16>, vector<32x32xbf16>, vector<2x32xf32> -> vector<2x32xf32>
    %c0_12 = arith.constant 0 : index
    %c0_13 = arith.constant 0 : index
    %17 = vector.load %arg5[%c0_12, %c0_13] : memref<1x32xf32, #tpu.memory_space<vmem>>, vector<1x32xf32>
    %18 = vector.broadcast %17 : vector<1x32xf32> to vector<2x32xf32>
    %19 = arith.addf %16, %18 : vector<2x32xf32>
    %c0_14 = arith.constant 0 : index
    %c0_15 = arith.constant 0 : index
    %20 = vector.load %arg7[%c0_14, %c0_15] : memref<2x32xf32, #tpu.memory_space<vmem>>, vector<2x32xf32>
    tpu.vector_store %arg7[%c0_14, %c0_15], %19 {strides = array<i32>} : memref<2x32xf32, #tpu.memory_space<vmem>>, vector<2x32xf32>,
    return
  }
  func.func @transform_0(%arg0: i32) -> (i32, i32) {
    %c0_i32 = arith.constant 0 : i32
    %c0_i32_0 = arith.constant 0 : i32
    return %arg0, %c0_i32 : i32, i32
  }
  func.func @transform_1(%arg0: i32) -> (i32, i32) {
    %c0_i32 = arith.constant 0 : i32
    %c0_i32_0 = arith.constant 0 : i32
    %c0_i32_1 = arith.constant 0 : i32
    return %c0_i32, %c0_i32_0 : i32, i32
  }
  func.func @transform_2(%arg0: i32) -> (i32, i32) {
    %c0_i32 = arith.constant 0 : i32
    %c0_i32_0 = arith.constant 0 : i32
    %c0_i32_1 = arith.constant 0 : i32
    return %c0_i32, %c0_i32_0 : i32, i32
  }
  func.func @transform_3(%arg0: i32) -> (i32, i32) {
    %c0_i32 = arith.constant 0 : i32
    %c0_i32_0 = arith.constant 0 : i32
    %c0_i32_1 = arith.constant 0 : i32
    return %c0_i32, %c0_i32_0 : i32, i32
  }
  func.func @transform_4(%arg0: i32) -> (i32, i32) {
    %c0_i32 = arith.constant 0 : i32
    %c0_i32_0 = arith.constant 0 : i32
    %c0_i32_1 = arith.constant 0 : i32
    return %c0_i32, %c0_i32_0 : i32, i32
  }
  func.func @transform_5(%arg0: i32) -> (i32, i32) {
    %c0_i32 = arith.constant 0 : i32
    %c0_i32_0 = arith.constant 0 : i32
    return %arg0, %c0_i32 : i32, i32
  }
  func.func @transform_6(%arg0: i32) -> (i32, i32) {
    %c0_i32 = arith.constant 0 : i32
    %c0_i32_0 = arith.constant 0 : i32
    return %arg0, %c0_i32 : i32, i32
  }
}

</mosaic_0001>

<llo_original>
// kernel: pose_guider_forward.18
$region0: #{pose_guider_forward.18}
  #allocation0 [shape = 'u32[]', space=smem, size = 0x4, offset = 0x4, fixed_abs, tag = 'smem constant byte address 0x4 - core index']
  #allocation1 [shape = 'u32[144,128]{1,0:T(1,128)}', space=vmem, size = 0x12000, scoped, tag = 'internal scratch']
  %s0 = inlined_call_operand.vmem [shape: bf16[3,2048,27], index: 0, kind: input, shape index: {}]
  %s1 = inlined_call_operand.vmem [shape: bf16[3,27,8], index: 1, kind: input, shape index: {}]
  %s2 = inlined_call_operand.vmem [shape: f32[3,1,8], index: 2, kind: input, shape index: {}]
  %s3 = inlined_call_operand.vmem [shape: f32[3,2048,8], index: 3, kind: output, shape index: {}]
  %s4 = sld [smem:[#allocation0]]
  $region45: #{pose_guider_forward.18} parent=0
    _
  %s6 = ssub.s32 1, %s4
  %s7 = scalar_select 0, %s6, %s4
  loop: start=0, step=1, limit=14
  $region2: #{pose_guider_forward.18} parent=0 // loop_pre_header
    _
  $region3: #{pose_guider_forward.18} parent=0 // loop_header
    %s9 = sphi 0, %s13
    %p10 = scmp.ge.s32.totalorder %s9, 14
    %s16 = sphi 0, %s28
    %s17 = sphi 0, %s24
    %s18 = sphi 0, %s16
    %s19 = sphi 0, %s17
    %s20 = sphi 0, %s18
    %s21 = sphi 0, %s19
    %s33 = sphi 0, %s35
    %s36 = sphi 0, %s33
    %s37 = sphi 0, %s36
    %s53 = sphi 0, %s37
    %s59 = sphi 0, %s61
    %s62 = sphi 0, %s59
    %s63 = sphi 0, %s62
    %s79 = sphi 0, %s63
    %s85 = sphi 0, %s87
    %s88 = sphi 0, %s85
    %s89 = sphi 0, %s88
    %s105 = sphi 0, %s89
    %s113 = sphi 0, %s115
    %s116 = sphi 0, %s113
    %s117 = sphi 0, %s116
    %s133 = sphi 0, %s117
  $region4: #{pose_guider_forward.18} parent=0 // loop_header_branch
    %12 = sbr.rel (%p10) target = $region8
  $region5: #{pose_guider_forward.18} parent=0 // loop_body
    %s14 = ssub.s32 %s9, 1
    %s15 = ssub.s32 %s9, 2
    %s22 = sadd.s32 1, %s17
    %p23 = scmp.ge.s32.totalorder %s22, 4
    %s24 = scalar_select %p23, 0, %s22
    %s25 = sadd.s32 1, %s16
    %s26 = scalar_select %p23, %s25, %s16
    %p27 = scmp.ge.s32.totalorder %s26, 3
    %s28 = scalar_select %p27, 0, %s26
    %s29 = ssub.s32 %s16, %s28
    %s30 = ssub.s32 %s17, %s24
    %s31 = sor.u32 %s29, %s30
    %p32 = scmp.eq.s32.totalorder %s31, 0
    %s34 = sadd.s32 %s33, 1
    %s35 = scalar_select %p32, %s33, %s34
    %p38 = pneg %p32
    %p39 = scmp.eq.s32.totalorder %s9, 11
    %p40 = por %p38, %p39
    %p41 = scmp.ne.s32.totalorder %s33, %s36
    %p42 = scmp.eq.s32.totalorder %s9, 0
    %p43 = por %p41, %p42
    %p44 = scmp.ne.s32.totalorder %s33, %s36
    %p45 = scmp.eq.s32.totalorder %s14, 11
    %p46 = por %p44, %p45
    %p47 = scmp.ne.s32.totalorder %s36, %s37
    %p48 = scmp.eq.s32.totalorder %s14, 0
    %p49 = por %p47, %p48
    %p50 = scmp.ne.s32.totalorder %s36, %s37
    %p51 = scmp.eq.s32.totalorder %s15, 11
    %p52 = por %p50, %p51
    %p54 = scmp.ne.s32.totalorder %s37, %s53
    %p55 = scmp.eq.s32.totalorder %s15, 0
    %p56 = por %p54, %p55
    %s57 = ssub.s32 %s16, %s28
    %p58 = scmp.eq.s32.totalorder %s57, 0
    %s60 = sadd.s32 %s59, 1
    %s61 = scalar_select %p58, %s59, %s60
    %p64 = pneg %p58
    %p65 = scmp.eq.s32.totalorder %s9, 11
    %p66 = por %p64, %p65
    %p67 = scmp.ne.s32.totalorder %s59, %s62
    %p68 = scmp.eq.s32.totalorder %s9, 0
    %p69 = por %p67, %p68
    %p70 = scmp.ne.s32.totalorder %s59, %s62
    %p71 = scmp.eq.s32.totalorder %s14, 11
    %p72 = por %p70, %p71
    %p73 = scmp.ne.s32.totalorder %s62, %s63
    %p74 = scmp.eq.s32.totalorder %s14, 0
    %p75 = por %p73, %p74
    %p76 = scmp.ne.s32.totalorder %s62, %s63
    %p77 = scmp.eq.s32.totalorder %s15, 11
    %p78 = por %p76, %p77
    %p80 = scmp.ne.s32.totalorder %s63, %s79
    %p81 = scmp.eq.s32.totalorder %s15, 0
    %p82 = por %p80, %p81
    %s83 = ssub.s32 %s16, %s28
    %p84 = scmp.eq.s32.totalorder %s83, 0
    %s86 = sadd.s32 %s85, 1
    %s87 = scalar_select %p84, %s85, %s86
    %p90 = pneg %p84
    %p91 = scmp.eq.s32.totalorder %s9, 11
    %p92 = por %p90, %p91
    %p93 = scmp.ne.s32.totalorder %s85, %s88
    %p94 = scmp.eq.s32.totalorder %s9, 0
    %p95 = por %p93, %p94
    %p96 = scmp.ne.s32.totalorder %s85, %s88
    %p97 = scmp.eq.s32.totalorder %s14, 11
    %p98 = por %p96, %p97
    %p99 = scmp.ne.s32.totalorder %s88, %s89
    %p100 = scmp.eq.s32.totalorder %s14, 0
    %p101 = por %p99, %p100
    %p102 = scmp.ne.s32.totalorder %s88, %s89
    %p103 = scmp.eq.s32.totalorder %s15, 11
    %p104 = por %p102, %p103
    %p106 = scmp.ne.s32.totalorder %s89, %s105
    %p107 = scmp.eq.s32.totalorder %s15, 0
    %p108 = por %p106, %p107
    %s109 = ssub.s32 %s16, %s28
    %s110 = ssub.s32 %s17, %s24
    %s111 = sor.u32 %s109, %s110
    %p112 = scmp.eq.s32.totalorder %s111, 0
    %s114 = sadd.s32 %s113, 1
    %s115 = scalar_select %p112, %s113, %s114
    %p118 = pneg %p112
    %p119 = scmp.eq.s32.totalorder %s9, 11
    %p120 = por %p118, %p119
    %p121 = scmp.ne.s32.totalorder %s113, %s116
    %p122 = scmp.eq.s32.totalorder %s9, 0
    %p123 = por %p121, %p122
    %p124 = scmp.ne.s32.totalorder %s113, %s116
    %p125 = scmp.eq.s32.totalorder %s14, 11
    %p126 = por %p124, %p125
    %p127 = scmp.ne.s32.totalorder %s116, %s117
    %p128 = scmp.eq.s32.totalorder %s14, 0
    %p129 = por %p127, %p128
    %p130 = scmp.ne.s32.totalorder %s116, %s117
    %p131 = scmp.eq.s32.totalorder %s15, 11
    %p132 = por %p130, %p131
    %p134 = scmp.ne.s32.totalorder %s117, %s133
    %p135 = scmp.eq.s32.totalorder %s15, 0
    %p136 = por %p134, %p135
    %p137 = scmp.le.s32.totalorder 1, %s9
    %p138 = scmp.lt.s32.totalorder %s9, 13
    %p139 = pnand %p137, %p138
    %p140 = pneg %p139
    // Predicated region
    $region9: #{pose_guider_forward.18} parent=5 // pred_check
      _
    $region10: #{pose_guider_forward.18} parent=5 // pred_check_branch
      %142 = sbr.rel (%p139) target = $region12
    $region11: #{pose_guider_forward.18} parent=5 // pred_region
      %s143 = ssub.s32 %s9, 1
    $region12: #{pose_guider_forward.18} parent=5 // pred_fallthru
      _
    %p144 = scmp.lt.s32.totalorder %s9, 12
    // Predicated region
    $region13: #{pose_guider_forward.18} parent=5 // pred_check
      %p145 = pneg %p144
    $region14: #{pose_guider_forward.18} parent=5 // pred_check_branch
      %147 = sbr.rel (%p145) target = $region16
    $region15: #{pose_guider_forward.18} parent=5 // pred_region
      // Predicated region
      $region17: #{pose_guider_forward.18} parent=15 // pred_check
        %p148 = pneg %p43
      $region18: #{pose_guider_forward.18} parent=15 // pred_check_branch
        %150 = sbr.rel (%p148) target = $region20
      $region19: #{pose_guider_forward.18} parent=15 // pred_region
        %s151 = smul.u32 64, %s17
        %p152 = scmp.lt.s32.totalorder %s16, 2
        %s153 = scalar_select %p152, %s16, 2
        %p154 = scmp.lt.s32.totalorder %s151, 255
        %s155 = scalar_select %p154, %s151, 255
        %s156 = smul.addr %s153, 256
        %s157 = sadd.s32 %s155, %s156
        %s158 = smul.addr %s157, 4
        %s159 = scalar_lea.vmem %s0, %s158
        %s160 = smul.u32 64, %s17
      $region20: #{pose_guider_forward.18} parent=15 // pred_fallthru
        _
      // Predicated region
      $region21: #{pose_guider_forward.18} parent=15 // pred_check
        %p161 = pneg %p69
      $region22: #{pose_guider_forward.18} parent=15 // pred_check_branch
        %163 = sbr.rel (%p161) target = $region24
      $region23: #{pose_guider_forward.18} parent=15 // pred_region
        %p164 = scmp.lt.s32.totalorder %s16, 2
        %s165 = scalar_select %p164, %s16, 2
        %s166 = smul.addr %s165, 4
        %s167 = smul.addr %s166, 4
        %s168 = scalar_lea.vmem %s1, %s167
      $region24: #{pose_guider_forward.18} parent=15 // pred_fallthru
        _
      // Predicated region
      $region25: #{pose_guider_forward.18} parent=15 // pred_check
        %p169 = pneg %p95
      $region26: #{pose_guider_forward.18} parent=15 // pred_check_branch
        %171 = sbr.rel (%p169) target = $region28
      $region27: #{pose_guider_forward.18} parent=15 // pred_region
        %p172 = scmp.lt.s32.totalorder %s16, 2
        %s173 = scalar_select %p172, %s16, 2
        %s174 = scalar_lea.vmem %s2, %s173
      $region28: #{pose_guider_forward.18} parent=15 // pred_fallthru
        _
    $region16: #{pose_guider_forward.18} parent=5 // pred_fallthru
      _
    %p175 = scmp.le.s32.totalorder 1, %s9
    %p176 = scmp.lt.s32.totalorder %s9, 13
    %p177 = pnand %p175, %p176
    %p178 = pneg %p177
    // Predicated region
    $region29: #{pose_guider_forward.18} parent=5 // pred_check
      _
    $region30: #{pose_guider_forward.18} parent=5 // pred_check_branch
      %180 = sbr.rel (%p177) target = $region32
    $region31: #{pose_guider_forward.18} parent=5 // pred_region
      %s181 = ssub.s32 %s9, 1
      %s182 = smul.u32 64, %s19
      %p183 = scmp.lt.s32.totalorder %s18, 2
      %s184 = scalar_select %p183, %s18, 2
      %p185 = scmp.lt.s32.totalorder %s182, 255
      %s186 = scalar_select %p185, %s182, 255
      %s187 = smul.addr %s184, 256
      %s188 = sadd.s32 %s186, %s187
      %s189 = smul.addr %s188, 4
      %s190 = scalar_lea.vmem %s0, %s189
      %p191 = pneg %p49
      %p192 = pneg %p46
      %p193 = scmp.lt.s32.totalorder %s18, 2
      %s194 = scalar_select %p193, %s18, 2
      %s195 = smul.addr %s194, 4
      %s196 = smul.addr %s195, 4
      %s197 = scalar_lea.vmem %s1, %s196
      %p198 = pneg %p75
      %p199 = pneg %p72
      %p200 = scmp.lt.s32.totalorder %s18, 2
      %s201 = scalar_select %p200, %s18, 2
      %s202 = scalar_lea.vmem %s2, %s201
      %p203 = pneg %p101
      %p204 = pneg %p98
      %p205 = pneg %p129
      %p206 = pneg %p126
      %s207 = smul.u32 64, %s19
      %p208 = scmp.lt.s32.totalorder %s18, 2
      %s209 = scalar_select %p208, %s18, 2
      %p210 = scmp.lt.s32.totalorder %s207, 255
      %s211 = scalar_select %p210, %s207, 255
      %s212 = smul.addr %s209, 256
      %s213 = sadd.s32 %s211, %s212
      %s214 = smul.addr %s213, 8
      %s215 = scalar_lea.vmem %s3, %s214
      %s216 = smul.u32 64, %s19
      %p217 = scmp.lt.s32.totalorder %s18, 2
      %s218 = scalar_select %p217, %s18, 2
      %p219 = scmp.lt.s32.totalorder %s216, 255
      %s220 = scalar_select %p219, %s216, 255
      %s221 = smul.addr %s218, 256
      %s222 = sadd.s32 %s220, %s221
      %s223 = smul.addr %s222, 4
      %s224 = scalar_lea.vmem %s0, %s223
      %s225 = smul.u32 64, %s19
      %p226 = scmp.lt.s32.totalorder %s18, 2
      %s227 = scalar_select %p226, %s18, 2
      %s228 = smul.addr %s227, 4
      %s229 = smul.addr %s228, 4
      %s230 = scalar_lea.vmem %s1, %s229
      %p231 = scmp.lt.s32.totalorder %s18, 2
      %s232 = scalar_select %p231, %s18, 2
      %s233 = scalar_lea.vmem %s2, %s232
      %s234 = smul.u32 64, %s19
      %p235 = scmp.lt.s32.totalorder %s18, 2
      %s236 = scalar_select %p235, %s18, 2
      %p237 = scmp.lt.s32.totalorder %s234, 255
      %s238 = scalar_select %p237, %s234, 255
      %s239 = smul.addr %s236, 256
      %s240 = sadd.s32 %s238, %s239
      %s241 = smul.addr %s240, 8
      %s242 = scalar_lea.vmem %s3, %s241
      %s243 = smul.u32 64, %s19
      %v245 = vld [vmem:[%s224] sm:$0xf]
      %v246 = vld [vmem:[%s224 + $0x4] sm:$0xf]
      %v247 = vld [vmem:[%s224 + $0x8] sm:$0xf]
      %v248 = vld [vmem:[%s224 + $0xc] sm:$0xf]
      %v249 = vld [vmem:[%s224 + $0x10] sm:$0xf]
      %v250 = vld [vmem:[%s224 + $0x14] sm:$0xf]
      %v251 = vld [vmem:[%s224 + $0x18] sm:$0xf]
      %v252 = vld [vmem:[%s224 + $0x1c] sm:$0xf]
      %v253 = vld [vmem:[%s224 + $0x20] sm:$0xf]
      %v254 = vld [vmem:[%s224 + $0x24] sm:$0xf]
      %v255 = vld [vmem:[%s224 + $0x28] sm:$0xf]
      %v256 = vld [vmem:[%s224 + $0x2c] sm:$0xf]
      %v257 = vld [vmem:[%s224 + $0x30] sm:$0xf]
      %v258 = vld [vmem:[%s224 + $0x34] sm:$0xf]
      %v259 = vld [vmem:[%s224 + $0x38] sm:$0xf]
      %v260 = vld [vmem:[%s224 + $0x3c] sm:$0xf]
      %v261 = vld [vmem:[%s224 + $0x40] sm:$0xf]
      %v262 = vld [vmem:[%s224 + $0x44] sm:$0xf]
      %v263 = vld [vmem:[%s224 + $0x48] sm:$0xf]
      %v264 = vld [vmem:[%s224 + $0x4c] sm:$0xf]
      %v265 = vld [vmem:[%s224 + $0x50] sm:$0xf]
      %v266 = vld [vmem:[%s224 + $0x54] sm:$0xf]
      %v267 = vld [vmem:[%s224 + $0x58] sm:$0xf]
      %v268 = vld [vmem:[%s224 + $0x5c] sm:$0xf]
      %v269 = vld [vmem:[%s224 + $0x60] sm:$0xf]
      %v270 = vld [vmem:[%s224 + $0x64] sm:$0xf]
      %v271 = vld [vmem:[%s224 + $0x68] sm:$0xf]
      %v272 = vld [vmem:[%s224 + $0x6c] sm:$0xf]
      %v273 = vld [vmem:[%s224 + $0x70] sm:$0xf]
      %v274 = vld [vmem:[%s224 + $0x74] sm:$0xf]
      %v275 = vld [vmem:[%s224 + $0x78] sm:$0xf]
      %v276 = vld [vmem:[%s224 + $0x7c] sm:$0xf]
      %v277 = vld [vmem:[%s224 + $0x80] sm:$0xf]
      %v278 = vld [vmem:[%s224 + $0x84] sm:$0xf]
      %v279 = vld [vmem:[%s224 + $0x88] sm:$0xf]
      %v280 = vld [vmem:[%s224 + $0x8c] sm:$0xf]
      %v281 = vld [vmem:[%s224 + $0x90] sm:$0xf]
      %v282 = vld [vmem:[%s224 + $0x94] sm:$0xf]
      %v283 = vld [vmem:[%s224 + $0x98] sm:$0xf]
      %v284 = vld [vmem:[%s224 + $0x9c] sm:$0xf]
      %v285 = vld [vmem:[%s224 + $0xa0] sm:$0xf]
      %v286 = vld [vmem:[%s224 + $0xa4] sm:$0xf]
      %v287 = vld [vmem:[%s224 + $0xa8] sm:$0xf]
      %v288 = vld [vmem:[%s224 + $0xac] sm:$0xf]
      %v289 = vld [vmem:[%s224 + $0xb0] sm:$0xf]
      %v290 = vld [vmem:[%s224 + $0xb4] sm:$0xf]
      %v291 = vld [vmem:[%s224 + $0xb8] sm:$0xf]
      %v292 = vld [vmem:[%s224 + $0xbc] sm:$0xf]
      %v293 = vld [vmem:[%s224 + $0xc0] sm:$0xf]
      %v294 = vld [vmem:[%s224 + $0xc4] sm:$0xf]
      %v295 = vld [vmem:[%s224 + $0xc8] sm:$0xf]
      %v296 = vld [vmem:[%s224 + $0xcc] sm:$0xf]
      %v297 = vld [vmem:[%s224 + $0xd0] sm:$0xf]
      %v298 = vld [vmem:[%s224 + $0xd4] sm:$0xf]
      %v299 = vld [vmem:[%s224 + $0xd8] sm:$0xf]
      %v300 = vld [vmem:[%s224 + $0xdc] sm:$0xf]
      %v301 = vld [vmem:[%s224 + $0xe0] sm:$0xf]
      %v302 = vld [vmem:[%s224 + $0xe4] sm:$0xf]
      %v303 = vld [vmem:[%s224 + $0xe8] sm:$0xf]
      %v304 = vld [vmem:[%s224 + $0xec] sm:$0xf]
      %v305 = vld [vmem:[%s224 + $0xf0] sm:$0xf]
      %v306 = vld [vmem:[%s224 + $0xf4] sm:$0xf]
      %v307 = vld [vmem:[%s224 + $0xf8] sm:$0xf]
      %v308 = vld [vmem:[%s224 + $0xfc] sm:$0xf]
      %v309 = vld [vmem:[%s230] sm:$0xf]
      %v310 = vld [vmem:[%s230 + $0x4] sm:$0xf]
      %v311 = vld [vmem:[%s230 + $0x8] sm:$0xf]
      %v312 = vld [vmem:[%s230 + $0xc] sm:$0x3]
      %v313 = vld [vmem:[%s233] sm:$0x1]
      %v315 = vlaneseq
      %v316 = vshrl.u32 %v315, 7
      %v317 = vsub.s32 0, %v316
      %v318 = vrot.slane %v313, %v317
      %v384 = vunpack.c.l.b16 %v245
      %v385 = vunpack.c.l.b16 %v246
      %v386 = vunpack.c.l.b16 %v247
      %v387 = vunpack.c.l.b16 %v248
      %v388 = vunpack.c.l.b16 %v249
      %v389 = vunpack.c.l.b16 %v250
      %v390 = vunpack.c.l.b16 %v251
      %v391 = vunpack.c.l.b16 %v252
      %v392 = vunpack.c.l.b16 %v253
      %v393 = vunpack.c.l.b16 %v254
      %v394 = vunpack.c.l.b16 %v255
      %v395 = vunpack.c.l.b16 %v256
      %v396 = vunpack.c.l.b16 %v257
      %v397 = vunpack.c.l.b16 %v258
      %v398 = vunpack.c.l.b16 %v259
      %v399 = vunpack.c.l.b16 %v260
      %v400 = vunpack.c.l.b16 %v261
      %v401 = vunpack.c.l.b16 %v262
      %v402 = vunpack.c.l.b16 %v263
      %v403 = vunpack.c.l.b16 %v264
      %v404 = vunpack.c.l.b16 %v265
      %v405 = vunpack.c.l.b16 %v266
      %v406 = vunpack.c.l.b16 %v267
      %v407 = vunpack.c.l.b16 %v268
      %v408 = vunpack.c.l.b16 %v269
      %v409 = vunpack.c.l.b16 %v270
      %v410 = vunpack.c.l.b16 %v271
      %v411 = vunpack.c.l.b16 %v272
      %v412 = vunpack.c.l.b16 %v273
      %v413 = vunpack.c.l.b16 %v274
      %v414 = vunpack.c.l.b16 %v275
      %v415 = vunpack.c.l.b16 %v276
      %v416 = vunpack.c.l.b16 %v277
      %v417 = vunpack.c.l.b16 %v278
      %v418 = vunpack.c.l.b16 %v279
      %v419 = vunpack.c.l.b16 %v280
      %v420 = vunpack.c.l.b16 %v281
      %v421 = vunpack.c.l.b16 %v282
      %v422 = vunpack.c.l.b16 %v283
      %v423 = vunpack.c.l.b16 %v284
      %v424 = vunpack.c.l.b16 %v285
      %v425 = vunpack.c.l.b16 %v286
      %v426 = vunpack.c.l.b16 %v287
      %v427 = vunpack.c.l.b16 %v288
      %v428 = vunpack.c.l.b16 %v289
      %v429 = vunpack.c.l.b16 %v290
      %v430 = vunpack.c.l.b16 %v291
      %v431 = vunpack.c.l.b16 %v292
      %v432 = vunpack.c.l.b16 %v293
      %v433 = vunpack.c.l.b16 %v294
      %v434 = vunpack.c.l.b16 %v295
      %v435 = vunpack.c.l.b16 %v296
      %v436 = vunpack.c.l.b16 %v297
      %v437 = vunpack.c.l.b16 %v298
      %v438 = vunpack.c.l.b16 %v299
      %v439 = vunpack.c.l.b16 %v300
      %v440 = vunpack.c.l.b16 %v301
      %v441 = vunpack.c.l.b16 %v302
      %v442 = vunpack.c.l.b16 %v303
      %v443 = vunpack.c.l.b16 %v304
      %v444 = vunpack.c.l.b16 %v305
      %v445 = vunpack.c.l.b16 %v306
      %v446 = vunpack.c.l.b16 %v307
      %v447 = vunpack.c.l.b16 %v308
      %v448 = vpack.c.b16 %v385, %v384
      %v449 = vpack.c.b16 %v387, %v386
      %v450 = vpack.c.b16 %v389, %v388
      %v451 = vpack.c.b16 %v391, %v390
      %v452 = vpack.c.b16 %v393, %v392
      %v453 = vpack.c.b16 %v395, %v394
      %v454 = vpack.c.b16 %v397, %v396
      %v455 = vpack.c.b16 %v399, %v398
      %v456 = vpack.c.b16 %v401, %v400
      %v457 = vpack.c.b16 %v403, %v402
      %v458 = vpack.c.b16 %v405, %v404
      %v459 = vpack.c.b16 %v407, %v406
      %v460 = vpack.c.b16 %v409, %v408
      %v461 = vpack.c.b16 %v411, %v410
      %v462 = vpack.c.b16 %v413, %v412
      %v463 = vpack.c.b16 %v415, %v414
      %v464 = vpack.c.b16 %v417, %v416
      %v465 = vpack.c.b16 %v419, %v418
      %v466 = vpack.c.b16 %v421, %v420
      %v467 = vpack.c.b16 %v423, %v422
      %v468 = vpack.c.b16 %v425, %v424
      %v469 = vpack.c.b16 %v427, %v426
      %v470 = vpack.c.b16 %v429, %v428
      %v471 = vpack.c.b16 %v431, %v430
      %v472 = vpack.c.b16 %v433, %v432
      %v473 = vpack.c.b16 %v435, %v434
      %v474 = vpack.c.b16 %v437, %v436
      %v475 = vpack.c.b16 %v439, %v438
      %v476 = vpack.c.b16 %v441, %v440
      %v477 = vpack.c.b16 %v443, %v442
      %v478 = vpack.c.b16 %v445, %v444
      %v479 = vpack.c.b16 %v447, %v446
      %v484 = vunpack.c.l.b16 %v309
      %v485 = vunpack.c.l.b16 %v310
      %v486 = vunpack.c.l.b16 %v311
      %v487 = vunpack.c.l.b16 %v312
      %v488 = vpack.c.b16 %v485, %v484
      %v489 = vpack.c.b16 %v487, %v486
      %vm491 = vcmask 220160
      %v493 = vsel %vm491, %v448, 0
      %v496 = vsel %vm491, %v449, 0
      %v499 = vsel %vm491, %v450, 0
      %v502 = vsel %vm491, %v451, 0
      %v505 = vsel %vm491, %v452, 0
      %v508 = vsel %vm491, %v453, 0
      %v511 = vsel %vm491, %v454, 0
      %v514 = vsel %vm491, %v455, 0
      %v517 = vsel %vm491, %v456, 0
      %v520 = vsel %vm491, %v457, 0
      %v523 = vsel %vm491, %v458, 0
      %v526 = vsel %vm491, %v459, 0
      %v529 = vsel %vm491, %v460, 0
      %v532 = vsel %vm491, %v461, 0
      %v535 = vsel %vm491, %v462, 0
      %v538 = vsel %vm491, %v463, 0
      %v541 = vsel %vm491, %v464, 0
      %v544 = vsel %vm491, %v465, 0
      %v547 = vsel %vm491, %v466, 0
      %v550 = vsel %vm491, %v467, 0
      %v553 = vsel %vm491, %v468, 0
      %v556 = vsel %vm491, %v469, 0
      %v559 = vsel %vm491, %v470, 0
      %v562 = vsel %vm491, %v471, 0
      %v565 = vsel %vm491, %v472, 0
      %v568 = vsel %vm491, %v473, 0
      %v571 = vsel %vm491, %v474, 0
      %v574 = vsel %vm491, %v475, 0
      %v577 = vsel %vm491, %v476, 0
      %v580 = vsel %vm491, %v477, 0
      %v583 = vsel %vm491, %v478, 0
      %v586 = vsel %vm491, %v479, 0
      %vm588 = vcmask 1044480
      %vm589 = vcmask 1045504
      %v590 = vsel %vm588, 4294967295, 65535
      %v591 = vsel %vm589, %v590, 0
      %v593 = vand.u32 %v489, %v591
      %595 = vmatprep.subr.bf16.mxu0 0
      %596 = vmatpush1.bf16.msra.mxu0 0
      %597 = vmatprep.subr.bf16.mxu0 0
      %598 = vmatpush1.bf16.msra.mxu0 0
      %599 = vmatprep.subr.bf16.mxu0 0
      %600 = vmatpush1.bf16.msra.mxu0 0
      %601 = vmatprep.subr.bf16.mxu0 0
      %602 = vmatpush1.bf16.msra.mxu0 0
      %603 = vmatprep.subr.bf16.mxu0 0
      %604 = vmatpush1.bf16.msra.mxu0 0
      %605 = vmatprep.subr.bf16.mxu0 0
      %606 = vmatpush1.bf16.msra.mxu0 0
      %607 = vmatprep.subr.bf16.mxu0 0
      %608 = vmatpush1.bf16.msra.mxu0 %v593
      %609 = vmatprep.subr.bf16.mxu0 0
      %610 = vmatpush1.bf16.msra.mxu0 %v488
      %611 = vmatprep.subr.bf16.mxu0 0
      %612 = vmatpush2.bf16.msra.mxu0 0
      %613 = vmatprep.subr.bf16.mxu0 0
      %614 = vmatpush2.bf16.msra.mxu0 0
      %615 = vmatprep.subr.bf16.mxu0 0
      %616 = vmatpush2.bf16.msra.mxu0 0
      %617 = vmatprep.subr.bf16.mxu0 0
      %618 = vmatpush2.bf16.msra.mxu0 0
      %619 = vmatprep.subr.bf16.mxu0 0
      %620 = vmatpush2.bf16.msra.mxu0 0
      %621 = vmatprep.subr.bf16.mxu0 0
      %622 = vmatpush2.bf16.msra.mxu0 0
      %623 = vmatprep.subr.bf16.mxu0 0
      %624 = vmatpush2.bf16.msra.mxu0 0
      %625 = vmatprep.subr.bf16.mxu0 0
      %626 = vmatpush2.bf16.msra.mxu0 0
      %627 = vmatprep.mubr.bf16.mxu0 0
      %628 = vmatmul.mubr.bf16.gmra.mxu0 %v493
      %v629 = vpop.f32.mrf.mxu0
      %v630 = vadd.f32 %v318, %v629
      %v631 = vpop.f32.mrf.mxu0
      %v632 = vpop.f32.mrf.mxu0
      %v633 = vadd.f32 %v318, %v632
      %v634 = vpop.f32.mrf.mxu0
      %635 = vmatprep.mubr.bf16.mxu0 0
      %636 = vmatmul.mubr.bf16.gmra.mxu0 %v496
      %v637 = vpop.f32.mrf.mxu0
      %v638 = vadd.f32 %v318, %v637
      %v639 = vpop.f32.mrf.mxu0
      %v640 = vpop.f32.mrf.mxu0
      %v641 = vadd.f32 %v318, %v640
      %v642 = vpop.f32.mrf.mxu0
      %643 = vmatprep.mubr.bf16.mxu0 0
      %644 = vmatmul.mubr.bf16.gmra.mxu0 %v499
      %v645 = vpop.f32.mrf.mxu0
      %v646 = vadd.f32 %v318, %v645
      %v647 = vpop.f32.mrf.mxu0
      %v648 = vpop.f32.mrf.mxu0
      %v649 = vadd.f32 %v318, %v648
      %v650 = vpop.f32.mrf.mxu0
      %651 = vmatprep.mubr.bf16.mxu0 0
      %652 = vmatmul.mubr.bf16.gmra.mxu0 %v502
      %v653 = vpop.f32.mrf.mxu0
      %v654 = vadd.f32 %v318, %v653
      %v655 = vpop.f32.mrf.mxu0
      %v656 = vpop.f32.mrf.mxu0
      %v657 = vadd.f32 %v318, %v656
      %v658 = vpop.f32.mrf.mxu0
      %659 = vmatprep.mubr.bf16.mxu0 0
      %660 = vmatmul.mubr.bf16.gmra.mxu0 %v505
      %v661 = vpop.f32.mrf.mxu0
      %v662 = vadd.f32 %v318, %v661
      %v663 = vpop.f32.mrf.mxu0
      %v664 = vpop.f32.mrf.mxu0
      %v665 = vadd.f32 %v318, %v664
      %v666 = vpop.f32.mrf.mxu0
      %667 = vmatprep.mubr.bf16.mxu0 0
      %668 = vmatmul.mubr.bf16.gmra.mxu0 %v508
      %v669 = vpop.f32.mrf.mxu0
      %v670 = vadd.f32 %v318, %v669
      %v671 = vpop.f32.mrf.mxu0
      %v672 = vpop.f32.mrf.mxu0
      %v673 = vadd.f32 %v318, %v672
      %v674 = vpop.f32.mrf.mxu0
      %675 = vmatprep.mubr.bf16.mxu0 0
      %676 = vmatmul.mubr.bf16.gmra.mxu0 %v511
      %v677 = vpop.f32.mrf.mxu0
      %v678 = vadd.f32 %v318, %v677
      %v679 = vpop.f32.mrf.mxu0
      %v680 = vpop.f32.mrf.mxu0
      %v681 = vadd.f32 %v318, %v680
      %v682 = vpop.f32.mrf.mxu0
      %683 = vmatprep.mubr.bf16.mxu0 0
      %684 = vmatmul.mubr.bf16.gmra.mxu0 %v514
      %v685 = vpop.f32.mrf.mxu0
      %v686 = vadd.f32 %v318, %v685
      %v687 = vpop.f32.mrf.mxu0
      %v688 = vpop.f32.mrf.mxu0
      %v689 = vadd.f32 %v318, %v688
      %v690 = vpop.f32.mrf.mxu0
      %691 = vmatprep.mubr.bf16.mxu0 0
      %692 = vmatmul.mubr.bf16.gmra.mxu0 %v517
      %v693 = vpop.f32.mrf.mxu0
      %v694 = vadd.f32 %v318, %v693
      %v695 = vpop.f32.mrf.mxu0
      %v696 = vpop.f32.mrf.mxu0
      %v697 = vadd.f32 %v318, %v696
      %v698 = vpop.f32.mrf.mxu0
      %699 = vmatprep.mubr.bf16.mxu0 0
      %700 = vmatmul.mubr.bf16.gmra.mxu0 %v520
      %v701 = vpop.f32.mrf.mxu0
      %v702 = vadd.f32 %v318, %v701
      %v703 = vpop.f32.mrf.mxu0
      %v704 = vpop.f32.mrf.mxu0
      %v705 = vadd.f32 %v318, %v704
      %v706 = vpop.f32.mrf.mxu0
      %707 = vmatprep.mubr.bf16.mxu0 0
      %708 = vmatmul.mubr.bf16.gmra.mxu0 %v523
      %v709 = vpop.f32.mrf.mxu0
      %v710 = vadd.f32 %v318, %v709
      %v711 = vpop.f32.mrf.mxu0
      %v712 = vpop.f32.mrf.mxu0
      %v713 = vadd.f32 %v318, %v712
      %v714 = vpop.f32.mrf.mxu0
      %715 = vmatprep.mubr.bf16.mxu0 0
      %716 = vmatmul.mubr.bf16.gmra.mxu0 %v526
      %v717 = vpop.f32.mrf.mxu0
      %v718 = vadd.f32 %v318, %v717
      %v719 = vpop.f32.mrf.mxu0
      %v720 = vpop.f32.mrf.mxu0
      %v721 = vadd.f32 %v318, %v720
      %v722 = vpop.f32.mrf.mxu0
      %723 = vmatprep.mubr.bf16.mxu0 0
      %724 = vmatmul.mubr.bf16.gmra.mxu0 %v529
      %v725 = vpop.f32.mrf.mxu0
      %v726 = vadd.f32 %v318, %v725
      %v727 = vpop.f32.mrf.mxu0
      %v728 = vpop.f32.mrf.mxu0
      %v729 = vadd.f32 %v318, %v728
      %v730 = vpop.f32.mrf.mxu0
      %731 = vmatprep.mubr.bf16.mxu0 0
      %732 = vmatmul.mubr.bf16.gmra.mxu0 %v532
      %v733 = vpop.f32.mrf.mxu0
      %v734 = vadd.f32 %v318, %v733
      %v735 = vpop.f32.mrf.mxu0
      %v736 = vpop.f32.mrf.mxu0
      %v737 = vadd.f32 %v318, %v736
      %v738 = vpop.f32.mrf.mxu0
      %739 = vmatprep.mubr.bf16.mxu0 0
      %740 = vmatmul.mubr.bf16.gmra.mxu0 %v535
      %v741 = vpop.f32.mrf.mxu0
      %v742 = vadd.f32 %v318, %v741
      %v743 = vpop.f32.mrf.mxu0
      %v744 = vpop.f32.mrf.mxu0
      %v745 = vadd.f32 %v318, %v744
      %v746 = vpop.f32.mrf.mxu0
      %747 = vmatprep.mubr.bf16.mxu0 0
      %748 = vmatmul.mubr.bf16.gmra.mxu0 %v538
      %v749 = vpop.f32.mrf.mxu0
      %v750 = vadd.f32 %v318, %v749
      %v751 = vpop.f32.mrf.mxu0
      %v752 = vpop.f32.mrf.mxu0
      %v753 = vadd.f32 %v318, %v752
      %v754 = vpop.f32.mrf.mxu0
      %755 = vmatprep.mubr.bf16.mxu0 0
      %756 = vmatmul.mubr.bf16.gmra.mxu0 %v541
      %v757 = vpop.f32.mrf.mxu0
      %v758 = vadd.f32 %v318, %v757
      %v759 = vpop.f32.mrf.mxu0
      %v760 = vpop.f32.mrf.mxu0
      %v761 = vadd.f32 %v318, %v760
      %v762 = vpop.f32.mrf.mxu0
      %763 = vmatprep.mubr.bf16.mxu0 0
      %764 = vmatmul.mubr.bf16.gmra.mxu0 %v544
      %v765 = vpop.f32.mrf.mxu0
      %v766 = vadd.f32 %v318, %v765
      %v767 = vpop.f32.mrf.mxu0
      %v768 = vpop.f32.mrf.mxu0
      %v769 = vadd.f32 %v318, %v768
      %v770 = vpop.f32.mrf.mxu0
      %771 = vmatprep.mubr.bf16.mxu0 0
      %772 = vmatmul.mubr.bf16.gmra.mxu0 %v547
      %v773 = vpop.f32.mrf.mxu0
      %v774 = vadd.f32 %v318, %v773
      %v775 = vpop.f32.mrf.mxu0
      %v776 = vpop.f32.mrf.mxu0
      %v777 = vadd.f32 %v318, %v776
      %v778 = vpop.f32.mrf.mxu0
      %779 = vmatprep.mubr.bf16.mxu0 0
      %780 = vmatmul.mubr.bf16.gmra.mxu0 %v550
      %v781 = vpop.f32.mrf.mxu0
      %v782 = vadd.f32 %v318, %v781
      %v783 = vpop.f32.mrf.mxu0
      %v784 = vpop.f32.mrf.mxu0
      %v785 = vadd.f32 %v318, %v784
      %v786 = vpop.f32.mrf.mxu0
      %787 = vmatprep.mubr.bf16.mxu0 0
      %788 = vmatmul.mubr.bf16.gmra.mxu0 %v553
      %v789 = vpop.f32.mrf.mxu0
      %v790 = vadd.f32 %v318, %v789
      %v791 = vpop.f32.mrf.mxu0
      %v792 = vpop.f32.mrf.mxu0
      %v793 = vadd.f32 %v318, %v792
      %v794 = vpop.f32.mrf.mxu0
      %795 = vmatprep.mubr.bf16.mxu0 0
      %796 = vmatmul.mubr.bf16.gmra.mxu0 %v556
      %v797 = vpop.f32.mrf.mxu0
      %v798 = vadd.f32 %v318, %v797
      %v799 = vpop.f32.mrf.mxu0
      %v800 = vpop.f32.mrf.mxu0
      %v801 = vadd.f32 %v318, %v800
      %v802 = vpop.f32.mrf.mxu0
      %803 = vmatprep.mubr.bf16.mxu0 0
      %804 = vmatmul.mubr.bf16.gmra.mxu0 %v559
      %v805 = vpop.f32.mrf.mxu0
      %v806 = vadd.f32 %v318, %v805
      %v807 = vpop.f32.mrf.mxu0
      %v808 = vpop.f32.mrf.mxu0
      %v809 = vadd.f32 %v318, %v808
      %v810 = vpop.f32.mrf.mxu0
      %811 = vmatprep.mubr.bf16.mxu0 0
      %812 = vmatmul.mubr.bf16.gmra.mxu0 %v562
      %v813 = vpop.f32.mrf.mxu0
      %v814 = vadd.f32 %v318, %v813
      %v815 = vpop.f32.mrf.mxu0
      %v816 = vpop.f32.mrf.mxu0
      %v817 = vadd.f32 %v318, %v816
      %v818 = vpop.f32.mrf.mxu0
      %819 = vmatprep.mubr.bf16.mxu0 0
      %820 = vmatmul.mubr.bf16.gmra.mxu0 %v565
      %v821 = vpop.f32.mrf.mxu0
      %v822 = vadd.f32 %v318, %v821
      %v823 = vpop.f32.mrf.mxu0
      %v824 = vpop.f32.mrf.mxu0
      %v825 = vadd.f32 %v318, %v824
      %v826 = vpop.f32.mrf.mxu0
      %827 = vmatprep.mubr.bf16.mxu0 0
      %828 = vmatmul.mubr.bf16.gmra.mxu0 %v568
      %v829 = vpop.f32.mrf.mxu0
      %v830 = vadd.f32 %v318, %v829
      %v831 = vpop.f32.mrf.mxu0
      %v832 = vpop.f32.mrf.mxu0
      %v833 = vadd.f32 %v318, %v832
      %v834 = vpop.f32.mrf.mxu0
      %835 = vmatprep.mubr.bf16.mxu0 0
      %836 = vmatmul.mubr.bf16.gmra.mxu0 %v571
      %v837 = vpop.f32.mrf.mxu0
      %v838 = vadd.f32 %v318, %v837
      %v839 = vpop.f32.mrf.mxu0
      %v840 = vpop.f32.mrf.mxu0
      %v841 = vadd.f32 %v318, %v840
      %v842 = vpop.f32.mrf.mxu0
      %843 = vmatprep.mubr.bf16.mxu0 0
      %844 = vmatmul.mubr.bf16.gmra.mxu0 %v574
      %v845 = vpop.f32.mrf.mxu0
      %v846 = vadd.f32 %v318, %v845
      %v847 = vpop.f32.mrf.mxu0
      %v848 = vpop.f32.mrf.mxu0
      %v849 = vadd.f32 %v318, %v848
      %v850 = vpop.f32.mrf.mxu0
      %851 = vmatprep.mubr.bf16.mxu0 0
      %852 = vmatmul.mubr.bf16.gmra.mxu0 %v577
      %v853 = vpop.f32.mrf.mxu0
      %v854 = vadd.f32 %v318, %v853
      %v855 = vpop.f32.mrf.mxu0
      %v856 = vpop.f32.mrf.mxu0
      %v857 = vadd.f32 %v318, %v856
      %v858 = vpop.f32.mrf.mxu0
      %859 = vmatprep.mubr.bf16.mxu0 0
      %860 = vmatmul.mubr.bf16.gmra.mxu0 %v580
      %v861 = vpop.f32.mrf.mxu0
      %v862 = vadd.f32 %v318, %v861
      %v863 = vpop.f32.mrf.mxu0
      %v864 = vpop.f32.mrf.mxu0
      %v865 = vadd.f32 %v318, %v864
      %v866 = vpop.f32.mrf.mxu0
      %867 = vmatprep.mubr.bf16.mxu0 0
      %868 = vmatmul.mubr.bf16.gmra.mxu0 %v583
      %v869 = vpop.f32.mrf.mxu0
      %v870 = vadd.f32 %v318, %v869
      %v871 = vpop.f32.mrf.mxu0
      %v872 = vpop.f32.mrf.mxu0
      %v873 = vadd.f32 %v318, %v872
      %v874 = vpop.f32.mrf.mxu0
      %875 = vmatprep.mubr.bf16.mxu0 0
      %876 = vmatmul.mubr.bf16.gmra.mxu0 %v586
      %v877 = vpop.f32.mrf.mxu0
      %v878 = vadd.f32 %v318, %v877
      %v879 = vpop.f32.mrf.mxu0
      %v880 = vpop.f32.mrf.mxu0
      %v881 = vadd.f32 %v318, %v880
      %v882 = vpop.f32.mrf.mxu0
      %883 = vdwg.mxu0
      %v884 = vsub.f32 0.0, %v630
      %v885 = vsub.f32 0.0, %v633
      %v886 = vsub.f32 0.0, %v638
      %v887 = vsub.f32 0.0, %v641
      %v888 = vsub.f32 0.0, %v646
      %v889 = vsub.f32 0.0, %v649
      %v890 = vsub.f32 0.0, %v654
      %v891 = vsub.f32 0.0, %v657
      %v892 = vsub.f32 0.0, %v662
      %v893 = vsub.f32 0.0, %v665
      %v894 = vsub.f32 0.0, %v670
      %v895 = vsub.f32 0.0, %v673
      %v896 = vsub.f32 0.0, %v678
      %v897 = vsub.f32 0.0, %v681
      %v898 = vsub.f32 0.0, %v686
      %v899 = vsub.f32 0.0, %v689
      %v900 = vsub.f32 0.0, %v694
      %v901 = vsub.f32 0.0, %v697
      %v902 = vsub.f32 0.0, %v702
      %v903 = vsub.f32 0.0, %v705
      %v904 = vsub.f32 0.0, %v710
      %v905 = vsub.f32 0.0, %v713
      %v906 = vsub.f32 0.0, %v718
      %v907 = vsub.f32 0.0, %v721
      %v908 = vsub.f32 0.0, %v726
      %v909 = vsub.f32 0.0, %v729
      %v910 = vsub.f32 0.0, %v734
      %v911 = vsub.f32 0.0, %v737
      %v912 = vsub.f32 0.0, %v742
      %v913 = vsub.f32 0.0, %v745
      %v914 = vsub.f32 0.0, %v750
      %v915 = vsub.f32 0.0, %v753
      %v916 = vsub.f32 0.0, %v758
      %v917 = vsub.f32 0.0, %v761
      %v918 = vsub.f32 0.0, %v766
      %v919 = vsub.f32 0.0, %v769
      %v920 = vsub.f32 0.0, %v774
      %v921 = vsub.f32 0.0, %v777
      %v922 = vsub.f32 0.0, %v782
      %v923 = vsub.f32 0.0, %v785
      %v924 = vsub.f32 0.0, %v790
      %v925 = vsub.f32 0.0, %v793
      %v926 = vsub.f32 0.0, %v798
      %v927 = vsub.f32 0.0, %v801
      %v928 = vsub.f32 0.0, %v806
      %v929 = vsub.f32 0.0, %v809
      %v930 = vsub.f32 0.0, %v814
      %v931 = vsub.f32 0.0, %v817
      %v932 = vsub.f32 0.0, %v822
      %v933 = vsub.f32 0.0, %v825
      %v934 = vsub.f32 0.0, %v830
      %v935 = vsub.f32 0.0, %v833
      %v936 = vsub.f32 0.0, %v838
      %v937 = vsub.f32 0.0, %v841
      %v938 = vsub.f32 0.0, %v846
      %v939 = vsub.f32 0.0, %v849
      %v940 = vsub.f32 0.0, %v854
      %v941 = vsub.f32 0.0, %v857
      %v942 = vsub.f32 0.0, %v862
      %v943 = vsub.f32 0.0, %v865
      %v944 = vsub.f32 0.0, %v870
      %v945 = vsub.f32 0.0, %v873
      %v946 = vsub.f32 0.0, %v878
      %v947 = vsub.f32 0.0, %v881
      %v948 = vmul.f32 %v884, 1.442695
      %v949 = vpow.pop %v948
      %v950 = vmul.f32 %v885, 1.442695
      %v951 = vpow.pop %v950
      %v952 = vmul.f32 %v886, 1.442695
      %v953 = vpow.pop %v952
      %v954 = vmul.f32 %v887, 1.442695
      %v955 = vpow.pop %v954
      %v956 = vmul.f32 %v888, 1.442695
      %v957 = vpow.pop %v956
      %v958 = vmul.f32 %v889, 1.442695
      %v959 = vpow.pop %v958
      %v960 = vmul.f32 %v890, 1.442695
      %v961 = vpow.pop %v960
      %v962 = vmul.f32 %v891, 1.442695
      %v963 = vpow.pop %v962
      %v964 = vmul.f32 %v892, 1.442695
      %v965 = vpow.pop %v964
      %v966 = vmul.f32 %v893, 1.442695
      %v967 = vpow.pop %v966
      %v968 = vmul.f32 %v894, 1.442695
      %v969 = vpow.pop %v968
      %v970 = vmul.f32 %v895, 1.442695
      %v971 = vpow.pop %v970
      %v972 = vmul.f32 %v896, 1.442695
      %v973 = vpow.pop %v972
      %v974 = vmul.f32 %v897, 1.442695
      %v975 = vpow.pop %v974
      %v976 = vmul.f32 %v898, 1.442695
      %v977 = vpow.pop %v976
      %v978 = vmul.f32 %v899, 1.442695
      %v979 = vpow.pop %v978
      %v980 = vmul.f32 %v900, 1.442695
      %v981 = vpow.pop %v980
      %v982 = vmul.f32 %v901, 1.442695
      %v983 = vpow.pop %v982
      %v984 = vmul.f32 %v902, 1.442695
      %v985 = vpow.pop %v984
      %v986 = vmul.f32 %v903, 1.442695
      %v987 = vpow.pop %v986
      %v988 = vmul.f32 %v904, 1.442695
      %v989 = vpow.pop %v988
      %v990 = vmul.f32 %v905, 1.442695
      %v991 = vpow.pop %v990
      %v992 = vmul.f32 %v906, 1.442695
      %v993 = vpow.pop %v992
      %v994 = vmul.f32 %v907, 1.442695
      %v995 = vpow.pop %v994
      %v996 = vmul.f32 %v908, 1.442695
      %v997 = vpow.pop %v996
      %v998 = vmul.f32 %v909, 1.442695
      %v999 = vpow.pop %v998
      %v1000 = vmul.f32 %v910, 1.442695
      %v1001 = vpow.pop %v1000
      %v1002 = vmul.f32 %v911, 1.442695
      %v1003 = vpow.pop %v1002
      %v1004 = vmul.f32 %v912, 1.442695
      %v1005 = vpow.pop %v1004
      %v1006 = vmul.f32 %v913, 1.442695
      %v1007 = vpow.pop %v1006
      %v1008 = vmul.f32 %v914, 1.442695
      %v1009 = vpow.pop %v1008
      %v1010 = vmul.f32 %v915, 1.442695
      %v1011 = vpow.pop %v1010
      %v1012 = vmul.f32 %v916, 1.442695
      %v1013 = vpow.pop %v1012
      %v1014 = vmul.f32 %v917, 1.442695
      %v1015 = vpow.pop %v1014
      %v1016 = vmul.f32 %v918, 1.442695
      %v1017 = vpow.pop %v1016
      %v1018 = vmul.f32 %v919, 1.442695
      %v1019 = vpow.pop %v1018
      %v1020 = vmul.f32 %v920, 1.442695
      %v1021 = vpow.pop %v1020
      %v1022 = vmul.f32 %v921, 1.442695
      %v1023 = vpow.pop %v1022
      %v1024 = vmul.f32 %v922, 1.442695
      %v1025 = vpow.pop %v1024
      %v1026 = vmul.f32 %v923, 1.442695
      %v1027 = vpow.pop %v1026
      %v1028 = vmul.f32 %v924, 1.442695
      %v1029 = vpow.pop %v1028
      %v1030 = vmul.f32 %v925, 1.442695
      %v1031 = vpow.pop %v1030
      %v1032 = vmul.f32 %v926, 1.442695
      %v1033 = vpow.pop %v1032
      %v1034 = vmul.f32 %v927, 1.442695
      %v1035 = vpow.pop %v1034
      %v1036 = vmul.f32 %v928, 1.442695
      %v1037 = vpow.pop %v1036
      %v1038 = vmul.f32 %v929, 1.442695
      %v1039 = vpow.pop %v1038
      %v1040 = vmul.f32 %v930, 1.442695
      %v1041 = vpow.pop %v1040
      %v1042 = vmul.f32 %v931, 1.442695
      %v1043 = vpow.pop %v1042
      %v1044 = vmul.f32 %v932, 1.442695
      %v1045 = vpow.pop %v1044
      %v1046 = vmul.f32 %v933, 1.442695
      %v1047 = vpow.pop %v1046
      %v1048 = vmul.f32 %v934, 1.442695
      %v1049 = vpow.pop %v1048
      %v1050 = vmul.f32 %v935, 1.442695
      %v1051 = vpow.pop %v1050
      %v1052 = vmul.f32 %v936, 1.442695
      %v1053 = vpow.pop %v1052
      %v1054 = vmul.f32 %v937, 1.442695
      %v1055 = vpow.pop %v1054
      %v1056 = vmul.f32 %v938, 1.442695
      %v1057 = vpow.pop %v1056
      %v1058 = vmul.f32 %v939, 1.442695
      %v1059 = vpow.pop %v1058
      %v1060 = vmul.f32 %v940, 1.442695
      %v1061 = vpow.pop %v1060
      %v1062 = vmul.f32 %v941, 1.442695
      %v1063 = vpow.pop %v1062
      %v1064 = vmul.f32 %v942, 1.442695
      %v1065 = vpow.pop %v1064
      %v1066 = vmul.f32 %v943, 1.442695
      %v1067 = vpow.pop %v1066
      %v1068 = vmul.f32 %v944, 1.442695
      %v1069 = vpow.pop %v1068
      %v1070 = vmul.f32 %v945, 1.442695
      %v1071 = vpow.pop %v1070
      %v1072 = vmul.f32 %v946, 1.442695
      %v1073 = vpow.pop %v1072
      %v1074 = vmul.f32 %v947, 1.442695
      %v1075 = vpow.pop %v1074
      %v1076 = vadd.f32 %v949, 1.0
      %v1077 = vadd.f32 %v951, 1.0
      %v1078 = vadd.f32 %v953, 1.0
      %v1079 = vadd.f32 %v955, 1.0
      %v1080 = vadd.f32 %v957, 1.0
      %v1081 = vadd.f32 %v959, 1.0
      %v1082 = vadd.f32 %v961, 1.0
      %v1083 = vadd.f32 %v963, 1.0
      %v1084 = vadd.f32 %v965, 1.0
      %v1085 = vadd.f32 %v967, 1.0
      %v1086 = vadd.f32 %v969, 1.0
      %v1087 = vadd.f32 %v971, 1.0
      %v1088 = vadd.f32 %v973, 1.0
      %v1089 = vadd.f32 %v975, 1.0
      %v1090 = vadd.f32 %v977, 1.0
      %v1091 = vadd.f32 %v979, 1.0
      %v1092 = vadd.f32 %v981, 1.0
      %v1093 = vadd.f32 %v983, 1.0
      %v1094 = vadd.f32 %v985, 1.0
      %v1095 = vadd.f32 %v987, 1.0
      %v1096 = vadd.f32 %v989, 1.0
      %v1097 = vadd.f32 %v991, 1.0
      %v1098 = vadd.f32 %v993, 1.0
      %v1099 = vadd.f32 %v995, 1.0
      %v1100 = vadd.f32 %v997, 1.0
      %v1101 = vadd.f32 %v999, 1.0
      %v1102 = vadd.f32 %v1001, 1.0
      %v1103 = vadd.f32 %v1003, 1.0
      %v1104 = vadd.f32 %v1005, 1.0
      %v1105 = vadd.f32 %v1007, 1.0
      %v1106 = vadd.f32 %v1009, 1.0
      %v1107 = vadd.f32 %v1011, 1.0
      %v1108 = vadd.f32 %v1013, 1.0
      %v1109 = vadd.f32 %v1015, 1.0
      %v1110 = vadd.f32 %v1017, 1.0
      %v1111 = vadd.f32 %v1019, 1.0
      %v1112 = vadd.f32 %v1021, 1.0
      %v1113 = vadd.f32 %v1023, 1.0
      %v1114 = vadd.f32 %v1025, 1.0
      %v1115 = vadd.f32 %v1027, 1.0
      %v1116 = vadd.f32 %v1029, 1.0
      %v1117 = vadd.f32 %v1031, 1.0
      %v1118 = vadd.f32 %v1033, 1.0
      %v1119 = vadd.f32 %v1035, 1.0
      %v1120 = vadd.f32 %v1037, 1.0
      %v1121 = vadd.f32 %v1039, 1.0
      %v1122 = vadd.f32 %v1041, 1.0
      %v1123 = vadd.f32 %v1043, 1.0
      %v1124 = vadd.f32 %v1045, 1.0
      %v1125 = vadd.f32 %v1047, 1.0
      %v1126 = vadd.f32 %v1049, 1.0
      %v1127 = vadd.f32 %v1051, 1.0
      %v1128 = vadd.f32 %v1053, 1.0
      %v1129 = vadd.f32 %v1055, 1.0
      %v1130 = vadd.f32 %v1057, 1.0
      %v1131 = vadd.f32 %v1059, 1.0
      %v1132 = vadd.f32 %v1061, 1.0
      %v1133 = vadd.f32 %v1063, 1.0
      %v1134 = vadd.f32 %v1065, 1.0
      %v1135 = vadd.f32 %v1067, 1.0
      %v1136 = vadd.f32 %v1069, 1.0
      %v1137 = vadd.f32 %v1071, 1.0
      %v1138 = vadd.f32 %v1073, 1.0
      %v1139 = vadd.f32 %v1075, 1.0
      %v1140 = vrcp.pop %v1076
      %v1141 = vrcp.pop %v1077
      %v1142 = vrcp.pop %v1078
      %v1143 = vrcp.pop %v1079
      %v1144 = vrcp.pop %v1080
      %v1145 = vrcp.pop %v1081
      %v1146 = vrcp.pop %v1082
      %v1147 = vrcp.pop %v1083
      %v1148 = vrcp.pop %v1084
      %v1149 = vrcp.pop %v1085
      %v1150 = vrcp.pop %v1086
      %v1151 = vrcp.pop %v1087
      %v1152 = vrcp.pop %v1088
      %v1153 = vrcp.pop %v1089
      %v1154 = vrcp.pop %v1090
      %v1155 = vrcp.pop %v1091
      %v1156 = vrcp.pop %v1092
      %v1157 = vrcp.pop %v1093
      %v1158 = vrcp.pop %v1094
      %v1159 = vrcp.pop %v1095
      %v1160 = vrcp.pop %v1096
      %v1161 = vrcp.pop %v1097
      %v1162 = vrcp.pop %v1098
      %v1163 = vrcp.pop %v1099
      %v1164 = vrcp.pop %v1100
      %v1165 = vrcp.pop %v1101
      %v1166 = vrcp.pop %v1102
      %v1167 = vrcp.pop %v1103
      %v1168 = vrcp.pop %v1104
      %v1169 = vrcp.pop %v1105
      %v1170 = vrcp.pop %v1106
      %v1171 = vrcp.pop %v1107
      %v1172 = vrcp.pop %v1108
      %v1173 = vrcp.pop %v1109
      %v1174 = vrcp.pop %v1110
      %v1175 = vrcp.pop %v1111
      %v1176 = vrcp.pop %v1112
      %v1177 = vrcp.pop %v1113
      %v1178 = vrcp.pop %v1114
      %v1179 = vrcp.pop %v1115
      %v1180 = vrcp.pop %v1116
      %v1181 = vrcp.pop %v1117
      %v1182 = vrcp.pop %v1118
      %v1183 = vrcp.pop %v1119
      %v1184 = vrcp.pop %v1120
      %v1185 = vrcp.pop %v1121
      %v1186 = vrcp.pop %v1122
      %v1187 = vrcp.pop %v1123
      %v1188 = vrcp.pop %v1124
      %v1189 = vrcp.pop %v1125
      %v1190 = vrcp.pop %v1126
      %v1191 = vrcp.pop %v1127
      %v1192 = vrcp.pop %v1128
      %v1193 = vrcp.pop %v1129
      %v1194 = vrcp.pop %v1130
      %v1195 = vrcp.pop %v1131
      %v1196 = vrcp.pop %v1132
      %v1197 = vrcp.pop %v1133
      %v1198 = vrcp.pop %v1134
      %v1199 = vrcp.pop %v1135
      %v1200 = vrcp.pop %v1136
      %v1201 = vrcp.pop %v1137
      %v1202 = vrcp.pop %v1138
      %v1203 = vrcp.pop %v1139
      %v1204 = vmul.f32 %v630, %v1140
      %v1205 = vmul.f32 %v633, %v1141
      %v1206 = vmul.f32 %v638, %v1142
      %v1207 = vmul.f32 %v641, %v1143
      %v1208 = vmul.f32 %v646, %v1144
      %v1209 = vmul.f32 %v649, %v1145
      %v1210 = vmul.f32 %v654, %v1146
      %v1211 = vmul.f32 %v657, %v1147
      %v1212 = vmul.f32 %v662, %v1148
      %v1213 = vmul.f32 %v665, %v1149
      %v1214 = vmul.f32 %v670, %v1150
      %v1215 = vmul.f32 %v673, %v1151
      %v1216 = vmul.f32 %v678, %v1152
      %v1217 = vmul.f32 %v681, %v1153
      %v1218 = vmul.f32 %v686, %v1154
      %v1219 = vmul.f32 %v689, %v1155
      %v1220 = vmul.f32 %v694, %v1156
      %v1221 = vmul.f32 %v697, %v1157
      %v1222 = vmul.f32 %v702, %v1158
      %v1223 = vmul.f32 %v705, %v1159
      %v1224 = vmul.f32 %v710, %v1160
      %v1225 = vmul.f32 %v713, %v1161
      %v1226 = vmul.f32 %v718, %v1162
      %v1227 = vmul.f32 %v721, %v1163
      %v1228 = vmul.f32 %v726, %v1164
      %v1229 = vmul.f32 %v729, %v1165
      %v1230 = vmul.f32 %v734, %v1166
      %v1231 = vmul.f32 %v737, %v1167
      %v1232 = vmul.f32 %v742, %v1168
      %v1233 = vmul.f32 %v745, %v1169
      %v1234 = vmul.f32 %v750, %v1170
      %v1235 = vmul.f32 %v753, %v1171
      %v1236 = vmul.f32 %v758, %v1172
      %v1237 = vmul.f32 %v761, %v1173
      %v1238 = vmul.f32 %v766, %v1174
      %v1239 = vmul.f32 %v769, %v1175
      %v1240 = vmul.f32 %v774, %v1176
      %v1241 = vmul.f32 %v777, %v1177
      %v1242 = vmul.f32 %v782, %v1178
      %v1243 = vmul.f32 %v785, %v1179
      %v1244 = vmul.f32 %v790, %v1180
      %v1245 = vmul.f32 %v793, %v1181
      %v1246 = vmul.f32 %v798, %v1182
      %v1247 = vmul.f32 %v801, %v1183
      %v1248 = vmul.f32 %v806, %v1184
      %v1249 = vmul.f32 %v809, %v1185
      %v1250 = vmul.f32 %v814, %v1186
      %v1251 = vmul.f32 %v817, %v1187
      %v1252 = vmul.f32 %v822, %v1188
      %v1253 = vmul.f32 %v825, %v1189
      %v1254 = vmul.f32 %v830, %v1190
      %v1255 = vmul.f32 %v833, %v1191
      %v1256 = vmul.f32 %v838, %v1192
      %v1257 = vmul.f32 %v841, %v1193
      %v1258 = vmul.f32 %v846, %v1194
      %v1259 = vmul.f32 %v849, %v1195
      %v1260 = vmul.f32 %v854, %v1196
      %v1261 = vmul.f32 %v857, %v1197
      %v1262 = vmul.f32 %v862, %v1198
      %v1263 = vmul.f32 %v865, %v1199
      %v1264 = vmul.f32 %v870, %v1200
      %v1265 = vmul.f32 %v873, %v1201
      %v1266 = vmul.f32 %v878, %v1202
      %v1267 = vmul.f32 %v881, %v1203
      %vm1268 = vcmask 64512
      %1269 = vst.msk [vmem:[%s242] sm:$0xff] %vm1268, %v1204
      %1270 = vst.msk [vmem:[%s242 + $0x8] sm:$0xff] %vm1268, %v1205
      %1271 = vst.msk [vmem:[%s242 + $0x10] sm:$0xff] %vm1268, %v1206
      %1272 = vst.msk [vmem:[%s242 + $0x18] sm:$0xff] %vm1268, %v1207
      %1273 = vst.msk [vmem:[%s242 + $0x20] sm:$0xff] %vm1268, %v1208
      %1274 = vst.msk [vmem:[%s242 + $0x28] sm:$0xff] %vm1268, %v1209
      %1275 = vst.msk [vmem:[%s242 + $0x30] sm:$0xff] %vm1268, %v1210
      %1276 = vst.msk [vmem:[%s242 + $0x38] sm:$0xff] %vm1268, %v1211
      %1277 = vst.msk [vmem:[%s242 + $0x40] sm:$0xff] %vm1268, %v1212
      %1278 = vst.msk [vmem:[%s242 + $0x48] sm:$0xff] %vm1268, %v1213
      %1279 = vst.msk [vmem:[%s242 + $0x50] sm:$0xff] %vm1268, %v1214
      %1280 = vst.msk [vmem:[%s242 + $0x58] sm:$0xff] %vm1268, %v1215
      %1281 = vst.msk [vmem:[%s242 + $0x60] sm:$0xff] %vm1268, %v1216
      %1282 = vst.msk [vmem:[%s242 + $0x68] sm:$0xff] %vm1268, %v1217
      %1283 = vst.msk [vmem:[%s242 + $0x70] sm:$0xff] %vm1268, %v1218
      %1284 = vst.msk [vmem:[%s242 + $0x78] sm:$0xff] %vm1268, %v1219
      %1285 = vst.msk [vmem:[%s242 + $0x80] sm:$0xff] %vm1268, %v1220
      %1286 = vst.msk [vmem:[%s242 + $0x88] sm:$0xff] %vm1268, %v1221
      %1287 = vst.msk [vmem:[%s242 + $0x90] sm:$0xff] %vm1268, %v1222
      %1288 = vst.msk [vmem:[%s242 + $0x98] sm:$0xff] %vm1268, %v1223
      %1289 = vst.msk [vmem:[%s242 + $0xa0] sm:$0xff] %vm1268, %v1224
      %1290 = vst.msk [vmem:[%s242 + $0xa8] sm:$0xff] %vm1268, %v1225
      %1291 = vst.msk [vmem:[%s242 + $0xb0] sm:$0xff] %vm1268, %v1226
      %1292 = vst.msk [vmem:[%s242 + $0xb8] sm:$0xff] %vm1268, %v1227
      %1293 = vst.msk [vmem:[%s242 + $0xc0] sm:$0xff] %vm1268, %v1228
      %1294 = vst.msk [vmem:[%s242 + $0xc8] sm:$0xff] %vm1268, %v1229
      %1295 = vst.msk [vmem:[%s242 + $0xd0] sm:$0xff] %vm1268, %v1230
      %1296 = vst.msk [vmem:[%s242 + $0xd8] sm:$0xff] %vm1268, %v1231
      %1297 = vst.msk [vmem:[%s242 + $0xe0] sm:$0xff] %vm1268, %v1232
      %1298 = vst.msk [vmem:[%s242 + $0xe8] sm:$0xff] %vm1268, %v1233
      %1299 = vst.msk [vmem:[%s242 + $0xf0] sm:$0xff] %vm1268, %v1234
      %1300 = vst.msk [vmem:[%s242 + $0xf8] sm:$0xff] %vm1268, %v1235
      %1301 = vst.msk [vmem:[%s242 + $0x100] sm:$0xff] %vm1268, %v1236
      %1302 = vst.msk [vmem:[%s242 + $0x108] sm:$0xff] %vm1268, %v1237
      %1303 = vst.msk [vmem:[%s242 + $0x110] sm:$0xff] %vm1268, %v1238
      %1304 = vst.msk [vmem:[%s242 + $0x118] sm:$0xff] %vm1268, %v1239
      %1305 = vst.msk [vmem:[%s242 + $0x120] sm:$0xff] %vm1268, %v1240
      %1306 = vst.msk [vmem:[%s242 + $0x128] sm:$0xff] %vm1268, %v1241
      %1307 = vst.msk [vmem:[%s242 + $0x130] sm:$0xff] %vm1268, %v1242
      %1308 = vst.msk [vmem:[%s242 + $0x138] sm:$0xff] %vm1268, %v1243
      %1309 = vst.msk [vmem:[%s242 + $0x140] sm:$0xff] %vm1268, %v1244
      %1310 = vst.msk [vmem:[%s242 + $0x148] sm:$0xff] %vm1268, %v1245
      %1311 = vst.msk [vmem:[%s242 + $0x150] sm:$0xff] %vm1268, %v1246
      %1312 = vst.msk [vmem:[%s242 + $0x158] sm:$0xff] %vm1268, %v1247
      %1313 = vst.msk [vmem:[%s242 + $0x160] sm:$0xff] %vm1268, %v1248
      %1314 = vst.msk [vmem:[%s242 + $0x168] sm:$0xff] %vm1268, %v1249
      %1315 = vst.msk [vmem:[%s242 + $0x170] sm:$0xff] %vm1268, %v1250
      %1316 = vst.msk [vmem:[%s242 + $0x178] sm:$0xff] %vm1268, %v1251
      %1317 = vst.msk [vmem:[%s242 + $0x180] sm:$0xff] %vm1268, %v1252
      %1318 = vst.msk [vmem:[%s242 + $0x188] sm:$0xff] %vm1268, %v1253
      %1319 = vst.msk [vmem:[%s242 + $0x190] sm:$0xff] %vm1268, %v1254
      %1320 = vst.msk [vmem:[%s242 + $0x198] sm:$0xff] %vm1268, %v1255
      %1321 = vst.msk [vmem:[%s242 + $0x1a0] sm:$0xff] %vm1268, %v1256
      %1322 = vst.msk [vmem:[%s242 + $0x1a8] sm:$0xff] %vm1268, %v1257
      %1323 = vst.msk [vmem:[%s242 + $0x1b0] sm:$0xff] %vm1268, %v1258
      %1324 = vst.msk [vmem:[%s242 + $0x1b8] sm:$0xff] %vm1268, %v1259
      %1325 = vst.msk [vmem:[%s242 + $0x1c0] sm:$0xff] %vm1268, %v1260
      %1326 = vst.msk [vmem:[%s242 + $0x1c8] sm:$0xff] %vm1268, %v1261
      %1327 = vst.msk [vmem:[%s242 + $0x1d0] sm:$0xff] %vm1268, %v1262
      %1328 = vst.msk [vmem:[%s242 + $0x1d8] sm:$0xff] %vm1268, %v1263
      %1329 = vst.msk [vmem:[%s242 + $0x1e0] sm:$0xff] %vm1268, %v1264
      %1330 = vst.msk [vmem:[%s242 + $0x1e8] sm:$0xff] %vm1268, %v1265
      %1331 = vst.msk [vmem:[%s242 + $0x1f0] sm:$0xff] %vm1268, %v1266
      %1332 = vst.msk [vmem:[%s242 + $0x1f8] sm:$0xff] %vm1268, %v1267
      %s1333 = smul.u32 64, %s19
      %p1334 = scmp.lt.s32.totalorder %s18, 2
      %s1335 = scalar_select %p1334, %s18, 2
      %p1336 = scmp.lt.s32.totalorder %s1333, 255
      %s1337 = scalar_select %p1336, %s1333, 255
      %s1338 = smul.addr %s1335, 256
      %s1339 = sadd.s32 %s1337, %s1338
      %s1340 = smul.addr %s1339, 8
      %s1341 = scalar_lea.vmem %s3, %s1340
      // Predicated region
      $region33: #{pose_guider_forward.18} parent=31 // pred_check
        %p1342 = pneg %p126
      $region34: #{pose_guider_forward.18} parent=31 // pred_check_branch
        %1344 = sbr.rel (%p1342) target = $region36
      $region35: #{pose_guider_forward.18} parent=31 // pred_region
        %s1345 = smul.u32 64, %s19
      $region36: #{pose_guider_forward.18} parent=31 // pred_fallthru
        _
    $region32: #{pose_guider_forward.18} parent=5 // pred_fallthru
      _
    %p1346 = scmp.le.s32.totalorder 2, %s9
    // Predicated region
    $region37: #{pose_guider_forward.18} parent=5 // pred_check
      %p1347 = pneg %p1346
    $region38: #{pose_guider_forward.18} parent=5 // pred_check_branch
      %1349 = sbr.rel (%p1347) target = $region40
    $region39: #{pose_guider_forward.18} parent=5 // pred_region
      %s1350 = ssub.s32 %s9, 2
      // Predicated region
      $region41: #{pose_guider_forward.18} parent=39 // pred_check
        %p1351 = pneg %p132
      $region42: #{pose_guider_forward.18} parent=39 // pred_check_branch
        %1353 = sbr.rel (%p1351) target = $region44
      $region43: #{pose_guider_forward.18} parent=39 // pred_region
        %s1354 = smul.u32 64, %s21
        %p1355 = scmp.lt.s32.totalorder %s20, 2
        %s1356 = scalar_select %p1355, %s20, 2
        %p1357 = scmp.lt.s32.totalorder %s1354, 255
        %s1358 = scalar_select %p1357, %s1354, 255
        %s1359 = smul.addr %s1356, 256
        %s1360 = sadd.s32 %s1358, %s1359
        %s1361 = smul.addr %s1360, 8
        %s1362 = scalar_lea.vmem %s3, %s1361
      $region44: #{pose_guider_forward.18} parent=39 // pred_fallthru
        _
    $region40: #{pose_guider_forward.18} parent=5 // pred_fallthru
      _
  $region6: #{pose_guider_forward.18} parent=0 // loop_footer
    %s13 = sadd.s32 1, %s9
  $region7: #{pose_guider_forward.18} parent=0 // loop_footer_branch
    %8 = sbr.rel target = $region3
  $region8: #{pose_guider_forward.18} parent=0 // loop_exit
    _

// kernel: pose_guider_forward.19
$region0: #{pose_guider_forward.19}
  #allocation0 [shape = 'u32[]', space=smem, size = 0x4, offset = 0x4, fixed_abs, tag = 'smem constant byte address 0x4 - core index']
  #allocation1 [shape = 'u32[144,128]{1,0:T(1,128)}', space=vmem, size = 0x12000, scoped, tag = 'internal scratch']
  %s0 = inlined_call_operand.vmem [shape: bf16[3,2048,72], index: 0, kind: input, shape index: {}]
  %s1 = inlined_call_operand.vmem [shape: bf16[3,72,8], index: 1, kind: input, shape index: {}]
  %s2 = inlined_call_operand.vmem [shape: f32[3,1,8], index: 2, kind: input, shape index: {}]
  %s3 = inlined_call_operand.vmem [shape: f32[3,2048,8], index: 3, kind: output, shape index: {}]
  %s4 = sld [smem:[#allocation0]]
  $region45: #{pose_guider_forward.19} parent=0
    _
  %s6 = ssub.s32 1, %s4
  %s7 = scalar_select 0, %s6, %s4
  loop: start=0, step=1, limit=14
  $region2: #{pose_guider_forward.19} parent=0 // loop_pre_header
    _
  $region3: #{pose_guider_forward.19} parent=0 // loop_header
    %s9 = sphi 0, %s13
    %p10 = scmp.ge.s32.totalorder %s9, 14
    %s16 = sphi 0, %s28
    %s17 = sphi 0, %s24
    %s18 = sphi 0, %s16
    %s19 = sphi 0, %s17
    %s20 = sphi 0, %s18
    %s21 = sphi 0, %s19
    %s33 = sphi 0, %s35
    %s36 = sphi 0, %s33
    %s37 = sphi 0, %s36
    %s53 = sphi 0, %s37
    %s59 = sphi 0, %s61
    %s62 = sphi 0, %s59
    %s63 = sphi 0, %s62
    %s79 = sphi 0, %s63
    %s85 = sphi 0, %s87
    %s88 = sphi 0, %s85
    %s89 = sphi 0, %s88
    %s105 = sphi 0, %s89
    %s113 = sphi 0, %s115
    %s116 = sphi 0, %s113
    %s117 = sphi 0, %s116
    %s133 = sphi 0, %s117
  $region4: #{pose_guider_forward.19} parent=0 // loop_header_branch
    %12 = sbr.rel (%p10) target = $region8
  $region5: #{pose_guider_forward.19} parent=0 // loop_body
    %s14 = ssub.s32 %s9, 1
    %s15 = ssub.s32 %s9, 2
    %s22 = sadd.s32 1, %s17
    %p23 = scmp.ge.s32.totalorder %s22, 4
    %s24 = scalar_select %p23, 0, %s22
    %s25 = sadd.s32 1, %s16
    %s26 = scalar_select %p23, %s25, %s16
    %p27 = scmp.ge.s32.totalorder %s26, 3
    %s28 = scalar_select %p27, 0, %s26
    %s29 = ssub.s32 %s16, %s28
    %s30 = ssub.s32 %s17, %s24
    %s31 = sor.u32 %s29, %s30
    %p32 = scmp.eq.s32.totalorder %s31, 0
    %s34 = sadd.s32 %s33, 1
    %s35 = scalar_select %p32, %s33, %s34
    %p38 = pneg %p32
    %p39 = scmp.eq.s32.totalorder %s9, 11
    %p40 = por %p38, %p39
    %p41 = scmp.ne.s32.totalorder %s33, %s36
    %p42 = scmp.eq.s32.totalorder %s9, 0
    %p43 = por %p41, %p42
    %p44 = scmp.ne.s32.totalorder %s33, %s36
    %p45 = scmp.eq.s32.totalorder %s14, 11
    %p46 = por %p44, %p45
    %p47 = scmp.ne.s32.totalorder %s36, %s37
    %p48 = scmp.eq.s32.totalorder %s14, 0
    %p49 = por %p47, %p48
    %p50 = scmp.ne.s32.totalorder %s36, %s37
    %p51 = scmp.eq.s32.totalorder %s15, 11
    %p52 = por %p50, %p51
    %p54 = scmp.ne.s32.totalorder %s37, %s53
    %p55 = scmp.eq.s32.totalorder %s15, 0
    %p56 = por %p54, %p55
    %s57 = ssub.s32 %s16, %s28
    %p58 = scmp.eq.s32.totalorder %s57, 0
    %s60 = sadd.s32 %s59, 1
    %s61 = scalar_select %p58, %s59, %s60
    %p64 = pneg %p58
    %p65 = scmp.eq.s32.totalorder %s9, 11
    %p66 = por %p64, %p65
    %p67 = scmp.ne.s32.totalorder %s59, %s62
    %p68 = scmp.eq.s32.totalorder %s9, 0
    %p69 = por %p67, %p68
    %p70 = scmp.ne.s32.totalorder %s59, %s62
    %p71 = scmp.eq.s32.totalorder %s14, 11
    %p72 = por %p70, %p71
    %p73 = scmp.ne.s32.totalorder %s62, %s63
    %p74 = scmp.eq.s32.totalorder %s14, 0
    %p75 = por %p73, %p74
    %p76 = scmp.ne.s32.totalorder %s62, %s63
    %p77 = scmp.eq.s32.totalorder %s15, 11
    %p78 = por %p76, %p77
    %p80 = scmp.ne.s32.totalorder %s63, %s79
    %p81 = scmp.eq.s32.totalorder %s15, 0
    %p82 = por %p80, %p81
    %s83 = ssub.s32 %s16, %s28
    %p84 = scmp.eq.s32.totalorder %s83, 0
    %s86 = sadd.s32 %s85, 1
    %s87 = scalar_select %p84, %s85, %s86
    %p90 = pneg %p84
    %p91 = scmp.eq.s32.totalorder %s9, 11
    %p92 = por %p90, %p91
    %p93 = scmp.ne.s32.totalorder %s85, %s88
    %p94 = scmp.eq.s32.totalorder %s9, 0
    %p95 = por %p93, %p94
    %p96 = scmp.ne.s32.totalorder %s85, %s88
    %p97 = scmp.eq.s32.totalorder %s14, 11
    %p98 = por %p96, %p97
    %p99 = scmp.ne.s32.totalorder %s88, %s89
    %p100 = scmp.eq.s32.totalorder %s14, 0
    %p101 = por %p99, %p100
    %p102 = scmp.ne.s32.totalorder %s88, %s89
    %p103 = scmp.eq.s32.totalorder %s15, 11
    %p104 = por %p102, %p103
    %p106 = scmp.ne.s32.totalorder %s89, %s105
    %p107 = scmp.eq.s32.totalorder %s15, 0
    %p108 = por %p106, %p107
    %s109 = ssub.s32 %s16, %s28
    %s110 = ssub.s32 %s17, %s24
    %s111 = sor.u32 %s109, %s110
    %p112 = scmp.eq.s32.totalorder %s111, 0
    %s114 = sadd.s32 %s113, 1
    %s115 = scalar_select %p112, %s113, %s114
    %p118 = pneg %p112
    %p119 = scmp.eq.s32.totalorder %s9, 11
    %p120 = por %p118, %p119
    %p121 = scmp.ne.s32.totalorder %s113, %s116
    %p122 = scmp.eq.s32.totalorder %s9, 0
    %p123 = por %p121, %p122
    %p124 = scmp.ne.s32.totalorder %s113, %s116
    %p125 = scmp.eq.s32.totalorder %s14, 11
    %p126 = por %p124, %p125
    %p127 = scmp.ne.s32.totalorder %s116, %s117
    %p128 = scmp.eq.s32.totalorder %s14, 0
    %p129 = por %p127, %p128
    %p130 = scmp.ne.s32.totalorder %s116, %s117
    %p131 = scmp.eq.s32.totalorder %s15, 11
    %p132 = por %p130, %p131
    %p134 = scmp.ne.s32.totalorder %s117, %s133
    %p135 = scmp.eq.s32.totalorder %s15, 0
    %p136 = por %p134, %p135
    %p137 = scmp.le.s32.totalorder 1, %s9
    %p138 = scmp.lt.s32.totalorder %s9, 13
    %p139 = pnand %p137, %p138
    %p140 = pneg %p139
    // Predicated region
    $region9: #{pose_guider_forward.19} parent=5 // pred_check
      _
    $region10: #{pose_guider_forward.19} parent=5 // pred_check_branch
      %142 = sbr.rel (%p139) target = $region12
    $region11: #{pose_guider_forward.19} parent=5 // pred_region
      %s143 = ssub.s32 %s9, 1
    $region12: #{pose_guider_forward.19} parent=5 // pred_fallthru
      _
    %p144 = scmp.lt.s32.totalorder %s9, 12
    // Predicated region
    $region13: #{pose_guider_forward.19} parent=5 // pred_check
      %p145 = pneg %p144
    $region14: #{pose_guider_forward.19} parent=5 // pred_check_branch
      %147 = sbr.rel (%p145) target = $region16
    $region15: #{pose_guider_forward.19} parent=5 // pred_region
      // Predicated region
      $region17: #{pose_guider_forward.19} parent=15 // pred_check
        %p148 = pneg %p43
      $region18: #{pose_guider_forward.19} parent=15 // pred_check_branch
        %150 = sbr.rel (%p148) target = $region20
      $region19: #{pose_guider_forward.19} parent=15 // pred_region
        %s151 = smul.u32 64, %s17
        %p152 = scmp.lt.s32.totalorder %s16, 2
        %s153 = scalar_select %p152, %s16, 2
        %p154 = scmp.lt.s32.totalorder %s151, 255
        %s155 = scalar_select %p154, %s151, 255
        %s156 = smul.addr %s153, 256
        %s157 = sadd.s32 %s155, %s156
        %s158 = smul.addr %s157, 4
        %s159 = scalar_lea.vmem %s0, %s158
        %s160 = smul.u32 64, %s17
      $region20: #{pose_guider_forward.19} parent=15 // pred_fallthru
        _
      // Predicated region
      $region21: #{pose_guider_forward.19} parent=15 // pred_check
        %p161 = pneg %p69
      $region22: #{pose_guider_forward.19} parent=15 // pred_check_branch
        %163 = sbr.rel (%p161) target = $region24
      $region23: #{pose_guider_forward.19} parent=15 // pred_region
        %p164 = scmp.lt.s32.totalorder %s16, 2
        %s165 = scalar_select %p164, %s16, 2
        %s166 = smul.addr %s165, 9
        %s167 = smul.addr %s166, 4
        %s168 = scalar_lea.vmem %s1, %s167
      $region24: #{pose_guider_forward.19} parent=15 // pred_fallthru
        _
      // Predicated region
      $region25: #{pose_guider_forward.19} parent=15 // pred_check
        %p169 = pneg %p95
      $region26: #{pose_guider_forward.19} parent=15 // pred_check_branch
        %171 = sbr.rel (%p169) target = $region28
      $region27: #{pose_guider_forward.19} parent=15 // pred_region
        %p172 = scmp.lt.s32.totalorder %s16, 2
        %s173 = scalar_select %p172, %s16, 2
        %s174 = scalar_lea.vmem %s2, %s173
      $region28: #{pose_guider_forward.19} parent=15 // pred_fallthru
        _
    $region16: #{pose_guider_forward.19} parent=5 // pred_fallthru
      _
    %p175 = scmp.le.s32.totalorder 1, %s9
    %p176 = scmp.lt.s32.totalorder %s9, 13
    %p177 = pnand %p175, %p176
    %p178 = pneg %p177
    // Predicated region
    $region29: #{pose_guider_forward.19} parent=5 // pred_check
      _
    $region30: #{pose_guider_forward.19} parent=5 // pred_check_branch
      %180 = sbr.rel (%p177) target = $region32
    $region31: #{pose_guider_forward.19} parent=5 // pred_region
      %s181 = ssub.s32 %s9, 1
      %s182 = smul.u32 64, %s19
      %p183 = scmp.lt.s32.totalorder %s18, 2
      %s184 = scalar_select %p183, %s18, 2
      %p185 = scmp.lt.s32.totalorder %s182, 255
      %s186 = scalar_select %p185, %s182, 255
      %s187 = smul.addr %s184, 256
      %s188 = sadd.s32 %s186, %s187
      %s189 = smul.addr %s188, 4
      %s190 = scalar_lea.vmem %s0, %s189
      %p191 = pneg %p49
      %p192 = pneg %p46
      %p193 = scmp.lt.s32.totalorder %s18, 2
      %s194 = scalar_select %p193, %s18, 2
      %s195 = smul.addr %s194, 9
      %s196 = smul.addr %s195, 4
      %s197 = scalar_lea.vmem %s1, %s196
      %p198 = pneg %p75
      %p199 = pneg %p72
      %p200 = scmp.lt.s32.totalorder %s18, 2
      %s201 = scalar_select %p200, %s18, 2
      %s202 = scalar_lea.vmem %s2, %s201
      %p203 = pneg %p101
      %p204 = pneg %p98
      %p205 = pneg %p129
      %p206 = pneg %p126
      %s207 = smul.u32 64, %s19
      %p208 = scmp.lt.s32.totalorder %s18, 2
      %s209 = scalar_select %p208, %s18, 2
      %p210 = scmp.lt.s32.totalorder %s207, 255
      %s211 = scalar_select %p210, %s207, 255
      %s212 = smul.addr %s209, 256
      %s213 = sadd.s32 %s211, %s212
      %s214 = smul.addr %s213, 8
      %s215 = scalar_lea.vmem %s3, %s214
      %s216 = smul.u32 64, %s19
      %p217 = scmp.lt.s32.totalorder %s18, 2
      %s218 = scalar_select %p217, %s18, 2
      %p219 = scmp.lt.s32.totalorder %s216, 255
      %s220 = scalar_select %p219, %s216, 255
      %s221 = smul.addr %s218, 256
      %s222 = sadd.s32 %s220, %s221
      %s223 = smul.addr %s222, 4
      %s224 = scalar_lea.vmem %s0, %s223
      %s225 = smul.u32 64, %s19
      %p226 = scmp.lt.s32.totalorder %s18, 2
      %s227 = scalar_select %p226, %s18, 2
      %s228 = smul.addr %s227, 9
      %s229 = smul.addr %s228, 4
      %s230 = scalar_lea.vmem %s1, %s229
      %p231 = scmp.lt.s32.totalorder %s18, 2
      %s232 = scalar_select %p231, %s18, 2
      %s233 = scalar_lea.vmem %s2, %s232
      %s234 = smul.u32 64, %s19
      %p235 = scmp.lt.s32.totalorder %s18, 2
      %s236 = scalar_select %p235, %s18, 2
      %p237 = scmp.lt.s32.totalorder %s234, 255
      %s238 = scalar_select %p237, %s234, 255
      %s239 = smul.addr %s236, 256
      %s240 = sadd.s32 %s238, %s239
      %s241 = smul.addr %s240, 8
      %s242 = scalar_lea.vmem %s3, %s241
      %s243 = smul.u32 64, %s19
      %v245 = vld [vmem:[%s224] sm:$0xf]
      %v246 = vld [vmem:[%s224 + $0x4] sm:$0xf]
      %v247 = vld [vmem:[%s224 + $0x8] sm:$0xf]
      %v248 = vld [vmem:[%s224 + $0xc] sm:$0xf]
      %v249 = vld [vmem:[%s224 + $0x10] sm:$0xf]
      %v250 = vld [vmem:[%s224 + $0x14] sm:$0xf]
      %v251 = vld [vmem:[%s224 + $0x18] sm:$0xf]
      %v252 = vld [vmem:[%s224 + $0x1c] sm:$0xf]
      %v253 = vld [vmem:[%s224 + $0x20] sm:$0xf]
      %v254 = vld [vmem:[%s224 + $0x24] sm:$0xf]
      %v255 = vld [vmem:[%s224 + $0x28] sm:$0xf]
      %v256 = vld [vmem:[%s224 + $0x2c] sm:$0xf]
      %v257 = vld [vmem:[%s224 + $0x30] sm:$0xf]
      %v258 = vld [vmem:[%s224 + $0x34] sm:$0xf]
      %v259 = vld [vmem:[%s224 + $0x38] sm:$0xf]
      %v260 = vld [vmem:[%s224 + $0x3c] sm:$0xf]
      %v261 = vld [vmem:[%s224 + $0x40] sm:$0xf]
      %v262 = vld [vmem:[%s224 + $0x44] sm:$0xf]
      %v263 = vld [vmem:[%s224 + $0x48] sm:$0xf]
      %v264 = vld [vmem:[%s224 + $0x4c] sm:$0xf]
      %v265 = vld [vmem:[%s224 + $0x50] sm:$0xf]
      %v266 = vld [vmem:[%s224 + $0x54] sm:$0xf]
      %v267 = vld [vmem:[%s224 + $0x58] sm:$0xf]
      %v268 = vld [vmem:[%s224 + $0x5c] sm:$0xf]
      %v269 = vld [vmem:[%s224 + $0x60] sm:$0xf]
      %v270 = vld [vmem:[%s224 + $0x64] sm:$0xf]
      %v271 = vld [vmem:[%s224 + $0x68] sm:$0xf]
      %v272 = vld [vmem:[%s224 + $0x6c] sm:$0xf]
      %v273 = vld [vmem:[%s224 + $0x70] sm:$0xf]
      %v274 = vld [vmem:[%s224 + $0x74] sm:$0xf]
      %v275 = vld [vmem:[%s224 + $0x78] sm:$0xf]
      %v276 = vld [vmem:[%s224 + $0x7c] sm:$0xf]
      %v277 = vld [vmem:[%s224 + $0x80] sm:$0xf]
      %v278 = vld [vmem:[%s224 + $0x84] sm:$0xf]
      %v279 = vld [vmem:[%s224 + $0x88] sm:$0xf]
      %v280 = vld [vmem:[%s224 + $0x8c] sm:$0xf]
      %v281 = vld [vmem:[%s224 + $0x90] sm:$0xf]
      %v282 = vld [vmem:[%s224 + $0x94] sm:$0xf]
      %v283 = vld [vmem:[%s224 + $0x98] sm:$0xf]
      %v284 = vld [vmem:[%s224 + $0x9c] sm:$0xf]
      %v285 = vld [vmem:[%s224 + $0xa0] sm:$0xf]
      %v286 = vld [vmem:[%s224 + $0xa4] sm:$0xf]
      %v287 = vld [vmem:[%s224 + $0xa8] sm:$0xf]
      %v288 = vld [vmem:[%s224 + $0xac] sm:$0xf]
      %v289 = vld [vmem:[%s224 + $0xb0] sm:$0xf]
      %v290 = vld [vmem:[%s224 + $0xb4] sm:$0xf]
      %v291 = vld [vmem:[%s224 + $0xb8] sm:$0xf]
      %v292 = vld [vmem:[%s224 + $0xbc] sm:$0xf]
      %v293 = vld [vmem:[%s224 + $0xc0] sm:$0xf]
      %v294 = vld [vmem:[%s224 + $0xc4] sm:$0xf]
      %v295 = vld [vmem:[%s224 + $0xc8] sm:$0xf]
      %v296 = vld [vmem:[%s224 + $0xcc] sm:$0xf]
      %v297 = vld [vmem:[%s224 + $0xd0] sm:$0xf]
      %v298 = vld [vmem:[%s224 + $0xd4] sm:$0xf]
      %v299 = vld [vmem:[%s224 + $0xd8] sm:$0xf]
      %v300 = vld [vmem:[%s224 + $0xdc] sm:$0xf]
      %v301 = vld [vmem:[%s224 + $0xe0] sm:$0xf]
      %v302 = vld [vmem:[%s224 + $0xe4] sm:$0xf]
      %v303 = vld [vmem:[%s224 + $0xe8] sm:$0xf]
      %v304 = vld [vmem:[%s224 + $0xec] sm:$0xf]
      %v305 = vld [vmem:[%s224 + $0xf0] sm:$0xf]
      %v306 = vld [vmem:[%s224 + $0xf4] sm:$0xf]
      %v307 = vld [vmem:[%s224 + $0xf8] sm:$0xf]
      %v308 = vld [vmem:[%s224 + $0xfc] sm:$0xf]
      %v309 = vld [vmem:[%s230] sm:$0xf]
      %v310 = vld [vmem:[%s230 + $0x4] sm:$0xf]
      %v311 = vld [vmem:[%s230 + $0x8] sm:$0xf]
      %v312 = vld [vmem:[%s230 + $0xc] sm:$0xf]
      %v313 = vld [vmem:[%s230 + $0x10] sm:$0xf]
      %v314 = vld [vmem:[%s230 + $0x14] sm:$0xf]
      %v315 = vld [vmem:[%s230 + $0x18] sm:$0xf]
      %v316 = vld [vmem:[%s230 + $0x1c] sm:$0xf]
      %v317 = vld [vmem:[%s230 + $0x20] sm:$0xf]
      %v318 = vld [vmem:[%s233] sm:$0x1]
      %v320 = vlaneseq
      %v321 = vshrl.u32 %v320, 7
      %v322 = vsub.s32 0, %v321
      %v323 = vrot.slane %v318, %v322
      %v389 = vunpack.c.l.b16 %v245
      %v390 = vunpack.c.l.b16 %v246
      %v391 = vunpack.c.l.b16 %v247
      %v392 = vunpack.c.l.b16 %v248
      %v393 = vunpack.c.l.b16 %v249
      %v394 = vunpack.c.l.b16 %v250
      %v395 = vunpack.c.l.b16 %v251
      %v396 = vunpack.c.l.b16 %v252
      %v397 = vunpack.c.l.b16 %v253
      %v398 = vunpack.c.l.b16 %v254
      %v399 = vunpack.c.l.b16 %v255
      %v400 = vunpack.c.l.b16 %v256
      %v401 = vunpack.c.l.b16 %v257
      %v402 = vunpack.c.l.b16 %v258
      %v403 = vunpack.c.l.b16 %v259
      %v404 = vunpack.c.l.b16 %v260
      %v405 = vunpack.c.l.b16 %v261
      %v406 = vunpack.c.l.b16 %v262
      %v407 = vunpack.c.l.b16 %v263
      %v408 = vunpack.c.l.b16 %v264
      %v409 = vunpack.c.l.b16 %v265
      %v410 = vunpack.c.l.b16 %v266
      %v411 = vunpack.c.l.b16 %v267
      %v412 = vunpack.c.l.b16 %v268
      %v413 = vunpack.c.l.b16 %v269
      %v414 = vunpack.c.l.b16 %v270
      %v415 = vunpack.c.l.b16 %v271
      %v416 = vunpack.c.l.b16 %v272
      %v417 = vunpack.c.l.b16 %v273
      %v418 = vunpack.c.l.b16 %v274
      %v419 = vunpack.c.l.b16 %v275
      %v420 = vunpack.c.l.b16 %v276
      %v421 = vunpack.c.l.b16 %v277
      %v422 = vunpack.c.l.b16 %v278
      %v423 = vunpack.c.l.b16 %v279
      %v424 = vunpack.c.l.b16 %v280
      %v425 = vunpack.c.l.b16 %v281
      %v426 = vunpack.c.l.b16 %v282
      %v427 = vunpack.c.l.b16 %v283
      %v428 = vunpack.c.l.b16 %v284
      %v429 = vunpack.c.l.b16 %v285
      %v430 = vunpack.c.l.b16 %v286
      %v431 = vunpack.c.l.b16 %v287
      %v432 = vunpack.c.l.b16 %v288
      %v433 = vunpack.c.l.b16 %v289
      %v434 = vunpack.c.l.b16 %v290
      %v435 = vunpack.c.l.b16 %v291
      %v436 = vunpack.c.l.b16 %v292
      %v437 = vunpack.c.l.b16 %v293
      %v438 = vunpack.c.l.b16 %v294
      %v439 = vunpack.c.l.b16 %v295
      %v440 = vunpack.c.l.b16 %v296
      %v441 = vunpack.c.l.b16 %v297
      %v442 = vunpack.c.l.b16 %v298
      %v443 = vunpack.c.l.b16 %v299
      %v444 = vunpack.c.l.b16 %v300
      %v445 = vunpack.c.l.b16 %v301
      %v446 = vunpack.c.l.b16 %v302
      %v447 = vunpack.c.l.b16 %v303
      %v448 = vunpack.c.l.b16 %v304
      %v449 = vunpack.c.l.b16 %v305
      %v450 = vunpack.c.l.b16 %v306
      %v451 = vunpack.c.l.b16 %v307
      %v452 = vunpack.c.l.b16 %v308
      %v453 = vpack.c.b16 %v390, %v389
      %v454 = vpack.c.b16 %v392, %v391
      %v455 = vpack.c.b16 %v394, %v393
      %v456 = vpack.c.b16 %v396, %v395
      %v457 = vpack.c.b16 %v398, %v397
      %v458 = vpack.c.b16 %v400, %v399
      %v459 = vpack.c.b16 %v402, %v401
      %v460 = vpack.c.b16 %v404, %v403
      %v461 = vpack.c.b16 %v406, %v405
      %v462 = vpack.c.b16 %v408, %v407
      %v463 = vpack.c.b16 %v410, %v409
      %v464 = vpack.c.b16 %v412, %v411
      %v465 = vpack.c.b16 %v414, %v413
      %v466 = vpack.c.b16 %v416, %v415
      %v467 = vpack.c.b16 %v418, %v417
      %v468 = vpack.c.b16 %v420, %v419
      %v469 = vpack.c.b16 %v422, %v421
      %v470 = vpack.c.b16 %v424, %v423
      %v471 = vpack.c.b16 %v426, %v425
      %v472 = vpack.c.b16 %v428, %v427
      %v473 = vpack.c.b16 %v430, %v429
      %v474 = vpack.c.b16 %v432, %v431
      %v475 = vpack.c.b16 %v434, %v433
      %v476 = vpack.c.b16 %v436, %v435
      %v477 = vpack.c.b16 %v438, %v437
      %v478 = vpack.c.b16 %v440, %v439
      %v479 = vpack.c.b16 %v442, %v441
      %v480 = vpack.c.b16 %v444, %v443
      %v481 = vpack.c.b16 %v446, %v445
      %v482 = vpack.c.b16 %v448, %v447
      %v483 = vpack.c.b16 %v450, %v449
      %v484 = vpack.c.b16 %v452, %v451
      %v494 = vunpack.c.l.b16 %v309
      %v495 = vunpack.c.l.b16 %v310
      %v496 = vunpack.c.l.b16 %v311
      %v497 = vunpack.c.l.b16 %v312
      %v498 = vunpack.c.l.b16 %v313
      %v499 = vunpack.c.l.b16 %v314
      %v500 = vunpack.c.l.b16 %v315
      %v501 = vunpack.c.l.b16 %v316
      %v502 = vunpack.c.l.b16 %v317
      %v503 = vpack.c.b16 %v495, %v494
      %v504 = vpack.c.b16 %v497, %v496
      %v505 = vpack.c.b16 %v499, %v498
      %v506 = vpack.c.b16 %v501, %v500
      %v507 = vpack.c.b16 %v502, %v502
      %vm512 = vcmask 588800
      %v514 = vsel %vm512, %v453, 0
      %v517 = vsel %vm512, %v454, 0
      %v520 = vsel %vm512, %v455, 0
      %v523 = vsel %vm512, %v456, 0
      %v526 = vsel %vm512, %v457, 0
      %v529 = vsel %vm512, %v458, 0
      %v532 = vsel %vm512, %v459, 0
      %v535 = vsel %vm512, %v460, 0
      %v538 = vsel %vm512, %v461, 0
      %v541 = vsel %vm512, %v462, 0
      %v544 = vsel %vm512, %v463, 0
      %v547 = vsel %vm512, %v464, 0
      %v550 = vsel %vm512, %v465, 0
      %v553 = vsel %vm512, %v466, 0
      %v556 = vsel %vm512, %v467, 0
      %v559 = vsel %vm512, %v468, 0
      %v562 = vsel %vm512, %v469, 0
      %v565 = vsel %vm512, %v470, 0
      %v568 = vsel %vm512, %v471, 0
      %v571 = vsel %vm512, %v472, 0
      %v574 = vsel %vm512, %v473, 0
      %v577 = vsel %vm512, %v474, 0
      %v580 = vsel %vm512, %v475, 0
      %v583 = vsel %vm512, %v476, 0
      %v586 = vsel %vm512, %v477, 0
      %v589 = vsel %vm512, %v478, 0
      %v592 = vsel %vm512, %v479, 0
      %v595 = vsel %vm512, %v480, 0
      %v598 = vsel %vm512, %v481, 0
      %v601 = vsel %vm512, %v482, 0
      %v604 = vsel %vm512, %v483, 0
      %v607 = vsel %vm512, %v484, 0
      %vm609 = vcmask 1043456
      %v611 = vsel %vm609, %v507, 0
      %613 = vmatprep.subr.bf16.mxu0 0
      %614 = vmatpush1.bf16.msra.mxu0 0
      %615 = vmatprep.subr.bf16.mxu0 0
      %616 = vmatpush1.bf16.msra.mxu0 0
      %617 = vmatprep.subr.bf16.mxu0 0
      %618 = vmatpush1.bf16.msra.mxu0 0
      %619 = vmatprep.subr.bf16.mxu0 0
      %620 = vmatpush1.bf16.msra.mxu0 %v611
      %621 = vmatprep.subr.bf16.mxu0 0
      %622 = vmatpush1.bf16.msra.mxu0 %v506
      %623 = vmatprep.subr.bf16.mxu0 0
      %624 = vmatpush1.bf16.msra.mxu0 %v505
      %625 = vmatprep.subr.bf16.mxu0 0
      %626 = vmatpush1.bf16.msra.mxu0 %v504
      %627 = vmatprep.subr.bf16.mxu0 0
      %628 = vmatpush1.bf16.msra.mxu0 %v503
      %629 = vmatprep.subr.bf16.mxu0 0
      %630 = vmatpush2.bf16.msra.mxu0 0
      %631 = vmatprep.subr.bf16.mxu0 0
      %632 = vmatpush2.bf16.msra.mxu0 0
      %633 = vmatprep.subr.bf16.mxu0 0
      %634 = vmatpush2.bf16.msra.mxu0 0
      %635 = vmatprep.subr.bf16.mxu0 0
      %636 = vmatpush2.bf16.msra.mxu0 0
      %637 = vmatprep.subr.bf16.mxu0 0
      %638 = vmatpush2.bf16.msra.mxu0 0
      %639 = vmatprep.subr.bf16.mxu0 0
      %640 = vmatpush2.bf16.msra.mxu0 0
      %641 = vmatprep.subr.bf16.mxu0 0
      %642 = vmatpush2.bf16.msra.mxu0 0
      %643 = vmatprep.subr.bf16.mxu0 0
      %644 = vmatpush2.bf16.msra.mxu0 0
      %645 = vmatprep.mubr.bf16.mxu0 0
      %646 = vmatmul.mubr.bf16.gmra.mxu0 %v514
      %v647 = vpop.f32.mrf.mxu0
      %v648 = vadd.f32 %v323, %v647
      %v649 = vpop.f32.mrf.mxu0
      %v650 = vpop.f32.mrf.mxu0
      %v651 = vadd.f32 %v323, %v650
      %v652 = vpop.f32.mrf.mxu0
      %653 = vmatprep.mubr.bf16.mxu0 0
      %654 = vmatmul.mubr.bf16.gmra.mxu0 %v517
      %v655 = vpop.f32.mrf.mxu0
      %v656 = vadd.f32 %v323, %v655
      %v657 = vpop.f32.mrf.mxu0
      %v658 = vpop.f32.mrf.mxu0
      %v659 = vadd.f32 %v323, %v658
      %v660 = vpop.f32.mrf.mxu0
      %661 = vmatprep.mubr.bf16.mxu0 0
      %662 = vmatmul.mubr.bf16.gmra.mxu0 %v520
      %v663 = vpop.f32.mrf.mxu0
      %v664 = vadd.f32 %v323, %v663
      %v665 = vpop.f32.mrf.mxu0
      %v666 = vpop.f32.mrf.mxu0
      %v667 = vadd.f32 %v323, %v666
      %v668 = vpop.f32.mrf.mxu0
      %669 = vmatprep.mubr.bf16.mxu0 0
      %670 = vmatmul.mubr.bf16.gmra.mxu0 %v523
      %v671 = vpop.f32.mrf.mxu0
      %v672 = vadd.f32 %v323, %v671
      %v673 = vpop.f32.mrf.mxu0
      %v674 = vpop.f32.mrf.mxu0
      %v675 = vadd.f32 %v323, %v674
      %v676 = vpop.f32.mrf.mxu0
      %677 = vmatprep.mubr.bf16.mxu0 0
      %678 = vmatmul.mubr.bf16.gmra.mxu0 %v526
      %v679 = vpop.f32.mrf.mxu0
      %v680 = vadd.f32 %v323, %v679
      %v681 = vpop.f32.mrf.mxu0
      %v682 = vpop.f32.mrf.mxu0
      %v683 = vadd.f32 %v323, %v682
      %v684 = vpop.f32.mrf.mxu0
      %685 = vmatprep.mubr.bf16.mxu0 0
      %686 = vmatmul.mubr.bf16.gmra.mxu0 %v529
      %v687 = vpop.f32.mrf.mxu0
      %v688 = vadd.f32 %v323, %v687
      %v689 = vpop.f32.mrf.mxu0
      %v690 = vpop.f32.mrf.mxu0
      %v691 = vadd.f32 %v323, %v690
      %v692 = vpop.f32.mrf.mxu0
      %693 = vmatprep.mubr.bf16.mxu0 0
      %694 = vmatmul.mubr.bf16.gmra.mxu0 %v532
      %v695 = vpop.f32.mrf.mxu0
      %v696 = vadd.f32 %v323, %v695
      %v697 = vpop.f32.mrf.mxu0
      %v698 = vpop.f32.mrf.mxu0
      %v699 = vadd.f32 %v323, %v698
      %v700 = vpop.f32.mrf.mxu0
      %701 = vmatprep.mubr.bf16.mxu0 0
      %702 = vmatmul.mubr.bf16.gmra.mxu0 %v535
      %v703 = vpop.f32.mrf.mxu0
      %v704 = vadd.f32 %v323, %v703
      %v705 = vpop.f32.mrf.mxu0
      %v706 = vpop.f32.mrf.mxu0
      %v707 = vadd.f32 %v323, %v706
      %v708 = vpop.f32.mrf.mxu0
      %709 = vmatprep.mubr.bf16.mxu0 0
      %710 = vmatmul.mubr.bf16.gmra.mxu0 %v538
      %v711 = vpop.f32.mrf.mxu0
      %v712 = vadd.f32 %v323, %v711
      %v713 = vpop.f32.mrf.mxu0
      %v714 = vpop.f32.mrf.mxu0
      %v715 = vadd.f32 %v323, %v714
      %v716 = vpop.f32.mrf.mxu0
      %717 = vmatprep.mubr.bf16.mxu0 0
      %718 = vmatmul.mubr.bf16.gmra.mxu0 %v541
      %v719 = vpop.f32.mrf.mxu0
      %v720 = vadd.f32 %v323, %v719
      %v721 = vpop.f32.mrf.mxu0
      %v722 = vpop.f32.mrf.mxu0
      %v723 = vadd.f32 %v323, %v722
      %v724 = vpop.f32.mrf.mxu0
      %725 = vmatprep.mubr.bf16.mxu0 0
      %726 = vmatmul.mubr.bf16.gmra.mxu0 %v544
      %v727 = vpop.f32.mrf.mxu0
      %v728 = vadd.f32 %v323, %v727
      %v729 = vpop.f32.mrf.mxu0
      %v730 = vpop.f32.mrf.mxu0
      %v731 = vadd.f32 %v323, %v730
      %v732 = vpop.f32.mrf.mxu0
      %733 = vmatprep.mubr.bf16.mxu0 0
      %734 = vmatmul.mubr.bf16.gmra.mxu0 %v547
      %v735 = vpop.f32.mrf.mxu0
      %v736 = vadd.f32 %v323, %v735
      %v737 = vpop.f32.mrf.mxu0
      %v738 = vpop.f32.mrf.mxu0
      %v739 = vadd.f32 %v323, %v738
      %v740 = vpop.f32.mrf.mxu0
      %741 = vmatprep.mubr.bf16.mxu0 0
      %742 = vmatmul.mubr.bf16.gmra.mxu0 %v550
      %v743 = vpop.f32.mrf.mxu0
      %v744 = vadd.f32 %v323, %v743
      %v745 = vpop.f32.mrf.mxu0
      %v746 = vpop.f32.mrf.mxu0
      %v747 = vadd.f32 %v323, %v746
      %v748 = vpop.f32.mrf.mxu0
      %749 = vmatprep.mubr.bf16.mxu0 0
      %750 = vmatmul.mubr.bf16.gmra.mxu0 %v553
      %v751 = vpop.f32.mrf.mxu0
      %v752 = vadd.f32 %v323, %v751
      %v753 = vpop.f32.mrf.mxu0
      %v754 = vpop.f32.mrf.mxu0
      %v755 = vadd.f32 %v323, %v754
      %v756 = vpop.f32.mrf.mxu0
      %757 = vmatprep.mubr.bf16.mxu0 0
      %758 = vmatmul.mubr.bf16.gmra.mxu0 %v556
      %v759 = vpop.f32.mrf.mxu0
      %v760 = vadd.f32 %v323, %v759
      %v761 = vpop.f32.mrf.mxu0
      %v762 = vpop.f32.mrf.mxu0
      %v763 = vadd.f32 %v323, %v762
      %v764 = vpop.f32.mrf.mxu0
      %765 = vmatprep.mubr.bf16.mxu0 0
      %766 = vmatmul.mubr.bf16.gmra.mxu0 %v559
      %v767 = vpop.f32.mrf.mxu0
      %v768 = vadd.f32 %v323, %v767
      %v769 = vpop.f32.mrf.mxu0
      %v770 = vpop.f32.mrf.mxu0
      %v771 = vadd.f32 %v323, %v770
      %v772 = vpop.f32.mrf.mxu0
      %773 = vmatprep.mubr.bf16.mxu0 0
      %774 = vmatmul.mubr.bf16.gmra.mxu0 %v562
      %v775 = vpop.f32.mrf.mxu0
      %v776 = vadd.f32 %v323, %v775
      %v777 = vpop.f32.mrf.mxu0
      %v778 = vpop.f32.mrf.mxu0
      %v779 = vadd.f32 %v323, %v778
      %v780 = vpop.f32.mrf.mxu0
      %781 = vmatprep.mubr.bf16.mxu0 0
      %782 = vmatmul.mubr.bf16.gmra.mxu0 %v565
      %v783 = vpop.f32.mrf.mxu0
      %v784 = vadd.f32 %v323, %v783
      %v785 = vpop.f32.mrf.mxu0
      %v786 = vpop.f32.mrf.mxu0
      %v787 = vadd.f32 %v323, %v786
      %v788 = vpop.f32.mrf.mxu0
      %789 = vmatprep.mubr.bf16.mxu0 0
      %790 = vmatmul.mubr.bf16.gmra.mxu0 %v568
      %v791 = vpop.f32.mrf.mxu0
      %v792 = vadd.f32 %v323, %v791
      %v793 = vpop.f32.mrf.mxu0
      %v794 = vpop.f32.mrf.mxu0
      %v795 = vadd.f32 %v323, %v794
      %v796 = vpop.f32.mrf.mxu0
      %797 = vmatprep.mubr.bf16.mxu0 0
      %798 = vmatmul.mubr.bf16.gmra.mxu0 %v571
      %v799 = vpop.f32.mrf.mxu0
      %v800 = vadd.f32 %v323, %v799
      %v801 = vpop.f32.mrf.mxu0
      %v802 = vpop.f32.mrf.mxu0
      %v803 = vadd.f32 %v323, %v802
      %v804 = vpop.f32.mrf.mxu0
      %805 = vmatprep.mubr.bf16.mxu0 0
      %806 = vmatmul.mubr.bf16.gmra.mxu0 %v574
      %v807 = vpop.f32.mrf.mxu0
      %v808 = vadd.f32 %v323, %v807
      %v809 = vpop.f32.mrf.mxu0
      %v810 = vpop.f32.mrf.mxu0
      %v811 = vadd.f32 %v323, %v810
      %v812 = vpop.f32.mrf.mxu0
      %813 = vmatprep.mubr.bf16.mxu0 0
      %814 = vmatmul.mubr.bf16.gmra.mxu0 %v577
      %v815 = vpop.f32.mrf.mxu0
      %v816 = vadd.f32 %v323, %v815
      %v817 = vpop.f32.mrf.mxu0
      %v818 = vpop.f32.mrf.mxu0
      %v819 = vadd.f32 %v323, %v818
      %v820 = vpop.f32.mrf.mxu0
      %821 = vmatprep.mubr.bf16.mxu0 0
      %822 = vmatmul.mubr.bf16.gmra.mxu0 %v580
      %v823 = vpop.f32.mrf.mxu0
      %v824 = vadd.f32 %v323, %v823
      %v825 = vpop.f32.mrf.mxu0
      %v826 = vpop.f32.mrf.mxu0
      %v827 = vadd.f32 %v323, %v826
      %v828 = vpop.f32.mrf.mxu0
      %829 = vmatprep.mubr.bf16.mxu0 0
      %830 = vmatmul.mubr.bf16.gmra.mxu0 %v583
      %v831 = vpop.f32.mrf.mxu0
      %v832 = vadd.f32 %v323, %v831
      %v833 = vpop.f32.mrf.mxu0
      %v834 = vpop.f32.mrf.mxu0
      %v835 = vadd.f32 %v323, %v834
      %v836 = vpop.f32.mrf.mxu0
      %837 = vmatprep.mubr.bf16.mxu0 0
      %838 = vmatmul.mubr.bf16.gmra.mxu0 %v586
      %v839 = vpop.f32.mrf.mxu0
      %v840 = vadd.f32 %v323, %v839
      %v841 = vpop.f32.mrf.mxu0
      %v842 = vpop.f32.mrf.mxu0
      %v843 = vadd.f32 %v323, %v842
      %v844 = vpop.f32.mrf.mxu0
      %845 = vmatprep.mubr.bf16.mxu0 0
      %846 = vmatmul.mubr.bf16.gmra.mxu0 %v589
      %v847 = vpop.f32.mrf.mxu0
      %v848 = vadd.f32 %v323, %v847
      %v849 = vpop.f32.mrf.mxu0
      %v850 = vpop.f32.mrf.mxu0
      %v851 = vadd.f32 %v323, %v850
      %v852 = vpop.f32.mrf.mxu0
      %853 = vmatprep.mubr.bf16.mxu0 0
      %854 = vmatmul.mubr.bf16.gmra.mxu0 %v592
      %v855 = vpop.f32.mrf.mxu0
      %v856 = vadd.f32 %v323, %v855
      %v857 = vpop.f32.mrf.mxu0
      %v858 = vpop.f32.mrf.mxu0
      %v859 = vadd.f32 %v323, %v858
      %v860 = vpop.f32.mrf.mxu0
      %861 = vmatprep.mubr.bf16.mxu0 0
      %862 = vmatmul.mubr.bf16.gmra.mxu0 %v595
      %v863 = vpop.f32.mrf.mxu0
      %v864 = vadd.f32 %v323, %v863
      %v865 = vpop.f32.mrf.mxu0
      %v866 = vpop.f32.mrf.mxu0
      %v867 = vadd.f32 %v323, %v866
      %v868 = vpop.f32.mrf.mxu0
      %869 = vmatprep.mubr.bf16.mxu0 0
      %870 = vmatmul.mubr.bf16.gmra.mxu0 %v598
      %v871 = vpop.f32.mrf.mxu0
      %v872 = vadd.f32 %v323, %v871
      %v873 = vpop.f32.mrf.mxu0
      %v874 = vpop.f32.mrf.mxu0
      %v875 = vadd.f32 %v323, %v874
      %v876 = vpop.f32.mrf.mxu0
      %877 = vmatprep.mubr.bf16.mxu0 0
      %878 = vmatmul.mubr.bf16.gmra.mxu0 %v601
      %v879 = vpop.f32.mrf.mxu0
      %v880 = vadd.f32 %v323, %v879
      %v881 = vpop.f32.mrf.mxu0
      %v882 = vpop.f32.mrf.mxu0
      %v883 = vadd.f32 %v323, %v882
      %v884 = vpop.f32.mrf.mxu0
      %885 = vmatprep.mubr.bf16.mxu0 0
      %886 = vmatmul.mubr.bf16.gmra.mxu0 %v604
      %v887 = vpop.f32.mrf.mxu0
      %v888 = vadd.f32 %v323, %v887
      %v889 = vpop.f32.mrf.mxu0
      %v890 = vpop.f32.mrf.mxu0
      %v891 = vadd.f32 %v323, %v890
      %v892 = vpop.f32.mrf.mxu0
      %893 = vmatprep.mubr.bf16.mxu0 0
      %894 = vmatmul.mubr.bf16.gmra.mxu0 %v607
      %v895 = vpop.f32.mrf.mxu0
      %v896 = vadd.f32 %v323, %v895
      %v897 = vpop.f32.mrf.mxu0
      %v898 = vpop.f32.mrf.mxu0
      %v899 = vadd.f32 %v323, %v898
      %v900 = vpop.f32.mrf.mxu0
      %901 = vdwg.mxu0
      %v902 = vsub.f32 0.0, %v648
      %v903 = vsub.f32 0.0, %v651
      %v904 = vsub.f32 0.0, %v656
      %v905 = vsub.f32 0.0, %v659
      %v906 = vsub.f32 0.0, %v664
      %v907 = vsub.f32 0.0, %v667
      %v908 = vsub.f32 0.0, %v672
      %v909 = vsub.f32 0.0, %v675
      %v910 = vsub.f32 0.0, %v680
      %v911 = vsub.f32 0.0, %v683
      %v912 = vsub.f32 0.0, %v688
      %v913 = vsub.f32 0.0, %v691
      %v914 = vsub.f32 0.0, %v696
      %v915 = vsub.f32 0.0, %v699
      %v916 = vsub.f32 0.0, %v704
      %v917 = vsub.f32 0.0, %v707
      %v918 = vsub.f32 0.0, %v712
      %v919 = vsub.f32 0.0, %v715
      %v920 = vsub.f32 0.0, %v720
      %v921 = vsub.f32 0.0, %v723
      %v922 = vsub.f32 0.0, %v728
      %v923 = vsub.f32 0.0, %v731
      %v924 = vsub.f32 0.0, %v736
      %v925 = vsub.f32 0.0, %v739
      %v926 = vsub.f32 0.0, %v744
      %v927 = vsub.f32 0.0, %v747
      %v928 = vsub.f32 0.0, %v752
      %v929 = vsub.f32 0.0, %v755
      %v930 = vsub.f32 0.0, %v760
      %v931 = vsub.f32 0.0, %v763
      %v932 = vsub.f32 0.0, %v768
      %v933 = vsub.f32 0.0, %v771
      %v934 = vsub.f32 0.0, %v776
      %v935 = vsub.f32 0.0, %v779
      %v936 = vsub.f32 0.0, %v784
      %v937 = vsub.f32 0.0, %v787
      %v938 = vsub.f32 0.0, %v792
      %v939 = vsub.f32 0.0, %v795
      %v940 = vsub.f32 0.0, %v800
      %v941 = vsub.f32 0.0, %v803
      %v942 = vsub.f32 0.0, %v808
      %v943 = vsub.f32 0.0, %v811
      %v944 = vsub.f32 0.0, %v816
      %v945 = vsub.f32 0.0, %v819
      %v946 = vsub.f32 0.0, %v824
      %v947 = vsub.f32 0.0, %v827
      %v948 = vsub.f32 0.0, %v832
      %v949 = vsub.f32 0.0, %v835
      %v950 = vsub.f32 0.0, %v840
      %v951 = vsub.f32 0.0, %v843
      %v952 = vsub.f32 0.0, %v848
      %v953 = vsub.f32 0.0, %v851
      %v954 = vsub.f32 0.0, %v856
      %v955 = vsub.f32 0.0, %v859
      %v956 = vsub.f32 0.0, %v864
      %v957 = vsub.f32 0.0, %v867
      %v958 = vsub.f32 0.0, %v872
      %v959 = vsub.f32 0.0, %v875
      %v960 = vsub.f32 0.0, %v880
      %v961 = vsub.f32 0.0, %v883
      %v962 = vsub.f32 0.0, %v888
      %v963 = vsub.f32 0.0, %v891
      %v964 = vsub.f32 0.0, %v896
      %v965 = vsub.f32 0.0, %v899
      %v966 = vmul.f32 %v902, 1.442695
      %v967 = vpow.pop %v966
      %v968 = vmul.f32 %v903, 1.442695
      %v969 = vpow.pop %v968
      %v970 = vmul.f32 %v904, 1.442695
      %v971 = vpow.pop %v970
      %v972 = vmul.f32 %v905, 1.442695
      %v973 = vpow.pop %v972
      %v974 = vmul.f32 %v906, 1.442695
      %v975 = vpow.pop %v974
      %v976 = vmul.f32 %v907, 1.442695
      %v977 = vpow.pop %v976
      %v978 = vmul.f32 %v908, 1.442695
      %v979 = vpow.pop %v978
      %v980 = vmul.f32 %v909, 1.442695
      %v981 = vpow.pop %v980
      %v982 = vmul.f32 %v910, 1.442695
      %v983 = vpow.pop %v982
      %v984 = vmul.f32 %v911, 1.442695
      %v985 = vpow.pop %v984
      %v986 = vmul.f32 %v912, 1.442695
      %v987 = vpow.pop %v986
      %v988 = vmul.f32 %v913, 1.442695
      %v989 = vpow.pop %v988
      %v990 = vmul.f32 %v914, 1.442695
      %v991 = vpow.pop %v990
      %v992 = vmul.f32 %v915, 1.442695
      %v993 = vpow.pop %v992
      %v994 = vmul.f32 %v916, 1.442695
      %v995 = vpow.pop %v994
      %v996 = vmul.f32 %v917, 1.442695
      %v997 = vpow.pop %v996
      %v998 = vmul.f32 %v918, 1.442695
      %v999 = vpow.pop %v998
      %v1000 = vmul.f32 %v919, 1.442695
      %v1001 = vpow.pop %v1000
      %v1002 = vmul.f32 %v920, 1.442695
      %v1003 = vpow.pop %v1002
      %v1004 = vmul.f32 %v921, 1.442695
      %v1005 = vpow.pop %v1004
      %v1006 = vmul.f32 %v922, 1.442695
      %v1007 = vpow.pop %v1006
      %v1008 = vmul.f32 %v923, 1.442695
      %v1009 = vpow.pop %v1008
      %v1010 = vmul.f32 %v924, 1.442695
      %v1011 = vpow.pop %v1010
      %v1012 = vmul.f32 %v925, 1.442695
      %v1013 = vpow.pop %v1012
      %v1014 = vmul.f32 %v926, 1.442695
      %v1015 = vpow.pop %v1014
      %v1016 = vmul.f32 %v927, 1.442695
      %v1017 = vpow.pop %v1016
      %v1018 = vmul.f32 %v928, 1.442695
      %v1019 = vpow.pop %v1018
      %v1020 = vmul.f32 %v929, 1.442695
      %v1021 = vpow.pop %v1020
      %v1022 = vmul.f32 %v930, 1.442695
      %v1023 = vpow.pop %v1022
      %v1024 = vmul.f32 %v931, 1.442695
      %v1025 = vpow.pop %v1024
      %v1026 = vmul.f32 %v932, 1.442695
      %v1027 = vpow.pop %v1026
      %v1028 = vmul.f32 %v933, 1.442695
      %v1029 = vpow.pop %v1028
      %v1030 = vmul.f32 %v934, 1.442695
      %v1031 = vpow.pop %v1030
      %v1032 = vmul.f32 %v935, 1.442695
      %v1033 = vpow.pop %v1032
      %v1034 = vmul.f32 %v936, 1.442695
      %v1035 = vpow.pop %v1034
      %v1036 = vmul.f32 %v937, 1.442695
      %v1037 = vpow.pop %v1036
      %v1038 = vmul.f32 %v938, 1.442695
      %v1039 = vpow.pop %v1038
      %v1040 = vmul.f32 %v939, 1.442695
      %v1041 = vpow.pop %v1040
      %v1042 = vmul.f32 %v940, 1.442695
      %v1043 = vpow.pop %v1042
      %v1044 = vmul.f32 %v941, 1.442695
      %v1045 = vpow.pop %v1044
      %v1046 = vmul.f32 %v942, 1.442695
      %v1047 = vpow.pop %v1046
      %v1048 = vmul.f32 %v943, 1.442695
      %v1049 = vpow.pop %v1048
      %v1050 = vmul.f32 %v944, 1.442695
      %v1051 = vpow.pop %v1050
      %v1052 = vmul.f32 %v945, 1.442695
      %v1053 = vpow.pop %v1052
      %v1054 = vmul.f32 %v946, 1.442695
      %v1055 = vpow.pop %v1054
      %v1056 = vmul.f32 %v947, 1.442695
      %v1057 = vpow.pop %v1056
      %v1058 = vmul.f32 %v948, 1.442695
      %v1059 = vpow.pop %v1058
      %v1060 = vmul.f32 %v949, 1.442695
      %v1061 = vpow.pop %v1060
      %v1062 = vmul.f32 %v950, 1.442695
      %v1063 = vpow.pop %v1062
      %v1064 = vmul.f32 %v951, 1.442695
      %v1065 = vpow.pop %v1064
      %v1066 = vmul.f32 %v952, 1.442695
      %v1067 = vpow.pop %v1066
      %v1068 = vmul.f32 %v953, 1.442695
      %v1069 = vpow.pop %v1068
      %v1070 = vmul.f32 %v954, 1.442695
      %v1071 = vpow.pop %v1070
      %v1072 = vmul.f32 %v955, 1.442695
      %v1073 = vpow.pop %v1072
      %v1074 = vmul.f32 %v956, 1.442695
      %v1075 = vpow.pop %v1074
      %v1076 = vmul.f32 %v957, 1.442695
      %v1077 = vpow.pop %v1076
      %v1078 = vmul.f32 %v958, 1.442695
      %v1079 = vpow.pop %v1078
      %v1080 = vmul.f32 %v959, 1.442695
      %v1081 = vpow.pop %v1080
      %v1082 = vmul.f32 %v960, 1.442695
      %v1083 = vpow.pop %v1082
      %v1084 = vmul.f32 %v961, 1.442695
      %v1085 = vpow.pop %v1084
      %v1086 = vmul.f32 %v962, 1.442695
      %v1087 = vpow.pop %v1086
      %v1088 = vmul.f32 %v963, 1.442695
      %v1089 = vpow.pop %v1088
      %v1090 = vmul.f32 %v964, 1.442695
      %v1091 = vpow.pop %v1090
      %v1092 = vmul.f32 %v965, 1.442695
      %v1093 = vpow.pop %v1092
      %v1094 = vadd.f32 %v967, 1.0
      %v1095 = vadd.f32 %v969, 1.0
      %v1096 = vadd.f32 %v971, 1.0
      %v1097 = vadd.f32 %v973, 1.0
      %v1098 = vadd.f32 %v975, 1.0
      %v1099 = vadd.f32 %v977, 1.0
      %v1100 = vadd.f32 %v979, 1.0
      %v1101 = vadd.f32 %v981, 1.0
      %v1102 = vadd.f32 %v983, 1.0
      %v1103 = vadd.f32 %v985, 1.0
      %v1104 = vadd.f32 %v987, 1.0
      %v1105 = vadd.f32 %v989, 1.0
      %v1106 = vadd.f32 %v991, 1.0
      %v1107 = vadd.f32 %v993, 1.0
      %v1108 = vadd.f32 %v995, 1.0
      %v1109 = vadd.f32 %v997, 1.0
      %v1110 = vadd.f32 %v999, 1.0
      %v1111 = vadd.f32 %v1001, 1.0
      %v1112 = vadd.f32 %v1003, 1.0
      %v1113 = vadd.f32 %v1005, 1.0
      %v1114 = vadd.f32 %v1007, 1.0
      %v1115 = vadd.f32 %v1009, 1.0
      %v1116 = vadd.f32 %v1011, 1.0
      %v1117 = vadd.f32 %v1013, 1.0
      %v1118 = vadd.f32 %v1015, 1.0
      %v1119 = vadd.f32 %v1017, 1.0
      %v1120 = vadd.f32 %v1019, 1.0
      %v1121 = vadd.f32 %v1021, 1.0
      %v1122 = vadd.f32 %v1023, 1.0
      %v1123 = vadd.f32 %v1025, 1.0
      %v1124 = vadd.f32 %v1027, 1.0
      %v1125 = vadd.f32 %v1029, 1.0
      %v1126 = vadd.f32 %v1031, 1.0
      %v1127 = vadd.f32 %v1033, 1.0
      %v1128 = vadd.f32 %v1035, 1.0
      %v1129 = vadd.f32 %v1037, 1.0
      %v1130 = vadd.f32 %v1039, 1.0
      %v1131 = vadd.f32 %v1041, 1.0
      %v1132 = vadd.f32 %v1043, 1.0
      %v1133 = vadd.f32 %v1045, 1.0
      %v1134 = vadd.f32 %v1047, 1.0
      %v1135 = vadd.f32 %v1049, 1.0
      %v1136 = vadd.f32 %v1051, 1.0
      %v1137 = vadd.f32 %v1053, 1.0
      %v1138 = vadd.f32 %v1055, 1.0
      %v1139 = vadd.f32 %v1057, 1.0
      %v1140 = vadd.f32 %v1059, 1.0
      %v1141 = vadd.f32 %v1061, 1.0
      %v1142 = vadd.f32 %v1063, 1.0
      %v1143 = vadd.f32 %v1065, 1.0
      %v1144 = vadd.f32 %v1067, 1.0
      %v1145 = vadd.f32 %v1069, 1.0
      %v1146 = vadd.f32 %v1071, 1.0
      %v1147 = vadd.f32 %v1073, 1.0
      %v1148 = vadd.f32 %v1075, 1.0
      %v1149 = vadd.f32 %v1077, 1.0
      %v1150 = vadd.f32 %v1079, 1.0
      %v1151 = vadd.f32 %v1081, 1.0
      %v1152 = vadd.f32 %v1083, 1.0
      %v1153 = vadd.f32 %v1085, 1.0
      %v1154 = vadd.f32 %v1087, 1.0
      %v1155 = vadd.f32 %v1089, 1.0
      %v1156 = vadd.f32 %v1091, 1.0
      %v1157 = vadd.f32 %v1093, 1.0
      %v1158 = vrcp.pop %v1094
      %v1159 = vrcp.pop %v1095
      %v1160 = vrcp.pop %v1096
      %v1161 = vrcp.pop %v1097
      %v1162 = vrcp.pop %v1098
      %v1163 = vrcp.pop %v1099
      %v1164 = vrcp.pop %v1100
      %v1165 = vrcp.pop %v1101
      %v1166 = vrcp.pop %v1102
      %v1167 = vrcp.pop %v1103
      %v1168 = vrcp.pop %v1104
      %v1169 = vrcp.pop %v1105
      %v1170 = vrcp.pop %v1106
      %v1171 = vrcp.pop %v1107
      %v1172 = vrcp.pop %v1108
      %v1173 = vrcp.pop %v1109
      %v1174 = vrcp.pop %v1110
      %v1175 = vrcp.pop %v1111
      %v1176 = vrcp.pop %v1112
      %v1177 = vrcp.pop %v1113
      %v1178 = vrcp.pop %v1114
      %v1179 = vrcp.pop %v1115
      %v1180 = vrcp.pop %v1116
      %v1181 = vrcp.pop %v1117
      %v1182 = vrcp.pop %v1118
      %v1183 = vrcp.pop %v1119
      %v1184 = vrcp.pop %v1120
      %v1185 = vrcp.pop %v1121
      %v1186 = vrcp.pop %v1122
      %v1187 = vrcp.pop %v1123
      %v1188 = vrcp.pop %v1124
      %v1189 = vrcp.pop %v1125
      %v1190 = vrcp.pop %v1126
      %v1191 = vrcp.pop %v1127
      %v1192 = vrcp.pop %v1128
      %v1193 = vrcp.pop %v1129
      %v1194 = vrcp.pop %v1130
      %v1195 = vrcp.pop %v1131
      %v1196 = vrcp.pop %v1132
      %v1197 = vrcp.pop %v1133
      %v1198 = vrcp.pop %v1134
      %v1199 = vrcp.pop %v1135
      %v1200 = vrcp.pop %v1136
      %v1201 = vrcp.pop %v1137
      %v1202 = vrcp.pop %v1138
      %v1203 = vrcp.pop %v1139
      %v1204 = vrcp.pop %v1140
      %v1205 = vrcp.pop %v1141
      %v1206 = vrcp.pop %v1142
      %v1207 = vrcp.pop %v1143
      %v1208 = vrcp.pop %v1144
      %v1209 = vrcp.pop %v1145
      %v1210 = vrcp.pop %v1146
      %v1211 = vrcp.pop %v1147
      %v1212 = vrcp.pop %v1148
      %v1213 = vrcp.pop %v1149
      %v1214 = vrcp.pop %v1150
      %v1215 = vrcp.pop %v1151
      %v1216 = vrcp.pop %v1152
      %v1217 = vrcp.pop %v1153
      %v1218 = vrcp.pop %v1154
      %v1219 = vrcp.pop %v1155
      %v1220 = vrcp.pop %v1156
      %v1221 = vrcp.pop %v1157
      %v1222 = vmul.f32 %v648, %v1158
      %v1223 = vmul.f32 %v651, %v1159
      %v1224 = vmul.f32 %v656, %v1160
      %v1225 = vmul.f32 %v659, %v1161
      %v1226 = vmul.f32 %v664, %v1162
      %v1227 = vmul.f32 %v667, %v1163
      %v1228 = vmul.f32 %v672, %v1164
      %v1229 = vmul.f32 %v675, %v1165
      %v1230 = vmul.f32 %v680, %v1166
      %v1231 = vmul.f32 %v683, %v1167
      %v1232 = vmul.f32 %v688, %v1168
      %v1233 = vmul.f32 %v691, %v1169
      %v1234 = vmul.f32 %v696, %v1170
      %v1235 = vmul.f32 %v699, %v1171
      %v1236 = vmul.f32 %v704, %v1172
      %v1237 = vmul.f32 %v707, %v1173
      %v1238 = vmul.f32 %v712, %v1174
      %v1239 = vmul.f32 %v715, %v1175
      %v1240 = vmul.f32 %v720, %v1176
      %v1241 = vmul.f32 %v723, %v1177
      %v1242 = vmul.f32 %v728, %v1178
      %v1243 = vmul.f32 %v731, %v1179
      %v1244 = vmul.f32 %v736, %v1180
      %v1245 = vmul.f32 %v739, %v1181
      %v1246 = vmul.f32 %v744, %v1182
      %v1247 = vmul.f32 %v747, %v1183
      %v1248 = vmul.f32 %v752, %v1184
      %v1249 = vmul.f32 %v755, %v1185
      %v1250 = vmul.f32 %v760, %v1186
      %v1251 = vmul.f32 %v763, %v1187
      %v1252 = vmul.f32 %v768, %v1188
      %v1253 = vmul.f32 %v771, %v1189
      %v1254 = vmul.f32 %v776, %v1190
      %v1255 = vmul.f32 %v779, %v1191
      %v1256 = vmul.f32 %v784, %v1192
      %v1257 = vmul.f32 %v787, %v1193
      %v1258 = vmul.f32 %v792, %v1194
      %v1259 = vmul.f32 %v795, %v1195
      %v1260 = vmul.f32 %v800, %v1196
      %v1261 = vmul.f32 %v803, %v1197
      %v1262 = vmul.f32 %v808, %v1198
      %v1263 = vmul.f32 %v811, %v1199
      %v1264 = vmul.f32 %v816, %v1200
      %v1265 = vmul.f32 %v819, %v1201
      %v1266 = vmul.f32 %v824, %v1202
      %v1267 = vmul.f32 %v827, %v1203
      %v1268 = vmul.f32 %v832, %v1204
      %v1269 = vmul.f32 %v835, %v1205
      %v1270 = vmul.f32 %v840, %v1206
      %v1271 = vmul.f32 %v843, %v1207
      %v1272 = vmul.f32 %v848, %v1208
      %v1273 = vmul.f32 %v851, %v1209
      %v1274 = vmul.f32 %v856, %v1210
      %v1275 = vmul.f32 %v859, %v1211
      %v1276 = vmul.f32 %v864, %v1212
      %v1277 = vmul.f32 %v867, %v1213
      %v1278 = vmul.f32 %v872, %v1214
      %v1279 = vmul.f32 %v875, %v1215
      %v1280 = vmul.f32 %v880, %v1216
      %v1281 = vmul.f32 %v883, %v1217
      %v1282 = vmul.f32 %v888, %v1218
      %v1283 = vmul.f32 %v891, %v1219
      %v1284 = vmul.f32 %v896, %v1220
      %v1285 = vmul.f32 %v899, %v1221
      %vm1286 = vcmask 64512
      %1287 = vst.msk [vmem:[%s242] sm:$0xff] %vm1286, %v1222
      %1288 = vst.msk [vmem:[%s242 + $0x8] sm:$0xff] %vm1286, %v1223
      %1289 = vst.msk [vmem:[%s242 + $0x10] sm:$0xff] %vm1286, %v1224
      %1290 = vst.msk [vmem:[%s242 + $0x18] sm:$0xff] %vm1286, %v1225
      %1291 = vst.msk [vmem:[%s242 + $0x20] sm:$0xff] %vm1286, %v1226
      %1292 = vst.msk [vmem:[%s242 + $0x28] sm:$0xff] %vm1286, %v1227
      %1293 = vst.msk [vmem:[%s242 + $0x30] sm:$0xff] %vm1286, %v1228
      %1294 = vst.msk [vmem:[%s242 + $0x38] sm:$0xff] %vm1286, %v1229
      %1295 = vst.msk [vmem:[%s242 + $0x40] sm:$0xff] %vm1286, %v1230
      %1296 = vst.msk [vmem:[%s242 + $0x48] sm:$0xff] %vm1286, %v1231
      %1297 = vst.msk [vmem:[%s242 + $0x50] sm:$0xff] %vm1286, %v1232
      %1298 = vst.msk [vmem:[%s242 + $0x58] sm:$0xff] %vm1286, %v1233
      %1299 = vst.msk [vmem:[%s242 + $0x60] sm:$0xff] %vm1286, %v1234
      %1300 = vst.msk [vmem:[%s242 + $0x68] sm:$0xff] %vm1286, %v1235
      %1301 = vst.msk [vmem:[%s242 + $0x70] sm:$0xff] %vm1286, %v1236
      %1302 = vst.msk [vmem:[%s242 + $0x78] sm:$0xff] %vm1286, %v1237
      %1303 = vst.msk [vmem:[%s242 + $0x80] sm:$0xff] %vm1286, %v1238
      %1304 = vst.msk [vmem:[%s242 + $0x88] sm:$0xff] %vm1286, %v1239
      %1305 = vst.msk [vmem:[%s242 + $0x90] sm:$0xff] %vm1286, %v1240
      %1306 = vst.msk [vmem:[%s242 + $0x98] sm:$0xff] %vm1286, %v1241
      %1307 = vst.msk [vmem:[%s242 + $0xa0] sm:$0xff] %vm1286, %v1242
      %1308 = vst.msk [vmem:[%s242 + $0xa8] sm:$0xff] %vm1286, %v1243
      %1309 = vst.msk [vmem:[%s242 + $0xb0] sm:$0xff] %vm1286, %v1244
      %1310 = vst.msk [vmem:[%s242 + $0xb8] sm:$0xff] %vm1286, %v1245
      %1311 = vst.msk [vmem:[%s242 + $0xc0] sm:$0xff] %vm1286, %v1246
      %1312 = vst.msk [vmem:[%s242 + $0xc8] sm:$0xff] %vm1286, %v1247
      %1313 = vst.msk [vmem:[%s242 + $0xd0] sm:$0xff] %vm1286, %v1248
      %1314 = vst.msk [vmem:[%s242 + $0xd8] sm:$0xff] %vm1286, %v1249
      %1315 = vst.msk [vmem:[%s242 + $0xe0] sm:$0xff] %vm1286, %v1250
      %1316 = vst.msk [vmem:[%s242 + $0xe8] sm:$0xff] %vm1286, %v1251
      %1317 = vst.msk [vmem:[%s242 + $0xf0] sm:$0xff] %vm1286, %v1252
      %1318 = vst.msk [vmem:[%s242 + $0xf8] sm:$0xff] %vm1286, %v1253
      %1319 = vst.msk [vmem:[%s242 + $0x100] sm:$0xff] %vm1286, %v1254
      %1320 = vst.msk [vmem:[%s242 + $0x108] sm:$0xff] %vm1286, %v1255
      %1321 = vst.msk [vmem:[%s242 + $0x110] sm:$0xff] %vm1286, %v1256
      %1322 = vst.msk [vmem:[%s242 + $0x118] sm:$0xff] %vm1286, %v1257
      %1323 = vst.msk [vmem:[%s242 + $0x120] sm:$0xff] %vm1286, %v1258
      %1324 = vst.msk [vmem:[%s242 + $0x128] sm:$0xff] %vm1286, %v1259
      %1325 = vst.msk [vmem:[%s242 + $0x130] sm:$0xff] %vm1286, %v1260
      %1326 = vst.msk [vmem:[%s242 + $0x138] sm:$0xff] %vm1286, %v1261
      %1327 = vst.msk [vmem:[%s242 + $0x140] sm:$0xff] %vm1286, %v1262
      %1328 = vst.msk [vmem:[%s242 + $0x148] sm:$0xff] %vm1286, %v1263
      %1329 = vst.msk [vmem:[%s242 + $0x150] sm:$0xff] %vm1286, %v1264
      %1330 = vst.msk [vmem:[%s242 + $0x158] sm:$0xff] %vm1286, %v1265
      %1331 = vst.msk [vmem:[%s242 + $0x160] sm:$0xff] %vm1286, %v1266
      %1332 = vst.msk [vmem:[%s242 + $0x168] sm:$0xff] %vm1286, %v1267
      %1333 = vst.msk [vmem:[%s242 + $0x170] sm:$0xff] %vm1286, %v1268
      %1334 = vst.msk [vmem:[%s242 + $0x178] sm:$0xff] %vm1286, %v1269
      %1335 = vst.msk [vmem:[%s242 + $0x180] sm:$0xff] %vm1286, %v1270
      %1336 = vst.msk [vmem:[%s242 + $0x188] sm:$0xff] %vm1286, %v1271
      %1337 = vst.msk [vmem:[%s242 + $0x190] sm:$0xff] %vm1286, %v1272
      %1338 = vst.msk [vmem:[%s242 + $0x198] sm:$0xff] %vm1286, %v1273
      %1339 = vst.msk [vmem:[%s242 + $0x1a0] sm:$0xff] %vm1286, %v1274
      %1340 = vst.msk [vmem:[%s242 + $0x1a8] sm:$0xff] %vm1286, %v1275
      %1341 = vst.msk [vmem:[%s242 + $0x1b0] sm:$0xff] %vm1286, %v1276
      %1342 = vst.msk [vmem:[%s242 + $0x1b8] sm:$0xff] %vm1286, %v1277
      %1343 = vst.msk [vmem:[%s242 + $0x1c0] sm:$0xff] %vm1286, %v1278
      %1344 = vst.msk [vmem:[%s242 + $0x1c8] sm:$0xff] %vm1286, %v1279
      %1345 = vst.msk [vmem:[%s242 + $0x1d0] sm:$0xff] %vm1286, %v1280
      %1346 = vst.msk [vmem:[%s242 + $0x1d8] sm:$0xff] %vm1286, %v1281
      %1347 = vst.msk [vmem:[%s242 + $0x1e0] sm:$0xff] %vm1286, %v1282
      %1348 = vst.msk [vmem:[%s242 + $0x1e8] sm:$0xff] %vm1286, %v1283
      %1349 = vst.msk [vmem:[%s242 + $0x1f0] sm:$0xff] %vm1286, %v1284
      %1350 = vst.msk [vmem:[%s242 + $0x1f8] sm:$0xff] %vm1286, %v1285
      %s1351 = smul.u32 64, %s19
      %p1352 = scmp.lt.s32.totalorder %s18, 2
      %s1353 = scalar_select %p1352, %s18, 2
      %p1354 = scmp.lt.s32.totalorder %s1351, 255
      %s1355 = scalar_select %p1354, %s1351, 255
      %s1356 = smul.addr %s1353, 256
      %s1357 = sadd.s32 %s1355, %s1356
      %s1358 = smul.addr %s1357, 8
      %s1359 = scalar_lea.vmem %s3, %s1358
      // Predicated region
      $region33: #{pose_guider_forward.19} parent=31 // pred_check
        %p1360 = pneg %p126
      $region34: #{pose_guider_forward.19} parent=31 // pred_check_branch
        %1362 = sbr.rel (%p1360) target = $region36
      $region35: #{pose_guider_forward.19} parent=31 // pred_region
        %s1363 = smul.u32 64, %s19
      $region36: #{pose_guider_forward.19} parent=31 // pred_fallthru
        _
    $region32: #{pose_guider_forward.19} parent=5 // pred_fallthru
      _
    %p1364 = scmp.le.s32.totalorder 2, %s9
    // Predicated region
    $region37: #{pose_guider_forward.19} parent=5 // pred_check
      %p1365 = pneg %p1364
    $region38: #{pose_guider_forward.19} parent=5 // pred_check_branch
      %1367 = sbr.rel (%p1365) target = $region40
    $region39: #{pose_guider_forward.19} parent=5 // pred_region
      %s1368 = ssub.s32 %s9, 2
      // Predicated region
      $region41: #{pose_guider_forward.19} parent=39 // pred_check
        %p1369 = pneg %p132
      $region42: #{pose_guider_forward.19} parent=39 // pred_check_branch
        %1371 = sbr.rel (%p1369) target = $region44
      $region43: #{pose_guider_forward.19} parent=39 // pred_region
        %s1372 = smul.u32 64, %s21
        %p1373 = scmp.lt.s32.totalorder %s20, 2
        %s1374 = scalar_select %p1373, %s20, 2
        %p1375 = scmp.lt.s32.totalorder %s1372, 255
        %s1376 = scalar_select %p1375, %s1372, 255
        %s1377 = smul.addr %s1374, 256
        %s1378 = sadd.s32 %s1376, %s1377
        %s1379 = smul.addr %s1378, 8
        %s1380 = scalar_lea.vmem %s3, %s1379
      $region44: #{pose_guider_forward.19} parent=39 // pred_fallthru
        _
    $region40: #{pose_guider_forward.19} parent=5 // pred_fallthru
      _
  $region6: #{pose_guider_forward.19} parent=0 // loop_footer
    %s13 = sadd.s32 1, %s9
  $region7: #{pose_guider_forward.19} parent=0 // loop_footer_branch
    %8 = sbr.rel target = $region3
  $region8: #{pose_guider_forward.19} parent=0 // loop_exit
    _

// kernel: pose_guider_forward.20
$region0: #{pose_guider_forward.20}
  #allocation0 [shape = 'u32[]', space=smem, size = 0x4, offset = 0x4, fixed_abs, tag = 'smem constant byte address 0x4 - core index']
  #allocation1 [shape = 'u32[144,128]{1,0:T(1,128)}', space=vmem, size = 0x12000, scoped, tag = 'internal scratch']
  %s0 = inlined_call_operand.vmem [shape: bf16[3,512,72], index: 0, kind: input, shape index: {}]
  %s1 = inlined_call_operand.vmem [shape: bf16[3,72,16], index: 1, kind: input, shape index: {}]
  %s2 = inlined_call_operand.vmem [shape: f32[3,1,16], index: 2, kind: input, shape index: {}]
  %s3 = inlined_call_operand.vmem [shape: f32[3,512,16], index: 3, kind: output, shape index: {}]
  %s4 = sld [smem:[#allocation0]]
  $region45: #{pose_guider_forward.20} parent=0
    _
  %s6 = ssub.s32 1, %s4
  %s7 = scalar_select 0, %s6, %s4
  loop: start=0, step=1, limit=5
  $region2: #{pose_guider_forward.20} parent=0 // loop_pre_header
    _
  $region3: #{pose_guider_forward.20} parent=0 // loop_header
    %s9 = sphi 0, %s13
    %p10 = scmp.ge.s32.totalorder %s9, 5
    %s16 = sphi 0, %s28
    %s17 = sphi 0, %s24
    %s18 = sphi 0, %s16
    %s19 = sphi 0, %s17
    %s20 = sphi 0, %s18
    %s21 = sphi 0, %s19
    %s33 = sphi 0, %s35
    %s36 = sphi 0, %s33
    %s37 = sphi 0, %s36
    %s53 = sphi 0, %s37
    %s59 = sphi 0, %s61
    %s62 = sphi 0, %s59
    %s63 = sphi 0, %s62
    %s79 = sphi 0, %s63
    %s85 = sphi 0, %s87
    %s88 = sphi 0, %s85
    %s89 = sphi 0, %s88
    %s105 = sphi 0, %s89
    %s113 = sphi 0, %s115
    %s116 = sphi 0, %s113
    %s117 = sphi 0, %s116
    %s133 = sphi 0, %s117
  $region4: #{pose_guider_forward.20} parent=0 // loop_header_branch
    %12 = sbr.rel (%p10) target = $region8
  $region5: #{pose_guider_forward.20} parent=0 // loop_body
    %s14 = ssub.s32 %s9, 1
    %s15 = ssub.s32 %s9, 2
    %s22 = sadd.s32 1, %s17
    %p23 = scmp.ge.s32.totalorder %s22, 1
    %s24 = scalar_select %p23, 0, %s22
    %s25 = sadd.s32 1, %s16
    %s26 = scalar_select %p23, %s25, %s16
    %p27 = scmp.ge.s32.totalorder %s26, 3
    %s28 = scalar_select %p27, 0, %s26
    %s29 = ssub.s32 %s16, %s28
    %s30 = ssub.s32 %s17, %s24
    %s31 = sor.u32 %s29, %s30
    %p32 = scmp.eq.s32.totalorder %s31, 0
    %s34 = sadd.s32 %s33, 1
    %s35 = scalar_select %p32, %s33, %s34
    %p38 = pneg %p32
    %p39 = scmp.eq.s32.totalorder %s9, 2
    %p40 = por %p38, %p39
    %p41 = scmp.ne.s32.totalorder %s33, %s36
    %p42 = scmp.eq.s32.totalorder %s9, 0
    %p43 = por %p41, %p42
    %p44 = scmp.ne.s32.totalorder %s33, %s36
    %p45 = scmp.eq.s32.totalorder %s14, 2
    %p46 = por %p44, %p45
    %p47 = scmp.ne.s32.totalorder %s36, %s37
    %p48 = scmp.eq.s32.totalorder %s14, 0
    %p49 = por %p47, %p48
    %p50 = scmp.ne.s32.totalorder %s36, %s37
    %p51 = scmp.eq.s32.totalorder %s15, 2
    %p52 = por %p50, %p51
    %p54 = scmp.ne.s32.totalorder %s37, %s53
    %p55 = scmp.eq.s32.totalorder %s15, 0
    %p56 = por %p54, %p55
    %s57 = ssub.s32 %s16, %s28
    %p58 = scmp.eq.s32.totalorder %s57, 0
    %s60 = sadd.s32 %s59, 1
    %s61 = scalar_select %p58, %s59, %s60
    %p64 = pneg %p58
    %p65 = scmp.eq.s32.totalorder %s9, 2
    %p66 = por %p64, %p65
    %p67 = scmp.ne.s32.totalorder %s59, %s62
    %p68 = scmp.eq.s32.totalorder %s9, 0
    %p69 = por %p67, %p68
    %p70 = scmp.ne.s32.totalorder %s59, %s62
    %p71 = scmp.eq.s32.totalorder %s14, 2
    %p72 = por %p70, %p71
    %p73 = scmp.ne.s32.totalorder %s62, %s63
    %p74 = scmp.eq.s32.totalorder %s14, 0
    %p75 = por %p73, %p74
    %p76 = scmp.ne.s32.totalorder %s62, %s63
    %p77 = scmp.eq.s32.totalorder %s15, 2
    %p78 = por %p76, %p77
    %p80 = scmp.ne.s32.totalorder %s63, %s79
    %p81 = scmp.eq.s32.totalorder %s15, 0
    %p82 = por %p80, %p81
    %s83 = ssub.s32 %s16, %s28
    %p84 = scmp.eq.s32.totalorder %s83, 0
    %s86 = sadd.s32 %s85, 1
    %s87 = scalar_select %p84, %s85, %s86
    %p90 = pneg %p84
    %p91 = scmp.eq.s32.totalorder %s9, 2
    %p92 = por %p90, %p91
    %p93 = scmp.ne.s32.totalorder %s85, %s88
    %p94 = scmp.eq.s32.totalorder %s9, 0
    %p95 = por %p93, %p94
    %p96 = scmp.ne.s32.totalorder %s85, %s88
    %p97 = scmp.eq.s32.totalorder %s14, 2
    %p98 = por %p96, %p97
    %p99 = scmp.ne.s32.totalorder %s88, %s89
    %p100 = scmp.eq.s32.totalorder %s14, 0
    %p101 = por %p99, %p100
    %p102 = scmp.ne.s32.totalorder %s88, %s89
    %p103 = scmp.eq.s32.totalorder %s15, 2
    %p104 = por %p102, %p103
    %p106 = scmp.ne.s32.totalorder %s89, %s105
    %p107 = scmp.eq.s32.totalorder %s15, 0
    %p108 = por %p106, %p107
    %s109 = ssub.s32 %s16, %s28
    %s110 = ssub.s32 %s17, %s24
    %s111 = sor.u32 %s109, %s110
    %p112 = scmp.eq.s32.totalorder %s111, 0
    %s114 = sadd.s32 %s113, 1
    %s115 = scalar_select %p112, %s113, %s114
    %p118 = pneg %p112
    %p119 = scmp.eq.s32.totalorder %s9, 2
    %p120 = por %p118, %p119
    %p121 = scmp.ne.s32.totalorder %s113, %s116
    %p122 = scmp.eq.s32.totalorder %s9, 0
    %p123 = por %p121, %p122
    %p124 = scmp.ne.s32.totalorder %s113, %s116
    %p125 = scmp.eq.s32.totalorder %s14, 2
    %p126 = por %p124, %p125
    %p127 = scmp.ne.s32.totalorder %s116, %s117
    %p128 = scmp.eq.s32.totalorder %s14, 0
    %p129 = por %p127, %p128
    %p130 = scmp.ne.s32.totalorder %s116, %s117
    %p131 = scmp.eq.s32.totalorder %s15, 2
    %p132 = por %p130, %p131
    %p134 = scmp.ne.s32.totalorder %s117, %s133
    %p135 = scmp.eq.s32.totalorder %s15, 0
    %p136 = por %p134, %p135
    %p137 = scmp.le.s32.totalorder 1, %s9
    %p138 = scmp.lt.s32.totalorder %s9, 4
    %p139 = pnand %p137, %p138
    %p140 = pneg %p139
    // Predicated region
    $region9: #{pose_guider_forward.20} parent=5 // pred_check
      _
    $region10: #{pose_guider_forward.20} parent=5 // pred_check_branch
      %142 = sbr.rel (%p139) target = $region12
    $region11: #{pose_guider_forward.20} parent=5 // pred_region
      %s143 = ssub.s32 %s9, 1
    $region12: #{pose_guider_forward.20} parent=5 // pred_fallthru
      _
    %p144 = scmp.lt.s32.totalorder %s9, 3
    // Predicated region
    $region13: #{pose_guider_forward.20} parent=5 // pred_check
      %p145 = pneg %p144
    $region14: #{pose_guider_forward.20} parent=5 // pred_check_branch
      %147 = sbr.rel (%p145) target = $region16
    $region15: #{pose_guider_forward.20} parent=5 // pred_region
      // Predicated region
      $region17: #{pose_guider_forward.20} parent=15 // pred_check
        %p148 = pneg %p43
      $region18: #{pose_guider_forward.20} parent=15 // pred_check_branch
        %150 = sbr.rel (%p148) target = $region20
      $region19: #{pose_guider_forward.20} parent=15 // pred_region
        %s151 = smul.u32 64, %s17
        %p152 = scmp.lt.s32.totalorder %s16, 2
        %s153 = scalar_select %p152, %s16, 2
        %p154 = scmp.lt.s32.totalorder %s151, 63
        %s155 = scalar_select %p154, %s151, 63
        %s156 = smul.addr %s153, 64
        %s157 = sadd.s32 %s155, %s156
        %s158 = smul.addr %s157, 4
        %s159 = scalar_lea.vmem %s0, %s158
        %s160 = smul.u32 64, %s17
      $region20: #{pose_guider_forward.20} parent=15 // pred_fallthru
        _
      // Predicated region
      $region21: #{pose_guider_forward.20} parent=15 // pred_check
        %p161 = pneg %p69
      $region22: #{pose_guider_forward.20} parent=15 // pred_check_branch
        %163 = sbr.rel (%p161) target = $region24
      $region23: #{pose_guider_forward.20} parent=15 // pred_region
        %p164 = scmp.lt.s32.totalorder %s16, 2
        %s165 = scalar_select %p164, %s16, 2
        %s166 = smul.addr %s165, 9
        %s167 = smul.addr %s166, 4
        %s168 = scalar_lea.vmem %s1, %s167
      $region24: #{pose_guider_forward.20} parent=15 // pred_fallthru
        _
      // Predicated region
      $region25: #{pose_guider_forward.20} parent=15 // pred_check
        %p169 = pneg %p95
      $region26: #{pose_guider_forward.20} parent=15 // pred_check_branch
        %171 = sbr.rel (%p169) target = $region28
      $region27: #{pose_guider_forward.20} parent=15 // pred_region
        %p172 = scmp.lt.s32.totalorder %s16, 2
        %s173 = scalar_select %p172, %s16, 2
        %s174 = scalar_lea.vmem %s2, %s173
      $region28: #{pose_guider_forward.20} parent=15 // pred_fallthru
        _
    $region16: #{pose_guider_forward.20} parent=5 // pred_fallthru
      _
    %p175 = scmp.le.s32.totalorder 1, %s9
    %p176 = scmp.lt.s32.totalorder %s9, 4
    %p177 = pnand %p175, %p176
    %p178 = pneg %p177
    // Predicated region
    $region29: #{pose_guider_forward.20} parent=5 // pred_check
      _
    $region30: #{pose_guider_forward.20} parent=5 // pred_check_branch
      %180 = sbr.rel (%p177) target = $region32
    $region31: #{pose_guider_forward.20} parent=5 // pred_region
      %s181 = ssub.s32 %s9, 1
      %s182 = smul.u32 64, %s19
      %p183 = scmp.lt.s32.totalorder %s18, 2
      %s184 = scalar_select %p183, %s18, 2
      %p185 = scmp.lt.s32.totalorder %s182, 63
      %s186 = scalar_select %p185, %s182, 63
      %s187 = smul.addr %s184, 64
      %s188 = sadd.s32 %s186, %s187
      %s189 = smul.addr %s188, 4
      %s190 = scalar_lea.vmem %s0, %s189
      %p191 = pneg %p49
      %p192 = pneg %p46
      %p193 = scmp.lt.s32.totalorder %s18, 2
      %s194 = scalar_select %p193, %s18, 2
      %s195 = smul.addr %s194, 9
      %s196 = smul.addr %s195, 4
      %s197 = scalar_lea.vmem %s1, %s196
      %p198 = pneg %p75
      %p199 = pneg %p72
      %p200 = scmp.lt.s32.totalorder %s18, 2
      %s201 = scalar_select %p200, %s18, 2
      %s202 = scalar_lea.vmem %s2, %s201
      %p203 = pneg %p101
      %p204 = pneg %p98
      %p205 = pneg %p129
      %p206 = pneg %p126
      %s207 = smul.u32 64, %s19
      %p208 = scmp.lt.s32.totalorder %s18, 2
      %s209 = scalar_select %p208, %s18, 2
      %p210 = scmp.lt.s32.totalorder %s207, 63
      %s211 = scalar_select %p210, %s207, 63
      %s212 = smul.addr %s209, 64
      %s213 = sadd.s32 %s211, %s212
      %s214 = smul.addr %s213, 8
      %s215 = scalar_lea.vmem %s3, %s214
      %s216 = smul.u32 64, %s19
      %p217 = scmp.lt.s32.totalorder %s18, 2
      %s218 = scalar_select %p217, %s18, 2
      %p219 = scmp.lt.s32.totalorder %s216, 63
      %s220 = scalar_select %p219, %s216, 63
      %s221 = smul.addr %s218, 64
      %s222 = sadd.s32 %s220, %s221
      %s223 = smul.addr %s222, 4
      %s224 = scalar_lea.vmem %s0, %s223
      %s225 = smul.u32 64, %s19
      %p226 = scmp.lt.s32.totalorder %s18, 2
      %s227 = scalar_select %p226, %s18, 2
      %s228 = smul.addr %s227, 9
      %s229 = smul.addr %s228, 4
      %s230 = scalar_lea.vmem %s1, %s229
      %p231 = scmp.lt.s32.totalorder %s18, 2
      %s232 = scalar_select %p231, %s18, 2
      %s233 = scalar_lea.vmem %s2, %s232
      %s234 = smul.u32 64, %s19
      %p235 = scmp.lt.s32.totalorder %s18, 2
      %s236 = scalar_select %p235, %s18, 2
      %p237 = scmp.lt.s32.totalorder %s234, 63
      %s238 = scalar_select %p237, %s234, 63
      %s239 = smul.addr %s236, 64
      %s240 = sadd.s32 %s238, %s239
      %s241 = smul.addr %s240, 8
      %s242 = scalar_lea.vmem %s3, %s241
      %s243 = smul.u32 64, %s19
      %v245 = vld [vmem:[%s224] sm:$0xf]
      %v246 = vld [vmem:[%s224 + $0x4] sm:$0xf]
      %v247 = vld [vmem:[%s224 + $0x8] sm:$0xf]
      %v248 = vld [vmem:[%s224 + $0xc] sm:$0xf]
      %v249 = vld [vmem:[%s224 + $0x10] sm:$0xf]
      %v250 = vld [vmem:[%s224 + $0x14] sm:$0xf]
      %v251 = vld [vmem:[%s224 + $0x18] sm:$0xf]
      %v252 = vld [vmem:[%s224 + $0x1c] sm:$0xf]
      %v253 = vld [vmem:[%s224 + $0x20] sm:$0xf]
      %v254 = vld [vmem:[%s224 + $0x24] sm:$0xf]
      %v255 = vld [vmem:[%s224 + $0x28] sm:$0xf]
      %v256 = vld [vmem:[%s224 + $0x2c] sm:$0xf]
      %v257 = vld [vmem:[%s224 + $0x30] sm:$0xf]
      %v258 = vld [vmem:[%s224 + $0x34] sm:$0xf]
      %v259 = vld [vmem:[%s224 + $0x38] sm:$0xf]
      %v260 = vld [vmem:[%s224 + $0x3c] sm:$0xf]
      %v261 = vld [vmem:[%s224 + $0x40] sm:$0xf]
      %v262 = vld [vmem:[%s224 + $0x44] sm:$0xf]
      %v263 = vld [vmem:[%s224 + $0x48] sm:$0xf]
      %v264 = vld [vmem:[%s224 + $0x4c] sm:$0xf]
      %v265 = vld [vmem:[%s224 + $0x50] sm:$0xf]
      %v266 = vld [vmem:[%s224 + $0x54] sm:$0xf]
      %v267 = vld [vmem:[%s224 + $0x58] sm:$0xf]
      %v268 = vld [vmem:[%s224 + $0x5c] sm:$0xf]
      %v269 = vld [vmem:[%s224 + $0x60] sm:$0xf]
      %v270 = vld [vmem:[%s224 + $0x64] sm:$0xf]
      %v271 = vld [vmem:[%s224 + $0x68] sm:$0xf]
      %v272 = vld [vmem:[%s224 + $0x6c] sm:$0xf]
      %v273 = vld [vmem:[%s224 + $0x70] sm:$0xf]
      %v274 = vld [vmem:[%s224 + $0x74] sm:$0xf]
      %v275 = vld [vmem:[%s224 + $0x78] sm:$0xf]
      %v276 = vld [vmem:[%s224 + $0x7c] sm:$0xf]
      %v277 = vld [vmem:[%s224 + $0x80] sm:$0xf]
      %v278 = vld [vmem:[%s224 + $0x84] sm:$0xf]
      %v279 = vld [vmem:[%s224 + $0x88] sm:$0xf]
      %v280 = vld [vmem:[%s224 + $0x8c] sm:$0xf]
      %v281 = vld [vmem:[%s224 + $0x90] sm:$0xf]
      %v282 = vld [vmem:[%s224 + $0x94] sm:$0xf]
      %v283 = vld [vmem:[%s224 + $0x98] sm:$0xf]
      %v284 = vld [vmem:[%s224 + $0x9c] sm:$0xf]
      %v285 = vld [vmem:[%s224 + $0xa0] sm:$0xf]
      %v286 = vld [vmem:[%s224 + $0xa4] sm:$0xf]
      %v287 = vld [vmem:[%s224 + $0xa8] sm:$0xf]
      %v288 = vld [vmem:[%s224 + $0xac] sm:$0xf]
      %v289 = vld [vmem:[%s224 + $0xb0] sm:$0xf]
      %v290 = vld [vmem:[%s224 + $0xb4] sm:$0xf]
      %v291 = vld [vmem:[%s224 + $0xb8] sm:$0xf]
      %v292 = vld [vmem:[%s224 + $0xbc] sm:$0xf]
      %v293 = vld [vmem:[%s224 + $0xc0] sm:$0xf]
      %v294 = vld [vmem:[%s224 + $0xc4] sm:$0xf]
      %v295 = vld [vmem:[%s224 + $0xc8] sm:$0xf]
      %v296 = vld [vmem:[%s224 + $0xcc] sm:$0xf]
      %v297 = vld [vmem:[%s224 + $0xd0] sm:$0xf]
      %v298 = vld [vmem:[%s224 + $0xd4] sm:$0xf]
      %v299 = vld [vmem:[%s224 + $0xd8] sm:$0xf]
      %v300 = vld [vmem:[%s224 + $0xdc] sm:$0xf]
      %v301 = vld [vmem:[%s224 + $0xe0] sm:$0xf]
      %v302 = vld [vmem:[%s224 + $0xe4] sm:$0xf]
      %v303 = vld [vmem:[%s224 + $0xe8] sm:$0xf]
      %v304 = vld [vmem:[%s224 + $0xec] sm:$0xf]
      %v305 = vld [vmem:[%s224 + $0xf0] sm:$0xf]
      %v306 = vld [vmem:[%s224 + $0xf4] sm:$0xf]
      %v307 = vld [vmem:[%s224 + $0xf8] sm:$0xf]
      %v308 = vld [vmem:[%s224 + $0xfc] sm:$0xf]
      %v309 = vld [vmem:[%s230] sm:$0xf]
      %v310 = vld [vmem:[%s230 + $0x4] sm:$0xf]
      %v311 = vld [vmem:[%s230 + $0x8] sm:$0xf]
      %v312 = vld [vmem:[%s230 + $0xc] sm:$0xf]
      %v313 = vld [vmem:[%s230 + $0x10] sm:$0xf]
      %v314 = vld [vmem:[%s230 + $0x14] sm:$0xf]
      %v315 = vld [vmem:[%s230 + $0x18] sm:$0xf]
      %v316 = vld [vmem:[%s230 + $0x1c] sm:$0xf]
      %v317 = vld [vmem:[%s230 + $0x20] sm:$0xf]
      %v318 = vld [vmem:[%s233] sm:$0x1]
      %v320 = vlaneseq
      %v321 = vshrl.u32 %v320, 7
      %v322 = vsub.s32 0, %v321
      %v323 = vrot.slane %v318, %v322
      %v389 = vunpack.c.l.b16 %v245
      %v390 = vunpack.c.l.b16 %v246
      %v391 = vunpack.c.l.b16 %v247
      %v392 = vunpack.c.l.b16 %v248
      %v393 = vunpack.c.l.b16 %v249
      %v394 = vunpack.c.l.b16 %v250
      %v395 = vunpack.c.l.b16 %v251
      %v396 = vunpack.c.l.b16 %v252
      %v397 = vunpack.c.l.b16 %v253
      %v398 = vunpack.c.l.b16 %v254
      %v399 = vunpack.c.l.b16 %v255
      %v400 = vunpack.c.l.b16 %v256
      %v401 = vunpack.c.l.b16 %v257
      %v402 = vunpack.c.l.b16 %v258
      %v403 = vunpack.c.l.b16 %v259
      %v404 = vunpack.c.l.b16 %v260
      %v405 = vunpack.c.l.b16 %v261
      %v406 = vunpack.c.l.b16 %v262
      %v407 = vunpack.c.l.b16 %v263
      %v408 = vunpack.c.l.b16 %v264
      %v409 = vunpack.c.l.b16 %v265
      %v410 = vunpack.c.l.b16 %v266
      %v411 = vunpack.c.l.b16 %v267
      %v412 = vunpack.c.l.b16 %v268
      %v413 = vunpack.c.l.b16 %v269
      %v414 = vunpack.c.l.b16 %v270
      %v415 = vunpack.c.l.b16 %v271
      %v416 = vunpack.c.l.b16 %v272
      %v417 = vunpack.c.l.b16 %v273
      %v418 = vunpack.c.l.b16 %v274
      %v419 = vunpack.c.l.b16 %v275
      %v420 = vunpack.c.l.b16 %v276
      %v421 = vunpack.c.l.b16 %v277
      %v422 = vunpack.c.l.b16 %v278
      %v423 = vunpack.c.l.b16 %v279
      %v424 = vunpack.c.l.b16 %v280
      %v425 = vunpack.c.l.b16 %v281
      %v426 = vunpack.c.l.b16 %v282
      %v427 = vunpack.c.l.b16 %v283
      %v428 = vunpack.c.l.b16 %v284
      %v429 = vunpack.c.l.b16 %v285
      %v430 = vunpack.c.l.b16 %v286
      %v431 = vunpack.c.l.b16 %v287
      %v432 = vunpack.c.l.b16 %v288
      %v433 = vunpack.c.l.b16 %v289
      %v434 = vunpack.c.l.b16 %v290
      %v435 = vunpack.c.l.b16 %v291
      %v436 = vunpack.c.l.b16 %v292
      %v437 = vunpack.c.l.b16 %v293
      %v438 = vunpack.c.l.b16 %v294
      %v439 = vunpack.c.l.b16 %v295
      %v440 = vunpack.c.l.b16 %v296
      %v441 = vunpack.c.l.b16 %v297
      %v442 = vunpack.c.l.b16 %v298
      %v443 = vunpack.c.l.b16 %v299
      %v444 = vunpack.c.l.b16 %v300
      %v445 = vunpack.c.l.b16 %v301
      %v446 = vunpack.c.l.b16 %v302
      %v447 = vunpack.c.l.b16 %v303
      %v448 = vunpack.c.l.b16 %v304
      %v449 = vunpack.c.l.b16 %v305
      %v450 = vunpack.c.l.b16 %v306
      %v451 = vunpack.c.l.b16 %v307
      %v452 = vunpack.c.l.b16 %v308
      %v453 = vpack.c.b16 %v390, %v389
      %v454 = vpack.c.b16 %v392, %v391
      %v455 = vpack.c.b16 %v394, %v393
      %v456 = vpack.c.b16 %v396, %v395
      %v457 = vpack.c.b16 %v398, %v397
      %v458 = vpack.c.b16 %v400, %v399
      %v459 = vpack.c.b16 %v402, %v401
      %v460 = vpack.c.b16 %v404, %v403
      %v461 = vpack.c.b16 %v406, %v405
      %v462 = vpack.c.b16 %v408, %v407
      %v463 = vpack.c.b16 %v410, %v409
      %v464 = vpack.c.b16 %v412, %v411
      %v465 = vpack.c.b16 %v414, %v413
      %v466 = vpack.c.b16 %v416, %v415
      %v467 = vpack.c.b16 %v418, %v417
      %v468 = vpack.c.b16 %v420, %v419
      %v469 = vpack.c.b16 %v422, %v421
      %v470 = vpack.c.b16 %v424, %v423
      %v471 = vpack.c.b16 %v426, %v425
      %v472 = vpack.c.b16 %v428, %v427
      %v473 = vpack.c.b16 %v430, %v429
      %v474 = vpack.c.b16 %v432, %v431
      %v475 = vpack.c.b16 %v434, %v433
      %v476 = vpack.c.b16 %v436, %v435
      %v477 = vpack.c.b16 %v438, %v437
      %v478 = vpack.c.b16 %v440, %v439
      %v479 = vpack.c.b16 %v442, %v441
      %v480 = vpack.c.b16 %v444, %v443
      %v481 = vpack.c.b16 %v446, %v445
      %v482 = vpack.c.b16 %v448, %v447
      %v483 = vpack.c.b16 %v450, %v449
      %v484 = vpack.c.b16 %v452, %v451
      %v494 = vunpack.c.l.b16 %v309
      %v495 = vunpack.c.l.b16 %v310
      %v496 = vunpack.c.l.b16 %v311
      %v497 = vunpack.c.l.b16 %v312
      %v498 = vunpack.c.l.b16 %v313
      %v499 = vunpack.c.l.b16 %v314
      %v500 = vunpack.c.l.b16 %v315
      %v501 = vunpack.c.l.b16 %v316
      %v502 = vunpack.c.l.b16 %v317
      %v503 = vpack.c.b16 %v495, %v494
      %v504 = vpack.c.b16 %v497, %v496
      %v505 = vpack.c.b16 %v499, %v498
      %v506 = vpack.c.b16 %v501, %v500
      %v507 = vpack.c.b16 %v502, %v502
      %vm512 = vcmask 588800
      %v514 = vsel %vm512, %v453, 0
      %v517 = vsel %vm512, %v454, 0
      %v520 = vsel %vm512, %v455, 0
      %v523 = vsel %vm512, %v456, 0
      %v526 = vsel %vm512, %v457, 0
      %v529 = vsel %vm512, %v458, 0
      %v532 = vsel %vm512, %v459, 0
      %v535 = vsel %vm512, %v460, 0
      %v538 = vsel %vm512, %v461, 0
      %v541 = vsel %vm512, %v462, 0
      %v544 = vsel %vm512, %v463, 0
      %v547 = vsel %vm512, %v464, 0
      %v550 = vsel %vm512, %v465, 0
      %v553 = vsel %vm512, %v466, 0
      %v556 = vsel %vm512, %v467, 0
      %v559 = vsel %vm512, %v468, 0
      %v562 = vsel %vm512, %v469, 0
      %v565 = vsel %vm512, %v470, 0
      %v568 = vsel %vm512, %v471, 0
      %v571 = vsel %vm512, %v472, 0
      %v574 = vsel %vm512, %v473, 0
      %v577 = vsel %vm512, %v474, 0
      %v580 = vsel %vm512, %v475, 0
      %v583 = vsel %vm512, %v476, 0
      %v586 = vsel %vm512, %v477, 0
      %v589 = vsel %vm512, %v478, 0
      %v592 = vsel %vm512, %v479, 0
      %v595 = vsel %vm512, %v480, 0
      %v598 = vsel %vm512, %v481, 0
      %v601 = vsel %vm512, %v482, 0
      %v604 = vsel %vm512, %v483, 0
      %v607 = vsel %vm512, %v484, 0
      %vm609 = vcmask 1043456
      %v611 = vsel %vm609, %v507, 0
      %613 = vmatprep.subr.bf16.mxu0 0
      %614 = vmatpush1.bf16.msra.mxu0 0
      %615 = vmatprep.subr.bf16.mxu0 0
      %616 = vmatpush1.bf16.msra.mxu0 0
      %617 = vmatprep.subr.bf16.mxu0 0
      %618 = vmatpush1.bf16.msra.mxu0 0
      %619 = vmatprep.subr.bf16.mxu0 0
      %620 = vmatpush1.bf16.msra.mxu0 %v611
      %621 = vmatprep.subr.bf16.mxu0 0
      %622 = vmatpush1.bf16.msra.mxu0 %v506
      %623 = vmatprep.subr.bf16.mxu0 0
      %624 = vmatpush1.bf16.msra.mxu0 %v505
      %625 = vmatprep.subr.bf16.mxu0 0
      %626 = vmatpush1.bf16.msra.mxu0 %v504
      %627 = vmatprep.subr.bf16.mxu0 0
      %628 = vmatpush1.bf16.msra.mxu0 %v503
      %629 = vmatprep.subr.bf16.mxu0 0
      %630 = vmatpush2.bf16.msra.mxu0 0
      %631 = vmatprep.subr.bf16.mxu0 0
      %632 = vmatpush2.bf16.msra.mxu0 0
      %633 = vmatprep.subr.bf16.mxu0 0
      %634 = vmatpush2.bf16.msra.mxu0 0
      %635 = vmatprep.subr.bf16.mxu0 0
      %636 = vmatpush2.bf16.msra.mxu0 0
      %637 = vmatprep.subr.bf16.mxu0 0
      %638 = vmatpush2.bf16.msra.mxu0 0
      %639 = vmatprep.subr.bf16.mxu0 0
      %640 = vmatpush2.bf16.msra.mxu0 0
      %641 = vmatprep.subr.bf16.mxu0 0
      %642 = vmatpush2.bf16.msra.mxu0 0
      %643 = vmatprep.subr.bf16.mxu0 0
      %644 = vmatpush2.bf16.msra.mxu0 0
      %645 = vmatprep.mubr.bf16.mxu0 0
      %646 = vmatmul.mubr.bf16.gmra.mxu0 %v514
      %v647 = vpop.f32.mrf.mxu0
      %v648 = vadd.f32 %v323, %v647
      %v649 = vpop.f32.mrf.mxu0
      %v650 = vpop.f32.mrf.mxu0
      %v651 = vadd.f32 %v323, %v650
      %v652 = vpop.f32.mrf.mxu0
      %653 = vmatprep.mubr.bf16.mxu0 0
      %654 = vmatmul.mubr.bf16.gmra.mxu0 %v517
      %v655 = vpop.f32.mrf.mxu0
      %v656 = vadd.f32 %v323, %v655
      %v657 = vpop.f32.mrf.mxu0
      %v658 = vpop.f32.mrf.mxu0
      %v659 = vadd.f32 %v323, %v658
      %v660 = vpop.f32.mrf.mxu0
      %661 = vmatprep.mubr.bf16.mxu0 0
      %662 = vmatmul.mubr.bf16.gmra.mxu0 %v520
      %v663 = vpop.f32.mrf.mxu0
      %v664 = vadd.f32 %v323, %v663
      %v665 = vpop.f32.mrf.mxu0
      %v666 = vpop.f32.mrf.mxu0
      %v667 = vadd.f32 %v323, %v666
      %v668 = vpop.f32.mrf.mxu0
      %669 = vmatprep.mubr.bf16.mxu0 0
      %670 = vmatmul.mubr.bf16.gmra.mxu0 %v523
      %v671 = vpop.f32.mrf.mxu0
      %v672 = vadd.f32 %v323, %v671
      %v673 = vpop.f32.mrf.mxu0
      %v674 = vpop.f32.mrf.mxu0
      %v675 = vadd.f32 %v323, %v674
      %v676 = vpop.f32.mrf.mxu0
      %677 = vmatprep.mubr.bf16.mxu0 0
      %678 = vmatmul.mubr.bf16.gmra.mxu0 %v526
      %v679 = vpop.f32.mrf.mxu0
      %v680 = vadd.f32 %v323, %v679
      %v681 = vpop.f32.mrf.mxu0
      %v682 = vpop.f32.mrf.mxu0
      %v683 = vadd.f32 %v323, %v682
      %v684 = vpop.f32.mrf.mxu0
      %685 = vmatprep.mubr.bf16.mxu0 0
      %686 = vmatmul.mubr.bf16.gmra.mxu0 %v529
      %v687 = vpop.f32.mrf.mxu0
      %v688 = vadd.f32 %v323, %v687
      %v689 = vpop.f32.mrf.mxu0
      %v690 = vpop.f32.mrf.mxu0
      %v691 = vadd.f32 %v323, %v690
      %v692 = vpop.f32.mrf.mxu0
      %693 = vmatprep.mubr.bf16.mxu0 0
      %694 = vmatmul.mubr.bf16.gmra.mxu0 %v532
      %v695 = vpop.f32.mrf.mxu0
      %v696 = vadd.f32 %v323, %v695
      %v697 = vpop.f32.mrf.mxu0
      %v698 = vpop.f32.mrf.mxu0
      %v699 = vadd.f32 %v323, %v698
      %v700 = vpop.f32.mrf.mxu0
      %701 = vmatprep.mubr.bf16.mxu0 0
      %702 = vmatmul.mubr.bf16.gmra.mxu0 %v535
      %v703 = vpop.f32.mrf.mxu0
      %v704 = vadd.f32 %v323, %v703
      %v705 = vpop.f32.mrf.mxu0
      %v706 = vpop.f32.mrf.mxu0
      %v707 = vadd.f32 %v323, %v706
      %v708 = vpop.f32.mrf.mxu0
      %709 = vmatprep.mubr.bf16.mxu0 0
      %710 = vmatmul.mubr.bf16.gmra.mxu0 %v538
      %v711 = vpop.f32.mrf.mxu0
      %v712 = vadd.f32 %v323, %v711
      %v713 = vpop.f32.mrf.mxu0
      %v714 = vpop.f32.mrf.mxu0
      %v715 = vadd.f32 %v323, %v714
      %v716 = vpop.f32.mrf.mxu0
      %717 = vmatprep.mubr.bf16.mxu0 0
      %718 = vmatmul.mubr.bf16.gmra.mxu0 %v541
      %v719 = vpop.f32.mrf.mxu0
      %v720 = vadd.f32 %v323, %v719
      %v721 = vpop.f32.mrf.mxu0
      %v722 = vpop.f32.mrf.mxu0
      %v723 = vadd.f32 %v323, %v722
      %v724 = vpop.f32.mrf.mxu0
      %725 = vmatprep.mubr.bf16.mxu0 0
      %726 = vmatmul.mubr.bf16.gmra.mxu0 %v544
      %v727 = vpop.f32.mrf.mxu0
      %v728 = vadd.f32 %v323, %v727
      %v729 = vpop.f32.mrf.mxu0
      %v730 = vpop.f32.mrf.mxu0
      %v731 = vadd.f32 %v323, %v730
      %v732 = vpop.f32.mrf.mxu0
      %733 = vmatprep.mubr.bf16.mxu0 0
      %734 = vmatmul.mubr.bf16.gmra.mxu0 %v547
      %v735 = vpop.f32.mrf.mxu0
      %v736 = vadd.f32 %v323, %v735
      %v737 = vpop.f32.mrf.mxu0
      %v738 = vpop.f32.mrf.mxu0
      %v739 = vadd.f32 %v323, %v738
      %v740 = vpop.f32.mrf.mxu0
      %741 = vmatprep.mubr.bf16.mxu0 0
      %742 = vmatmul.mubr.bf16.gmra.mxu0 %v550
      %v743 = vpop.f32.mrf.mxu0
      %v744 = vadd.f32 %v323, %v743
      %v745 = vpop.f32.mrf.mxu0
      %v746 = vpop.f32.mrf.mxu0
      %v747 = vadd.f32 %v323, %v746
      %v748 = vpop.f32.mrf.mxu0
      %749 = vmatprep.mubr.bf16.mxu0 0
      %750 = vmatmul.mubr.bf16.gmra.mxu0 %v553
      %v751 = vpop.f32.mrf.mxu0
      %v752 = vadd.f32 %v323, %v751
      %v753 = vpop.f32.mrf.mxu0
      %v754 = vpop.f32.mrf.mxu0
      %v755 = vadd.f32 %v323, %v754
      %v756 = vpop.f32.mrf.mxu0
      %757 = vmatprep.mubr.bf16.mxu0 0
      %758 = vmatmul.mubr.bf16.gmra.mxu0 %v556
      %v759 = vpop.f32.mrf.mxu0
      %v760 = vadd.f32 %v323, %v759
      %v761 = vpop.f32.mrf.mxu0
      %v762 = vpop.f32.mrf.mxu0
      %v763 = vadd.f32 %v323, %v762
      %v764 = vpop.f32.mrf.mxu0
      %765 = vmatprep.mubr.bf16.mxu0 0
      %766 = vmatmul.mubr.bf16.gmra.mxu0 %v559
      %v767 = vpop.f32.mrf.mxu0
      %v768 = vadd.f32 %v323, %v767
      %v769 = vpop.f32.mrf.mxu0
      %v770 = vpop.f32.mrf.mxu0
      %v771 = vadd.f32 %v323, %v770
      %v772 = vpop.f32.mrf.mxu0
      %773 = vmatprep.mubr.bf16.mxu0 0
      %774 = vmatmul.mubr.bf16.gmra.mxu0 %v562
      %v775 = vpop.f32.mrf.mxu0
      %v776 = vadd.f32 %v323, %v775
      %v777 = vpop.f32.mrf.mxu0
      %v778 = vpop.f32.mrf.mxu0
      %v779 = vadd.f32 %v323, %v778
      %v780 = vpop.f32.mrf.mxu0
      %781 = vmatprep.mubr.bf16.mxu0 0
      %782 = vmatmul.mubr.bf16.gmra.mxu0 %v565
      %v783 = vpop.f32.mrf.mxu0
      %v784 = vadd.f32 %v323, %v783
      %v785 = vpop.f32.mrf.mxu0
      %v786 = vpop.f32.mrf.mxu0
      %v787 = vadd.f32 %v323, %v786
      %v788 = vpop.f32.mrf.mxu0
      %789 = vmatprep.mubr.bf16.mxu0 0
      %790 = vmatmul.mubr.bf16.gmra.mxu0 %v568
      %v791 = vpop.f32.mrf.mxu0
      %v792 = vadd.f32 %v323, %v791
      %v793 = vpop.f32.mrf.mxu0
      %v794 = vpop.f32.mrf.mxu0
      %v795 = vadd.f32 %v323, %v794
      %v796 = vpop.f32.mrf.mxu0
      %797 = vmatprep.mubr.bf16.mxu0 0
      %798 = vmatmul.mubr.bf16.gmra.mxu0 %v571
      %v799 = vpop.f32.mrf.mxu0
      %v800 = vadd.f32 %v323, %v799
      %v801 = vpop.f32.mrf.mxu0
      %v802 = vpop.f32.mrf.mxu0
      %v803 = vadd.f32 %v323, %v802
      %v804 = vpop.f32.mrf.mxu0
      %805 = vmatprep.mubr.bf16.mxu0 0
      %806 = vmatmul.mubr.bf16.gmra.mxu0 %v574
      %v807 = vpop.f32.mrf.mxu0
      %v808 = vadd.f32 %v323, %v807
      %v809 = vpop.f32.mrf.mxu0
      %v810 = vpop.f32.mrf.mxu0
      %v811 = vadd.f32 %v323, %v810
      %v812 = vpop.f32.mrf.mxu0
      %813 = vmatprep.mubr.bf16.mxu0 0
      %814 = vmatmul.mubr.bf16.gmra.mxu0 %v577
      %v815 = vpop.f32.mrf.mxu0
      %v816 = vadd.f32 %v323, %v815
      %v817 = vpop.f32.mrf.mxu0
      %v818 = vpop.f32.mrf.mxu0
      %v819 = vadd.f32 %v323, %v818
      %v820 = vpop.f32.mrf.mxu0
      %821 = vmatprep.mubr.bf16.mxu0 0
      %822 = vmatmul.mubr.bf16.gmra.mxu0 %v580
      %v823 = vpop.f32.mrf.mxu0
      %v824 = vadd.f32 %v323, %v823
      %v825 = vpop.f32.mrf.mxu0
      %v826 = vpop.f32.mrf.mxu0
      %v827 = vadd.f32 %v323, %v826
      %v828 = vpop.f32.mrf.mxu0
      %829 = vmatprep.mubr.bf16.mxu0 0
      %830 = vmatmul.mubr.bf16.gmra.mxu0 %v583
      %v831 = vpop.f32.mrf.mxu0
      %v832 = vadd.f32 %v323, %v831
      %v833 = vpop.f32.mrf.mxu0
      %v834 = vpop.f32.mrf.mxu0
      %v835 = vadd.f32 %v323, %v834
      %v836 = vpop.f32.mrf.mxu0
      %837 = vmatprep.mubr.bf16.mxu0 0
      %838 = vmatmul.mubr.bf16.gmra.mxu0 %v586
      %v839 = vpop.f32.mrf.mxu0
      %v840 = vadd.f32 %v323, %v839
      %v841 = vpop.f32.mrf.mxu0
      %v842 = vpop.f32.mrf.mxu0
      %v843 = vadd.f32 %v323, %v842
      %v844 = vpop.f32.mrf.mxu0
      %845 = vmatprep.mubr.bf16.mxu0 0
      %846 = vmatmul.mubr.bf16.gmra.mxu0 %v589
      %v847 = vpop.f32.mrf.mxu0
      %v848 = vadd.f32 %v323, %v847
      %v849 = vpop.f32.mrf.mxu0
      %v850 = vpop.f32.mrf.mxu0
      %v851 = vadd.f32 %v323, %v850
      %v852 = vpop.f32.mrf.mxu0
      %853 = vmatprep.mubr.bf16.mxu0 0
      %854 = vmatmul.mubr.bf16.gmra.mxu0 %v592
      %v855 = vpop.f32.mrf.mxu0
      %v856 = vadd.f32 %v323, %v855
      %v857 = vpop.f32.mrf.mxu0
      %v858 = vpop.f32.mrf.mxu0
      %v859 = vadd.f32 %v323, %v858
      %v860 = vpop.f32.mrf.mxu0
      %861 = vmatprep.mubr.bf16.mxu0 0
      %862 = vmatmul.mubr.bf16.gmra.mxu0 %v595
      %v863 = vpop.f32.mrf.mxu0
      %v864 = vadd.f32 %v323, %v863
      %v865 = vpop.f32.mrf.mxu0
      %v866 = vpop.f32.mrf.mxu0
      %v867 = vadd.f32 %v323, %v866
      %v868 = vpop.f32.mrf.mxu0
      %869 = vmatprep.mubr.bf16.mxu0 0
      %870 = vmatmul.mubr.bf16.gmra.mxu0 %v598
      %v871 = vpop.f32.mrf.mxu0
      %v872 = vadd.f32 %v323, %v871
      %v873 = vpop.f32.mrf.mxu0
      %v874 = vpop.f32.mrf.mxu0
      %v875 = vadd.f32 %v323, %v874
      %v876 = vpop.f32.mrf.mxu0
      %877 = vmatprep.mubr.bf16.mxu0 0
      %878 = vmatmul.mubr.bf16.gmra.mxu0 %v601
      %v879 = vpop.f32.mrf.mxu0
      %v880 = vadd.f32 %v323, %v879
      %v881 = vpop.f32.mrf.mxu0
      %v882 = vpop.f32.mrf.mxu0
      %v883 = vadd.f32 %v323, %v882
      %v884 = vpop.f32.mrf.mxu0
      %885 = vmatprep.mubr.bf16.mxu0 0
      %886 = vmatmul.mubr.bf16.gmra.mxu0 %v604
      %v887 = vpop.f32.mrf.mxu0
      %v888 = vadd.f32 %v323, %v887
      %v889 = vpop.f32.mrf.mxu0
      %v890 = vpop.f32.mrf.mxu0
      %v891 = vadd.f32 %v323, %v890
      %v892 = vpop.f32.mrf.mxu0
      %893 = vmatprep.mubr.bf16.mxu0 0
      %894 = vmatmul.mubr.bf16.gmra.mxu0 %v607
      %v895 = vpop.f32.mrf.mxu0
      %v896 = vadd.f32 %v323, %v895
      %v897 = vpop.f32.mrf.mxu0
      %v898 = vpop.f32.mrf.mxu0
      %v899 = vadd.f32 %v323, %v898
      %v900 = vpop.f32.mrf.mxu0
      %901 = vdwg.mxu0
      %v902 = vsub.f32 0.0, %v648
      %v903 = vsub.f32 0.0, %v651
      %v904 = vsub.f32 0.0, %v656
      %v905 = vsub.f32 0.0, %v659
      %v906 = vsub.f32 0.0, %v664
      %v907 = vsub.f32 0.0, %v667
      %v908 = vsub.f32 0.0, %v672
      %v909 = vsub.f32 0.0, %v675
      %v910 = vsub.f32 0.0, %v680
      %v911 = vsub.f32 0.0, %v683
      %v912 = vsub.f32 0.0, %v688
      %v913 = vsub.f32 0.0, %v691
      %v914 = vsub.f32 0.0, %v696
      %v915 = vsub.f32 0.0, %v699
      %v916 = vsub.f32 0.0, %v704
      %v917 = vsub.f32 0.0, %v707
      %v918 = vsub.f32 0.0, %v712
      %v919 = vsub.f32 0.0, %v715
      %v920 = vsub.f32 0.0, %v720
      %v921 = vsub.f32 0.0, %v723
      %v922 = vsub.f32 0.0, %v728
      %v923 = vsub.f32 0.0, %v731
      %v924 = vsub.f32 0.0, %v736
      %v925 = vsub.f32 0.0, %v739
      %v926 = vsub.f32 0.0, %v744
      %v927 = vsub.f32 0.0, %v747
      %v928 = vsub.f32 0.0, %v752
      %v929 = vsub.f32 0.0, %v755
      %v930 = vsub.f32 0.0, %v760
      %v931 = vsub.f32 0.0, %v763
      %v932 = vsub.f32 0.0, %v768
      %v933 = vsub.f32 0.0, %v771
      %v934 = vsub.f32 0.0, %v776
      %v935 = vsub.f32 0.0, %v779
      %v936 = vsub.f32 0.0, %v784
      %v937 = vsub.f32 0.0, %v787
      %v938 = vsub.f32 0.0, %v792
      %v939 = vsub.f32 0.0, %v795
      %v940 = vsub.f32 0.0, %v800
      %v941 = vsub.f32 0.0, %v803
      %v942 = vsub.f32 0.0, %v808
      %v943 = vsub.f32 0.0, %v811
      %v944 = vsub.f32 0.0, %v816
      %v945 = vsub.f32 0.0, %v819
      %v946 = vsub.f32 0.0, %v824
      %v947 = vsub.f32 0.0, %v827
      %v948 = vsub.f32 0.0, %v832
      %v949 = vsub.f32 0.0, %v835
      %v950 = vsub.f32 0.0, %v840
      %v951 = vsub.f32 0.0, %v843
      %v952 = vsub.f32 0.0, %v848
      %v953 = vsub.f32 0.0, %v851
      %v954 = vsub.f32 0.0, %v856
      %v955 = vsub.f32 0.0, %v859
      %v956 = vsub.f32 0.0, %v864
      %v957 = vsub.f32 0.0, %v867
      %v958 = vsub.f32 0.0, %v872
      %v959 = vsub.f32 0.0, %v875
      %v960 = vsub.f32 0.0, %v880
      %v961 = vsub.f32 0.0, %v883
      %v962 = vsub.f32 0.0, %v888
      %v963 = vsub.f32 0.0, %v891
      %v964 = vsub.f32 0.0, %v896
      %v965 = vsub.f32 0.0, %v899
      %v966 = vmul.f32 %v902, 1.442695
      %v967 = vpow.pop %v966
      %v968 = vmul.f32 %v903, 1.442695
      %v969 = vpow.pop %v968
      %v970 = vmul.f32 %v904, 1.442695
      %v971 = vpow.pop %v970
      %v972 = vmul.f32 %v905, 1.442695
      %v973 = vpow.pop %v972
      %v974 = vmul.f32 %v906, 1.442695
      %v975 = vpow.pop %v974
      %v976 = vmul.f32 %v907, 1.442695
      %v977 = vpow.pop %v976
      %v978 = vmul.f32 %v908, 1.442695
      %v979 = vpow.pop %v978
      %v980 = vmul.f32 %v909, 1.442695
      %v981 = vpow.pop %v980
      %v982 = vmul.f32 %v910, 1.442695
      %v983 = vpow.pop %v982
      %v984 = vmul.f32 %v911, 1.442695
      %v985 = vpow.pop %v984
      %v986 = vmul.f32 %v912, 1.442695
      %v987 = vpow.pop %v986
      %v988 = vmul.f32 %v913, 1.442695
      %v989 = vpow.pop %v988
      %v990 = vmul.f32 %v914, 1.442695
      %v991 = vpow.pop %v990
      %v992 = vmul.f32 %v915, 1.442695
      %v993 = vpow.pop %v992
      %v994 = vmul.f32 %v916, 1.442695
      %v995 = vpow.pop %v994
      %v996 = vmul.f32 %v917, 1.442695
      %v997 = vpow.pop %v996
      %v998 = vmul.f32 %v918, 1.442695
      %v999 = vpow.pop %v998
      %v1000 = vmul.f32 %v919, 1.442695
      %v1001 = vpow.pop %v1000
      %v1002 = vmul.f32 %v920, 1.442695
      %v1003 = vpow.pop %v1002
      %v1004 = vmul.f32 %v921, 1.442695
      %v1005 = vpow.pop %v1004
      %v1006 = vmul.f32 %v922, 1.442695
      %v1007 = vpow.pop %v1006
      %v1008 = vmul.f32 %v923, 1.442695
      %v1009 = vpow.pop %v1008
      %v1010 = vmul.f32 %v924, 1.442695
      %v1011 = vpow.pop %v1010
      %v1012 = vmul.f32 %v925, 1.442695
      %v1013 = vpow.pop %v1012
      %v1014 = vmul.f32 %v926, 1.442695
      %v1015 = vpow.pop %v1014
      %v1016 = vmul.f32 %v927, 1.442695
      %v1017 = vpow.pop %v1016
      %v1018 = vmul.f32 %v928, 1.442695
      %v1019 = vpow.pop %v1018
      %v1020 = vmul.f32 %v929, 1.442695
      %v1021 = vpow.pop %v1020
      %v1022 = vmul.f32 %v930, 1.442695
      %v1023 = vpow.pop %v1022
      %v1024 = vmul.f32 %v931, 1.442695
      %v1025 = vpow.pop %v1024
      %v1026 = vmul.f32 %v932, 1.442695
      %v1027 = vpow.pop %v1026
      %v1028 = vmul.f32 %v933, 1.442695
      %v1029 = vpow.pop %v1028
      %v1030 = vmul.f32 %v934, 1.442695
      %v1031 = vpow.pop %v1030
      %v1032 = vmul.f32 %v935, 1.442695
      %v1033 = vpow.pop %v1032
      %v1034 = vmul.f32 %v936, 1.442695
      %v1035 = vpow.pop %v1034
      %v1036 = vmul.f32 %v937, 1.442695
      %v1037 = vpow.pop %v1036
      %v1038 = vmul.f32 %v938, 1.442695
      %v1039 = vpow.pop %v1038
      %v1040 = vmul.f32 %v939, 1.442695
      %v1041 = vpow.pop %v1040
      %v1042 = vmul.f32 %v940, 1.442695
      %v1043 = vpow.pop %v1042
      %v1044 = vmul.f32 %v941, 1.442695
      %v1045 = vpow.pop %v1044
      %v1046 = vmul.f32 %v942, 1.442695
      %v1047 = vpow.pop %v1046
      %v1048 = vmul.f32 %v943, 1.442695
      %v1049 = vpow.pop %v1048
      %v1050 = vmul.f32 %v944, 1.442695
      %v1051 = vpow.pop %v1050
      %v1052 = vmul.f32 %v945, 1.442695
      %v1053 = vpow.pop %v1052
      %v1054 = vmul.f32 %v946, 1.442695
      %v1055 = vpow.pop %v1054
      %v1056 = vmul.f32 %v947, 1.442695
      %v1057 = vpow.pop %v1056
      %v1058 = vmul.f32 %v948, 1.442695
      %v1059 = vpow.pop %v1058
      %v1060 = vmul.f32 %v949, 1.442695
      %v1061 = vpow.pop %v1060
      %v1062 = vmul.f32 %v950, 1.442695
      %v1063 = vpow.pop %v1062
      %v1064 = vmul.f32 %v951, 1.442695
      %v1065 = vpow.pop %v1064
      %v1066 = vmul.f32 %v952, 1.442695
      %v1067 = vpow.pop %v1066
      %v1068 = vmul.f32 %v953, 1.442695
      %v1069 = vpow.pop %v1068
      %v1070 = vmul.f32 %v954, 1.442695
      %v1071 = vpow.pop %v1070
      %v1072 = vmul.f32 %v955, 1.442695
      %v1073 = vpow.pop %v1072
      %v1074 = vmul.f32 %v956, 1.442695
      %v1075 = vpow.pop %v1074
      %v1076 = vmul.f32 %v957, 1.442695
      %v1077 = vpow.pop %v1076
      %v1078 = vmul.f32 %v958, 1.442695
      %v1079 = vpow.pop %v1078
      %v1080 = vmul.f32 %v959, 1.442695
      %v1081 = vpow.pop %v1080
      %v1082 = vmul.f32 %v960, 1.442695
      %v1083 = vpow.pop %v1082
      %v1084 = vmul.f32 %v961, 1.442695
      %v1085 = vpow.pop %v1084
      %v1086 = vmul.f32 %v962, 1.442695
      %v1087 = vpow.pop %v1086
      %v1088 = vmul.f32 %v963, 1.442695
      %v1089 = vpow.pop %v1088
      %v1090 = vmul.f32 %v964, 1.442695
      %v1091 = vpow.pop %v1090
      %v1092 = vmul.f32 %v965, 1.442695
      %v1093 = vpow.pop %v1092
      %v1094 = vadd.f32 %v967, 1.0
      %v1095 = vadd.f32 %v969, 1.0
      %v1096 = vadd.f32 %v971, 1.0
      %v1097 = vadd.f32 %v973, 1.0
      %v1098 = vadd.f32 %v975, 1.0
      %v1099 = vadd.f32 %v977, 1.0
      %v1100 = vadd.f32 %v979, 1.0
      %v1101 = vadd.f32 %v981, 1.0
      %v1102 = vadd.f32 %v983, 1.0
      %v1103 = vadd.f32 %v985, 1.0
      %v1104 = vadd.f32 %v987, 1.0
      %v1105 = vadd.f32 %v989, 1.0
      %v1106 = vadd.f32 %v991, 1.0
      %v1107 = vadd.f32 %v993, 1.0
      %v1108 = vadd.f32 %v995, 1.0
      %v1109 = vadd.f32 %v997, 1.0
      %v1110 = vadd.f32 %v999, 1.0
      %v1111 = vadd.f32 %v1001, 1.0
      %v1112 = vadd.f32 %v1003, 1.0
      %v1113 = vadd.f32 %v1005, 1.0
      %v1114 = vadd.f32 %v1007, 1.0
      %v1115 = vadd.f32 %v1009, 1.0
      %v1116 = vadd.f32 %v1011, 1.0
      %v1117 = vadd.f32 %v1013, 1.0
      %v1118 = vadd.f32 %v1015, 1.0
      %v1119 = vadd.f32 %v1017, 1.0
      %v1120 = vadd.f32 %v1019, 1.0
      %v1121 = vadd.f32 %v1021, 1.0
      %v1122 = vadd.f32 %v1023, 1.0
      %v1123 = vadd.f32 %v1025, 1.0
      %v1124 = vadd.f32 %v1027, 1.0
      %v1125 = vadd.f32 %v1029, 1.0
      %v1126 = vadd.f32 %v1031, 1.0
      %v1127 = vadd.f32 %v1033, 1.0
      %v1128 = vadd.f32 %v1035, 1.0
      %v1129 = vadd.f32 %v1037, 1.0
      %v1130 = vadd.f32 %v1039, 1.0
      %v1131 = vadd.f32 %v1041, 1.0
      %v1132 = vadd.f32 %v1043, 1.0
      %v1133 = vadd.f32 %v1045, 1.0
      %v1134 = vadd.f32 %v1047, 1.0
      %v1135 = vadd.f32 %v1049, 1.0
      %v1136 = vadd.f32 %v1051, 1.0
      %v1137 = vadd.f32 %v1053, 1.0
      %v1138 = vadd.f32 %v1055, 1.0
      %v1139 = vadd.f32 %v1057, 1.0
      %v1140 = vadd.f32 %v1059, 1.0
      %v1141 = vadd.f32 %v1061, 1.0
      %v1142 = vadd.f32 %v1063, 1.0
      %v1143 = vadd.f32 %v1065, 1.0
      %v1144 = vadd.f32 %v1067, 1.0
      %v1145 = vadd.f32 %v1069, 1.0
      %v1146 = vadd.f32 %v1071, 1.0
      %v1147 = vadd.f32 %v1073, 1.0
      %v1148 = vadd.f32 %v1075, 1.0
      %v1149 = vadd.f32 %v1077, 1.0
      %v1150 = vadd.f32 %v1079, 1.0
      %v1151 = vadd.f32 %v1081, 1.0
      %v1152 = vadd.f32 %v1083, 1.0
      %v1153 = vadd.f32 %v1085, 1.0
      %v1154 = vadd.f32 %v1087, 1.0
      %v1155 = vadd.f32 %v1089, 1.0
      %v1156 = vadd.f32 %v1091, 1.0
      %v1157 = vadd.f32 %v1093, 1.0
      %v1158 = vrcp.pop %v1094
      %v1159 = vrcp.pop %v1095
      %v1160 = vrcp.pop %v1096
      %v1161 = vrcp.pop %v1097
      %v1162 = vrcp.pop %v1098
      %v1163 = vrcp.pop %v1099
      %v1164 = vrcp.pop %v1100
      %v1165 = vrcp.pop %v1101
      %v1166 = vrcp.pop %v1102
      %v1167 = vrcp.pop %v1103
      %v1168 = vrcp.pop %v1104
      %v1169 = vrcp.pop %v1105
      %v1170 = vrcp.pop %v1106
      %v1171 = vrcp.pop %v1107
      %v1172 = vrcp.pop %v1108
      %v1173 = vrcp.pop %v1109
      %v1174 = vrcp.pop %v1110
      %v1175 = vrcp.pop %v1111
      %v1176 = vrcp.pop %v1112
      %v1177 = vrcp.pop %v1113
      %v1178 = vrcp.pop %v1114
      %v1179 = vrcp.pop %v1115
      %v1180 = vrcp.pop %v1116
      %v1181 = vrcp.pop %v1117
      %v1182 = vrcp.pop %v1118
      %v1183 = vrcp.pop %v1119
      %v1184 = vrcp.pop %v1120
      %v1185 = vrcp.pop %v1121
      %v1186 = vrcp.pop %v1122
      %v1187 = vrcp.pop %v1123
      %v1188 = vrcp.pop %v1124
      %v1189 = vrcp.pop %v1125
      %v1190 = vrcp.pop %v1126
      %v1191 = vrcp.pop %v1127
      %v1192 = vrcp.pop %v1128
      %v1193 = vrcp.pop %v1129
      %v1194 = vrcp.pop %v1130
      %v1195 = vrcp.pop %v1131
      %v1196 = vrcp.pop %v1132
      %v1197 = vrcp.pop %v1133
      %v1198 = vrcp.pop %v1134
      %v1199 = vrcp.pop %v1135
      %v1200 = vrcp.pop %v1136
      %v1201 = vrcp.pop %v1137
      %v1202 = vrcp.pop %v1138
      %v1203 = vrcp.pop %v1139
      %v1204 = vrcp.pop %v1140
      %v1205 = vrcp.pop %v1141
      %v1206 = vrcp.pop %v1142
      %v1207 = vrcp.pop %v1143
      %v1208 = vrcp.pop %v1144
      %v1209 = vrcp.pop %v1145
      %v1210 = vrcp.pop %v1146
      %v1211 = vrcp.pop %v1147
      %v1212 = vrcp.pop %v1148
      %v1213 = vrcp.pop %v1149
      %v1214 = vrcp.pop %v1150
      %v1215 = vrcp.pop %v1151
      %v1216 = vrcp.pop %v1152
      %v1217 = vrcp.pop %v1153
      %v1218 = vrcp.pop %v1154
      %v1219 = vrcp.pop %v1155
      %v1220 = vrcp.pop %v1156
      %v1221 = vrcp.pop %v1157
      %v1222 = vmul.f32 %v648, %v1158
      %v1223 = vmul.f32 %v651, %v1159
      %v1224 = vmul.f32 %v656, %v1160
      %v1225 = vmul.f32 %v659, %v1161
      %v1226 = vmul.f32 %v664, %v1162
      %v1227 = vmul.f32 %v667, %v1163
      %v1228 = vmul.f32 %v672, %v1164
      %v1229 = vmul.f32 %v675, %v1165
      %v1230 = vmul.f32 %v680, %v1166
      %v1231 = vmul.f32 %v683, %v1167
      %v1232 = vmul.f32 %v688, %v1168
      %v1233 = vmul.f32 %v691, %v1169
      %v1234 = vmul.f32 %v696, %v1170
      %v1235 = vmul.f32 %v699, %v1171
      %v1236 = vmul.f32 %v704, %v1172
      %v1237 = vmul.f32 %v707, %v1173
      %v1238 = vmul.f32 %v712, %v1174
      %v1239 = vmul.f32 %v715, %v1175
      %v1240 = vmul.f32 %v720, %v1176
      %v1241 = vmul.f32 %v723, %v1177
      %v1242 = vmul.f32 %v728, %v1178
      %v1243 = vmul.f32 %v731, %v1179
      %v1244 = vmul.f32 %v736, %v1180
      %v1245 = vmul.f32 %v739, %v1181
      %v1246 = vmul.f32 %v744, %v1182
      %v1247 = vmul.f32 %v747, %v1183
      %v1248 = vmul.f32 %v752, %v1184
      %v1249 = vmul.f32 %v755, %v1185
      %v1250 = vmul.f32 %v760, %v1186
      %v1251 = vmul.f32 %v763, %v1187
      %v1252 = vmul.f32 %v768, %v1188
      %v1253 = vmul.f32 %v771, %v1189
      %v1254 = vmul.f32 %v776, %v1190
      %v1255 = vmul.f32 %v779, %v1191
      %v1256 = vmul.f32 %v784, %v1192
      %v1257 = vmul.f32 %v787, %v1193
      %v1258 = vmul.f32 %v792, %v1194
      %v1259 = vmul.f32 %v795, %v1195
      %v1260 = vmul.f32 %v800, %v1196
      %v1261 = vmul.f32 %v803, %v1197
      %v1262 = vmul.f32 %v808, %v1198
      %v1263 = vmul.f32 %v811, %v1199
      %v1264 = vmul.f32 %v816, %v1200
      %v1265 = vmul.f32 %v819, %v1201
      %v1266 = vmul.f32 %v824, %v1202
      %v1267 = vmul.f32 %v827, %v1203
      %v1268 = vmul.f32 %v832, %v1204
      %v1269 = vmul.f32 %v835, %v1205
      %v1270 = vmul.f32 %v840, %v1206
      %v1271 = vmul.f32 %v843, %v1207
      %v1272 = vmul.f32 %v848, %v1208
      %v1273 = vmul.f32 %v851, %v1209
      %v1274 = vmul.f32 %v856, %v1210
      %v1275 = vmul.f32 %v859, %v1211
      %v1276 = vmul.f32 %v864, %v1212
      %v1277 = vmul.f32 %v867, %v1213
      %v1278 = vmul.f32 %v872, %v1214
      %v1279 = vmul.f32 %v875, %v1215
      %v1280 = vmul.f32 %v880, %v1216
      %v1281 = vmul.f32 %v883, %v1217
      %v1282 = vmul.f32 %v888, %v1218
      %v1283 = vmul.f32 %v891, %v1219
      %v1284 = vmul.f32 %v896, %v1220
      %v1285 = vmul.f32 %v899, %v1221
      %vm1286 = vcmask 130048
      %1287 = vst.msk [vmem:[%s242] sm:$0xff] %vm1286, %v1222
      %1288 = vst.msk [vmem:[%s242 + $0x8] sm:$0xff] %vm1286, %v1223
      %1289 = vst.msk [vmem:[%s242 + $0x10] sm:$0xff] %vm1286, %v1224
      %1290 = vst.msk [vmem:[%s242 + $0x18] sm:$0xff] %vm1286, %v1225
      %1291 = vst.msk [vmem:[%s242 + $0x20] sm:$0xff] %vm1286, %v1226
      %1292 = vst.msk [vmem:[%s242 + $0x28] sm:$0xff] %vm1286, %v1227
      %1293 = vst.msk [vmem:[%s242 + $0x30] sm:$0xff] %vm1286, %v1228
      %1294 = vst.msk [vmem:[%s242 + $0x38] sm:$0xff] %vm1286, %v1229
      %1295 = vst.msk [vmem:[%s242 + $0x40] sm:$0xff] %vm1286, %v1230
      %1296 = vst.msk [vmem:[%s242 + $0x48] sm:$0xff] %vm1286, %v1231
      %1297 = vst.msk [vmem:[%s242 + $0x50] sm:$0xff] %vm1286, %v1232
      %1298 = vst.msk [vmem:[%s242 + $0x58] sm:$0xff] %vm1286, %v1233
      %1299 = vst.msk [vmem:[%s242 + $0x60] sm:$0xff] %vm1286, %v1234
      %1300 = vst.msk [vmem:[%s242 + $0x68] sm:$0xff] %vm1286, %v1235
      %1301 = vst.msk [vmem:[%s242 + $0x70] sm:$0xff] %vm1286, %v1236
      %1302 = vst.msk [vmem:[%s242 + $0x78] sm:$0xff] %vm1286, %v1237
      %1303 = vst.msk [vmem:[%s242 + $0x80] sm:$0xff] %vm1286, %v1238
      %1304 = vst.msk [vmem:[%s242 + $0x88] sm:$0xff] %vm1286, %v1239
      %1305 = vst.msk [vmem:[%s242 + $0x90] sm:$0xff] %vm1286, %v1240
      %1306 = vst.msk [vmem:[%s242 + $0x98] sm:$0xff] %vm1286, %v1241
      %1307 = vst.msk [vmem:[%s242 + $0xa0] sm:$0xff] %vm1286, %v1242
      %1308 = vst.msk [vmem:[%s242 + $0xa8] sm:$0xff] %vm1286, %v1243
      %1309 = vst.msk [vmem:[%s242 + $0xb0] sm:$0xff] %vm1286, %v1244
      %1310 = vst.msk [vmem:[%s242 + $0xb8] sm:$0xff] %vm1286, %v1245
      %1311 = vst.msk [vmem:[%s242 + $0xc0] sm:$0xff] %vm1286, %v1246
      %1312 = vst.msk [vmem:[%s242 + $0xc8] sm:$0xff] %vm1286, %v1247
      %1313 = vst.msk [vmem:[%s242 + $0xd0] sm:$0xff] %vm1286, %v1248
      %1314 = vst.msk [vmem:[%s242 + $0xd8] sm:$0xff] %vm1286, %v1249
      %1315 = vst.msk [vmem:[%s242 + $0xe0] sm:$0xff] %vm1286, %v1250
      %1316 = vst.msk [vmem:[%s242 + $0xe8] sm:$0xff] %vm1286, %v1251
      %1317 = vst.msk [vmem:[%s242 + $0xf0] sm:$0xff] %vm1286, %v1252
      %1318 = vst.msk [vmem:[%s242 + $0xf8] sm:$0xff] %vm1286, %v1253
      %1319 = vst.msk [vmem:[%s242 + $0x100] sm:$0xff] %vm1286, %v1254
      %1320 = vst.msk [vmem:[%s242 + $0x108] sm:$0xff] %vm1286, %v1255
      %1321 = vst.msk [vmem:[%s242 + $0x110] sm:$0xff] %vm1286, %v1256
      %1322 = vst.msk [vmem:[%s242 + $0x118] sm:$0xff] %vm1286, %v1257
      %1323 = vst.msk [vmem:[%s242 + $0x120] sm:$0xff] %vm1286, %v1258
      %1324 = vst.msk [vmem:[%s242 + $0x128] sm:$0xff] %vm1286, %v1259
      %1325 = vst.msk [vmem:[%s242 + $0x130] sm:$0xff] %vm1286, %v1260
      %1326 = vst.msk [vmem:[%s242 + $0x138] sm:$0xff] %vm1286, %v1261
      %1327 = vst.msk [vmem:[%s242 + $0x140] sm:$0xff] %vm1286, %v1262
      %1328 = vst.msk [vmem:[%s242 + $0x148] sm:$0xff] %vm1286, %v1263
      %1329 = vst.msk [vmem:[%s242 + $0x150] sm:$0xff] %vm1286, %v1264
      %1330 = vst.msk [vmem:[%s242 + $0x158] sm:$0xff] %vm1286, %v1265
      %1331 = vst.msk [vmem:[%s242 + $0x160] sm:$0xff] %vm1286, %v1266
      %1332 = vst.msk [vmem:[%s242 + $0x168] sm:$0xff] %vm1286, %v1267
      %1333 = vst.msk [vmem:[%s242 + $0x170] sm:$0xff] %vm1286, %v1268
      %1334 = vst.msk [vmem:[%s242 + $0x178] sm:$0xff] %vm1286, %v1269
      %1335 = vst.msk [vmem:[%s242 + $0x180] sm:$0xff] %vm1286, %v1270
      %1336 = vst.msk [vmem:[%s242 + $0x188] sm:$0xff] %vm1286, %v1271
      %1337 = vst.msk [vmem:[%s242 + $0x190] sm:$0xff] %vm1286, %v1272
      %1338 = vst.msk [vmem:[%s242 + $0x198] sm:$0xff] %vm1286, %v1273
      %1339 = vst.msk [vmem:[%s242 + $0x1a0] sm:$0xff] %vm1286, %v1274
      %1340 = vst.msk [vmem:[%s242 + $0x1a8] sm:$0xff] %vm1286, %v1275
      %1341 = vst.msk [vmem:[%s242 + $0x1b0] sm:$0xff] %vm1286, %v1276
      %1342 = vst.msk [vmem:[%s242 + $0x1b8] sm:$0xff] %vm1286, %v1277
      %1343 = vst.msk [vmem:[%s242 + $0x1c0] sm:$0xff] %vm1286, %v1278
      %1344 = vst.msk [vmem:[%s242 + $0x1c8] sm:$0xff] %vm1286, %v1279
      %1345 = vst.msk [vmem:[%s242 + $0x1d0] sm:$0xff] %vm1286, %v1280
      %1346 = vst.msk [vmem:[%s242 + $0x1d8] sm:$0xff] %vm1286, %v1281
      %1347 = vst.msk [vmem:[%s242 + $0x1e0] sm:$0xff] %vm1286, %v1282
      %1348 = vst.msk [vmem:[%s242 + $0x1e8] sm:$0xff] %vm1286, %v1283
      %1349 = vst.msk [vmem:[%s242 + $0x1f0] sm:$0xff] %vm1286, %v1284
      %1350 = vst.msk [vmem:[%s242 + $0x1f8] sm:$0xff] %vm1286, %v1285
      %s1351 = smul.u32 64, %s19
      %p1352 = scmp.lt.s32.totalorder %s18, 2
      %s1353 = scalar_select %p1352, %s18, 2
      %p1354 = scmp.lt.s32.totalorder %s1351, 63
      %s1355 = scalar_select %p1354, %s1351, 63
      %s1356 = smul.addr %s1353, 64
      %s1357 = sadd.s32 %s1355, %s1356
      %s1358 = smul.addr %s1357, 8
      %s1359 = scalar_lea.vmem %s3, %s1358
      // Predicated region
      $region33: #{pose_guider_forward.20} parent=31 // pred_check
        %p1360 = pneg %p126
      $region34: #{pose_guider_forward.20} parent=31 // pred_check_branch
        %1362 = sbr.rel (%p1360) target = $region36
      $region35: #{pose_guider_forward.20} parent=31 // pred_region
        %s1363 = smul.u32 64, %s19
      $region36: #{pose_guider_forward.20} parent=31 // pred_fallthru
        _
    $region32: #{pose_guider_forward.20} parent=5 // pred_fallthru
      _
    %p1364 = scmp.le.s32.totalorder 2, %s9
    // Predicated region
    $region37: #{pose_guider_forward.20} parent=5 // pred_check
      %p1365 = pneg %p1364
    $region38: #{pose_guider_forward.20} parent=5 // pred_check_branch
      %1367 = sbr.rel (%p1365) target = $region40
    $region39: #{pose_guider_forward.20} parent=5 // pred_region
      %s1368 = ssub.s32 %s9, 2
      // Predicated region
      $region41: #{pose_guider_forward.20} parent=39 // pred_check
        %p1369 = pneg %p132
      $region42: #{pose_guider_forward.20} parent=39 // pred_check_branch
        %1371 = sbr.rel (%p1369) target = $region44
      $region43: #{pose_guider_forward.20} parent=39 // pred_region
        %s1372 = smul.u32 64, %s21
        %p1373 = scmp.lt.s32.totalorder %s20, 2
        %s1374 = scalar_select %p1373, %s20, 2
        %p1375 = scmp.lt.s32.totalorder %s1372, 63
        %s1376 = scalar_select %p1375, %s1372, 63
        %s1377 = smul.addr %s1374, 64
        %s1378 = sadd.s32 %s1376, %s1377
        %s1379 = smul.addr %s1378, 8
        %s1380 = scalar_lea.vmem %s3, %s1379
      $region44: #{pose_guider_forward.20} parent=39 // pred_fallthru
        _
    $region40: #{pose_guider_forward.20} parent=5 // pred_fallthru
      _
  $region6: #{pose_guider_forward.20} parent=0 // loop_footer
    %s13 = sadd.s32 1, %s9
  $region7: #{pose_guider_forward.20} parent=0 // loop_footer_branch
    %8 = sbr.rel target = $region3
  $region8: #{pose_guider_forward.20} parent=0 // loop_exit
    _

// kernel: pose_guider_forward.21
$region0: #{pose_guider_forward.21}
  #allocation0 [shape = 'u32[]', space=smem, size = 0x4, offset = 0x4, fixed_abs, tag = 'smem constant byte address 0x4 - core index']
  #allocation1 [shape = 'u32[144,128]{1,0:T(1,128)}', space=vmem, size = 0x12000, scoped, tag = 'internal scratch']
  %s0 = inlined_call_operand.vmem [shape: bf16[3,512,144], index: 0, kind: input, shape index: {}]
  %s1 = inlined_call_operand.vmem [shape: bf16[3,144,16], index: 1, kind: input, shape index: {}]
  %s2 = inlined_call_operand.vmem [shape: f32[3,1,16], index: 2, kind: input, shape index: {}]
  %s3 = inlined_call_operand.vmem [shape: f32[3,512,16], index: 3, kind: output, shape index: {}]
  %s4 = sld [smem:[#allocation0]]
  $region45: #{pose_guider_forward.21} parent=0
    _
  %s6 = ssub.s32 1, %s4
  %s7 = scalar_select 0, %s6, %s4
  loop: start=0, step=1, limit=5
  $region2: #{pose_guider_forward.21} parent=0 // loop_pre_header
    _
  $region3: #{pose_guider_forward.21} parent=0 // loop_header
    %s9 = sphi 0, %s13
    %p10 = scmp.ge.s32.totalorder %s9, 5
    %s16 = sphi 0, %s28
    %s17 = sphi 0, %s24
    %s18 = sphi 0, %s16
    %s19 = sphi 0, %s17
    %s20 = sphi 0, %s18
    %s21 = sphi 0, %s19
    %s33 = sphi 0, %s35
    %s36 = sphi 0, %s33
    %s37 = sphi 0, %s36
    %s53 = sphi 0, %s37
    %s59 = sphi 0, %s61
    %s62 = sphi 0, %s59
    %s63 = sphi 0, %s62
    %s79 = sphi 0, %s63
    %s85 = sphi 0, %s87
    %s88 = sphi 0, %s85
    %s89 = sphi 0, %s88
    %s105 = sphi 0, %s89
    %s113 = sphi 0, %s115
    %s116 = sphi 0, %s113
    %s117 = sphi 0, %s116
    %s133 = sphi 0, %s117
  $region4: #{pose_guider_forward.21} parent=0 // loop_header_branch
    %12 = sbr.rel (%p10) target = $region8
  $region5: #{pose_guider_forward.21} parent=0 // loop_body
    %s14 = ssub.s32 %s9, 1
    %s15 = ssub.s32 %s9, 2
    %s22 = sadd.s32 1, %s17
    %p23 = scmp.ge.s32.totalorder %s22, 1
    %s24 = scalar_select %p23, 0, %s22
    %s25 = sadd.s32 1, %s16
    %s26 = scalar_select %p23, %s25, %s16
    %p27 = scmp.ge.s32.totalorder %s26, 3
    %s28 = scalar_select %p27, 0, %s26
    %s29 = ssub.s32 %s16, %s28
    %s30 = ssub.s32 %s17, %s24
    %s31 = sor.u32 %s29, %s30
    %p32 = scmp.eq.s32.totalorder %s31, 0
    %s34 = sadd.s32 %s33, 1
    %s35 = scalar_select %p32, %s33, %s34
    %p38 = pneg %p32
    %p39 = scmp.eq.s32.totalorder %s9, 2
    %p40 = por %p38, %p39
    %p41 = scmp.ne.s32.totalorder %s33, %s36
    %p42 = scmp.eq.s32.totalorder %s9, 0
    %p43 = por %p41, %p42
    %p44 = scmp.ne.s32.totalorder %s33, %s36
    %p45 = scmp.eq.s32.totalorder %s14, 2
    %p46 = por %p44, %p45
    %p47 = scmp.ne.s32.totalorder %s36, %s37
    %p48 = scmp.eq.s32.totalorder %s14, 0
    %p49 = por %p47, %p48
    %p50 = scmp.ne.s32.totalorder %s36, %s37
    %p51 = scmp.eq.s32.totalorder %s15, 2
    %p52 = por %p50, %p51
    %p54 = scmp.ne.s32.totalorder %s37, %s53
    %p55 = scmp.eq.s32.totalorder %s15, 0
    %p56 = por %p54, %p55
    %s57 = ssub.s32 %s16, %s28
    %p58 = scmp.eq.s32.totalorder %s57, 0
    %s60 = sadd.s32 %s59, 1
    %s61 = scalar_select %p58, %s59, %s60
    %p64 = pneg %p58
    %p65 = scmp.eq.s32.totalorder %s9, 2
    %p66 = por %p64, %p65
    %p67 = scmp.ne.s32.totalorder %s59, %s62
    %p68 = scmp.eq.s32.totalorder %s9, 0
    %p69 = por %p67, %p68
    %p70 = scmp.ne.s32.totalorder %s59, %s62
    %p71 = scmp.eq.s32.totalorder %s14, 2
    %p72 = por %p70, %p71
    %p73 = scmp.ne.s32.totalorder %s62, %s63
    %p74 = scmp.eq.s32.totalorder %s14, 0
    %p75 = por %p73, %p74
    %p76 = scmp.ne.s32.totalorder %s62, %s63
    %p77 = scmp.eq.s32.totalorder %s15, 2
    %p78 = por %p76, %p77
    %p80 = scmp.ne.s32.totalorder %s63, %s79
    %p81 = scmp.eq.s32.totalorder %s15, 0
    %p82 = por %p80, %p81
    %s83 = ssub.s32 %s16, %s28
    %p84 = scmp.eq.s32.totalorder %s83, 0
    %s86 = sadd.s32 %s85, 1
    %s87 = scalar_select %p84, %s85, %s86
    %p90 = pneg %p84
    %p91 = scmp.eq.s32.totalorder %s9, 2
    %p92 = por %p90, %p91
    %p93 = scmp.ne.s32.totalorder %s85, %s88
    %p94 = scmp.eq.s32.totalorder %s9, 0
    %p95 = por %p93, %p94
    %p96 = scmp.ne.s32.totalorder %s85, %s88
    %p97 = scmp.eq.s32.totalorder %s14, 2
    %p98 = por %p96, %p97
    %p99 = scmp.ne.s32.totalorder %s88, %s89
    %p100 = scmp.eq.s32.totalorder %s14, 0
    %p101 = por %p99, %p100
    %p102 = scmp.ne.s32.totalorder %s88, %s89
    %p103 = scmp.eq.s32.totalorder %s15, 2
    %p104 = por %p102, %p103
    %p106 = scmp.ne.s32.totalorder %s89, %s105
    %p107 = scmp.eq.s32.totalorder %s15, 0
    %p108 = por %p106, %p107
    %s109 = ssub.s32 %s16, %s28
    %s110 = ssub.s32 %s17, %s24
    %s111 = sor.u32 %s109, %s110
    %p112 = scmp.eq.s32.totalorder %s111, 0
    %s114 = sadd.s32 %s113, 1
    %s115 = scalar_select %p112, %s113, %s114
    %p118 = pneg %p112
    %p119 = scmp.eq.s32.totalorder %s9, 2
    %p120 = por %p118, %p119
    %p121 = scmp.ne.s32.totalorder %s113, %s116
    %p122 = scmp.eq.s32.totalorder %s9, 0
    %p123 = por %p121, %p122
    %p124 = scmp.ne.s32.totalorder %s113, %s116
    %p125 = scmp.eq.s32.totalorder %s14, 2
    %p126 = por %p124, %p125
    %p127 = scmp.ne.s32.totalorder %s116, %s117
    %p128 = scmp.eq.s32.totalorder %s14, 0
    %p129 = por %p127, %p128
    %p130 = scmp.ne.s32.totalorder %s116, %s117
    %p131 = scmp.eq.s32.totalorder %s15, 2
    %p132 = por %p130, %p131
    %p134 = scmp.ne.s32.totalorder %s117, %s133
    %p135 = scmp.eq.s32.totalorder %s15, 0
    %p136 = por %p134, %p135
    %p137 = scmp.le.s32.totalorder 1, %s9
    %p138 = scmp.lt.s32.totalorder %s9, 4
    %p139 = pnand %p137, %p138
    %p140 = pneg %p139
    // Predicated region
    $region9: #{pose_guider_forward.21} parent=5 // pred_check
      _
    $region10: #{pose_guider_forward.21} parent=5 // pred_check_branch
      %142 = sbr.rel (%p139) target = $region12
    $region11: #{pose_guider_forward.21} parent=5 // pred_region
      %s143 = ssub.s32 %s9, 1
    $region12: #{pose_guider_forward.21} parent=5 // pred_fallthru
      _
    %p144 = scmp.lt.s32.totalorder %s9, 3
    // Predicated region
    $region13: #{pose_guider_forward.21} parent=5 // pred_check
      %p145 = pneg %p144
    $region14: #{pose_guider_forward.21} parent=5 // pred_check_branch
      %147 = sbr.rel (%p145) target = $region16
    $region15: #{pose_guider_forward.21} parent=5 // pred_region
      // Predicated region
      $region17: #{pose_guider_forward.21} parent=15 // pred_check
        %p148 = pneg %p43
      $region18: #{pose_guider_forward.21} parent=15 // pred_check_branch
        %150 = sbr.rel (%p148) target = $region20
      $region19: #{pose_guider_forward.21} parent=15 // pred_region
        %s151 = smul.u32 64, %s17
        %p152 = scmp.lt.s32.totalorder %s16, 2
        %s153 = scalar_select %p152, %s16, 2
        %p154 = scmp.lt.s32.totalorder %s151, 63
        %s155 = scalar_select %p154, %s151, 63
        %s156 = smul.addr %s155, 2
        %s157 = smul.addr %s153, 128
        %s158 = sadd.s32 %s156, %s157
        %s159 = smul.addr %s158, 4
        %s160 = scalar_lea.vmem %s0, %s159
        %s161 = smul.u32 64, %s17
      $region20: #{pose_guider_forward.21} parent=15 // pred_fallthru
        _
      // Predicated region
      $region21: #{pose_guider_forward.21} parent=15 // pred_check
        %p162 = pneg %p69
      $region22: #{pose_guider_forward.21} parent=15 // pred_check_branch
        %164 = sbr.rel (%p162) target = $region24
      $region23: #{pose_guider_forward.21} parent=15 // pred_region
        %p165 = scmp.lt.s32.totalorder %s16, 2
        %s166 = scalar_select %p165, %s16, 2
        %s167 = smul.addr %s166, 18
        %s168 = smul.addr %s167, 4
        %s169 = scalar_lea.vmem %s1, %s168
      $region24: #{pose_guider_forward.21} parent=15 // pred_fallthru
        _
      // Predicated region
      $region25: #{pose_guider_forward.21} parent=15 // pred_check
        %p170 = pneg %p95
      $region26: #{pose_guider_forward.21} parent=15 // pred_check_branch
        %172 = sbr.rel (%p170) target = $region28
      $region27: #{pose_guider_forward.21} parent=15 // pred_region
        %p173 = scmp.lt.s32.totalorder %s16, 2
        %s174 = scalar_select %p173, %s16, 2
        %s175 = scalar_lea.vmem %s2, %s174
      $region28: #{pose_guider_forward.21} parent=15 // pred_fallthru
        _
    $region16: #{pose_guider_forward.21} parent=5 // pred_fallthru
      _
    %p176 = scmp.le.s32.totalorder 1, %s9
    %p177 = scmp.lt.s32.totalorder %s9, 4
    %p178 = pnand %p176, %p177
    %p179 = pneg %p178
    // Predicated region
    $region29: #{pose_guider_forward.21} parent=5 // pred_check
      _
    $region30: #{pose_guider_forward.21} parent=5 // pred_check_branch
      %181 = sbr.rel (%p178) target = $region32
    $region31: #{pose_guider_forward.21} parent=5 // pred_region
      %s182 = ssub.s32 %s9, 1
      %s183 = smul.u32 64, %s19
      %p184 = scmp.lt.s32.totalorder %s18, 2
      %s185 = scalar_select %p184, %s18, 2
      %p186 = scmp.lt.s32.totalorder %s183, 63
      %s187 = scalar_select %p186, %s183, 63
      %s188 = smul.addr %s187, 2
      %s189 = smul.addr %s185, 128
      %s190 = sadd.s32 %s188, %s189
      %s191 = smul.addr %s190, 4
      %s192 = scalar_lea.vmem %s0, %s191
      %p193 = pneg %p49
      %p194 = pneg %p46
      %p195 = scmp.lt.s32.totalorder %s18, 2
      %s196 = scalar_select %p195, %s18, 2
      %s197 = smul.addr %s196, 18
      %s198 = smul.addr %s197, 4
      %s199 = scalar_lea.vmem %s1, %s198
      %p200 = pneg %p75
      %p201 = pneg %p72
      %p202 = scmp.lt.s32.totalorder %s18, 2
      %s203 = scalar_select %p202, %s18, 2
      %s204 = scalar_lea.vmem %s2, %s203
      %p205 = pneg %p101
      %p206 = pneg %p98
      %p207 = pneg %p129
      %p208 = pneg %p126
      %s209 = smul.u32 64, %s19
      %p210 = scmp.lt.s32.totalorder %s18, 2
      %s211 = scalar_select %p210, %s18, 2
      %p212 = scmp.lt.s32.totalorder %s209, 63
      %s213 = scalar_select %p212, %s209, 63
      %s214 = smul.addr %s211, 64
      %s215 = sadd.s32 %s213, %s214
      %s216 = smul.addr %s215, 8
      %s217 = scalar_lea.vmem %s3, %s216
      %s218 = smul.u32 64, %s19
      %p219 = scmp.lt.s32.totalorder %s18, 2
      %s220 = scalar_select %p219, %s18, 2
      %p221 = scmp.lt.s32.totalorder %s218, 63
      %s222 = scalar_select %p221, %s218, 63
      %s223 = smul.addr %s222, 2
      %s224 = smul.addr %s220, 128
      %s225 = sadd.s32 %s223, %s224
      %s226 = smul.addr %s225, 4
      %s227 = scalar_lea.vmem %s0, %s226
      %s228 = smul.u32 64, %s19
      %p229 = scmp.lt.s32.totalorder %s18, 2
      %s230 = scalar_select %p229, %s18, 2
      %s231 = smul.addr %s230, 18
      %s232 = smul.addr %s231, 4
      %s233 = scalar_lea.vmem %s1, %s232
      %p234 = scmp.lt.s32.totalorder %s18, 2
      %s235 = scalar_select %p234, %s18, 2
      %s236 = scalar_lea.vmem %s2, %s235
      %s237 = smul.u32 64, %s19
      %p238 = scmp.lt.s32.totalorder %s18, 2
      %s239 = scalar_select %p238, %s18, 2
      %p240 = scmp.lt.s32.totalorder %s237, 63
      %s241 = scalar_select %p240, %s237, 63
      %s242 = smul.addr %s239, 64
      %s243 = sadd.s32 %s241, %s242
      %s244 = smul.addr %s243, 8
      %s245 = scalar_lea.vmem %s3, %s244
      %s246 = smul.u32 64, %s19
      %v248 = vld [vmem:[%s227] sm:$0xff]
      %v249 = vld [vmem:[%s227 + $0x8] sm:$0xff]
      %v250 = vld [vmem:[%s227 + $0x10] sm:$0xff]
      %v251 = vld [vmem:[%s227 + $0x18] sm:$0xff]
      %v252 = vld [vmem:[%s227 + $0x20] sm:$0xff]
      %v253 = vld [vmem:[%s227 + $0x28] sm:$0xff]
      %v254 = vld [vmem:[%s227 + $0x30] sm:$0xff]
      %v255 = vld [vmem:[%s227 + $0x38] sm:$0xff]
      %v256 = vld [vmem:[%s227 + $0x40] sm:$0xff]
      %v257 = vld [vmem:[%s227 + $0x48] sm:$0xff]
      %v258 = vld [vmem:[%s227 + $0x50] sm:$0xff]
      %v259 = vld [vmem:[%s227 + $0x58] sm:$0xff]
      %v260 = vld [vmem:[%s227 + $0x60] sm:$0xff]
      %v261 = vld [vmem:[%s227 + $0x68] sm:$0xff]
      %v262 = vld [vmem:[%s227 + $0x70] sm:$0xff]
      %v263 = vld [vmem:[%s227 + $0x78] sm:$0xff]
      %v264 = vld [vmem:[%s227 + $0x80] sm:$0xff]
      %v265 = vld [vmem:[%s227 + $0x88] sm:$0xff]
      %v266 = vld [vmem:[%s227 + $0x90] sm:$0xff]
      %v267 = vld [vmem:[%s227 + $0x98] sm:$0xff]
      %v268 = vld [vmem:[%s227 + $0xa0] sm:$0xff]
      %v269 = vld [vmem:[%s227 + $0xa8] sm:$0xff]
      %v270 = vld [vmem:[%s227 + $0xb0] sm:$0xff]
      %v271 = vld [vmem:[%s227 + $0xb8] sm:$0xff]
      %v272 = vld [vmem:[%s227 + $0xc0] sm:$0xff]
      %v273 = vld [vmem:[%s227 + $0xc8] sm:$0xff]
      %v274 = vld [vmem:[%s227 + $0xd0] sm:$0xff]
      %v275 = vld [vmem:[%s227 + $0xd8] sm:$0xff]
      %v276 = vld [vmem:[%s227 + $0xe0] sm:$0xff]
      %v277 = vld [vmem:[%s227 + $0xe8] sm:$0xff]
      %v278 = vld [vmem:[%s227 + $0xf0] sm:$0xff]
      %v279 = vld [vmem:[%s227 + $0xf8] sm:$0xff]
      %v280 = vld [vmem:[%s227 + $0x100] sm:$0xff]
      %v281 = vld [vmem:[%s227 + $0x108] sm:$0xff]
      %v282 = vld [vmem:[%s227 + $0x110] sm:$0xff]
      %v283 = vld [vmem:[%s227 + $0x118] sm:$0xff]
      %v284 = vld [vmem:[%s227 + $0x120] sm:$0xff]
      %v285 = vld [vmem:[%s227 + $0x128] sm:$0xff]
      %v286 = vld [vmem:[%s227 + $0x130] sm:$0xff]
      %v287 = vld [vmem:[%s227 + $0x138] sm:$0xff]
      %v288 = vld [vmem:[%s227 + $0x140] sm:$0xff]
      %v289 = vld [vmem:[%s227 + $0x148] sm:$0xff]
      %v290 = vld [vmem:[%s227 + $0x150] sm:$0xff]
      %v291 = vld [vmem:[%s227 + $0x158] sm:$0xff]
      %v292 = vld [vmem:[%s227 + $0x160] sm:$0xff]
      %v293 = vld [vmem:[%s227 + $0x168] sm:$0xff]
      %v294 = vld [vmem:[%s227 + $0x170] sm:$0xff]
      %v295 = vld [vmem:[%s227 + $0x178] sm:$0xff]
      %v296 = vld [vmem:[%s227 + $0x180] sm:$0xff]
      %v297 = vld [vmem:[%s227 + $0x188] sm:$0xff]
      %v298 = vld [vmem:[%s227 + $0x190] sm:$0xff]
      %v299 = vld [vmem:[%s227 + $0x198] sm:$0xff]
      %v300 = vld [vmem:[%s227 + $0x1a0] sm:$0xff]
      %v301 = vld [vmem:[%s227 + $0x1a8] sm:$0xff]
      %v302 = vld [vmem:[%s227 + $0x1b0] sm:$0xff]
      %v303 = vld [vmem:[%s227 + $0x1b8] sm:$0xff]
      %v304 = vld [vmem:[%s227 + $0x1c0] sm:$0xff]
      %v305 = vld [vmem:[%s227 + $0x1c8] sm:$0xff]
      %v306 = vld [vmem:[%s227 + $0x1d0] sm:$0xff]
      %v307 = vld [vmem:[%s227 + $0x1d8] sm:$0xff]
      %v308 = vld [vmem:[%s227 + $0x1e0] sm:$0xff]
      %v309 = vld [vmem:[%s227 + $0x1e8] sm:$0xff]
      %v310 = vld [vmem:[%s227 + $0x1f0] sm:$0xff]
      %v311 = vld [vmem:[%s227 + $0x1f8] sm:$0xff]
      %v312 = vld [vmem:[%s233] sm:$0xf]
      %v313 = vld [vmem:[%s233 + $0x4] sm:$0xf]
      %v314 = vld [vmem:[%s233 + $0x8] sm:$0xf]
      %v315 = vld [vmem:[%s233 + $0xc] sm:$0xf]
      %v316 = vld [vmem:[%s233 + $0x10] sm:$0xf]
      %v317 = vld [vmem:[%s233 + $0x14] sm:$0xf]
      %v318 = vld [vmem:[%s233 + $0x18] sm:$0xf]
      %v319 = vld [vmem:[%s233 + $0x1c] sm:$0xf]
      %v320 = vld [vmem:[%s233 + $0x20] sm:$0xf]
      %v321 = vld [vmem:[%s233 + $0x24] sm:$0xf]
      %v322 = vld [vmem:[%s233 + $0x28] sm:$0xf]
      %v323 = vld [vmem:[%s233 + $0x2c] sm:$0xf]
      %v324 = vld [vmem:[%s233 + $0x30] sm:$0xf]
      %v325 = vld [vmem:[%s233 + $0x34] sm:$0xf]
      %v326 = vld [vmem:[%s233 + $0x38] sm:$0xf]
      %v327 = vld [vmem:[%s233 + $0x3c] sm:$0xf]
      %v328 = vld [vmem:[%s233 + $0x40] sm:$0xf]
      %v329 = vld [vmem:[%s233 + $0x44] sm:$0xf]
      %v330 = vld [vmem:[%s236] sm:$0x1]
      %v332 = vlaneseq
      %v333 = vshrl.u32 %v332, 7
      %v334 = vsub.s32 0, %v333
      %v335 = vrot.slane %v330, %v334
      %v401 = vunpack.c.l.b16 %v248
      %v402 = vunpack.c.h.b16 %v248
      %v403 = vunpack.c.l.b16 %v249
      %v404 = vunpack.c.h.b16 %v249
      %v405 = vunpack.c.l.b16 %v250
      %v406 = vunpack.c.h.b16 %v250
      %v407 = vunpack.c.l.b16 %v251
      %v408 = vunpack.c.h.b16 %v251
      %v409 = vunpack.c.l.b16 %v252
      %v410 = vunpack.c.h.b16 %v252
      %v411 = vunpack.c.l.b16 %v253
      %v412 = vunpack.c.h.b16 %v253
      %v413 = vunpack.c.l.b16 %v254
      %v414 = vunpack.c.h.b16 %v254
      %v415 = vunpack.c.l.b16 %v255
      %v416 = vunpack.c.h.b16 %v255
      %v417 = vunpack.c.l.b16 %v256
      %v418 = vunpack.c.h.b16 %v256
      %v419 = vunpack.c.l.b16 %v257
      %v420 = vunpack.c.h.b16 %v257
      %v421 = vunpack.c.l.b16 %v258
      %v422 = vunpack.c.h.b16 %v258
      %v423 = vunpack.c.l.b16 %v259
      %v424 = vunpack.c.h.b16 %v259
      %v425 = vunpack.c.l.b16 %v260
      %v426 = vunpack.c.h.b16 %v260
      %v427 = vunpack.c.l.b16 %v261
      %v428 = vunpack.c.h.b16 %v261
      %v429 = vunpack.c.l.b16 %v262
      %v430 = vunpack.c.h.b16 %v262
      %v431 = vunpack.c.l.b16 %v263
      %v432 = vunpack.c.h.b16 %v263
      %v433 = vunpack.c.l.b16 %v264
      %v434 = vunpack.c.h.b16 %v264
      %v435 = vunpack.c.l.b16 %v265
      %v436 = vunpack.c.h.b16 %v265
      %v437 = vunpack.c.l.b16 %v266
      %v438 = vunpack.c.h.b16 %v266
      %v439 = vunpack.c.l.b16 %v267
      %v440 = vunpack.c.h.b16 %v267
      %v441 = vunpack.c.l.b16 %v268
      %v442 = vunpack.c.h.b16 %v268
      %v443 = vunpack.c.l.b16 %v269
      %v444 = vunpack.c.h.b16 %v269
      %v445 = vunpack.c.l.b16 %v270
      %v446 = vunpack.c.h.b16 %v270
      %v447 = vunpack.c.l.b16 %v271
      %v448 = vunpack.c.h.b16 %v271
      %v449 = vunpack.c.l.b16 %v272
      %v450 = vunpack.c.h.b16 %v272
      %v451 = vunpack.c.l.b16 %v273
      %v452 = vunpack.c.h.b16 %v273
      %v453 = vunpack.c.l.b16 %v274
      %v454 = vunpack.c.h.b16 %v274
      %v455 = vunpack.c.l.b16 %v275
      %v456 = vunpack.c.h.b16 %v275
      %v457 = vunpack.c.l.b16 %v276
      %v458 = vunpack.c.h.b16 %v276
      %v459 = vunpack.c.l.b16 %v277
      %v460 = vunpack.c.h.b16 %v277
      %v461 = vunpack.c.l.b16 %v278
      %v462 = vunpack.c.h.b16 %v278
      %v463 = vunpack.c.l.b16 %v279
      %v464 = vunpack.c.h.b16 %v279
      %v465 = vunpack.c.l.b16 %v280
      %v466 = vunpack.c.h.b16 %v280
      %v467 = vunpack.c.l.b16 %v281
      %v468 = vunpack.c.h.b16 %v281
      %v469 = vunpack.c.l.b16 %v282
      %v470 = vunpack.c.h.b16 %v282
      %v471 = vunpack.c.l.b16 %v283
      %v472 = vunpack.c.h.b16 %v283
      %v473 = vunpack.c.l.b16 %v284
      %v474 = vunpack.c.h.b16 %v284
      %v475 = vunpack.c.l.b16 %v285
      %v476 = vunpack.c.h.b16 %v285
      %v477 = vunpack.c.l.b16 %v286
      %v478 = vunpack.c.h.b16 %v286
      %v479 = vunpack.c.l.b16 %v287
      %v480 = vunpack.c.h.b16 %v287
      %v481 = vunpack.c.l.b16 %v288
      %v482 = vunpack.c.h.b16 %v288
      %v483 = vunpack.c.l.b16 %v289
      %v484 = vunpack.c.h.b16 %v289
      %v485 = vunpack.c.l.b16 %v290
      %v486 = vunpack.c.h.b16 %v290
      %v487 = vunpack.c.l.b16 %v291
      %v488 = vunpack.c.h.b16 %v291
      %v489 = vunpack.c.l.b16 %v292
      %v490 = vunpack.c.h.b16 %v292
      %v491 = vunpack.c.l.b16 %v293
      %v492 = vunpack.c.h.b16 %v293
      %v493 = vunpack.c.l.b16 %v294
      %v494 = vunpack.c.h.b16 %v294
      %v495 = vunpack.c.l.b16 %v295
      %v496 = vunpack.c.h.b16 %v295
      %v497 = vunpack.c.l.b16 %v296
      %v498 = vunpack.c.h.b16 %v296
      %v499 = vunpack.c.l.b16 %v297
      %v500 = vunpack.c.h.b16 %v297
      %v501 = vunpack.c.l.b16 %v298
      %v502 = vunpack.c.h.b16 %v298
      %v503 = vunpack.c.l.b16 %v299
      %v504 = vunpack.c.h.b16 %v299
      %v505 = vunpack.c.l.b16 %v300
      %v506 = vunpack.c.h.b16 %v300
      %v507 = vunpack.c.l.b16 %v301
      %v508 = vunpack.c.h.b16 %v301
      %v509 = vunpack.c.l.b16 %v302
      %v510 = vunpack.c.h.b16 %v302
      %v511 = vunpack.c.l.b16 %v303
      %v512 = vunpack.c.h.b16 %v303
      %v513 = vunpack.c.l.b16 %v304
      %v514 = vunpack.c.h.b16 %v304
      %v515 = vunpack.c.l.b16 %v305
      %v516 = vunpack.c.h.b16 %v305
      %v517 = vunpack.c.l.b16 %v306
      %v518 = vunpack.c.h.b16 %v306
      %v519 = vunpack.c.l.b16 %v307
      %v520 = vunpack.c.h.b16 %v307
      %v521 = vunpack.c.l.b16 %v308
      %v522 = vunpack.c.h.b16 %v308
      %v523 = vunpack.c.l.b16 %v309
      %v524 = vunpack.c.h.b16 %v309
      %v525 = vunpack.c.l.b16 %v310
      %v526 = vunpack.c.h.b16 %v310
      %v527 = vunpack.c.l.b16 %v311
      %v528 = vunpack.c.h.b16 %v311
      %v529 = vpack.c.b16 %v403, %v401
      %v530 = vpack.c.b16 %v404, %v402
      %v531 = vpack.c.b16 %v407, %v405
      %v532 = vpack.c.b16 %v408, %v406
      %v533 = vpack.c.b16 %v411, %v409
      %v534 = vpack.c.b16 %v412, %v410
      %v535 = vpack.c.b16 %v415, %v413
      %v536 = vpack.c.b16 %v416, %v414
      %v537 = vpack.c.b16 %v419, %v417
      %v538 = vpack.c.b16 %v420, %v418
      %v539 = vpack.c.b16 %v423, %v421
      %v540 = vpack.c.b16 %v424, %v422
      %v541 = vpack.c.b16 %v427, %v425
      %v542 = vpack.c.b16 %v428, %v426
      %v543 = vpack.c.b16 %v431, %v429
      %v544 = vpack.c.b16 %v432, %v430
      %v545 = vpack.c.b16 %v435, %v433
      %v546 = vpack.c.b16 %v436, %v434
      %v547 = vpack.c.b16 %v439, %v437
      %v548 = vpack.c.b16 %v440, %v438
      %v549 = vpack.c.b16 %v443, %v441
      %v550 = vpack.c.b16 %v444, %v442
      %v551 = vpack.c.b16 %v447, %v445
      %v552 = vpack.c.b16 %v448, %v446
      %v553 = vpack.c.b16 %v451, %v449
      %v554 = vpack.c.b16 %v452, %v450
      %v555 = vpack.c.b16 %v455, %v453
      %v556 = vpack.c.b16 %v456, %v454
      %v557 = vpack.c.b16 %v459, %v457
      %v558 = vpack.c.b16 %v460, %v458
      %v559 = vpack.c.b16 %v463, %v461
      %v560 = vpack.c.b16 %v464, %v462
      %v561 = vpack.c.b16 %v467, %v465
      %v562 = vpack.c.b16 %v468, %v466
      %v563 = vpack.c.b16 %v471, %v469
      %v564 = vpack.c.b16 %v472, %v470
      %v565 = vpack.c.b16 %v475, %v473
      %v566 = vpack.c.b16 %v476, %v474
      %v567 = vpack.c.b16 %v479, %v477
      %v568 = vpack.c.b16 %v480, %v478
      %v569 = vpack.c.b16 %v483, %v481
      %v570 = vpack.c.b16 %v484, %v482
      %v571 = vpack.c.b16 %v487, %v485
      %v572 = vpack.c.b16 %v488, %v486
      %v573 = vpack.c.b16 %v491, %v489
      %v574 = vpack.c.b16 %v492, %v490
      %v575 = vpack.c.b16 %v495, %v493
      %v576 = vpack.c.b16 %v496, %v494
      %v577 = vpack.c.b16 %v499, %v497
      %v578 = vpack.c.b16 %v500, %v498
      %v579 = vpack.c.b16 %v503, %v501
      %v580 = vpack.c.b16 %v504, %v502
      %v581 = vpack.c.b16 %v507, %v505
      %v582 = vpack.c.b16 %v508, %v506
      %v583 = vpack.c.b16 %v511, %v509
      %v584 = vpack.c.b16 %v512, %v510
      %v585 = vpack.c.b16 %v515, %v513
      %v586 = vpack.c.b16 %v516, %v514
      %v587 = vpack.c.b16 %v519, %v517
      %v588 = vpack.c.b16 %v520, %v518
      %v589 = vpack.c.b16 %v523, %v521
      %v590 = vpack.c.b16 %v524, %v522
      %v591 = vpack.c.b16 %v527, %v525
      %v592 = vpack.c.b16 %v528, %v526
      %v643 = vunpack.c.l.b16 %v312
      %v644 = vunpack.c.l.b16 %v313
      %v645 = vunpack.c.l.b16 %v314
      %v646 = vunpack.c.l.b16 %v315
      %v647 = vunpack.c.l.b16 %v316
      %v648 = vunpack.c.l.b16 %v317
      %v649 = vunpack.c.l.b16 %v318
      %v650 = vunpack.c.l.b16 %v319
      %v651 = vunpack.c.l.b16 %v320
      %v652 = vunpack.c.l.b16 %v321
      %v653 = vunpack.c.l.b16 %v322
      %v654 = vunpack.c.l.b16 %v323
      %v655 = vunpack.c.l.b16 %v324
      %v656 = vunpack.c.l.b16 %v325
      %v657 = vunpack.c.l.b16 %v326
      %v658 = vunpack.c.l.b16 %v327
      %v659 = vunpack.c.l.b16 %v328
      %v660 = vunpack.c.l.b16 %v329
      %v661 = vpack.c.b16 %v644, %v643
      %v662 = vpack.c.b16 %v646, %v645
      %v663 = vpack.c.b16 %v648, %v647
      %v664 = vpack.c.b16 %v650, %v649
      %v665 = vpack.c.b16 %v652, %v651
      %v666 = vpack.c.b16 %v654, %v653
      %v667 = vpack.c.b16 %v656, %v655
      %v668 = vpack.c.b16 %v658, %v657
      %v669 = vpack.c.b16 %v660, %v659
      %vm679 = vcmask 130048
      %v681 = vsel %vm679, %v530, 0
      %v684 = vsel %vm679, %v532, 0
      %v687 = vsel %vm679, %v534, 0
      %v690 = vsel %vm679, %v536, 0
      %v693 = vsel %vm679, %v538, 0
      %v696 = vsel %vm679, %v540, 0
      %v699 = vsel %vm679, %v542, 0
      %v702 = vsel %vm679, %v544, 0
      %v705 = vsel %vm679, %v546, 0
      %v708 = vsel %vm679, %v548, 0
      %v711 = vsel %vm679, %v550, 0
      %v714 = vsel %vm679, %v552, 0
      %v717 = vsel %vm679, %v554, 0
      %v720 = vsel %vm679, %v556, 0
      %v723 = vsel %vm679, %v558, 0
      %v726 = vsel %vm679, %v560, 0
      %v729 = vsel %vm679, %v562, 0
      %v732 = vsel %vm679, %v564, 0
      %v735 = vsel %vm679, %v566, 0
      %v738 = vsel %vm679, %v568, 0
      %v741 = vsel %vm679, %v570, 0
      %v744 = vsel %vm679, %v572, 0
      %v747 = vsel %vm679, %v574, 0
      %v750 = vsel %vm679, %v576, 0
      %v753 = vsel %vm679, %v578, 0
      %v756 = vsel %vm679, %v580, 0
      %v759 = vsel %vm679, %v582, 0
      %v762 = vsel %vm679, %v584, 0
      %v765 = vsel %vm679, %v586, 0
      %v768 = vsel %vm679, %v588, 0
      %v771 = vsel %vm679, %v590, 0
      %v774 = vsel %vm679, %v592, 0
      %776 = vmatprep.subr.bf16.mxu0 0
      %777 = vmatpush1.bf16.msra.mxu0 %v668
      %778 = vmatprep.subr.bf16.mxu0 0
      %779 = vmatpush1.bf16.msra.mxu0 %v667
      %780 = vmatprep.subr.bf16.mxu0 0
      %781 = vmatpush1.bf16.msra.mxu0 %v666
      %782 = vmatprep.subr.bf16.mxu0 0
      %783 = vmatpush1.bf16.msra.mxu0 %v665
      %784 = vmatprep.subr.bf16.mxu0 0
      %785 = vmatpush1.bf16.msra.mxu0 %v664
      %786 = vmatprep.subr.bf16.mxu0 0
      %787 = vmatpush1.bf16.msra.mxu0 %v663
      %788 = vmatprep.subr.bf16.mxu0 0
      %789 = vmatpush1.bf16.msra.mxu0 %v662
      %790 = vmatprep.subr.bf16.mxu0 0
      %791 = vmatpush1.bf16.msra.mxu0 %v661
      %792 = vmatprep.subr.bf16.mxu0 0
      %793 = vmatpush2.bf16.msra.mxu0 0
      %794 = vmatprep.subr.bf16.mxu0 0
      %795 = vmatpush2.bf16.msra.mxu0 0
      %796 = vmatprep.subr.bf16.mxu0 0
      %797 = vmatpush2.bf16.msra.mxu0 0
      %798 = vmatprep.subr.bf16.mxu0 0
      %799 = vmatpush2.bf16.msra.mxu0 0
      %800 = vmatprep.subr.bf16.mxu0 0
      %801 = vmatpush2.bf16.msra.mxu0 0
      %802 = vmatprep.subr.bf16.mxu0 0
      %803 = vmatpush2.bf16.msra.mxu0 0
      %804 = vmatprep.subr.bf16.mxu0 0
      %805 = vmatpush2.bf16.msra.mxu0 0
      %806 = vmatprep.subr.bf16.mxu0 0
      %807 = vmatpush2.bf16.msra.mxu0 %v669
      %808 = vmatprep.mubr.bf16.mxu0 %v681
      %809 = vmatmul.mubr.bf16.gmra.mxu0 %v529
      %v810 = vpop.f32.mrf.mxu0
      %v811 = vadd.f32 %v335, %v810
      %v812 = vpop.f32.mrf.mxu0
      %v813 = vpop.f32.mrf.mxu0
      %v814 = vadd.f32 %v335, %v813
      %v815 = vpop.f32.mrf.mxu0
      %816 = vmatprep.mubr.bf16.mxu0 %v684
      %817 = vmatmul.mubr.bf16.gmra.mxu0 %v531
      %v818 = vpop.f32.mrf.mxu0
      %v819 = vadd.f32 %v335, %v818
      %v820 = vpop.f32.mrf.mxu0
      %v821 = vpop.f32.mrf.mxu0
      %v822 = vadd.f32 %v335, %v821
      %v823 = vpop.f32.mrf.mxu0
      %824 = vmatprep.mubr.bf16.mxu0 %v687
      %825 = vmatmul.mubr.bf16.gmra.mxu0 %v533
      %v826 = vpop.f32.mrf.mxu0
      %v827 = vadd.f32 %v335, %v826
      %v828 = vpop.f32.mrf.mxu0
      %v829 = vpop.f32.mrf.mxu0
      %v830 = vadd.f32 %v335, %v829
      %v831 = vpop.f32.mrf.mxu0
      %832 = vmatprep.mubr.bf16.mxu0 %v690
      %833 = vmatmul.mubr.bf16.gmra.mxu0 %v535
      %v834 = vpop.f32.mrf.mxu0
      %v835 = vadd.f32 %v335, %v834
      %v836 = vpop.f32.mrf.mxu0
      %v837 = vpop.f32.mrf.mxu0
      %v838 = vadd.f32 %v335, %v837
      %v839 = vpop.f32.mrf.mxu0
      %840 = vmatprep.mubr.bf16.mxu0 %v693
      %841 = vmatmul.mubr.bf16.gmra.mxu0 %v537
      %v842 = vpop.f32.mrf.mxu0
      %v843 = vadd.f32 %v335, %v842
      %v844 = vpop.f32.mrf.mxu0
      %v845 = vpop.f32.mrf.mxu0
      %v846 = vadd.f32 %v335, %v845
      %v847 = vpop.f32.mrf.mxu0
      %848 = vmatprep.mubr.bf16.mxu0 %v696
      %849 = vmatmul.mubr.bf16.gmra.mxu0 %v539
      %v850 = vpop.f32.mrf.mxu0
      %v851 = vadd.f32 %v335, %v850
      %v852 = vpop.f32.mrf.mxu0
      %v853 = vpop.f32.mrf.mxu0
      %v854 = vadd.f32 %v335, %v853
      %v855 = vpop.f32.mrf.mxu0
      %856 = vmatprep.mubr.bf16.mxu0 %v699
      %857 = vmatmul.mubr.bf16.gmra.mxu0 %v541
      %v858 = vpop.f32.mrf.mxu0
      %v859 = vadd.f32 %v335, %v858
      %v860 = vpop.f32.mrf.mxu0
      %v861 = vpop.f32.mrf.mxu0
      %v862 = vadd.f32 %v335, %v861
      %v863 = vpop.f32.mrf.mxu0
      %864 = vmatprep.mubr.bf16.mxu0 %v702
      %865 = vmatmul.mubr.bf16.gmra.mxu0 %v543
      %v866 = vpop.f32.mrf.mxu0
      %v867 = vadd.f32 %v335, %v866
      %v868 = vpop.f32.mrf.mxu0
      %v869 = vpop.f32.mrf.mxu0
      %v870 = vadd.f32 %v335, %v869
      %v871 = vpop.f32.mrf.mxu0
      %872 = vmatprep.mubr.bf16.mxu0 %v705
      %873 = vmatmul.mubr.bf16.gmra.mxu0 %v545
      %v874 = vpop.f32.mrf.mxu0
      %v875 = vadd.f32 %v335, %v874
      %v876 = vpop.f32.mrf.mxu0
      %v877 = vpop.f32.mrf.mxu0
      %v878 = vadd.f32 %v335, %v877
      %v879 = vpop.f32.mrf.mxu0
      %880 = vmatprep.mubr.bf16.mxu0 %v708
      %881 = vmatmul.mubr.bf16.gmra.mxu0 %v547
      %v882 = vpop.f32.mrf.mxu0
      %v883 = vadd.f32 %v335, %v882
      %v884 = vpop.f32.mrf.mxu0
      %v885 = vpop.f32.mrf.mxu0
      %v886 = vadd.f32 %v335, %v885
      %v887 = vpop.f32.mrf.mxu0
      %888 = vmatprep.mubr.bf16.mxu0 %v711
      %889 = vmatmul.mubr.bf16.gmra.mxu0 %v549
      %v890 = vpop.f32.mrf.mxu0
      %v891 = vadd.f32 %v335, %v890
      %v892 = vpop.f32.mrf.mxu0
      %v893 = vpop.f32.mrf.mxu0
      %v894 = vadd.f32 %v335, %v893
      %v895 = vpop.f32.mrf.mxu0
      %896 = vmatprep.mubr.bf16.mxu0 %v714
      %897 = vmatmul.mubr.bf16.gmra.mxu0 %v551
      %v898 = vpop.f32.mrf.mxu0
      %v899 = vadd.f32 %v335, %v898
      %v900 = vpop.f32.mrf.mxu0
      %v901 = vpop.f32.mrf.mxu0
      %v902 = vadd.f32 %v335, %v901
      %v903 = vpop.f32.mrf.mxu0
      %904 = vmatprep.mubr.bf16.mxu0 %v717
      %905 = vmatmul.mubr.bf16.gmra.mxu0 %v553
      %v906 = vpop.f32.mrf.mxu0
      %v907 = vadd.f32 %v335, %v906
      %v908 = vpop.f32.mrf.mxu0
      %v909 = vpop.f32.mrf.mxu0
      %v910 = vadd.f32 %v335, %v909
      %v911 = vpop.f32.mrf.mxu0
      %912 = vmatprep.mubr.bf16.mxu0 %v720
      %913 = vmatmul.mubr.bf16.gmra.mxu0 %v555
      %v914 = vpop.f32.mrf.mxu0
      %v915 = vadd.f32 %v335, %v914
      %v916 = vpop.f32.mrf.mxu0
      %v917 = vpop.f32.mrf.mxu0
      %v918 = vadd.f32 %v335, %v917
      %v919 = vpop.f32.mrf.mxu0
      %920 = vmatprep.mubr.bf16.mxu0 %v723
      %921 = vmatmul.mubr.bf16.gmra.mxu0 %v557
      %v922 = vpop.f32.mrf.mxu0
      %v923 = vadd.f32 %v335, %v922
      %v924 = vpop.f32.mrf.mxu0
      %v925 = vpop.f32.mrf.mxu0
      %v926 = vadd.f32 %v335, %v925
      %v927 = vpop.f32.mrf.mxu0
      %928 = vmatprep.mubr.bf16.mxu0 %v726
      %929 = vmatmul.mubr.bf16.gmra.mxu0 %v559
      %v930 = vpop.f32.mrf.mxu0
      %v931 = vadd.f32 %v335, %v930
      %v932 = vpop.f32.mrf.mxu0
      %v933 = vpop.f32.mrf.mxu0
      %v934 = vadd.f32 %v335, %v933
      %v935 = vpop.f32.mrf.mxu0
      %936 = vmatprep.mubr.bf16.mxu0 %v729
      %937 = vmatmul.mubr.bf16.gmra.mxu0 %v561
      %v938 = vpop.f32.mrf.mxu0
      %v939 = vadd.f32 %v335, %v938
      %v940 = vpop.f32.mrf.mxu0
      %v941 = vpop.f32.mrf.mxu0
      %v942 = vadd.f32 %v335, %v941
      %v943 = vpop.f32.mrf.mxu0
      %944 = vmatprep.mubr.bf16.mxu0 %v732
      %945 = vmatmul.mubr.bf16.gmra.mxu0 %v563
      %v946 = vpop.f32.mrf.mxu0
      %v947 = vadd.f32 %v335, %v946
      %v948 = vpop.f32.mrf.mxu0
      %v949 = vpop.f32.mrf.mxu0
      %v950 = vadd.f32 %v335, %v949
      %v951 = vpop.f32.mrf.mxu0
      %952 = vmatprep.mubr.bf16.mxu0 %v735
      %953 = vmatmul.mubr.bf16.gmra.mxu0 %v565
      %v954 = vpop.f32.mrf.mxu0
      %v955 = vadd.f32 %v335, %v954
      %v956 = vpop.f32.mrf.mxu0
      %v957 = vpop.f32.mrf.mxu0
      %v958 = vadd.f32 %v335, %v957
      %v959 = vpop.f32.mrf.mxu0
      %960 = vmatprep.mubr.bf16.mxu0 %v738
      %961 = vmatmul.mubr.bf16.gmra.mxu0 %v567
      %v962 = vpop.f32.mrf.mxu0
      %v963 = vadd.f32 %v335, %v962
      %v964 = vpop.f32.mrf.mxu0
      %v965 = vpop.f32.mrf.mxu0
      %v966 = vadd.f32 %v335, %v965
      %v967 = vpop.f32.mrf.mxu0
      %968 = vmatprep.mubr.bf16.mxu0 %v741
      %969 = vmatmul.mubr.bf16.gmra.mxu0 %v569
      %v970 = vpop.f32.mrf.mxu0
      %v971 = vadd.f32 %v335, %v970
      %v972 = vpop.f32.mrf.mxu0
      %v973 = vpop.f32.mrf.mxu0
      %v974 = vadd.f32 %v335, %v973
      %v975 = vpop.f32.mrf.mxu0
      %976 = vmatprep.mubr.bf16.mxu0 %v744
      %977 = vmatmul.mubr.bf16.gmra.mxu0 %v571
      %v978 = vpop.f32.mrf.mxu0
      %v979 = vadd.f32 %v335, %v978
      %v980 = vpop.f32.mrf.mxu0
      %v981 = vpop.f32.mrf.mxu0
      %v982 = vadd.f32 %v335, %v981
      %v983 = vpop.f32.mrf.mxu0
      %984 = vmatprep.mubr.bf16.mxu0 %v747
      %985 = vmatmul.mubr.bf16.gmra.mxu0 %v573
      %v986 = vpop.f32.mrf.mxu0
      %v987 = vadd.f32 %v335, %v986
      %v988 = vpop.f32.mrf.mxu0
      %v989 = vpop.f32.mrf.mxu0
      %v990 = vadd.f32 %v335, %v989
      %v991 = vpop.f32.mrf.mxu0
      %992 = vmatprep.mubr.bf16.mxu0 %v750
      %993 = vmatmul.mubr.bf16.gmra.mxu0 %v575
      %v994 = vpop.f32.mrf.mxu0
      %v995 = vadd.f32 %v335, %v994
      %v996 = vpop.f32.mrf.mxu0
      %v997 = vpop.f32.mrf.mxu0
      %v998 = vadd.f32 %v335, %v997
      %v999 = vpop.f32.mrf.mxu0
      %1000 = vmatprep.mubr.bf16.mxu0 %v753
      %1001 = vmatmul.mubr.bf16.gmra.mxu0 %v577
      %v1002 = vpop.f32.mrf.mxu0
      %v1003 = vadd.f32 %v335, %v1002
      %v1004 = vpop.f32.mrf.mxu0
      %v1005 = vpop.f32.mrf.mxu0
      %v1006 = vadd.f32 %v335, %v1005
      %v1007 = vpop.f32.mrf.mxu0
      %1008 = vmatprep.mubr.bf16.mxu0 %v756
      %1009 = vmatmul.mubr.bf16.gmra.mxu0 %v579
      %v1010 = vpop.f32.mrf.mxu0
      %v1011 = vadd.f32 %v335, %v1010
      %v1012 = vpop.f32.mrf.mxu0
      %v1013 = vpop.f32.mrf.mxu0
      %v1014 = vadd.f32 %v335, %v1013
      %v1015 = vpop.f32.mrf.mxu0
      %1016 = vmatprep.mubr.bf16.mxu0 %v759
      %1017 = vmatmul.mubr.bf16.gmra.mxu0 %v581
      %v1018 = vpop.f32.mrf.mxu0
      %v1019 = vadd.f32 %v335, %v1018
      %v1020 = vpop.f32.mrf.mxu0
      %v1021 = vpop.f32.mrf.mxu0
      %v1022 = vadd.f32 %v335, %v1021
      %v1023 = vpop.f32.mrf.mxu0
      %1024 = vmatprep.mubr.bf16.mxu0 %v762
      %1025 = vmatmul.mubr.bf16.gmra.mxu0 %v583
      %v1026 = vpop.f32.mrf.mxu0
      %v1027 = vadd.f32 %v335, %v1026
      %v1028 = vpop.f32.mrf.mxu0
      %v1029 = vpop.f32.mrf.mxu0
      %v1030 = vadd.f32 %v335, %v1029
      %v1031 = vpop.f32.mrf.mxu0
      %1032 = vmatprep.mubr.bf16.mxu0 %v765
      %1033 = vmatmul.mubr.bf16.gmra.mxu0 %v585
      %v1034 = vpop.f32.mrf.mxu0
      %v1035 = vadd.f32 %v335, %v1034
      %v1036 = vpop.f32.mrf.mxu0
      %v1037 = vpop.f32.mrf.mxu0
      %v1038 = vadd.f32 %v335, %v1037
      %v1039 = vpop.f32.mrf.mxu0
      %1040 = vmatprep.mubr.bf16.mxu0 %v768
      %1041 = vmatmul.mubr.bf16.gmra.mxu0 %v587
      %v1042 = vpop.f32.mrf.mxu0
      %v1043 = vadd.f32 %v335, %v1042
      %v1044 = vpop.f32.mrf.mxu0
      %v1045 = vpop.f32.mrf.mxu0
      %v1046 = vadd.f32 %v335, %v1045
      %v1047 = vpop.f32.mrf.mxu0
      %1048 = vmatprep.mubr.bf16.mxu0 %v771
      %1049 = vmatmul.mubr.bf16.gmra.mxu0 %v589
      %v1050 = vpop.f32.mrf.mxu0
      %v1051 = vadd.f32 %v335, %v1050
      %v1052 = vpop.f32.mrf.mxu0
      %v1053 = vpop.f32.mrf.mxu0
      %v1054 = vadd.f32 %v335, %v1053
      %v1055 = vpop.f32.mrf.mxu0
      %1056 = vmatprep.mubr.bf16.mxu0 %v774
      %1057 = vmatmul.mubr.bf16.gmra.mxu0 %v591
      %v1058 = vpop.f32.mrf.mxu0
      %v1059 = vadd.f32 %v335, %v1058
      %v1060 = vpop.f32.mrf.mxu0
      %v1061 = vpop.f32.mrf.mxu0
      %v1062 = vadd.f32 %v335, %v1061
      %v1063 = vpop.f32.mrf.mxu0
      %1064 = vdwg.mxu0
      %v1065 = vsub.f32 0.0, %v811
      %v1066 = vsub.f32 0.0, %v814
      %v1067 = vsub.f32 0.0, %v819
      %v1068 = vsub.f32 0.0, %v822
      %v1069 = vsub.f32 0.0, %v827
      %v1070 = vsub.f32 0.0, %v830
      %v1071 = vsub.f32 0.0, %v835
      %v1072 = vsub.f32 0.0, %v838
      %v1073 = vsub.f32 0.0, %v843
      %v1074 = vsub.f32 0.0, %v846
      %v1075 = vsub.f32 0.0, %v851
      %v1076 = vsub.f32 0.0, %v854
      %v1077 = vsub.f32 0.0, %v859
      %v1078 = vsub.f32 0.0, %v862
      %v1079 = vsub.f32 0.0, %v867
      %v1080 = vsub.f32 0.0, %v870
      %v1081 = vsub.f32 0.0, %v875
      %v1082 = vsub.f32 0.0, %v878
      %v1083 = vsub.f32 0.0, %v883
      %v1084 = vsub.f32 0.0, %v886
      %v1085 = vsub.f32 0.0, %v891
      %v1086 = vsub.f32 0.0, %v894
      %v1087 = vsub.f32 0.0, %v899
      %v1088 = vsub.f32 0.0, %v902
      %v1089 = vsub.f32 0.0, %v907
      %v1090 = vsub.f32 0.0, %v910
      %v1091 = vsub.f32 0.0, %v915
      %v1092 = vsub.f32 0.0, %v918
      %v1093 = vsub.f32 0.0, %v923
      %v1094 = vsub.f32 0.0, %v926
      %v1095 = vsub.f32 0.0, %v931
      %v1096 = vsub.f32 0.0, %v934
      %v1097 = vsub.f32 0.0, %v939
      %v1098 = vsub.f32 0.0, %v942
      %v1099 = vsub.f32 0.0, %v947
      %v1100 = vsub.f32 0.0, %v950
      %v1101 = vsub.f32 0.0, %v955
      %v1102 = vsub.f32 0.0, %v958
      %v1103 = vsub.f32 0.0, %v963
      %v1104 = vsub.f32 0.0, %v966
      %v1105 = vsub.f32 0.0, %v971
      %v1106 = vsub.f32 0.0, %v974
      %v1107 = vsub.f32 0.0, %v979
      %v1108 = vsub.f32 0.0, %v982
      %v1109 = vsub.f32 0.0, %v987
      %v1110 = vsub.f32 0.0, %v990
      %v1111 = vsub.f32 0.0, %v995
      %v1112 = vsub.f32 0.0, %v998
      %v1113 = vsub.f32 0.0, %v1003
      %v1114 = vsub.f32 0.0, %v1006
      %v1115 = vsub.f32 0.0, %v1011
      %v1116 = vsub.f32 0.0, %v1014
      %v1117 = vsub.f32 0.0, %v1019
      %v1118 = vsub.f32 0.0, %v1022
      %v1119 = vsub.f32 0.0, %v1027
      %v1120 = vsub.f32 0.0, %v1030
      %v1121 = vsub.f32 0.0, %v1035
      %v1122 = vsub.f32 0.0, %v1038
      %v1123 = vsub.f32 0.0, %v1043
      %v1124 = vsub.f32 0.0, %v1046
      %v1125 = vsub.f32 0.0, %v1051
      %v1126 = vsub.f32 0.0, %v1054
      %v1127 = vsub.f32 0.0, %v1059
      %v1128 = vsub.f32 0.0, %v1062
      %v1129 = vmul.f32 %v1065, 1.442695
      %v1130 = vpow.pop %v1129
      %v1131 = vmul.f32 %v1066, 1.442695
      %v1132 = vpow.pop %v1131
      %v1133 = vmul.f32 %v1067, 1.442695
      %v1134 = vpow.pop %v1133
      %v1135 = vmul.f32 %v1068, 1.442695
      %v1136 = vpow.pop %v1135
      %v1137 = vmul.f32 %v1069, 1.442695
      %v1138 = vpow.pop %v1137
      %v1139 = vmul.f32 %v1070, 1.442695
      %v1140 = vpow.pop %v1139
      %v1141 = vmul.f32 %v1071, 1.442695
      %v1142 = vpow.pop %v1141
      %v1143 = vmul.f32 %v1072, 1.442695
      %v1144 = vpow.pop %v1143
      %v1145 = vmul.f32 %v1073, 1.442695
      %v1146 = vpow.pop %v1145
      %v1147 = vmul.f32 %v1074, 1.442695
      %v1148 = vpow.pop %v1147
      %v1149 = vmul.f32 %v1075, 1.442695
      %v1150 = vpow.pop %v1149
      %v1151 = vmul.f32 %v1076, 1.442695
      %v1152 = vpow.pop %v1151
      %v1153 = vmul.f32 %v1077, 1.442695
      %v1154 = vpow.pop %v1153
      %v1155 = vmul.f32 %v1078, 1.442695
      %v1156 = vpow.pop %v1155
      %v1157 = vmul.f32 %v1079, 1.442695
      %v1158 = vpow.pop %v1157
      %v1159 = vmul.f32 %v1080, 1.442695
      %v1160 = vpow.pop %v1159
      %v1161 = vmul.f32 %v1081, 1.442695
      %v1162 = vpow.pop %v1161
      %v1163 = vmul.f32 %v1082, 1.442695
      %v1164 = vpow.pop %v1163
      %v1165 = vmul.f32 %v1083, 1.442695
      %v1166 = vpow.pop %v1165
      %v1167 = vmul.f32 %v1084, 1.442695
      %v1168 = vpow.pop %v1167
      %v1169 = vmul.f32 %v1085, 1.442695
      %v1170 = vpow.pop %v1169
      %v1171 = vmul.f32 %v1086, 1.442695
      %v1172 = vpow.pop %v1171
      %v1173 = vmul.f32 %v1087, 1.442695
      %v1174 = vpow.pop %v1173
      %v1175 = vmul.f32 %v1088, 1.442695
      %v1176 = vpow.pop %v1175
      %v1177 = vmul.f32 %v1089, 1.442695
      %v1178 = vpow.pop %v1177
      %v1179 = vmul.f32 %v1090, 1.442695
      %v1180 = vpow.pop %v1179
      %v1181 = vmul.f32 %v1091, 1.442695
      %v1182 = vpow.pop %v1181
      %v1183 = vmul.f32 %v1092, 1.442695
      %v1184 = vpow.pop %v1183
      %v1185 = vmul.f32 %v1093, 1.442695
      %v1186 = vpow.pop %v1185
      %v1187 = vmul.f32 %v1094, 1.442695
      %v1188 = vpow.pop %v1187
      %v1189 = vmul.f32 %v1095, 1.442695
      %v1190 = vpow.pop %v1189
      %v1191 = vmul.f32 %v1096, 1.442695
      %v1192 = vpow.pop %v1191
      %v1193 = vmul.f32 %v1097, 1.442695
      %v1194 = vpow.pop %v1193
      %v1195 = vmul.f32 %v1098, 1.442695
      %v1196 = vpow.pop %v1195
      %v1197 = vmul.f32 %v1099, 1.442695
      %v1198 = vpow.pop %v1197
      %v1199 = vmul.f32 %v1100, 1.442695
      %v1200 = vpow.pop %v1199
      %v1201 = vmul.f32 %v1101, 1.442695
      %v1202 = vpow.pop %v1201
      %v1203 = vmul.f32 %v1102, 1.442695
      %v1204 = vpow.pop %v1203
      %v1205 = vmul.f32 %v1103, 1.442695
      %v1206 = vpow.pop %v1205
      %v1207 = vmul.f32 %v1104, 1.442695
      %v1208 = vpow.pop %v1207
      %v1209 = vmul.f32 %v1105, 1.442695
      %v1210 = vpow.pop %v1209
      %v1211 = vmul.f32 %v1106, 1.442695
      %v1212 = vpow.pop %v1211
      %v1213 = vmul.f32 %v1107, 1.442695
      %v1214 = vpow.pop %v1213
      %v1215 = vmul.f32 %v1108, 1.442695
      %v1216 = vpow.pop %v1215
      %v1217 = vmul.f32 %v1109, 1.442695
      %v1218 = vpow.pop %v1217
      %v1219 = vmul.f32 %v1110, 1.442695
      %v1220 = vpow.pop %v1219
      %v1221 = vmul.f32 %v1111, 1.442695
      %v1222 = vpow.pop %v1221
      %v1223 = vmul.f32 %v1112, 1.442695
      %v1224 = vpow.pop %v1223
      %v1225 = vmul.f32 %v1113, 1.442695
      %v1226 = vpow.pop %v1225
      %v1227 = vmul.f32 %v1114, 1.442695
      %v1228 = vpow.pop %v1227
      %v1229 = vmul.f32 %v1115, 1.442695
      %v1230 = vpow.pop %v1229
      %v1231 = vmul.f32 %v1116, 1.442695
      %v1232 = vpow.pop %v1231
      %v1233 = vmul.f32 %v1117, 1.442695
      %v1234 = vpow.pop %v1233
      %v1235 = vmul.f32 %v1118, 1.442695
      %v1236 = vpow.pop %v1235
      %v1237 = vmul.f32 %v1119, 1.442695
      %v1238 = vpow.pop %v1237
      %v1239 = vmul.f32 %v1120, 1.442695
      %v1240 = vpow.pop %v1239
      %v1241 = vmul.f32 %v1121, 1.442695
      %v1242 = vpow.pop %v1241
      %v1243 = vmul.f32 %v1122, 1.442695
      %v1244 = vpow.pop %v1243
      %v1245 = vmul.f32 %v1123, 1.442695
      %v1246 = vpow.pop %v1245
      %v1247 = vmul.f32 %v1124, 1.442695
      %v1248 = vpow.pop %v1247
      %v1249 = vmul.f32 %v1125, 1.442695
      %v1250 = vpow.pop %v1249
      %v1251 = vmul.f32 %v1126, 1.442695
      %v1252 = vpow.pop %v1251
      %v1253 = vmul.f32 %v1127, 1.442695
      %v1254 = vpow.pop %v1253
      %v1255 = vmul.f32 %v1128, 1.442695
      %v1256 = vpow.pop %v1255
      %v1257 = vadd.f32 %v1130, 1.0
      %v1258 = vadd.f32 %v1132, 1.0
      %v1259 = vadd.f32 %v1134, 1.0
      %v1260 = vadd.f32 %v1136, 1.0
      %v1261 = vadd.f32 %v1138, 1.0
      %v1262 = vadd.f32 %v1140, 1.0
      %v1263 = vadd.f32 %v1142, 1.0
      %v1264 = vadd.f32 %v1144, 1.0
      %v1265 = vadd.f32 %v1146, 1.0
      %v1266 = vadd.f32 %v1148, 1.0
      %v1267 = vadd.f32 %v1150, 1.0
      %v1268 = vadd.f32 %v1152, 1.0
      %v1269 = vadd.f32 %v1154, 1.0
      %v1270 = vadd.f32 %v1156, 1.0
      %v1271 = vadd.f32 %v1158, 1.0
      %v1272 = vadd.f32 %v1160, 1.0
      %v1273 = vadd.f32 %v1162, 1.0
      %v1274 = vadd.f32 %v1164, 1.0
      %v1275 = vadd.f32 %v1166, 1.0
      %v1276 = vadd.f32 %v1168, 1.0
      %v1277 = vadd.f32 %v1170, 1.0
      %v1278 = vadd.f32 %v1172, 1.0
      %v1279 = vadd.f32 %v1174, 1.0
      %v1280 = vadd.f32 %v1176, 1.0
      %v1281 = vadd.f32 %v1178, 1.0
      %v1282 = vadd.f32 %v1180, 1.0
      %v1283 = vadd.f32 %v1182, 1.0
      %v1284 = vadd.f32 %v1184, 1.0
      %v1285 = vadd.f32 %v1186, 1.0
      %v1286 = vadd.f32 %v1188, 1.0
      %v1287 = vadd.f32 %v1190, 1.0
      %v1288 = vadd.f32 %v1192, 1.0
      %v1289 = vadd.f32 %v1194, 1.0
      %v1290 = vadd.f32 %v1196, 1.0
      %v1291 = vadd.f32 %v1198, 1.0
      %v1292 = vadd.f32 %v1200, 1.0
      %v1293 = vadd.f32 %v1202, 1.0
      %v1294 = vadd.f32 %v1204, 1.0
      %v1295 = vadd.f32 %v1206, 1.0
      %v1296 = vadd.f32 %v1208, 1.0
      %v1297 = vadd.f32 %v1210, 1.0
      %v1298 = vadd.f32 %v1212, 1.0
      %v1299 = vadd.f32 %v1214, 1.0
      %v1300 = vadd.f32 %v1216, 1.0
      %v1301 = vadd.f32 %v1218, 1.0
      %v1302 = vadd.f32 %v1220, 1.0
      %v1303 = vadd.f32 %v1222, 1.0
      %v1304 = vadd.f32 %v1224, 1.0
      %v1305 = vadd.f32 %v1226, 1.0
      %v1306 = vadd.f32 %v1228, 1.0
      %v1307 = vadd.f32 %v1230, 1.0
      %v1308 = vadd.f32 %v1232, 1.0
      %v1309 = vadd.f32 %v1234, 1.0
      %v1310 = vadd.f32 %v1236, 1.0
      %v1311 = vadd.f32 %v1238, 1.0
      %v1312 = vadd.f32 %v1240, 1.0
      %v1313 = vadd.f32 %v1242, 1.0
      %v1314 = vadd.f32 %v1244, 1.0
      %v1315 = vadd.f32 %v1246, 1.0
      %v1316 = vadd.f32 %v1248, 1.0
      %v1317 = vadd.f32 %v1250, 1.0
      %v1318 = vadd.f32 %v1252, 1.0
      %v1319 = vadd.f32 %v1254, 1.0
      %v1320 = vadd.f32 %v1256, 1.0
      %v1321 = vrcp.pop %v1257
      %v1322 = vrcp.pop %v1258
      %v1323 = vrcp.pop %v1259
      %v1324 = vrcp.pop %v1260
      %v1325 = vrcp.pop %v1261
      %v1326 = vrcp.pop %v1262
      %v1327 = vrcp.pop %v1263
      %v1328 = vrcp.pop %v1264
      %v1329 = vrcp.pop %v1265
      %v1330 = vrcp.pop %v1266
      %v1331 = vrcp.pop %v1267
      %v1332 = vrcp.pop %v1268
      %v1333 = vrcp.pop %v1269
      %v1334 = vrcp.pop %v1270
      %v1335 = vrcp.pop %v1271
      %v1336 = vrcp.pop %v1272
      %v1337 = vrcp.pop %v1273
      %v1338 = vrcp.pop %v1274
      %v1339 = vrcp.pop %v1275
      %v1340 = vrcp.pop %v1276
      %v1341 = vrcp.pop %v1277
      %v1342 = vrcp.pop %v1278
      %v1343 = vrcp.pop %v1279
      %v1344 = vrcp.pop %v1280
      %v1345 = vrcp.pop %v1281
      %v1346 = vrcp.pop %v1282
      %v1347 = vrcp.pop %v1283
      %v1348 = vrcp.pop %v1284
      %v1349 = vrcp.pop %v1285
      %v1350 = vrcp.pop %v1286
      %v1351 = vrcp.pop %v1287
      %v1352 = vrcp.pop %v1288
      %v1353 = vrcp.pop %v1289
      %v1354 = vrcp.pop %v1290
      %v1355 = vrcp.pop %v1291
      %v1356 = vrcp.pop %v1292
      %v1357 = vrcp.pop %v1293
      %v1358 = vrcp.pop %v1294
      %v1359 = vrcp.pop %v1295
      %v1360 = vrcp.pop %v1296
      %v1361 = vrcp.pop %v1297
      %v1362 = vrcp.pop %v1298
      %v1363 = vrcp.pop %v1299
      %v1364 = vrcp.pop %v1300
      %v1365 = vrcp.pop %v1301
      %v1366 = vrcp.pop %v1302
      %v1367 = vrcp.pop %v1303
      %v1368 = vrcp.pop %v1304
      %v1369 = vrcp.pop %v1305
      %v1370 = vrcp.pop %v1306
      %v1371 = vrcp.pop %v1307
      %v1372 = vrcp.pop %v1308
      %v1373 = vrcp.pop %v1309
      %v1374 = vrcp.pop %v1310
      %v1375 = vrcp.pop %v1311
      %v1376 = vrcp.pop %v1312
      %v1377 = vrcp.pop %v1313
      %v1378 = vrcp.pop %v1314
      %v1379 = vrcp.pop %v1315
      %v1380 = vrcp.pop %v1316
      %v1381 = vrcp.pop %v1317
      %v1382 = vrcp.pop %v1318
      %v1383 = vrcp.pop %v1319
      %v1384 = vrcp.pop %v1320
      %v1385 = vmul.f32 %v811, %v1321
      %v1386 = vmul.f32 %v814, %v1322
      %v1387 = vmul.f32 %v819, %v1323
      %v1388 = vmul.f32 %v822, %v1324
      %v1389 = vmul.f32 %v827, %v1325
      %v1390 = vmul.f32 %v830, %v1326
      %v1391 = vmul.f32 %v835, %v1327
      %v1392 = vmul.f32 %v838, %v1328
      %v1393 = vmul.f32 %v843, %v1329
      %v1394 = vmul.f32 %v846, %v1330
      %v1395 = vmul.f32 %v851, %v1331
      %v1396 = vmul.f32 %v854, %v1332
      %v1397 = vmul.f32 %v859, %v1333
      %v1398 = vmul.f32 %v862, %v1334
      %v1399 = vmul.f32 %v867, %v1335
      %v1400 = vmul.f32 %v870, %v1336
      %v1401 = vmul.f32 %v875, %v1337
      %v1402 = vmul.f32 %v878, %v1338
      %v1403 = vmul.f32 %v883, %v1339
      %v1404 = vmul.f32 %v886, %v1340
      %v1405 = vmul.f32 %v891, %v1341
      %v1406 = vmul.f32 %v894, %v1342
      %v1407 = vmul.f32 %v899, %v1343
      %v1408 = vmul.f32 %v902, %v1344
      %v1409 = vmul.f32 %v907, %v1345
      %v1410 = vmul.f32 %v910, %v1346
      %v1411 = vmul.f32 %v915, %v1347
      %v1412 = vmul.f32 %v918, %v1348
      %v1413 = vmul.f32 %v923, %v1349
      %v1414 = vmul.f32 %v926, %v1350
      %v1415 = vmul.f32 %v931, %v1351
      %v1416 = vmul.f32 %v934, %v1352
      %v1417 = vmul.f32 %v939, %v1353
      %v1418 = vmul.f32 %v942, %v1354
      %v1419 = vmul.f32 %v947, %v1355
      %v1420 = vmul.f32 %v950, %v1356
      %v1421 = vmul.f32 %v955, %v1357
      %v1422 = vmul.f32 %v958, %v1358
      %v1423 = vmul.f32 %v963, %v1359
      %v1424 = vmul.f32 %v966, %v1360
      %v1425 = vmul.f32 %v971, %v1361
      %v1426 = vmul.f32 %v974, %v1362
      %v1427 = vmul.f32 %v979, %v1363
      %v1428 = vmul.f32 %v982, %v1364
      %v1429 = vmul.f32 %v987, %v1365
      %v1430 = vmul.f32 %v990, %v1366
      %v1431 = vmul.f32 %v995, %v1367
      %v1432 = vmul.f32 %v998, %v1368
      %v1433 = vmul.f32 %v1003, %v1369
      %v1434 = vmul.f32 %v1006, %v1370
      %v1435 = vmul.f32 %v1011, %v1371
      %v1436 = vmul.f32 %v1014, %v1372
      %v1437 = vmul.f32 %v1019, %v1373
      %v1438 = vmul.f32 %v1022, %v1374
      %v1439 = vmul.f32 %v1027, %v1375
      %v1440 = vmul.f32 %v1030, %v1376
      %v1441 = vmul.f32 %v1035, %v1377
      %v1442 = vmul.f32 %v1038, %v1378
      %v1443 = vmul.f32 %v1043, %v1379
      %v1444 = vmul.f32 %v1046, %v1380
      %v1445 = vmul.f32 %v1051, %v1381
      %v1446 = vmul.f32 %v1054, %v1382
      %v1447 = vmul.f32 %v1059, %v1383
      %v1448 = vmul.f32 %v1062, %v1384
      %1449 = vst.msk [vmem:[%s245] sm:$0xff] %vm679, %v1385
      %1450 = vst.msk [vmem:[%s245 + $0x8] sm:$0xff] %vm679, %v1386
      %1451 = vst.msk [vmem:[%s245 + $0x10] sm:$0xff] %vm679, %v1387
      %1452 = vst.msk [vmem:[%s245 + $0x18] sm:$0xff] %vm679, %v1388
      %1453 = vst.msk [vmem:[%s245 + $0x20] sm:$0xff] %vm679, %v1389
      %1454 = vst.msk [vmem:[%s245 + $0x28] sm:$0xff] %vm679, %v1390
      %1455 = vst.msk [vmem:[%s245 + $0x30] sm:$0xff] %vm679, %v1391
      %1456 = vst.msk [vmem:[%s245 + $0x38] sm:$0xff] %vm679, %v1392
      %1457 = vst.msk [vmem:[%s245 + $0x40] sm:$0xff] %vm679, %v1393
      %1458 = vst.msk [vmem:[%s245 + $0x48] sm:$0xff] %vm679, %v1394
      %1459 = vst.msk [vmem:[%s245 + $0x50] sm:$0xff] %vm679, %v1395
      %1460 = vst.msk [vmem:[%s245 + $0x58] sm:$0xff] %vm679, %v1396
      %1461 = vst.msk [vmem:[%s245 + $0x60] sm:$0xff] %vm679, %v1397
      %1462 = vst.msk [vmem:[%s245 + $0x68] sm:$0xff] %vm679, %v1398
      %1463 = vst.msk [vmem:[%s245 + $0x70] sm:$0xff] %vm679, %v1399
      %1464 = vst.msk [vmem:[%s245 + $0x78] sm:$0xff] %vm679, %v1400
      %1465 = vst.msk [vmem:[%s245 + $0x80] sm:$0xff] %vm679, %v1401
      %1466 = vst.msk [vmem:[%s245 + $0x88] sm:$0xff] %vm679, %v1402
      %1467 = vst.msk [vmem:[%s245 + $0x90] sm:$0xff] %vm679, %v1403
      %1468 = vst.msk [vmem:[%s245 + $0x98] sm:$0xff] %vm679, %v1404
      %1469 = vst.msk [vmem:[%s245 + $0xa0] sm:$0xff] %vm679, %v1405
      %1470 = vst.msk [vmem:[%s245 + $0xa8] sm:$0xff] %vm679, %v1406
      %1471 = vst.msk [vmem:[%s245 + $0xb0] sm:$0xff] %vm679, %v1407
      %1472 = vst.msk [vmem:[%s245 + $0xb8] sm:$0xff] %vm679, %v1408
      %1473 = vst.msk [vmem:[%s245 + $0xc0] sm:$0xff] %vm679, %v1409
      %1474 = vst.msk [vmem:[%s245 + $0xc8] sm:$0xff] %vm679, %v1410
      %1475 = vst.msk [vmem:[%s245 + $0xd0] sm:$0xff] %vm679, %v1411
      %1476 = vst.msk [vmem:[%s245 + $0xd8] sm:$0xff] %vm679, %v1412
      %1477 = vst.msk [vmem:[%s245 + $0xe0] sm:$0xff] %vm679, %v1413
      %1478 = vst.msk [vmem:[%s245 + $0xe8] sm:$0xff] %vm679, %v1414
      %1479 = vst.msk [vmem:[%s245 + $0xf0] sm:$0xff] %vm679, %v1415
      %1480 = vst.msk [vmem:[%s245 + $0xf8] sm:$0xff] %vm679, %v1416
      %1481 = vst.msk [vmem:[%s245 + $0x100] sm:$0xff] %vm679, %v1417
      %1482 = vst.msk [vmem:[%s245 + $0x108] sm:$0xff] %vm679, %v1418
      %1483 = vst.msk [vmem:[%s245 + $0x110] sm:$0xff] %vm679, %v1419
      %1484 = vst.msk [vmem:[%s245 + $0x118] sm:$0xff] %vm679, %v1420
      %1485 = vst.msk [vmem:[%s245 + $0x120] sm:$0xff] %vm679, %v1421
      %1486 = vst.msk [vmem:[%s245 + $0x128] sm:$0xff] %vm679, %v1422
      %1487 = vst.msk [vmem:[%s245 + $0x130] sm:$0xff] %vm679, %v1423
      %1488 = vst.msk [vmem:[%s245 + $0x138] sm:$0xff] %vm679, %v1424
      %1489 = vst.msk [vmem:[%s245 + $0x140] sm:$0xff] %vm679, %v1425
      %1490 = vst.msk [vmem:[%s245 + $0x148] sm:$0xff] %vm679, %v1426
      %1491 = vst.msk [vmem:[%s245 + $0x150] sm:$0xff] %vm679, %v1427
      %1492 = vst.msk [vmem:[%s245 + $0x158] sm:$0xff] %vm679, %v1428
      %1493 = vst.msk [vmem:[%s245 + $0x160] sm:$0xff] %vm679, %v1429
      %1494 = vst.msk [vmem:[%s245 + $0x168] sm:$0xff] %vm679, %v1430
      %1495 = vst.msk [vmem:[%s245 + $0x170] sm:$0xff] %vm679, %v1431
      %1496 = vst.msk [vmem:[%s245 + $0x178] sm:$0xff] %vm679, %v1432
      %1497 = vst.msk [vmem:[%s245 + $0x180] sm:$0xff] %vm679, %v1433
      %1498 = vst.msk [vmem:[%s245 + $0x188] sm:$0xff] %vm679, %v1434
      %1499 = vst.msk [vmem:[%s245 + $0x190] sm:$0xff] %vm679, %v1435
      %1500 = vst.msk [vmem:[%s245 + $0x198] sm:$0xff] %vm679, %v1436
      %1501 = vst.msk [vmem:[%s245 + $0x1a0] sm:$0xff] %vm679, %v1437
      %1502 = vst.msk [vmem:[%s245 + $0x1a8] sm:$0xff] %vm679, %v1438
      %1503 = vst.msk [vmem:[%s245 + $0x1b0] sm:$0xff] %vm679, %v1439
      %1504 = vst.msk [vmem:[%s245 + $0x1b8] sm:$0xff] %vm679, %v1440
      %1505 = vst.msk [vmem:[%s245 + $0x1c0] sm:$0xff] %vm679, %v1441
      %1506 = vst.msk [vmem:[%s245 + $0x1c8] sm:$0xff] %vm679, %v1442
      %1507 = vst.msk [vmem:[%s245 + $0x1d0] sm:$0xff] %vm679, %v1443
      %1508 = vst.msk [vmem:[%s245 + $0x1d8] sm:$0xff] %vm679, %v1444
      %1509 = vst.msk [vmem:[%s245 + $0x1e0] sm:$0xff] %vm679, %v1445
      %1510 = vst.msk [vmem:[%s245 + $0x1e8] sm:$0xff] %vm679, %v1446
      %1511 = vst.msk [vmem:[%s245 + $0x1f0] sm:$0xff] %vm679, %v1447
      %1512 = vst.msk [vmem:[%s245 + $0x1f8] sm:$0xff] %vm679, %v1448
      %s1513 = smul.u32 64, %s19
      %p1514 = scmp.lt.s32.totalorder %s18, 2
      %s1515 = scalar_select %p1514, %s18, 2
      %p1516 = scmp.lt.s32.totalorder %s1513, 63
      %s1517 = scalar_select %p1516, %s1513, 63
      %s1518 = smul.addr %s1515, 64
      %s1519 = sadd.s32 %s1517, %s1518
      %s1520 = smul.addr %s1519, 8
      %s1521 = scalar_lea.vmem %s3, %s1520
      // Predicated region
      $region33: #{pose_guider_forward.21} parent=31 // pred_check
        %p1522 = pneg %p126
      $region34: #{pose_guider_forward.21} parent=31 // pred_check_branch
        %1524 = sbr.rel (%p1522) target = $region36
      $region35: #{pose_guider_forward.21} parent=31 // pred_region
        %s1525 = smul.u32 64, %s19
      $region36: #{pose_guider_forward.21} parent=31 // pred_fallthru
        _
    $region32: #{pose_guider_forward.21} parent=5 // pred_fallthru
      _
    %p1526 = scmp.le.s32.totalorder 2, %s9
    // Predicated region
    $region37: #{pose_guider_forward.21} parent=5 // pred_check
      %p1527 = pneg %p1526
    $region38: #{pose_guider_forward.21} parent=5 // pred_check_branch
      %1529 = sbr.rel (%p1527) target = $region40
    $region39: #{pose_guider_forward.21} parent=5 // pred_region
      %s1530 = ssub.s32 %s9, 2
      // Predicated region
      $region41: #{pose_guider_forward.21} parent=39 // pred_check
        %p1531 = pneg %p132
      $region42: #{pose_guider_forward.21} parent=39 // pred_check_branch
        %1533 = sbr.rel (%p1531) target = $region44
      $region43: #{pose_guider_forward.21} parent=39 // pred_region
        %s1534 = smul.u32 64, %s21
        %p1535 = scmp.lt.s32.totalorder %s20, 2
        %s1536 = scalar_select %p1535, %s20, 2
        %p1537 = scmp.lt.s32.totalorder %s1534, 63
        %s1538 = scalar_select %p1537, %s1534, 63
        %s1539 = smul.addr %s1536, 64
        %s1540 = sadd.s32 %s1538, %s1539
        %s1541 = smul.addr %s1540, 8
        %s1542 = scalar_lea.vmem %s3, %s1541
      $region44: #{pose_guider_forward.21} parent=39 // pred_fallthru
        _
    $region40: #{pose_guider_forward.21} parent=5 // pred_fallthru
      _
  $region6: #{pose_guider_forward.21} parent=0 // loop_footer
    %s13 = sadd.s32 1, %s9
  $region7: #{pose_guider_forward.21} parent=0 // loop_footer_branch
    %8 = sbr.rel target = $region3
  $region8: #{pose_guider_forward.21} parent=0 // loop_exit
    _

// kernel: pose_guider_forward.22
$region0: #{pose_guider_forward.22}
  #allocation0 [shape = 'u32[]', space=smem, size = 0x4, offset = 0x4, fixed_abs, tag = 'smem constant byte address 0x4 - core index']
  #allocation1 [shape = 'u32[144,128]{1,0:T(1,128)}', space=vmem, size = 0x12000, scoped, tag = 'internal scratch']
  %s0 = inlined_call_operand.vmem [shape: bf16[3,128,144], index: 0, kind: input, shape index: {}]
  %s1 = inlined_call_operand.vmem [shape: bf16[3,144,16], index: 1, kind: input, shape index: {}]
  %s2 = inlined_call_operand.vmem [shape: f32[3,1,16], index: 2, kind: input, shape index: {}]
  %s3 = inlined_call_operand.vmem [shape: f32[3,128,16], index: 3, kind: output, shape index: {}]
  %s4 = sld [smem:[#allocation0]]
  $region45: #{pose_guider_forward.22} parent=0
    _
  %s6 = ssub.s32 1, %s4
  %s7 = scalar_select 0, %s6, %s4
  loop: start=0, step=1, limit=5
  $region2: #{pose_guider_forward.22} parent=0 // loop_pre_header
    _
  $region3: #{pose_guider_forward.22} parent=0 // loop_header
    %s9 = sphi 0, %s13
    %p10 = scmp.ge.s32.totalorder %s9, 5
    %s16 = sphi 0, %s28
    %s17 = sphi 0, %s24
    %s18 = sphi 0, %s16
    %s19 = sphi 0, %s17
    %s20 = sphi 0, %s18
    %s21 = sphi 0, %s19
    %s33 = sphi 0, %s35
    %s36 = sphi 0, %s33
    %s37 = sphi 0, %s36
    %s53 = sphi 0, %s37
    %s59 = sphi 0, %s61
    %s62 = sphi 0, %s59
    %s63 = sphi 0, %s62
    %s79 = sphi 0, %s63
    %s85 = sphi 0, %s87
    %s88 = sphi 0, %s85
    %s89 = sphi 0, %s88
    %s105 = sphi 0, %s89
    %s113 = sphi 0, %s115
    %s116 = sphi 0, %s113
    %s117 = sphi 0, %s116
    %s133 = sphi 0, %s117
  $region4: #{pose_guider_forward.22} parent=0 // loop_header_branch
    %12 = sbr.rel (%p10) target = $region8
  $region5: #{pose_guider_forward.22} parent=0 // loop_body
    %s14 = ssub.s32 %s9, 1
    %s15 = ssub.s32 %s9, 2
    %s22 = sadd.s32 1, %s17
    %p23 = scmp.ge.s32.totalorder %s22, 1
    %s24 = scalar_select %p23, 0, %s22
    %s25 = sadd.s32 1, %s16
    %s26 = scalar_select %p23, %s25, %s16
    %p27 = scmp.ge.s32.totalorder %s26, 3
    %s28 = scalar_select %p27, 0, %s26
    %s29 = ssub.s32 %s16, %s28
    %s30 = ssub.s32 %s17, %s24
    %s31 = sor.u32 %s29, %s30
    %p32 = scmp.eq.s32.totalorder %s31, 0
    %s34 = sadd.s32 %s33, 1
    %s35 = scalar_select %p32, %s33, %s34
    %p38 = pneg %p32
    %p39 = scmp.eq.s32.totalorder %s9, 2
    %p40 = por %p38, %p39
    %p41 = scmp.ne.s32.totalorder %s33, %s36
    %p42 = scmp.eq.s32.totalorder %s9, 0
    %p43 = por %p41, %p42
    %p44 = scmp.ne.s32.totalorder %s33, %s36
    %p45 = scmp.eq.s32.totalorder %s14, 2
    %p46 = por %p44, %p45
    %p47 = scmp.ne.s32.totalorder %s36, %s37
    %p48 = scmp.eq.s32.totalorder %s14, 0
    %p49 = por %p47, %p48
    %p50 = scmp.ne.s32.totalorder %s36, %s37
    %p51 = scmp.eq.s32.totalorder %s15, 2
    %p52 = por %p50, %p51
    %p54 = scmp.ne.s32.totalorder %s37, %s53
    %p55 = scmp.eq.s32.totalorder %s15, 0
    %p56 = por %p54, %p55
    %s57 = ssub.s32 %s16, %s28
    %p58 = scmp.eq.s32.totalorder %s57, 0
    %s60 = sadd.s32 %s59, 1
    %s61 = scalar_select %p58, %s59, %s60
    %p64 = pneg %p58
    %p65 = scmp.eq.s32.totalorder %s9, 2
    %p66 = por %p64, %p65
    %p67 = scmp.ne.s32.totalorder %s59, %s62
    %p68 = scmp.eq.s32.totalorder %s9, 0
    %p69 = por %p67, %p68
    %p70 = scmp.ne.s32.totalorder %s59, %s62
    %p71 = scmp.eq.s32.totalorder %s14, 2
    %p72 = por %p70, %p71
    %p73 = scmp.ne.s32.totalorder %s62, %s63
    %p74 = scmp.eq.s32.totalorder %s14, 0
    %p75 = por %p73, %p74
    %p76 = scmp.ne.s32.totalorder %s62, %s63
    %p77 = scmp.eq.s32.totalorder %s15, 2
    %p78 = por %p76, %p77
    %p80 = scmp.ne.s32.totalorder %s63, %s79
    %p81 = scmp.eq.s32.totalorder %s15, 0
    %p82 = por %p80, %p81
    %s83 = ssub.s32 %s16, %s28
    %p84 = scmp.eq.s32.totalorder %s83, 0
    %s86 = sadd.s32 %s85, 1
    %s87 = scalar_select %p84, %s85, %s86
    %p90 = pneg %p84
    %p91 = scmp.eq.s32.totalorder %s9, 2
    %p92 = por %p90, %p91
    %p93 = scmp.ne.s32.totalorder %s85, %s88
    %p94 = scmp.eq.s32.totalorder %s9, 0
    %p95 = por %p93, %p94
    %p96 = scmp.ne.s32.totalorder %s85, %s88
    %p97 = scmp.eq.s32.totalorder %s14, 2
    %p98 = por %p96, %p97
    %p99 = scmp.ne.s32.totalorder %s88, %s89
    %p100 = scmp.eq.s32.totalorder %s14, 0
    %p101 = por %p99, %p100
    %p102 = scmp.ne.s32.totalorder %s88, %s89
    %p103 = scmp.eq.s32.totalorder %s15, 2
    %p104 = por %p102, %p103
    %p106 = scmp.ne.s32.totalorder %s89, %s105
    %p107 = scmp.eq.s32.totalorder %s15, 0
    %p108 = por %p106, %p107
    %s109 = ssub.s32 %s16, %s28
    %s110 = ssub.s32 %s17, %s24
    %s111 = sor.u32 %s109, %s110
    %p112 = scmp.eq.s32.totalorder %s111, 0
    %s114 = sadd.s32 %s113, 1
    %s115 = scalar_select %p112, %s113, %s114
    %p118 = pneg %p112
    %p119 = scmp.eq.s32.totalorder %s9, 2
    %p120 = por %p118, %p119
    %p121 = scmp.ne.s32.totalorder %s113, %s116
    %p122 = scmp.eq.s32.totalorder %s9, 0
    %p123 = por %p121, %p122
    %p124 = scmp.ne.s32.totalorder %s113, %s116
    %p125 = scmp.eq.s32.totalorder %s14, 2
    %p126 = por %p124, %p125
    %p127 = scmp.ne.s32.totalorder %s116, %s117
    %p128 = scmp.eq.s32.totalorder %s14, 0
    %p129 = por %p127, %p128
    %p130 = scmp.ne.s32.totalorder %s116, %s117
    %p131 = scmp.eq.s32.totalorder %s15, 2
    %p132 = por %p130, %p131
    %p134 = scmp.ne.s32.totalorder %s117, %s133
    %p135 = scmp.eq.s32.totalorder %s15, 0
    %p136 = por %p134, %p135
    %p137 = scmp.le.s32.totalorder 1, %s9
    %p138 = scmp.lt.s32.totalorder %s9, 4
    %p139 = pnand %p137, %p138
    %p140 = pneg %p139
    // Predicated region
    $region9: #{pose_guider_forward.22} parent=5 // pred_check
      _
    $region10: #{pose_guider_forward.22} parent=5 // pred_check_branch
      %142 = sbr.rel (%p139) target = $region12
    $region11: #{pose_guider_forward.22} parent=5 // pred_region
      %s143 = ssub.s32 %s9, 1
    $region12: #{pose_guider_forward.22} parent=5 // pred_fallthru
      _
    %p144 = scmp.lt.s32.totalorder %s9, 3
    // Predicated region
    $region13: #{pose_guider_forward.22} parent=5 // pred_check
      %p145 = pneg %p144
    $region14: #{pose_guider_forward.22} parent=5 // pred_check_branch
      %147 = sbr.rel (%p145) target = $region16
    $region15: #{pose_guider_forward.22} parent=5 // pred_region
      // Predicated region
      $region17: #{pose_guider_forward.22} parent=15 // pred_check
        %p148 = pneg %p43
      $region18: #{pose_guider_forward.22} parent=15 // pred_check_branch
        %150 = sbr.rel (%p148) target = $region20
      $region19: #{pose_guider_forward.22} parent=15 // pred_region
        %s151 = smul.u32 16, %s17
        %p152 = scmp.lt.s32.totalorder %s16, 2
        %s153 = scalar_select %p152, %s16, 2
        %p154 = scmp.lt.s32.totalorder %s151, 15
        %s155 = scalar_select %p154, %s151, 15
        %s156 = smul.addr %s155, 2
        %s157 = smul.addr %s153, 32
        %s158 = sadd.s32 %s156, %s157
        %s159 = smul.addr %s158, 4
        %s160 = scalar_lea.vmem %s0, %s159
        %s161 = smul.u32 16, %s17
      $region20: #{pose_guider_forward.22} parent=15 // pred_fallthru
        _
      // Predicated region
      $region21: #{pose_guider_forward.22} parent=15 // pred_check
        %p162 = pneg %p69
      $region22: #{pose_guider_forward.22} parent=15 // pred_check_branch
        %164 = sbr.rel (%p162) target = $region24
      $region23: #{pose_guider_forward.22} parent=15 // pred_region
        %p165 = scmp.lt.s32.totalorder %s16, 2
        %s166 = scalar_select %p165, %s16, 2
        %s167 = smul.addr %s166, 18
        %s168 = smul.addr %s167, 4
        %s169 = scalar_lea.vmem %s1, %s168
      $region24: #{pose_guider_forward.22} parent=15 // pred_fallthru
        _
      // Predicated region
      $region25: #{pose_guider_forward.22} parent=15 // pred_check
        %p170 = pneg %p95
      $region26: #{pose_guider_forward.22} parent=15 // pred_check_branch
        %172 = sbr.rel (%p170) target = $region28
      $region27: #{pose_guider_forward.22} parent=15 // pred_region
        %p173 = scmp.lt.s32.totalorder %s16, 2
        %s174 = scalar_select %p173, %s16, 2
        %s175 = scalar_lea.vmem %s2, %s174
      $region28: #{pose_guider_forward.22} parent=15 // pred_fallthru
        _
    $region16: #{pose_guider_forward.22} parent=5 // pred_fallthru
      _
    %p176 = scmp.le.s32.totalorder 1, %s9
    %p177 = scmp.lt.s32.totalorder %s9, 4
    %p178 = pnand %p176, %p177
    %p179 = pneg %p178
    // Predicated region
    $region29: #{pose_guider_forward.22} parent=5 // pred_check
      _
    $region30: #{pose_guider_forward.22} parent=5 // pred_check_branch
      %181 = sbr.rel (%p178) target = $region32
    $region31: #{pose_guider_forward.22} parent=5 // pred_region
      %s182 = ssub.s32 %s9, 1
      %s183 = smul.u32 16, %s19
      %p184 = scmp.lt.s32.totalorder %s18, 2
      %s185 = scalar_select %p184, %s18, 2
      %p186 = scmp.lt.s32.totalorder %s183, 15
      %s187 = scalar_select %p186, %s183, 15
      %s188 = smul.addr %s187, 2
      %s189 = smul.addr %s185, 32
      %s190 = sadd.s32 %s188, %s189
      %s191 = smul.addr %s190, 4
      %s192 = scalar_lea.vmem %s0, %s191
      %p193 = pneg %p49
      %p194 = pneg %p46
      %p195 = scmp.lt.s32.totalorder %s18, 2
      %s196 = scalar_select %p195, %s18, 2
      %s197 = smul.addr %s196, 18
      %s198 = smul.addr %s197, 4
      %s199 = scalar_lea.vmem %s1, %s198
      %p200 = pneg %p75
      %p201 = pneg %p72
      %p202 = scmp.lt.s32.totalorder %s18, 2
      %s203 = scalar_select %p202, %s18, 2
      %s204 = scalar_lea.vmem %s2, %s203
      %p205 = pneg %p101
      %p206 = pneg %p98
      %p207 = pneg %p129
      %p208 = pneg %p126
      %s209 = smul.u32 16, %s19
      %p210 = scmp.lt.s32.totalorder %s18, 2
      %s211 = scalar_select %p210, %s18, 2
      %p212 = scmp.lt.s32.totalorder %s209, 15
      %s213 = scalar_select %p212, %s209, 15
      %s214 = smul.addr %s211, 16
      %s215 = sadd.s32 %s213, %s214
      %s216 = smul.addr %s215, 8
      %s217 = scalar_lea.vmem %s3, %s216
      %s218 = smul.u32 16, %s19
      %p219 = scmp.lt.s32.totalorder %s18, 2
      %s220 = scalar_select %p219, %s18, 2
      %p221 = scmp.lt.s32.totalorder %s218, 15
      %s222 = scalar_select %p221, %s218, 15
      %s223 = smul.addr %s222, 2
      %s224 = smul.addr %s220, 32
      %s225 = sadd.s32 %s223, %s224
      %s226 = smul.addr %s225, 4
      %s227 = scalar_lea.vmem %s0, %s226
      %s228 = smul.u32 16, %s19
      %p229 = scmp.lt.s32.totalorder %s18, 2
      %s230 = scalar_select %p229, %s18, 2
      %s231 = smul.addr %s230, 18
      %s232 = smul.addr %s231, 4
      %s233 = scalar_lea.vmem %s1, %s232
      %p234 = scmp.lt.s32.totalorder %s18, 2
      %s235 = scalar_select %p234, %s18, 2
      %s236 = scalar_lea.vmem %s2, %s235
      %s237 = smul.u32 16, %s19
      %p238 = scmp.lt.s32.totalorder %s18, 2
      %s239 = scalar_select %p238, %s18, 2
      %p240 = scmp.lt.s32.totalorder %s237, 15
      %s241 = scalar_select %p240, %s237, 15
      %s242 = smul.addr %s239, 16
      %s243 = sadd.s32 %s241, %s242
      %s244 = smul.addr %s243, 8
      %s245 = scalar_lea.vmem %s3, %s244
      %s246 = smul.u32 16, %s19
      %v248 = vld [vmem:[%s227] sm:$0xff]
      %v249 = vld [vmem:[%s227 + $0x8] sm:$0xff]
      %v250 = vld [vmem:[%s227 + $0x10] sm:$0xff]
      %v251 = vld [vmem:[%s227 + $0x18] sm:$0xff]
      %v252 = vld [vmem:[%s227 + $0x20] sm:$0xff]
      %v253 = vld [vmem:[%s227 + $0x28] sm:$0xff]
      %v254 = vld [vmem:[%s227 + $0x30] sm:$0xff]
      %v255 = vld [vmem:[%s227 + $0x38] sm:$0xff]
      %v256 = vld [vmem:[%s227 + $0x40] sm:$0xff]
      %v257 = vld [vmem:[%s227 + $0x48] sm:$0xff]
      %v258 = vld [vmem:[%s227 + $0x50] sm:$0xff]
      %v259 = vld [vmem:[%s227 + $0x58] sm:$0xff]
      %v260 = vld [vmem:[%s227 + $0x60] sm:$0xff]
      %v261 = vld [vmem:[%s227 + $0x68] sm:$0xff]
      %v262 = vld [vmem:[%s227 + $0x70] sm:$0xff]
      %v263 = vld [vmem:[%s227 + $0x78] sm:$0xff]
      %v264 = vld [vmem:[%s233] sm:$0xf]
      %v265 = vld [vmem:[%s233 + $0x4] sm:$0xf]
      %v266 = vld [vmem:[%s233 + $0x8] sm:$0xf]
      %v267 = vld [vmem:[%s233 + $0xc] sm:$0xf]
      %v268 = vld [vmem:[%s233 + $0x10] sm:$0xf]
      %v269 = vld [vmem:[%s233 + $0x14] sm:$0xf]
      %v270 = vld [vmem:[%s233 + $0x18] sm:$0xf]
      %v271 = vld [vmem:[%s233 + $0x1c] sm:$0xf]
      %v272 = vld [vmem:[%s233 + $0x20] sm:$0xf]
      %v273 = vld [vmem:[%s233 + $0x24] sm:$0xf]
      %v274 = vld [vmem:[%s233 + $0x28] sm:$0xf]
      %v275 = vld [vmem:[%s233 + $0x2c] sm:$0xf]
      %v276 = vld [vmem:[%s233 + $0x30] sm:$0xf]
      %v277 = vld [vmem:[%s233 + $0x34] sm:$0xf]
      %v278 = vld [vmem:[%s233 + $0x38] sm:$0xf]
      %v279 = vld [vmem:[%s233 + $0x3c] sm:$0xf]
      %v280 = vld [vmem:[%s233 + $0x40] sm:$0xf]
      %v281 = vld [vmem:[%s233 + $0x44] sm:$0xf]
      %v282 = vld [vmem:[%s236] sm:$0x1]
      %v284 = vlaneseq
      %v285 = vshrl.u32 %v284, 7
      %v286 = vsub.s32 0, %v285
      %v287 = vrot.slane %v282, %v286
      %v305 = vunpack.c.l.b16 %v248
      %v306 = vunpack.c.h.b16 %v248
      %v307 = vunpack.c.l.b16 %v249
      %v308 = vunpack.c.h.b16 %v249
      %v309 = vunpack.c.l.b16 %v250
      %v310 = vunpack.c.h.b16 %v250
      %v311 = vunpack.c.l.b16 %v251
      %v312 = vunpack.c.h.b16 %v251
      %v313 = vunpack.c.l.b16 %v252
      %v314 = vunpack.c.h.b16 %v252
      %v315 = vunpack.c.l.b16 %v253
      %v316 = vunpack.c.h.b16 %v253
      %v317 = vunpack.c.l.b16 %v254
      %v318 = vunpack.c.h.b16 %v254
      %v319 = vunpack.c.l.b16 %v255
      %v320 = vunpack.c.h.b16 %v255
      %v321 = vunpack.c.l.b16 %v256
      %v322 = vunpack.c.h.b16 %v256
      %v323 = vunpack.c.l.b16 %v257
      %v324 = vunpack.c.h.b16 %v257
      %v325 = vunpack.c.l.b16 %v258
      %v326 = vunpack.c.h.b16 %v258
      %v327 = vunpack.c.l.b16 %v259
      %v328 = vunpack.c.h.b16 %v259
      %v329 = vunpack.c.l.b16 %v260
      %v330 = vunpack.c.h.b16 %v260
      %v331 = vunpack.c.l.b16 %v261
      %v332 = vunpack.c.h.b16 %v261
      %v333 = vunpack.c.l.b16 %v262
      %v334 = vunpack.c.h.b16 %v262
      %v335 = vunpack.c.l.b16 %v263
      %v336 = vunpack.c.h.b16 %v263
      %v337 = vpack.c.b16 %v307, %v305
      %v338 = vpack.c.b16 %v308, %v306
      %v339 = vpack.c.b16 %v311, %v309
      %v340 = vpack.c.b16 %v312, %v310
      %v341 = vpack.c.b16 %v315, %v313
      %v342 = vpack.c.b16 %v316, %v314
      %v343 = vpack.c.b16 %v319, %v317
      %v344 = vpack.c.b16 %v320, %v318
      %v345 = vpack.c.b16 %v323, %v321
      %v346 = vpack.c.b16 %v324, %v322
      %v347 = vpack.c.b16 %v327, %v325
      %v348 = vpack.c.b16 %v328, %v326
      %v349 = vpack.c.b16 %v331, %v329
      %v350 = vpack.c.b16 %v332, %v330
      %v351 = vpack.c.b16 %v335, %v333
      %v352 = vpack.c.b16 %v336, %v334
      %v379 = vunpack.c.l.b16 %v264
      %v380 = vunpack.c.l.b16 %v265
      %v381 = vunpack.c.l.b16 %v266
      %v382 = vunpack.c.l.b16 %v267
      %v383 = vunpack.c.l.b16 %v268
      %v384 = vunpack.c.l.b16 %v269
      %v385 = vunpack.c.l.b16 %v270
      %v386 = vunpack.c.l.b16 %v271
      %v387 = vunpack.c.l.b16 %v272
      %v388 = vunpack.c.l.b16 %v273
      %v389 = vunpack.c.l.b16 %v274
      %v390 = vunpack.c.l.b16 %v275
      %v391 = vunpack.c.l.b16 %v276
      %v392 = vunpack.c.l.b16 %v277
      %v393 = vunpack.c.l.b16 %v278
      %v394 = vunpack.c.l.b16 %v279
      %v395 = vunpack.c.l.b16 %v280
      %v396 = vunpack.c.l.b16 %v281
      %v397 = vpack.c.b16 %v380, %v379
      %v398 = vpack.c.b16 %v382, %v381
      %v399 = vpack.c.b16 %v384, %v383
      %v400 = vpack.c.b16 %v386, %v385
      %v401 = vpack.c.b16 %v388, %v387
      %v402 = vpack.c.b16 %v390, %v389
      %v403 = vpack.c.b16 %v392, %v391
      %v404 = vpack.c.b16 %v394, %v393
      %v405 = vpack.c.b16 %v396, %v395
      %vm415 = vcmask 130048
      %v417 = vsel %vm415, %v338, 0
      %v420 = vsel %vm415, %v340, 0
      %v423 = vsel %vm415, %v342, 0
      %v426 = vsel %vm415, %v344, 0
      %v429 = vsel %vm415, %v346, 0
      %v432 = vsel %vm415, %v348, 0
      %v435 = vsel %vm415, %v350, 0
      %v438 = vsel %vm415, %v352, 0
      %440 = vmatprep.subr.bf16.mxu0 0
      %441 = vmatpush1.bf16.msra.mxu0 %v404
      %442 = vmatprep.subr.bf16.mxu0 0
      %443 = vmatpush1.bf16.msra.mxu0 %v403
      %444 = vmatprep.subr.bf16.mxu0 0
      %445 = vmatpush1.bf16.msra.mxu0 %v402
      %446 = vmatprep.subr.bf16.mxu0 0
      %447 = vmatpush1.bf16.msra.mxu0 %v401
      %448 = vmatprep.subr.bf16.mxu0 0
      %449 = vmatpush1.bf16.msra.mxu0 %v400
      %450 = vmatprep.subr.bf16.mxu0 0
      %451 = vmatpush1.bf16.msra.mxu0 %v399
      %452 = vmatprep.subr.bf16.mxu0 0
      %453 = vmatpush1.bf16.msra.mxu0 %v398
      %454 = vmatprep.subr.bf16.mxu0 0
      %455 = vmatpush1.bf16.msra.mxu0 %v397
      %456 = vmatprep.subr.bf16.mxu0 0
      %457 = vmatpush2.bf16.msra.mxu0 0
      %458 = vmatprep.subr.bf16.mxu0 0
      %459 = vmatpush2.bf16.msra.mxu0 0
      %460 = vmatprep.subr.bf16.mxu0 0
      %461 = vmatpush2.bf16.msra.mxu0 0
      %462 = vmatprep.subr.bf16.mxu0 0
      %463 = vmatpush2.bf16.msra.mxu0 0
      %464 = vmatprep.subr.bf16.mxu0 0
      %465 = vmatpush2.bf16.msra.mxu0 0
      %466 = vmatprep.subr.bf16.mxu0 0
      %467 = vmatpush2.bf16.msra.mxu0 0
      %468 = vmatprep.subr.bf16.mxu0 0
      %469 = vmatpush2.bf16.msra.mxu0 0
      %470 = vmatprep.subr.bf16.mxu0 0
      %471 = vmatpush2.bf16.msra.mxu0 %v405
      %472 = vmatprep.mubr.bf16.mxu0 %v417
      %473 = vmatmul.mubr.bf16.gmra.mxu0 %v337
      %v474 = vpop.f32.mrf.mxu0
      %v475 = vadd.f32 %v287, %v474
      %v476 = vpop.f32.mrf.mxu0
      %v477 = vpop.f32.mrf.mxu0
      %v478 = vadd.f32 %v287, %v477
      %v479 = vpop.f32.mrf.mxu0
      %480 = vmatprep.mubr.bf16.mxu0 %v420
      %481 = vmatmul.mubr.bf16.gmra.mxu0 %v339
      %v482 = vpop.f32.mrf.mxu0
      %v483 = vadd.f32 %v287, %v482
      %v484 = vpop.f32.mrf.mxu0
      %v485 = vpop.f32.mrf.mxu0
      %v486 = vadd.f32 %v287, %v485
      %v487 = vpop.f32.mrf.mxu0
      %488 = vmatprep.mubr.bf16.mxu0 %v423
      %489 = vmatmul.mubr.bf16.gmra.mxu0 %v341
      %v490 = vpop.f32.mrf.mxu0
      %v491 = vadd.f32 %v287, %v490
      %v492 = vpop.f32.mrf.mxu0
      %v493 = vpop.f32.mrf.mxu0
      %v494 = vadd.f32 %v287, %v493
      %v495 = vpop.f32.mrf.mxu0
      %496 = vmatprep.mubr.bf16.mxu0 %v426
      %497 = vmatmul.mubr.bf16.gmra.mxu0 %v343
      %v498 = vpop.f32.mrf.mxu0
      %v499 = vadd.f32 %v287, %v498
      %v500 = vpop.f32.mrf.mxu0
      %v501 = vpop.f32.mrf.mxu0
      %v502 = vadd.f32 %v287, %v501
      %v503 = vpop.f32.mrf.mxu0
      %504 = vmatprep.mubr.bf16.mxu0 %v429
      %505 = vmatmul.mubr.bf16.gmra.mxu0 %v345
      %v506 = vpop.f32.mrf.mxu0
      %v507 = vadd.f32 %v287, %v506
      %v508 = vpop.f32.mrf.mxu0
      %v509 = vpop.f32.mrf.mxu0
      %v510 = vadd.f32 %v287, %v509
      %v511 = vpop.f32.mrf.mxu0
      %512 = vmatprep.mubr.bf16.mxu0 %v432
      %513 = vmatmul.mubr.bf16.gmra.mxu0 %v347
      %v514 = vpop.f32.mrf.mxu0
      %v515 = vadd.f32 %v287, %v514
      %v516 = vpop.f32.mrf.mxu0
      %v517 = vpop.f32.mrf.mxu0
      %v518 = vadd.f32 %v287, %v517
      %v519 = vpop.f32.mrf.mxu0
      %520 = vmatprep.mubr.bf16.mxu0 %v435
      %521 = vmatmul.mubr.bf16.gmra.mxu0 %v349
      %v522 = vpop.f32.mrf.mxu0
      %v523 = vadd.f32 %v287, %v522
      %v524 = vpop.f32.mrf.mxu0
      %v525 = vpop.f32.mrf.mxu0
      %v526 = vadd.f32 %v287, %v525
      %v527 = vpop.f32.mrf.mxu0
      %528 = vmatprep.mubr.bf16.mxu0 %v438
      %529 = vmatmul.mubr.bf16.gmra.mxu0 %v351
      %v530 = vpop.f32.mrf.mxu0
      %v531 = vadd.f32 %v287, %v530
      %v532 = vpop.f32.mrf.mxu0
      %v533 = vpop.f32.mrf.mxu0
      %v534 = vadd.f32 %v287, %v533
      %v535 = vpop.f32.mrf.mxu0
      %536 = vdwg.mxu0
      %v537 = vsub.f32 0.0, %v475
      %v538 = vsub.f32 0.0, %v478
      %v539 = vsub.f32 0.0, %v483
      %v540 = vsub.f32 0.0, %v486
      %v541 = vsub.f32 0.0, %v491
      %v542 = vsub.f32 0.0, %v494
      %v543 = vsub.f32 0.0, %v499
      %v544 = vsub.f32 0.0, %v502
      %v545 = vsub.f32 0.0, %v507
      %v546 = vsub.f32 0.0, %v510
      %v547 = vsub.f32 0.0, %v515
      %v548 = vsub.f32 0.0, %v518
      %v549 = vsub.f32 0.0, %v523
      %v550 = vsub.f32 0.0, %v526
      %v551 = vsub.f32 0.0, %v531
      %v552 = vsub.f32 0.0, %v534
      %v553 = vmul.f32 %v537, 1.442695
      %v554 = vpow.pop %v553
      %v555 = vmul.f32 %v538, 1.442695
      %v556 = vpow.pop %v555
      %v557 = vmul.f32 %v539, 1.442695
      %v558 = vpow.pop %v557
      %v559 = vmul.f32 %v540, 1.442695
      %v560 = vpow.pop %v559
      %v561 = vmul.f32 %v541, 1.442695
      %v562 = vpow.pop %v561
      %v563 = vmul.f32 %v542, 1.442695
      %v564 = vpow.pop %v563
      %v565 = vmul.f32 %v543, 1.442695
      %v566 = vpow.pop %v565
      %v567 = vmul.f32 %v544, 1.442695
      %v568 = vpow.pop %v567
      %v569 = vmul.f32 %v545, 1.442695
      %v570 = vpow.pop %v569
      %v571 = vmul.f32 %v546, 1.442695
      %v572 = vpow.pop %v571
      %v573 = vmul.f32 %v547, 1.442695
      %v574 = vpow.pop %v573
      %v575 = vmul.f32 %v548, 1.442695
      %v576 = vpow.pop %v575
      %v577 = vmul.f32 %v549, 1.442695
      %v578 = vpow.pop %v577
      %v579 = vmul.f32 %v550, 1.442695
      %v580 = vpow.pop %v579
      %v581 = vmul.f32 %v551, 1.442695
      %v582 = vpow.pop %v581
      %v583 = vmul.f32 %v552, 1.442695
      %v584 = vpow.pop %v583
      %v585 = vadd.f32 %v554, 1.0
      %v586 = vadd.f32 %v556, 1.0
      %v587 = vadd.f32 %v558, 1.0
      %v588 = vadd.f32 %v560, 1.0
      %v589 = vadd.f32 %v562, 1.0
      %v590 = vadd.f32 %v564, 1.0
      %v591 = vadd.f32 %v566, 1.0
      %v592 = vadd.f32 %v568, 1.0
      %v593 = vadd.f32 %v570, 1.0
      %v594 = vadd.f32 %v572, 1.0
      %v595 = vadd.f32 %v574, 1.0
      %v596 = vadd.f32 %v576, 1.0
      %v597 = vadd.f32 %v578, 1.0
      %v598 = vadd.f32 %v580, 1.0
      %v599 = vadd.f32 %v582, 1.0
      %v600 = vadd.f32 %v584, 1.0
      %v601 = vrcp.pop %v585
      %v602 = vrcp.pop %v586
      %v603 = vrcp.pop %v587
      %v604 = vrcp.pop %v588
      %v605 = vrcp.pop %v589
      %v606 = vrcp.pop %v590
      %v607 = vrcp.pop %v591
      %v608 = vrcp.pop %v592
      %v609 = vrcp.pop %v593
      %v610 = vrcp.pop %v594
      %v611 = vrcp.pop %v595
      %v612 = vrcp.pop %v596
      %v613 = vrcp.pop %v597
      %v614 = vrcp.pop %v598
      %v615 = vrcp.pop %v599
      %v616 = vrcp.pop %v600
      %v617 = vmul.f32 %v475, %v601
      %v618 = vmul.f32 %v478, %v602
      %v619 = vmul.f32 %v483, %v603
      %v620 = vmul.f32 %v486, %v604
      %v621 = vmul.f32 %v491, %v605
      %v622 = vmul.f32 %v494, %v606
      %v623 = vmul.f32 %v499, %v607
      %v624 = vmul.f32 %v502, %v608
      %v625 = vmul.f32 %v507, %v609
      %v626 = vmul.f32 %v510, %v610
      %v627 = vmul.f32 %v515, %v611
      %v628 = vmul.f32 %v518, %v612
      %v629 = vmul.f32 %v523, %v613
      %v630 = vmul.f32 %v526, %v614
      %v631 = vmul.f32 %v531, %v615
      %v632 = vmul.f32 %v534, %v616
      %633 = vst.msk [vmem:[%s245] sm:$0xff] %vm415, %v617
      %634 = vst.msk [vmem:[%s245 + $0x8] sm:$0xff] %vm415, %v618
      %635 = vst.msk [vmem:[%s245 + $0x10] sm:$0xff] %vm415, %v619
      %636 = vst.msk [vmem:[%s245 + $0x18] sm:$0xff] %vm415, %v620
      %637 = vst.msk [vmem:[%s245 + $0x20] sm:$0xff] %vm415, %v621
      %638 = vst.msk [vmem:[%s245 + $0x28] sm:$0xff] %vm415, %v622
      %639 = vst.msk [vmem:[%s245 + $0x30] sm:$0xff] %vm415, %v623
      %640 = vst.msk [vmem:[%s245 + $0x38] sm:$0xff] %vm415, %v624
      %641 = vst.msk [vmem:[%s245 + $0x40] sm:$0xff] %vm415, %v625
      %642 = vst.msk [vmem:[%s245 + $0x48] sm:$0xff] %vm415, %v626
      %643 = vst.msk [vmem:[%s245 + $0x50] sm:$0xff] %vm415, %v627
      %644 = vst.msk [vmem:[%s245 + $0x58] sm:$0xff] %vm415, %v628
      %645 = vst.msk [vmem:[%s245 + $0x60] sm:$0xff] %vm415, %v629
      %646 = vst.msk [vmem:[%s245 + $0x68] sm:$0xff] %vm415, %v630
      %647 = vst.msk [vmem:[%s245 + $0x70] sm:$0xff] %vm415, %v631
      %648 = vst.msk [vmem:[%s245 + $0x78] sm:$0xff] %vm415, %v632
      %s649 = smul.u32 16, %s19
      %p650 = scmp.lt.s32.totalorder %s18, 2
      %s651 = scalar_select %p650, %s18, 2
      %p652 = scmp.lt.s32.totalorder %s649, 15
      %s653 = scalar_select %p652, %s649, 15
      %s654 = smul.addr %s651, 16
      %s655 = sadd.s32 %s653, %s654
      %s656 = smul.addr %s655, 8
      %s657 = scalar_lea.vmem %s3, %s656
      // Predicated region
      $region33: #{pose_guider_forward.22} parent=31 // pred_check
        %p658 = pneg %p126
      $region34: #{pose_guider_forward.22} parent=31 // pred_check_branch
        %660 = sbr.rel (%p658) target = $region36
      $region35: #{pose_guider_forward.22} parent=31 // pred_region
        %s661 = smul.u32 16, %s19
      $region36: #{pose_guider_forward.22} parent=31 // pred_fallthru
        _
    $region32: #{pose_guider_forward.22} parent=5 // pred_fallthru
      _
    %p662 = scmp.le.s32.totalorder 2, %s9
    // Predicated region
    $region37: #{pose_guider_forward.22} parent=5 // pred_check
      %p663 = pneg %p662
    $region38: #{pose_guider_forward.22} parent=5 // pred_check_branch
      %665 = sbr.rel (%p663) target = $region40
    $region39: #{pose_guider_forward.22} parent=5 // pred_region
      %s666 = ssub.s32 %s9, 2
      // Predicated region
      $region41: #{pose_guider_forward.22} parent=39 // pred_check
        %p667 = pneg %p132
      $region42: #{pose_guider_forward.22} parent=39 // pred_check_branch
        %669 = sbr.rel (%p667) target = $region44
      $region43: #{pose_guider_forward.22} parent=39 // pred_region
        %s670 = smul.u32 16, %s21
        %p671 = scmp.lt.s32.totalorder %s20, 2
        %s672 = scalar_select %p671, %s20, 2
        %p673 = scmp.lt.s32.totalorder %s670, 15
        %s674 = scalar_select %p673, %s670, 15
        %s675 = smul.addr %s672, 16
        %s676 = sadd.s32 %s674, %s675
        %s677 = smul.addr %s676, 8
        %s678 = scalar_lea.vmem %s3, %s677
      $region44: #{pose_guider_forward.22} parent=39 // pred_fallthru
        _
    $region40: #{pose_guider_forward.22} parent=5 // pred_fallthru
      _
  $region6: #{pose_guider_forward.22} parent=0 // loop_footer
    %s13 = sadd.s32 1, %s9
  $region7: #{pose_guider_forward.22} parent=0 // loop_footer_branch
    %8 = sbr.rel target = $region3
  $region8: #{pose_guider_forward.22} parent=0 // loop_exit
    _

// kernel: pose_guider_forward.24
$region0: #{pose_guider_forward.24}
  #allocation0 [shape = 'u32[]', space=smem, size = 0x4, offset = 0x4, fixed_abs, tag = 'smem constant byte address 0x4 - core index']
  #allocation1 [shape = 'u32[144,128]{1,0:T(1,128)}', space=vmem, size = 0x12000, scoped, tag = 'internal scratch']
  %s0 = inlined_call_operand.vmem [shape: bf16[3,32,144], index: 0, kind: input, shape index: {}]
  %s1 = inlined_call_operand.vmem [shape: bf16[3,144,32], index: 1, kind: input, shape index: {}]
  %s2 = inlined_call_operand.vmem [shape: f32[3,1,32], index: 2, kind: input, shape index: {}]
  %s3 = inlined_call_operand.vmem [shape: f32[3,32,32], index: 3, kind: output, shape index: {}]
  %s4 = sld [smem:[#allocation0]]
  $region45: #{pose_guider_forward.24} parent=0
    _
  %s6 = ssub.s32 1, %s4
  %s7 = scalar_select 0, %s6, %s4
  loop: start=0, step=1, limit=5
  $region2: #{pose_guider_forward.24} parent=0 // loop_pre_header
    _
  $region3: #{pose_guider_forward.24} parent=0 // loop_header
    %s9 = sphi 0, %s13
    %p10 = scmp.ge.s32.totalorder %s9, 5
    %s16 = sphi 0, %s28
    %s17 = sphi 0, %s24
    %s18 = sphi 0, %s16
    %s19 = sphi 0, %s17
    %s20 = sphi 0, %s18
    %s21 = sphi 0, %s19
    %s33 = sphi 0, %s35
    %s36 = sphi 0, %s33
    %s37 = sphi 0, %s36
    %s53 = sphi 0, %s37
    %s59 = sphi 0, %s61
    %s62 = sphi 0, %s59
    %s63 = sphi 0, %s62
    %s79 = sphi 0, %s63
    %s85 = sphi 0, %s87
    %s88 = sphi 0, %s85
    %s89 = sphi 0, %s88
    %s105 = sphi 0, %s89
    %s113 = sphi 0, %s115
    %s116 = sphi 0, %s113
    %s117 = sphi 0, %s116
    %s133 = sphi 0, %s117
  $region4: #{pose_guider_forward.24} parent=0 // loop_header_branch
    %12 = sbr.rel (%p10) target = $region8
  $region5: #{pose_guider_forward.24} parent=0 // loop_body
    %s14 = ssub.s32 %s9, 1
    %s15 = ssub.s32 %s9, 2
    %s22 = sadd.s32 1, %s17
    %p23 = scmp.ge.s32.totalorder %s22, 1
    %s24 = scalar_select %p23, 0, %s22
    %s25 = sadd.s32 1, %s16
    %s26 = scalar_select %p23, %s25, %s16
    %p27 = scmp.ge.s32.totalorder %s26, 3
    %s28 = scalar_select %p27, 0, %s26
    %s29 = ssub.s32 %s16, %s28
    %s30 = ssub.s32 %s17, %s24
    %s31 = sor.u32 %s29, %s30
    %p32 = scmp.eq.s32.totalorder %s31, 0
    %s34 = sadd.s32 %s33, 1
    %s35 = scalar_select %p32, %s33, %s34
    %p38 = pneg %p32
    %p39 = scmp.eq.s32.totalorder %s9, 2
    %p40 = por %p38, %p39
    %p41 = scmp.ne.s32.totalorder %s33, %s36
    %p42 = scmp.eq.s32.totalorder %s9, 0
    %p43 = por %p41, %p42
    %p44 = scmp.ne.s32.totalorder %s33, %s36
    %p45 = scmp.eq.s32.totalorder %s14, 2
    %p46 = por %p44, %p45
    %p47 = scmp.ne.s32.totalorder %s36, %s37
    %p48 = scmp.eq.s32.totalorder %s14, 0
    %p49 = por %p47, %p48
    %p50 = scmp.ne.s32.totalorder %s36, %s37
    %p51 = scmp.eq.s32.totalorder %s15, 2
    %p52 = por %p50, %p51
    %p54 = scmp.ne.s32.totalorder %s37, %s53
    %p55 = scmp.eq.s32.totalorder %s15, 0
    %p56 = por %p54, %p55
    %s57 = ssub.s32 %s16, %s28
    %p58 = scmp.eq.s32.totalorder %s57, 0
    %s60 = sadd.s32 %s59, 1
    %s61 = scalar_select %p58, %s59, %s60
    %p64 = pneg %p58
    %p65 = scmp.eq.s32.totalorder %s9, 2
    %p66 = por %p64, %p65
    %p67 = scmp.ne.s32.totalorder %s59, %s62
    %p68 = scmp.eq.s32.totalorder %s9, 0
    %p69 = por %p67, %p68
    %p70 = scmp.ne.s32.totalorder %s59, %s62
    %p71 = scmp.eq.s32.totalorder %s14, 2
    %p72 = por %p70, %p71
    %p73 = scmp.ne.s32.totalorder %s62, %s63
    %p74 = scmp.eq.s32.totalorder %s14, 0
    %p75 = por %p73, %p74
    %p76 = scmp.ne.s32.totalorder %s62, %s63
    %p77 = scmp.eq.s32.totalorder %s15, 2
    %p78 = por %p76, %p77
    %p80 = scmp.ne.s32.totalorder %s63, %s79
    %p81 = scmp.eq.s32.totalorder %s15, 0
    %p82 = por %p80, %p81
    %s83 = ssub.s32 %s16, %s28
    %p84 = scmp.eq.s32.totalorder %s83, 0
    %s86 = sadd.s32 %s85, 1
    %s87 = scalar_select %p84, %s85, %s86
    %p90 = pneg %p84
    %p91 = scmp.eq.s32.totalorder %s9, 2
    %p92 = por %p90, %p91
    %p93 = scmp.ne.s32.totalorder %s85, %s88
    %p94 = scmp.eq.s32.totalorder %s9, 0
    %p95 = por %p93, %p94
    %p96 = scmp.ne.s32.totalorder %s85, %s88
    %p97 = scmp.eq.s32.totalorder %s14, 2
    %p98 = por %p96, %p97
    %p99 = scmp.ne.s32.totalorder %s88, %s89
    %p100 = scmp.eq.s32.totalorder %s14, 0
    %p101 = por %p99, %p100
    %p102 = scmp.ne.s32.totalorder %s88, %s89
    %p103 = scmp.eq.s32.totalorder %s15, 2
    %p104 = por %p102, %p103
    %p106 = scmp.ne.s32.totalorder %s89, %s105
    %p107 = scmp.eq.s32.totalorder %s15, 0
    %p108 = por %p106, %p107
    %s109 = ssub.s32 %s16, %s28
    %s110 = ssub.s32 %s17, %s24
    %s111 = sor.u32 %s109, %s110
    %p112 = scmp.eq.s32.totalorder %s111, 0
    %s114 = sadd.s32 %s113, 1
    %s115 = scalar_select %p112, %s113, %s114
    %p118 = pneg %p112
    %p119 = scmp.eq.s32.totalorder %s9, 2
    %p120 = por %p118, %p119
    %p121 = scmp.ne.s32.totalorder %s113, %s116
    %p122 = scmp.eq.s32.totalorder %s9, 0
    %p123 = por %p121, %p122
    %p124 = scmp.ne.s32.totalorder %s113, %s116
    %p125 = scmp.eq.s32.totalorder %s14, 2
    %p126 = por %p124, %p125
    %p127 = scmp.ne.s32.totalorder %s116, %s117
    %p128 = scmp.eq.s32.totalorder %s14, 0
    %p129 = por %p127, %p128
    %p130 = scmp.ne.s32.totalorder %s116, %s117
    %p131 = scmp.eq.s32.totalorder %s15, 2
    %p132 = por %p130, %p131
    %p134 = scmp.ne.s32.totalorder %s117, %s133
    %p135 = scmp.eq.s32.totalorder %s15, 0
    %p136 = por %p134, %p135
    %p137 = scmp.le.s32.totalorder 1, %s9
    %p138 = scmp.lt.s32.totalorder %s9, 4
    %p139 = pnand %p137, %p138
    %p140 = pneg %p139
    // Predicated region
    $region9: #{pose_guider_forward.24} parent=5 // pred_check
      _
    $region10: #{pose_guider_forward.24} parent=5 // pred_check_branch
      %142 = sbr.rel (%p139) target = $region12
    $region11: #{pose_guider_forward.24} parent=5 // pred_region
      %s143 = ssub.s32 %s9, 1
    $region12: #{pose_guider_forward.24} parent=5 // pred_fallthru
      _
    %p144 = scmp.lt.s32.totalorder %s9, 3
    // Predicated region
    $region13: #{pose_guider_forward.24} parent=5 // pred_check
      %p145 = pneg %p144
    $region14: #{pose_guider_forward.24} parent=5 // pred_check_branch
      %147 = sbr.rel (%p145) target = $region16
    $region15: #{pose_guider_forward.24} parent=5 // pred_region
      // Predicated region
      $region17: #{pose_guider_forward.24} parent=15 // pred_check
        %p148 = pneg %p43
      $region18: #{pose_guider_forward.24} parent=15 // pred_check_branch
        %150 = sbr.rel (%p148) target = $region20
      $region19: #{pose_guider_forward.24} parent=15 // pred_region
        %s151 = smul.u32 4, %s17
        %p152 = scmp.lt.s32.totalorder %s16, 2
        %s153 = scalar_select %p152, %s16, 2
        %p154 = scmp.lt.s32.totalorder %s151, 3
        %s155 = scalar_select %p154, %s151, 3
        %s156 = smul.addr %s155, 2
        %s157 = smul.addr %s153, 8
        %s158 = sadd.s32 %s156, %s157
        %s159 = smul.addr %s158, 4
        %s160 = scalar_lea.vmem %s0, %s159
        %s161 = smul.u32 4, %s17
      $region20: #{pose_guider_forward.24} parent=15 // pred_fallthru
        _
      // Predicated region
      $region21: #{pose_guider_forward.24} parent=15 // pred_check
        %p162 = pneg %p69
      $region22: #{pose_guider_forward.24} parent=15 // pred_check_branch
        %164 = sbr.rel (%p162) target = $region24
      $region23: #{pose_guider_forward.24} parent=15 // pred_region
        %p165 = scmp.lt.s32.totalorder %s16, 2
        %s166 = scalar_select %p165, %s16, 2
        %s167 = smul.addr %s166, 18
        %s168 = smul.addr %s167, 4
        %s169 = scalar_lea.vmem %s1, %s168
      $region24: #{pose_guider_forward.24} parent=15 // pred_fallthru
        _
      // Predicated region
      $region25: #{pose_guider_forward.24} parent=15 // pred_check
        %p170 = pneg %p95
      $region26: #{pose_guider_forward.24} parent=15 // pred_check_branch
        %172 = sbr.rel (%p170) target = $region28
      $region27: #{pose_guider_forward.24} parent=15 // pred_region
        %p173 = scmp.lt.s32.totalorder %s16, 2
        %s174 = scalar_select %p173, %s16, 2
        %s175 = scalar_lea.vmem %s2, %s174
      $region28: #{pose_guider_forward.24} parent=15 // pred_fallthru
        _
    $region16: #{pose_guider_forward.24} parent=5 // pred_fallthru
      _
    %p176 = scmp.le.s32.totalorder 1, %s9
    %p177 = scmp.lt.s32.totalorder %s9, 4
    %p178 = pnand %p176, %p177
    %p179 = pneg %p178
    // Predicated region
    $region29: #{pose_guider_forward.24} parent=5 // pred_check
      _
    $region30: #{pose_guider_forward.24} parent=5 // pred_check_branch
      %181 = sbr.rel (%p178) target = $region32
    $region31: #{pose_guider_forward.24} parent=5 // pred_region
      %s182 = ssub.s32 %s9, 1
      %s183 = smul.u32 4, %s19
      %p184 = scmp.lt.s32.totalorder %s18, 2
      %s185 = scalar_select %p184, %s18, 2
      %p186 = scmp.lt.s32.totalorder %s183, 3
      %s187 = scalar_select %p186, %s183, 3
      %s188 = smul.addr %s187, 2
      %s189 = smul.addr %s185, 8
      %s190 = sadd.s32 %s188, %s189
      %s191 = smul.addr %s190, 4
      %s192 = scalar_lea.vmem %s0, %s191
      %p193 = pneg %p49
      %p194 = pneg %p46
      %p195 = scmp.lt.s32.totalorder %s18, 2
      %s196 = scalar_select %p195, %s18, 2
      %s197 = smul.addr %s196, 18
      %s198 = smul.addr %s197, 4
      %s199 = scalar_lea.vmem %s1, %s198
      %p200 = pneg %p75
      %p201 = pneg %p72
      %p202 = scmp.lt.s32.totalorder %s18, 2
      %s203 = scalar_select %p202, %s18, 2
      %s204 = scalar_lea.vmem %s2, %s203
      %p205 = pneg %p101
      %p206 = pneg %p98
      %p207 = pneg %p129
      %p208 = pneg %p126
      %s209 = smul.u32 4, %s19
      %p210 = scmp.lt.s32.totalorder %s18, 2
      %s211 = scalar_select %p210, %s18, 2
      %p212 = scmp.lt.s32.totalorder %s209, 3
      %s213 = scalar_select %p212, %s209, 3
      %s214 = smul.addr %s211, 4
      %s215 = sadd.s32 %s213, %s214
      %s216 = smul.addr %s215, 8
      %s217 = scalar_lea.vmem %s3, %s216
      %s218 = smul.u32 4, %s19
      %p219 = scmp.lt.s32.totalorder %s18, 2
      %s220 = scalar_select %p219, %s18, 2
      %p221 = scmp.lt.s32.totalorder %s218, 3
      %s222 = scalar_select %p221, %s218, 3
      %s223 = smul.addr %s222, 2
      %s224 = smul.addr %s220, 8
      %s225 = sadd.s32 %s223, %s224
      %s226 = smul.addr %s225, 4
      %s227 = scalar_lea.vmem %s0, %s226
      %s228 = smul.u32 4, %s19
      %p229 = scmp.lt.s32.totalorder %s18, 2
      %s230 = scalar_select %p229, %s18, 2
      %s231 = smul.addr %s230, 18
      %s232 = smul.addr %s231, 4
      %s233 = scalar_lea.vmem %s1, %s232
      %p234 = scmp.lt.s32.totalorder %s18, 2
      %s235 = scalar_select %p234, %s18, 2
      %s236 = scalar_lea.vmem %s2, %s235
      %s237 = smul.u32 4, %s19
      %p238 = scmp.lt.s32.totalorder %s18, 2
      %s239 = scalar_select %p238, %s18, 2
      %p240 = scmp.lt.s32.totalorder %s237, 3
      %s241 = scalar_select %p240, %s237, 3
      %s242 = smul.addr %s239, 4
      %s243 = sadd.s32 %s241, %s242
      %s244 = smul.addr %s243, 8
      %s245 = scalar_lea.vmem %s3, %s244
      %s246 = smul.u32 4, %s19
      %v248 = vld [vmem:[%s227] sm:$0xff]
      %v249 = vld [vmem:[%s227 + $0x8] sm:$0xff]
      %v250 = vld [vmem:[%s227 + $0x10] sm:$0xff]
      %v251 = vld [vmem:[%s227 + $0x18] sm:$0xff]
      %v252 = vld [vmem:[%s233] sm:$0xf]
      %v253 = vld [vmem:[%s233 + $0x4] sm:$0xf]
      %v254 = vld [vmem:[%s233 + $0x8] sm:$0xf]
      %v255 = vld [vmem:[%s233 + $0xc] sm:$0xf]
      %v256 = vld [vmem:[%s233 + $0x10] sm:$0xf]
      %v257 = vld [vmem:[%s233 + $0x14] sm:$0xf]
      %v258 = vld [vmem:[%s233 + $0x18] sm:$0xf]
      %v259 = vld [vmem:[%s233 + $0x1c] sm:$0xf]
      %v260 = vld [vmem:[%s233 + $0x20] sm:$0xf]
      %v261 = vld [vmem:[%s233 + $0x24] sm:$0xf]
      %v262 = vld [vmem:[%s233 + $0x28] sm:$0xf]
      %v263 = vld [vmem:[%s233 + $0x2c] sm:$0xf]
      %v264 = vld [vmem:[%s233 + $0x30] sm:$0xf]
      %v265 = vld [vmem:[%s233 + $0x34] sm:$0xf]
      %v266 = vld [vmem:[%s233 + $0x38] sm:$0xf]
      %v267 = vld [vmem:[%s233 + $0x3c] sm:$0xf]
      %v268 = vld [vmem:[%s233 + $0x40] sm:$0xf]
      %v269 = vld [vmem:[%s233 + $0x44] sm:$0xf]
      %v270 = vld [vmem:[%s236] sm:$0x1]
      %v272 = vlaneseq
      %v273 = vshrl.u32 %v272, 7
      %v274 = vsub.s32 0, %v273
      %v275 = vrot.slane %v270, %v274
      %v281 = vunpack.c.l.b16 %v248
      %v282 = vunpack.c.h.b16 %v248
      %v283 = vunpack.c.l.b16 %v249
      %v284 = vunpack.c.h.b16 %v249
      %v285 = vunpack.c.l.b16 %v250
      %v286 = vunpack.c.h.b16 %v250
      %v287 = vunpack.c.l.b16 %v251
      %v288 = vunpack.c.h.b16 %v251
      %v289 = vpack.c.b16 %v283, %v281
      %v290 = vpack.c.b16 %v284, %v282
      %v291 = vpack.c.b16 %v287, %v285
      %v292 = vpack.c.b16 %v288, %v286
      %v313 = vunpack.c.l.b16 %v252
      %v314 = vunpack.c.l.b16 %v253
      %v315 = vunpack.c.l.b16 %v254
      %v316 = vunpack.c.l.b16 %v255
      %v317 = vunpack.c.l.b16 %v256
      %v318 = vunpack.c.l.b16 %v257
      %v319 = vunpack.c.l.b16 %v258
      %v320 = vunpack.c.l.b16 %v259
      %v321 = vunpack.c.l.b16 %v260
      %v322 = vunpack.c.l.b16 %v261
      %v323 = vunpack.c.l.b16 %v262
      %v324 = vunpack.c.l.b16 %v263
      %v325 = vunpack.c.l.b16 %v264
      %v326 = vunpack.c.l.b16 %v265
      %v327 = vunpack.c.l.b16 %v266
      %v328 = vunpack.c.l.b16 %v267
      %v329 = vunpack.c.l.b16 %v268
      %v330 = vunpack.c.l.b16 %v269
      %v331 = vpack.c.b16 %v314, %v313
      %v332 = vpack.c.b16 %v316, %v315
      %v333 = vpack.c.b16 %v318, %v317
      %v334 = vpack.c.b16 %v320, %v319
      %v335 = vpack.c.b16 %v322, %v321
      %v336 = vpack.c.b16 %v324, %v323
      %v337 = vpack.c.b16 %v326, %v325
      %v338 = vpack.c.b16 %v328, %v327
      %v339 = vpack.c.b16 %v330, %v329
      %vm349 = vcmask 130048
      %v351 = vsel %vm349, %v290, 0
      %v354 = vsel %vm349, %v292, 0
      %356 = vmatprep.subr.bf16.mxu0 0
      %357 = vmatpush1.bf16.msra.mxu0 %v338
      %358 = vmatprep.subr.bf16.mxu0 0
      %359 = vmatpush1.bf16.msra.mxu0 %v337
      %360 = vmatprep.subr.bf16.mxu0 0
      %361 = vmatpush1.bf16.msra.mxu0 %v336
      %362 = vmatprep.subr.bf16.mxu0 0
      %363 = vmatpush1.bf16.msra.mxu0 %v335
      %364 = vmatprep.subr.bf16.mxu0 0
      %365 = vmatpush1.bf16.msra.mxu0 %v334
      %366 = vmatprep.subr.bf16.mxu0 0
      %367 = vmatpush1.bf16.msra.mxu0 %v333
      %368 = vmatprep.subr.bf16.mxu0 0
      %369 = vmatpush1.bf16.msra.mxu0 %v332
      %370 = vmatprep.subr.bf16.mxu0 0
      %371 = vmatpush1.bf16.msra.mxu0 %v331
      %372 = vmatprep.subr.bf16.mxu0 0
      %373 = vmatpush2.bf16.msra.mxu0 0
      %374 = vmatprep.subr.bf16.mxu0 0
      %375 = vmatpush2.bf16.msra.mxu0 0
      %376 = vmatprep.subr.bf16.mxu0 0
      %377 = vmatpush2.bf16.msra.mxu0 0
      %378 = vmatprep.subr.bf16.mxu0 0
      %379 = vmatpush2.bf16.msra.mxu0 0
      %380 = vmatprep.subr.bf16.mxu0 0
      %381 = vmatpush2.bf16.msra.mxu0 0
      %382 = vmatprep.subr.bf16.mxu0 0
      %383 = vmatpush2.bf16.msra.mxu0 0
      %384 = vmatprep.subr.bf16.mxu0 0
      %385 = vmatpush2.bf16.msra.mxu0 0
      %386 = vmatprep.subr.bf16.mxu0 0
      %387 = vmatpush2.bf16.msra.mxu0 %v339
      %388 = vmatprep.mubr.bf16.mxu0 %v351
      %389 = vmatmul.mubr.bf16.gmra.mxu0 %v289
      %v390 = vpop.f32.mrf.mxu0
      %v391 = vadd.f32 %v275, %v390
      %v392 = vpop.f32.mrf.mxu0
      %v393 = vpop.f32.mrf.mxu0
      %v394 = vadd.f32 %v275, %v393
      %v395 = vpop.f32.mrf.mxu0
      %396 = vmatprep.mubr.bf16.mxu0 %v354
      %397 = vmatmul.mubr.bf16.gmra.mxu0 %v291
      %v398 = vpop.f32.mrf.mxu0
      %v399 = vadd.f32 %v275, %v398
      %v400 = vpop.f32.mrf.mxu0
      %v401 = vpop.f32.mrf.mxu0
      %v402 = vadd.f32 %v275, %v401
      %v403 = vpop.f32.mrf.mxu0
      %404 = vdwg.mxu0
      %v405 = vsub.f32 0.0, %v391
      %v406 = vsub.f32 0.0, %v394
      %v407 = vsub.f32 0.0, %v399
      %v408 = vsub.f32 0.0, %v402
      %v409 = vmul.f32 %v405, 1.442695
      %v410 = vpow.pop %v409
      %v411 = vmul.f32 %v406, 1.442695
      %v412 = vpow.pop %v411
      %v413 = vmul.f32 %v407, 1.442695
      %v414 = vpow.pop %v413
      %v415 = vmul.f32 %v408, 1.442695
      %v416 = vpow.pop %v415
      %v417 = vadd.f32 %v410, 1.0
      %v418 = vadd.f32 %v412, 1.0
      %v419 = vadd.f32 %v414, 1.0
      %v420 = vadd.f32 %v416, 1.0
      %v421 = vrcp.pop %v417
      %v422 = vrcp.pop %v418
      %v423 = vrcp.pop %v419
      %v424 = vrcp.pop %v420
      %v425 = vmul.f32 %v391, %v421
      %v426 = vmul.f32 %v394, %v422
      %v427 = vmul.f32 %v399, %v423
      %v428 = vmul.f32 %v402, %v424
      %vm429 = vcmask 261120
      %430 = vst.msk [vmem:[%s245] sm:$0xff] %vm429, %v425
      %431 = vst.msk [vmem:[%s245 + $0x8] sm:$0xff] %vm429, %v426
      %432 = vst.msk [vmem:[%s245 + $0x10] sm:$0xff] %vm429, %v427
      %433 = vst.msk [vmem:[%s245 + $0x18] sm:$0xff] %vm429, %v428
      %s434 = smul.u32 4, %s19
      %p435 = scmp.lt.s32.totalorder %s18, 2
      %s436 = scalar_select %p435, %s18, 2
      %p437 = scmp.lt.s32.totalorder %s434, 3
      %s438 = scalar_select %p437, %s434, 3
      %s439 = smul.addr %s436, 4
      %s440 = sadd.s32 %s438, %s439
      %s441 = smul.addr %s440, 8
      %s442 = scalar_lea.vmem %s3, %s441
      // Predicated region
      $region33: #{pose_guider_forward.24} parent=31 // pred_check
        %p443 = pneg %p126
      $region34: #{pose_guider_forward.24} parent=31 // pred_check_branch
        %445 = sbr.rel (%p443) target = $region36
      $region35: #{pose_guider_forward.24} parent=31 // pred_region
        %s446 = smul.u32 4, %s19
      $region36: #{pose_guider_forward.24} parent=31 // pred_fallthru
        _
    $region32: #{pose_guider_forward.24} parent=5 // pred_fallthru
      _
    %p447 = scmp.le.s32.totalorder 2, %s9
    // Predicated region
    $region37: #{pose_guider_forward.24} parent=5 // pred_check
      %p448 = pneg %p447
    $region38: #{pose_guider_forward.24} parent=5 // pred_check_branch
      %450 = sbr.rel (%p448) target = $region40
    $region39: #{pose_guider_forward.24} parent=5 // pred_region
      %s451 = ssub.s32 %s9, 2
      // Predicated region
      $region41: #{pose_guider_forward.24} parent=39 // pred_check
        %p452 = pneg %p132
      $region42: #{pose_guider_forward.24} parent=39 // pred_check_branch
        %454 = sbr.rel (%p452) target = $region44
      $region43: #{pose_guider_forward.24} parent=39 // pred_region
        %s455 = smul.u32 4, %s21
        %p456 = scmp.lt.s32.totalorder %s20, 2
        %s457 = scalar_select %p456, %s20, 2
        %p458 = scmp.lt.s32.totalorder %s455, 3
        %s459 = scalar_select %p458, %s455, 3
        %s460 = smul.addr %s457, 4
        %s461 = sadd.s32 %s459, %s460
        %s462 = smul.addr %s461, 8
        %s463 = scalar_lea.vmem %s3, %s462
      $region44: #{pose_guider_forward.24} parent=39 // pred_fallthru
        _
    $region40: #{pose_guider_forward.24} parent=5 // pred_fallthru
      _
  $region6: #{pose_guider_forward.24} parent=0 // loop_footer
    %s13 = sadd.s32 1, %s9
  $region7: #{pose_guider_forward.24} parent=0 // loop_footer_branch
    %8 = sbr.rel target = $region3
  $region8: #{pose_guider_forward.24} parent=0 // loop_exit
    _

// kernel: pose_guider_forward.25
$region0: #{pose_guider_forward.25}
  #allocation0 [shape = 'u32[]', space=smem, size = 0x4, offset = 0x4, fixed_abs, tag = 'smem constant byte address 0x4 - core index']
  #allocation1 [shape = 'u32[144,128]{1,0:T(1,128)}', space=vmem, size = 0x12000, scoped, tag = 'internal scratch']
  %s0 = inlined_call_operand.vmem [shape: bf16[32,864], index: 0, kind: input, shape index: {}]
  %s1 = inlined_call_operand.vmem [shape: bf16[864,16], index: 1, kind: input, shape index: {}]
  %s2 = inlined_call_operand.vmem [shape: f32[1,16], index: 2, kind: input, shape index: {}]
  %s3 = inlined_call_operand.vmem [shape: f32[32,16], index: 3, kind: output, shape index: {}]
  %s4 = sld [smem:[#allocation0]]
  $region22: #{pose_guider_forward.25} parent=0
    _
  %s6 = ssub.s32 1, %s4
  %s7 = scalar_select 0, %s6, %s4
  // Predicated region
  $region2: #{pose_guider_forward.25} parent=0 // pred_check
    _
  $region3: #{pose_guider_forward.25} parent=0 // pred_check_branch
    %9 = sbr.rel (0) target = $region5
  $region4: #{pose_guider_forward.25} parent=0 // pred_region
    _
  $region5: #{pose_guider_forward.25} parent=0 // pred_fallthru
    _
  // Predicated region
  $region6: #{pose_guider_forward.25} parent=0 // pred_check
    _
  $region7: #{pose_guider_forward.25} parent=0 // pred_check_branch
    %11 = sbr.rel (0) target = $region9
  $region8: #{pose_guider_forward.25} parent=0 // pred_region
    _
  $region9: #{pose_guider_forward.25} parent=0 // pred_fallthru
    _
  // Predicated region
  $region10: #{pose_guider_forward.25} parent=0 // pred_check
    _
  $region11: #{pose_guider_forward.25} parent=0 // pred_check_branch
    %13 = sbr.rel (0) target = $region13
  $region12: #{pose_guider_forward.25} parent=0 // pred_region
    _
  $region13: #{pose_guider_forward.25} parent=0 // pred_fallthru
    _
  %v15 = vld [vmem:[%s0] sm:$0xff]
  %v16 = vld [vmem:[%s0 + $0x8] sm:$0xff]
  %v17 = vld [vmem:[%s0 + $0x10] sm:$0xff]
  %v18 = vld [vmem:[%s0 + $0x18] sm:$0xf]
  %v19 = vld [vmem:[%s0 + $0x1c] sm:$0xff]
  %v20 = vld [vmem:[%s0 + $0x24] sm:$0xff]
  %v21 = vld [vmem:[%s0 + $0x2c] sm:$0xff]
  %v22 = vld [vmem:[%s0 + $0x34] sm:$0xf]
  %v23 = vld [vmem:[%s0 + $0x38] sm:$0xff]
  %v24 = vld [vmem:[%s0 + $0x40] sm:$0xff]
  %v25 = vld [vmem:[%s0 + $0x48] sm:$0xff]
  %v26 = vld [vmem:[%s0 + $0x50] sm:$0xf]
  %v27 = vld [vmem:[%s0 + $0x54] sm:$0xff]
  %v28 = vld [vmem:[%s0 + $0x5c] sm:$0xff]
  %v29 = vld [vmem:[%s0 + $0x64] sm:$0xff]
  %v30 = vld [vmem:[%s0 + $0x6c] sm:$0xf]
  %v31 = vld [vmem:[%s1] sm:$0xf]
  %v32 = vld [vmem:[%s1 + $0x4] sm:$0xf]
  %v33 = vld [vmem:[%s1 + $0x8] sm:$0xf]
  %v34 = vld [vmem:[%s1 + $0xc] sm:$0xf]
  %v35 = vld [vmem:[%s1 + $0x10] sm:$0xf]
  %v36 = vld [vmem:[%s1 + $0x14] sm:$0xf]
  %v37 = vld [vmem:[%s1 + $0x18] sm:$0xf]
  %v38 = vld [vmem:[%s1 + $0x1c] sm:$0xf]
  %v39 = vld [vmem:[%s1 + $0x20] sm:$0xf]
  %v40 = vld [vmem:[%s1 + $0x24] sm:$0xf]
  %v41 = vld [vmem:[%s1 + $0x28] sm:$0xf]
  %v42 = vld [vmem:[%s1 + $0x2c] sm:$0xf]
  %v43 = vld [vmem:[%s1 + $0x30] sm:$0xf]
  %v44 = vld [vmem:[%s1 + $0x34] sm:$0xf]
  %v45 = vld [vmem:[%s1 + $0x38] sm:$0xf]
  %v46 = vld [vmem:[%s1 + $0x3c] sm:$0xf]
  %v47 = vld [vmem:[%s1 + $0x40] sm:$0xf]
  %v48 = vld [vmem:[%s1 + $0x44] sm:$0xf]
  %v49 = vld [vmem:[%s1 + $0x48] sm:$0xf]
  %v50 = vld [vmem:[%s1 + $0x4c] sm:$0xf]
  %v51 = vld [vmem:[%s1 + $0x50] sm:$0xf]
  %v52 = vld [vmem:[%s1 + $0x54] sm:$0xf]
  %v53 = vld [vmem:[%s1 + $0x58] sm:$0xf]
  %v54 = vld [vmem:[%s1 + $0x5c] sm:$0xf]
  %v55 = vld [vmem:[%s1 + $0x60] sm:$0xf]
  %v56 = vld [vmem:[%s1 + $0x64] sm:$0xf]
  %v57 = vld [vmem:[%s1 + $0x68] sm:$0xf]
  %v58 = vld [vmem:[%s1 + $0x6c] sm:$0xf]
  %v59 = vld [vmem:[%s1 + $0x70] sm:$0xf]
  %v60 = vld [vmem:[%s1 + $0x74] sm:$0xf]
  %v61 = vld [vmem:[%s1 + $0x78] sm:$0xf]
  %v62 = vld [vmem:[%s1 + $0x7c] sm:$0xf]
  %v63 = vld [vmem:[%s1 + $0x80] sm:$0xf]
  %v64 = vld [vmem:[%s1 + $0x84] sm:$0xf]
  %v65 = vld [vmem:[%s1 + $0x88] sm:$0xf]
  %v66 = vld [vmem:[%s1 + $0x8c] sm:$0xf]
  %v67 = vld [vmem:[%s1 + $0x90] sm:$0xf]
  %v68 = vld [vmem:[%s1 + $0x94] sm:$0xf]
  %v69 = vld [vmem:[%s1 + $0x98] sm:$0xf]
  %v70 = vld [vmem:[%s1 + $0x9c] sm:$0xf]
  %v71 = vld [vmem:[%s1 + $0xa0] sm:$0xf]
  %v72 = vld [vmem:[%s1 + $0xa4] sm:$0xf]
  %v73 = vld [vmem:[%s1 + $0xa8] sm:$0xf]
  %v74 = vld [vmem:[%s1 + $0xac] sm:$0xf]
  %v75 = vld [vmem:[%s1 + $0xb0] sm:$0xf]
  %v76 = vld [vmem:[%s1 + $0xb4] sm:$0xf]
  %v77 = vld [vmem:[%s1 + $0xb8] sm:$0xf]
  %v78 = vld [vmem:[%s1 + $0xbc] sm:$0xf]
  %v79 = vld [vmem:[%s1 + $0xc0] sm:$0xf]
  %v80 = vld [vmem:[%s1 + $0xc4] sm:$0xf]
  %v81 = vld [vmem:[%s1 + $0xc8] sm:$0xf]
  %v82 = vld [vmem:[%s1 + $0xcc] sm:$0xf]
  %v83 = vld [vmem:[%s1 + $0xd0] sm:$0xf]
  %v84 = vld [vmem:[%s1 + $0xd4] sm:$0xf]
  %v85 = vld [vmem:[%s1 + $0xd8] sm:$0xf]
  %v86 = vld [vmem:[%s1 + $0xdc] sm:$0xf]
  %v87 = vld [vmem:[%s1 + $0xe0] sm:$0xf]
  %v88 = vld [vmem:[%s1 + $0xe4] sm:$0xf]
  %v89 = vld [vmem:[%s1 + $0xe8] sm:$0xf]
  %v90 = vld [vmem:[%s1 + $0xec] sm:$0xf]
  %v91 = vld [vmem:[%s1 + $0xf0] sm:$0xf]
  %v92 = vld [vmem:[%s1 + $0xf4] sm:$0xf]
  %v93 = vld [vmem:[%s1 + $0xf8] sm:$0xf]
  %v94 = vld [vmem:[%s1 + $0xfc] sm:$0xf]
  %v95 = vld [vmem:[%s1 + $0x100] sm:$0xf]
  %v96 = vld [vmem:[%s1 + $0x104] sm:$0xf]
  %v97 = vld [vmem:[%s1 + $0x108] sm:$0xf]
  %v98 = vld [vmem:[%s1 + $0x10c] sm:$0xf]
  %v99 = vld [vmem:[%s1 + $0x110] sm:$0xf]
  %v100 = vld [vmem:[%s1 + $0x114] sm:$0xf]
  %v101 = vld [vmem:[%s1 + $0x118] sm:$0xf]
  %v102 = vld [vmem:[%s1 + $0x11c] sm:$0xf]
  %v103 = vld [vmem:[%s1 + $0x120] sm:$0xf]
  %v104 = vld [vmem:[%s1 + $0x124] sm:$0xf]
  %v105 = vld [vmem:[%s1 + $0x128] sm:$0xf]
  %v106 = vld [vmem:[%s1 + $0x12c] sm:$0xf]
  %v107 = vld [vmem:[%s1 + $0x130] sm:$0xf]
  %v108 = vld [vmem:[%s1 + $0x134] sm:$0xf]
  %v109 = vld [vmem:[%s1 + $0x138] sm:$0xf]
  %v110 = vld [vmem:[%s1 + $0x13c] sm:$0xf]
  %v111 = vld [vmem:[%s1 + $0x140] sm:$0xf]
  %v112 = vld [vmem:[%s1 + $0x144] sm:$0xf]
  %v113 = vld [vmem:[%s1 + $0x148] sm:$0xf]
  %v114 = vld [vmem:[%s1 + $0x14c] sm:$0xf]
  %v115 = vld [vmem:[%s1 + $0x150] sm:$0xf]
  %v116 = vld [vmem:[%s1 + $0x154] sm:$0xf]
  %v117 = vld [vmem:[%s1 + $0x158] sm:$0xf]
  %v118 = vld [vmem:[%s1 + $0x15c] sm:$0xf]
  %v119 = vld [vmem:[%s1 + $0x160] sm:$0xf]
  %v120 = vld [vmem:[%s1 + $0x164] sm:$0xf]
  %v121 = vld [vmem:[%s1 + $0x168] sm:$0xf]
  %v122 = vld [vmem:[%s1 + $0x16c] sm:$0xf]
  %v123 = vld [vmem:[%s1 + $0x170] sm:$0xf]
  %v124 = vld [vmem:[%s1 + $0x174] sm:$0xf]
  %v125 = vld [vmem:[%s1 + $0x178] sm:$0xf]
  %v126 = vld [vmem:[%s1 + $0x17c] sm:$0xf]
  %v127 = vld [vmem:[%s1 + $0x180] sm:$0xf]
  %v128 = vld [vmem:[%s1 + $0x184] sm:$0xf]
  %v129 = vld [vmem:[%s1 + $0x188] sm:$0xf]
  %v130 = vld [vmem:[%s1 + $0x18c] sm:$0xf]
  %v131 = vld [vmem:[%s1 + $0x190] sm:$0xf]
  %v132 = vld [vmem:[%s1 + $0x194] sm:$0xf]
  %v133 = vld [vmem:[%s1 + $0x198] sm:$0xf]
  %v134 = vld [vmem:[%s1 + $0x19c] sm:$0xf]
  %v135 = vld [vmem:[%s1 + $0x1a0] sm:$0xf]
  %v136 = vld [vmem:[%s1 + $0x1a4] sm:$0xf]
  %v137 = vld [vmem:[%s1 + $0x1a8] sm:$0xf]
  %v138 = vld [vmem:[%s1 + $0x1ac] sm:$0xf]
  %v139 = vld [vmem:[%s2] sm:$0x1]
  %v141 = vlaneseq
  %v142 = vshrl.u32 %v141, 7
  %v143 = vsub.s32 0, %v142
  %v144 = vrot.slane %v139, %v143
  %v162 = vunpack.c.l.b16 %v15
  %v163 = vunpack.c.h.b16 %v15
  %v164 = vunpack.c.l.b16 %v16
  %v165 = vunpack.c.h.b16 %v16
  %v166 = vunpack.c.l.b16 %v17
  %v167 = vunpack.c.h.b16 %v17
  %v168 = vunpack.c.l.b16 %v18
  %v169 = vunpack.c.l.b16 %v19
  %v170 = vunpack.c.h.b16 %v19
  %v171 = vunpack.c.l.b16 %v20
  %v172 = vunpack.c.h.b16 %v20
  %v173 = vunpack.c.l.b16 %v21
  %v174 = vunpack.c.h.b16 %v21
  %v175 = vunpack.c.l.b16 %v22
  %v176 = vunpack.c.l.b16 %v23
  %v177 = vunpack.c.h.b16 %v23
  %v178 = vunpack.c.l.b16 %v24
  %v179 = vunpack.c.h.b16 %v24
  %v180 = vunpack.c.l.b16 %v25
  %v181 = vunpack.c.h.b16 %v25
  %v182 = vunpack.c.l.b16 %v26
  %v183 = vunpack.c.l.b16 %v27
  %v184 = vunpack.c.h.b16 %v27
  %v185 = vunpack.c.l.b16 %v28
  %v186 = vunpack.c.h.b16 %v28
  %v187 = vunpack.c.l.b16 %v29
  %v188 = vunpack.c.h.b16 %v29
  %v189 = vunpack.c.l.b16 %v30
  %v190 = vpack.c.b16 %v169, %v162
  %v191 = vpack.c.b16 %v170, %v163
  %v192 = vpack.c.b16 %v171, %v164
  %v193 = vpack.c.b16 %v172, %v165
  %v194 = vpack.c.b16 %v173, %v166
  %v195 = vpack.c.b16 %v174, %v167
  %v196 = vpack.c.b16 %v175, %v168
  %v197 = vpack.c.b16 %v183, %v176
  %v198 = vpack.c.b16 %v184, %v177
  %v199 = vpack.c.b16 %v185, %v178
  %v200 = vpack.c.b16 %v186, %v179
  %v201 = vpack.c.b16 %v187, %v180
  %v202 = vpack.c.b16 %v188, %v181
  %v203 = vpack.c.b16 %v189, %v182
  %v324 = vunpack.c.l.b16 %v31
  %v325 = vunpack.c.l.b16 %v32
  %v326 = vunpack.c.l.b16 %v33
  %v327 = vunpack.c.l.b16 %v34
  %v328 = vunpack.c.l.b16 %v35
  %v329 = vunpack.c.l.b16 %v36
  %v330 = vunpack.c.l.b16 %v37
  %v331 = vunpack.c.l.b16 %v38
  %v332 = vunpack.c.l.b16 %v39
  %v333 = vunpack.c.l.b16 %v40
  %v334 = vunpack.c.l.b16 %v41
  %v335 = vunpack.c.l.b16 %v42
  %v336 = vunpack.c.l.b16 %v43
  %v337 = vunpack.c.l.b16 %v44
  %v338 = vunpack.c.l.b16 %v45
  %v339 = vunpack.c.l.b16 %v46
  %v340 = vunpack.c.l.b16 %v47
  %v341 = vunpack.c.l.b16 %v48
  %v342 = vunpack.c.l.b16 %v49
  %v343 = vunpack.c.l.b16 %v50
  %v344 = vunpack.c.l.b16 %v51
  %v345 = vunpack.c.l.b16 %v52
  %v346 = vunpack.c.l.b16 %v53
  %v347 = vunpack.c.l.b16 %v54
  %v348 = vunpack.c.l.b16 %v55
  %v349 = vunpack.c.l.b16 %v56
  %v350 = vunpack.c.l.b16 %v57
  %v351 = vunpack.c.l.b16 %v58
  %v352 = vunpack.c.l.b16 %v59
  %v353 = vunpack.c.l.b16 %v60
  %v354 = vunpack.c.l.b16 %v61
  %v355 = vunpack.c.l.b16 %v62
  %v356 = vunpack.c.l.b16 %v63
  %v357 = vunpack.c.l.b16 %v64
  %v358 = vunpack.c.l.b16 %v65
  %v359 = vunpack.c.l.b16 %v66
  %v360 = vunpack.c.l.b16 %v67
  %v361 = vunpack.c.l.b16 %v68
  %v362 = vunpack.c.l.b16 %v69
  %v363 = vunpack.c.l.b16 %v70
  %v364 = vunpack.c.l.b16 %v71
  %v365 = vunpack.c.l.b16 %v72
  %v366 = vunpack.c.l.b16 %v73
  %v367 = vunpack.c.l.b16 %v74
  %v368 = vunpack.c.l.b16 %v75
  %v369 = vunpack.c.l.b16 %v76
  %v370 = vunpack.c.l.b16 %v77
  %v371 = vunpack.c.l.b16 %v78
  %v372 = vunpack.c.l.b16 %v79
  %v373 = vunpack.c.l.b16 %v80
  %v374 = vunpack.c.l.b16 %v81
  %v375 = vunpack.c.l.b16 %v82
  %v376 = vunpack.c.l.b16 %v83
  %v377 = vunpack.c.l.b16 %v84
  %v378 = vunpack.c.l.b16 %v85
  %v379 = vunpack.c.l.b16 %v86
  %v380 = vunpack.c.l.b16 %v87
  %v381 = vunpack.c.l.b16 %v88
  %v382 = vunpack.c.l.b16 %v89
  %v383 = vunpack.c.l.b16 %v90
  %v384 = vunpack.c.l.b16 %v91
  %v385 = vunpack.c.l.b16 %v92
  %v386 = vunpack.c.l.b16 %v93
  %v387 = vunpack.c.l.b16 %v94
  %v388 = vunpack.c.l.b16 %v95
  %v389 = vunpack.c.l.b16 %v96
  %v390 = vunpack.c.l.b16 %v97
  %v391 = vunpack.c.l.b16 %v98
  %v392 = vunpack.c.l.b16 %v99
  %v393 = vunpack.c.l.b16 %v100
  %v394 = vunpack.c.l.b16 %v101
  %v395 = vunpack.c.l.b16 %v102
  %v396 = vunpack.c.l.b16 %v103
  %v397 = vunpack.c.l.b16 %v104
  %v398 = vunpack.c.l.b16 %v105
  %v399 = vunpack.c.l.b16 %v106
  %v400 = vunpack.c.l.b16 %v107
  %v401 = vunpack.c.l.b16 %v108
  %v402 = vunpack.c.l.b16 %v109
  %v403 = vunpack.c.l.b16 %v110
  %v404 = vunpack.c.l.b16 %v111
  %v405 = vunpack.c.l.b16 %v112
  %v406 = vunpack.c.l.b16 %v113
  %v407 = vunpack.c.l.b16 %v114
  %v408 = vunpack.c.l.b16 %v115
  %v409 = vunpack.c.l.b16 %v116
  %v410 = vunpack.c.l.b16 %v117
  %v411 = vunpack.c.l.b16 %v118
  %v412 = vunpack.c.l.b16 %v119
  %v413 = vunpack.c.l.b16 %v120
  %v414 = vunpack.c.l.b16 %v121
  %v415 = vunpack.c.l.b16 %v122
  %v416 = vunpack.c.l.b16 %v123
  %v417 = vunpack.c.l.b16 %v124
  %v418 = vunpack.c.l.b16 %v125
  %v419 = vunpack.c.l.b16 %v126
  %v420 = vunpack.c.l.b16 %v127
  %v421 = vunpack.c.l.b16 %v128
  %v422 = vunpack.c.l.b16 %v129
  %v423 = vunpack.c.l.b16 %v130
  %v424 = vunpack.c.l.b16 %v131
  %v425 = vunpack.c.l.b16 %v132
  %v426 = vunpack.c.l.b16 %v133
  %v427 = vunpack.c.l.b16 %v134
  %v428 = vunpack.c.l.b16 %v135
  %v429 = vunpack.c.l.b16 %v136
  %v430 = vunpack.c.l.b16 %v137
  %v431 = vunpack.c.l.b16 %v138
  %v432 = vpack.c.b16 %v325, %v324
  %v433 = vpack.c.b16 %v327, %v326
  %v434 = vpack.c.b16 %v329, %v328
  %v435 = vpack.c.b16 %v331, %v330
  %v436 = vpack.c.b16 %v333, %v332
  %v437 = vpack.c.b16 %v335, %v334
  %v438 = vpack.c.b16 %v337, %v336
  %v439 = vpack.c.b16 %v339, %v338
  %v440 = vpack.c.b16 %v341, %v340
  %v441 = vpack.c.b16 %v343, %v342
  %v442 = vpack.c.b16 %v345, %v344
  %v443 = vpack.c.b16 %v347, %v346
  %v444 = vpack.c.b16 %v349, %v348
  %v445 = vpack.c.b16 %v351, %v350
  %v446 = vpack.c.b16 %v353, %v352
  %v447 = vpack.c.b16 %v355, %v354
  %v448 = vpack.c.b16 %v357, %v356
  %v449 = vpack.c.b16 %v359, %v358
  %v450 = vpack.c.b16 %v361, %v360
  %v451 = vpack.c.b16 %v363, %v362
  %v452 = vpack.c.b16 %v365, %v364
  %v453 = vpack.c.b16 %v367, %v366
  %v454 = vpack.c.b16 %v369, %v368
  %v455 = vpack.c.b16 %v371, %v370
  %v456 = vpack.c.b16 %v373, %v372
  %v457 = vpack.c.b16 %v375, %v374
  %v458 = vpack.c.b16 %v377, %v376
  %v459 = vpack.c.b16 %v379, %v378
  %v460 = vpack.c.b16 %v381, %v380
  %v461 = vpack.c.b16 %v383, %v382
  %v462 = vpack.c.b16 %v385, %v384
  %v463 = vpack.c.b16 %v387, %v386
  %v464 = vpack.c.b16 %v389, %v388
  %v465 = vpack.c.b16 %v391, %v390
  %v466 = vpack.c.b16 %v393, %v392
  %v467 = vpack.c.b16 %v395, %v394
  %v468 = vpack.c.b16 %v397, %v396
  %v469 = vpack.c.b16 %v399, %v398
  %v470 = vpack.c.b16 %v401, %v400
  %v471 = vpack.c.b16 %v403, %v402
  %v472 = vpack.c.b16 %v405, %v404
  %v473 = vpack.c.b16 %v407, %v406
  %v474 = vpack.c.b16 %v409, %v408
  %v475 = vpack.c.b16 %v411, %v410
  %v476 = vpack.c.b16 %v413, %v412
  %v477 = vpack.c.b16 %v415, %v414
  %v478 = vpack.c.b16 %v417, %v416
  %v479 = vpack.c.b16 %v419, %v418
  %v480 = vpack.c.b16 %v421, %v420
  %v481 = vpack.c.b16 %v423, %v422
  %v482 = vpack.c.b16 %v425, %v424
  %v483 = vpack.c.b16 %v427, %v426
  %v484 = vpack.c.b16 %v429, %v428
  %v485 = vpack.c.b16 %v431, %v430
  %vm540 = vcmask 785408
  %v542 = vsel %vm540, %v196, 0
  %v545 = vsel %vm540, %v203, 0
  %547 = vmatprep.subr.bf16.mxu0 0
  %548 = vmatpush1.bf16.msra.mxu0 %v439
  %549 = vmatprep.subr.bf16.mxu0 0
  %550 = vmatpush1.bf16.msra.mxu0 %v438
  %551 = vmatprep.subr.bf16.mxu0 0
  %552 = vmatpush1.bf16.msra.mxu0 %v437
  %553 = vmatprep.subr.bf16.mxu0 0
  %554 = vmatpush1.bf16.msra.mxu0 %v436
  %555 = vmatprep.subr.bf16.mxu0 0
  %556 = vmatpush1.bf16.msra.mxu0 %v435
  %557 = vmatprep.subr.bf16.mxu0 0
  %558 = vmatpush1.bf16.msra.mxu0 %v434
  %559 = vmatprep.subr.bf16.mxu0 0
  %560 = vmatpush1.bf16.msra.mxu0 %v433
  %561 = vmatprep.subr.bf16.mxu0 0
  %562 = vmatpush1.bf16.msra.mxu0 %v432
  %563 = vmatprep.subr.bf16.mxu0 0
  %564 = vmatpush2.bf16.msra.mxu0 %v447
  %565 = vmatprep.subr.bf16.mxu0 0
  %566 = vmatpush2.bf16.msra.mxu0 %v446
  %567 = vmatprep.subr.bf16.mxu0 0
  %568 = vmatpush2.bf16.msra.mxu0 %v445
  %569 = vmatprep.subr.bf16.mxu0 0
  %570 = vmatpush2.bf16.msra.mxu0 %v444
  %571 = vmatprep.subr.bf16.mxu0 0
  %572 = vmatpush2.bf16.msra.mxu0 %v443
  %573 = vmatprep.subr.bf16.mxu0 0
  %574 = vmatpush2.bf16.msra.mxu0 %v442
  %575 = vmatprep.subr.bf16.mxu0 0
  %576 = vmatpush2.bf16.msra.mxu0 %v441
  %577 = vmatprep.subr.bf16.mxu0 0
  %578 = vmatpush2.bf16.msra.mxu0 %v440
  %579 = vmatprep.mubr.bf16.mxu0 %v191
  %580 = vmatmul.mubr.bf16.gmra.mxu0 %v190
  %v581 = vpop.f32.mrf.mxu0
  %v582 = vadd.f32 %v144, %v581
  %v583 = vpop.f32.mrf.mxu0
  %v584 = vpop.f32.mrf.mxu0
  %v585 = vadd.f32 %v144, %v584
  %v586 = vpop.f32.mrf.mxu0
  %587 = vmatprep.mubr.bf16.mxu0 %v198
  %588 = vmatmul.mubr.bf16.gmra.mxu0 %v197
  %v589 = vpop.f32.mrf.mxu0
  %v590 = vadd.f32 %v144, %v589
  %v591 = vpop.f32.mrf.mxu0
  %v592 = vpop.f32.mrf.mxu0
  %v593 = vadd.f32 %v144, %v592
  %v594 = vpop.f32.mrf.mxu0
  %595 = vdwg.mxu0
  %596 = vmatprep.subr.bf16.mxu0 0
  %597 = vmatpush1.bf16.msra.mxu0 %v455
  %598 = vmatprep.subr.bf16.mxu0 0
  %599 = vmatpush1.bf16.msra.mxu0 %v454
  %600 = vmatprep.subr.bf16.mxu0 0
  %601 = vmatpush1.bf16.msra.mxu0 %v453
  %602 = vmatprep.subr.bf16.mxu0 0
  %603 = vmatpush1.bf16.msra.mxu0 %v452
  %604 = vmatprep.subr.bf16.mxu0 0
  %605 = vmatpush1.bf16.msra.mxu0 %v451
  %606 = vmatprep.subr.bf16.mxu0 0
  %607 = vmatpush1.bf16.msra.mxu0 %v450
  %608 = vmatprep.subr.bf16.mxu0 0
  %609 = vmatpush1.bf16.msra.mxu0 %v449
  %610 = vmatprep.subr.bf16.mxu0 0
  %611 = vmatpush1.bf16.msra.mxu0 %v448
  %612 = vmatprep.subr.bf16.mxu0 0
  %613 = vmatpush2.bf16.msra.mxu0 %v463
  %614 = vmatprep.subr.bf16.mxu0 0
  %615 = vmatpush2.bf16.msra.mxu0 %v462
  %616 = vmatprep.subr.bf16.mxu0 0
  %617 = vmatpush2.bf16.msra.mxu0 %v461
  %618 = vmatprep.subr.bf16.mxu0 0
  %619 = vmatpush2.bf16.msra.mxu0 %v460
  %620 = vmatprep.subr.bf16.mxu0 0
  %621 = vmatpush2.bf16.msra.mxu0 %v459
  %622 = vmatprep.subr.bf16.mxu0 0
  %623 = vmatpush2.bf16.msra.mxu0 %v458
  %624 = vmatprep.subr.bf16.mxu0 0
  %625 = vmatpush2.bf16.msra.mxu0 %v457
  %626 = vmatprep.subr.bf16.mxu0 0
  %627 = vmatpush2.bf16.msra.mxu0 %v456
  %628 = vmatprep.mubr.bf16.mxu0 %v193
  %629 = vmatmul.mubr.bf16.gmra.mxu0 %v192
  %v630 = vpop.f32.mrf.mxu0
  %v631 = vadd.f32 %v582, %v630
  %v632 = vpop.f32.mrf.mxu0
  %v633 = vpop.f32.mrf.mxu0
  %v634 = vadd.f32 %v585, %v633
  %v635 = vpop.f32.mrf.mxu0
  %636 = vmatprep.mubr.bf16.mxu0 %v200
  %637 = vmatmul.mubr.bf16.gmra.mxu0 %v199
  %v638 = vpop.f32.mrf.mxu0
  %v639 = vadd.f32 %v590, %v638
  %v640 = vpop.f32.mrf.mxu0
  %v641 = vpop.f32.mrf.mxu0
  %v642 = vadd.f32 %v593, %v641
  %v643 = vpop.f32.mrf.mxu0
  %644 = vdwg.mxu0
  %645 = vmatprep.subr.bf16.mxu0 0
  %646 = vmatpush1.bf16.msra.mxu0 %v471
  %647 = vmatprep.subr.bf16.mxu0 0
  %648 = vmatpush1.bf16.msra.mxu0 %v470
  %649 = vmatprep.subr.bf16.mxu0 0
  %650 = vmatpush1.bf16.msra.mxu0 %v469
  %651 = vmatprep.subr.bf16.mxu0 0
  %652 = vmatpush1.bf16.msra.mxu0 %v468
  %653 = vmatprep.subr.bf16.mxu0 0
  %654 = vmatpush1.bf16.msra.mxu0 %v467
  %655 = vmatprep.subr.bf16.mxu0 0
  %656 = vmatpush1.bf16.msra.mxu0 %v466
  %657 = vmatprep.subr.bf16.mxu0 0
  %658 = vmatpush1.bf16.msra.mxu0 %v465
  %659 = vmatprep.subr.bf16.mxu0 0
  %660 = vmatpush1.bf16.msra.mxu0 %v464
  %661 = vmatprep.subr.bf16.mxu0 0
  %662 = vmatpush2.bf16.msra.mxu0 %v479
  %663 = vmatprep.subr.bf16.mxu0 0
  %664 = vmatpush2.bf16.msra.mxu0 %v478
  %665 = vmatprep.subr.bf16.mxu0 0
  %666 = vmatpush2.bf16.msra.mxu0 %v477
  %667 = vmatprep.subr.bf16.mxu0 0
  %668 = vmatpush2.bf16.msra.mxu0 %v476
  %669 = vmatprep.subr.bf16.mxu0 0
  %670 = vmatpush2.bf16.msra.mxu0 %v475
  %671 = vmatprep.subr.bf16.mxu0 0
  %672 = vmatpush2.bf16.msra.mxu0 %v474
  %673 = vmatprep.subr.bf16.mxu0 0
  %674 = vmatpush2.bf16.msra.mxu0 %v473
  %675 = vmatprep.subr.bf16.mxu0 0
  %676 = vmatpush2.bf16.msra.mxu0 %v472
  %677 = vmatprep.mubr.bf16.mxu0 %v195
  %678 = vmatmul.mubr.bf16.gmra.mxu0 %v194
  %v679 = vpop.f32.mrf.mxu0
  %v680 = vadd.f32 %v631, %v679
  %v681 = vpop.f32.mrf.mxu0
  %v682 = vpop.f32.mrf.mxu0
  %v683 = vadd.f32 %v634, %v682
  %v684 = vpop.f32.mrf.mxu0
  %685 = vmatprep.mubr.bf16.mxu0 %v202
  %686 = vmatmul.mubr.bf16.gmra.mxu0 %v201
  %v687 = vpop.f32.mrf.mxu0
  %v688 = vadd.f32 %v639, %v687
  %v689 = vpop.f32.mrf.mxu0
  %v690 = vpop.f32.mrf.mxu0
  %v691 = vadd.f32 %v642, %v690
  %v692 = vpop.f32.mrf.mxu0
  %693 = vdwg.mxu0
  %694 = vmatprep.subr.bf16.mxu0 0
  %695 = vmatpush1.bf16.msra.mxu0 0
  %696 = vmatprep.subr.bf16.mxu0 0
  %697 = vmatpush1.bf16.msra.mxu0 0
  %698 = vmatprep.subr.bf16.mxu0 0
  %699 = vmatpush1.bf16.msra.mxu0 %v485
  %700 = vmatprep.subr.bf16.mxu0 0
  %701 = vmatpush1.bf16.msra.mxu0 %v484
  %702 = vmatprep.subr.bf16.mxu0 0
  %703 = vmatpush1.bf16.msra.mxu0 %v483
  %704 = vmatprep.subr.bf16.mxu0 0
  %705 = vmatpush1.bf16.msra.mxu0 %v482
  %706 = vmatprep.subr.bf16.mxu0 0
  %707 = vmatpush1.bf16.msra.mxu0 %v481
  %708 = vmatprep.subr.bf16.mxu0 0
  %709 = vmatpush1.bf16.msra.mxu0 %v480
  %710 = vmatprep.subr.bf16.mxu0 0
  %711 = vmatpush2.bf16.msra.mxu0 0
  %712 = vmatprep.subr.bf16.mxu0 0
  %713 = vmatpush2.bf16.msra.mxu0 0
  %714 = vmatprep.subr.bf16.mxu0 0
  %715 = vmatpush2.bf16.msra.mxu0 0
  %716 = vmatprep.subr.bf16.mxu0 0
  %717 = vmatpush2.bf16.msra.mxu0 0
  %718 = vmatprep.subr.bf16.mxu0 0
  %719 = vmatpush2.bf16.msra.mxu0 0
  %720 = vmatprep.subr.bf16.mxu0 0
  %721 = vmatpush2.bf16.msra.mxu0 0
  %722 = vmatprep.subr.bf16.mxu0 0
  %723 = vmatpush2.bf16.msra.mxu0 0
  %724 = vmatprep.subr.bf16.mxu0 0
  %725 = vmatpush2.bf16.msra.mxu0 0
  %726 = vmatprep.mubr.bf16.mxu0 0
  %727 = vmatmul.mubr.bf16.gmra.mxu0 %v542
  %v728 = vpop.f32.mrf.mxu0
  %v729 = vadd.f32 %v680, %v728
  %v730 = vpop.f32.mrf.mxu0
  %v731 = vpop.f32.mrf.mxu0
  %v732 = vadd.f32 %v683, %v731
  %v733 = vpop.f32.mrf.mxu0
  %734 = vmatprep.mubr.bf16.mxu0 0
  %735 = vmatmul.mubr.bf16.gmra.mxu0 %v545
  %v736 = vpop.f32.mrf.mxu0
  %v737 = vadd.f32 %v688, %v736
  %v738 = vpop.f32.mrf.mxu0
  %v739 = vpop.f32.mrf.mxu0
  %v740 = vadd.f32 %v691, %v739
  %v741 = vpop.f32.mrf.mxu0
  %742 = vdwg.mxu0
  %v743 = vsub.f32 0.0, %v729
  %v744 = vsub.f32 0.0, %v732
  %v745 = vsub.f32 0.0, %v737
  %v746 = vsub.f32 0.0, %v740
  %v747 = vmul.f32 %v743, 1.442695
  %v748 = vpow.pop %v747
  %v749 = vmul.f32 %v744, 1.442695
  %v750 = vpow.pop %v749
  %v751 = vmul.f32 %v745, 1.442695
  %v752 = vpow.pop %v751
  %v753 = vmul.f32 %v746, 1.442695
  %v754 = vpow.pop %v753
  %v755 = vadd.f32 %v748, 1.0
  %v756 = vadd.f32 %v750, 1.0
  %v757 = vadd.f32 %v752, 1.0
  %v758 = vadd.f32 %v754, 1.0
  %v759 = vrcp.pop %v755
  %v760 = vrcp.pop %v756
  %v761 = vrcp.pop %v757
  %v762 = vrcp.pop %v758
  %v763 = vmul.f32 %v729, %v759
  %v764 = vmul.f32 %v732, %v760
  %v765 = vmul.f32 %v737, %v761
  %v766 = vmul.f32 %v740, %v762
  %vm767 = vcmask 130048
  %768 = vst.msk [vmem:[%s3] sm:$0xff] %vm767, %v763
  %769 = vst.msk [vmem:[%s3 + $0x8] sm:$0xff] %vm767, %v764
  %770 = vst.msk [vmem:[%s3 + $0x10] sm:$0xff] %vm767, %v765
  %771 = vst.msk [vmem:[%s3 + $0x18] sm:$0xff] %vm767, %v766
  // Predicated region
  $region14: #{pose_guider_forward.25} parent=0 // pred_check
    _
  $region15: #{pose_guider_forward.25} parent=0 // pred_check_branch
    %773 = sbr.rel (0) target = $region17
  $region16: #{pose_guider_forward.25} parent=0 // pred_region
    _
  $region17: #{pose_guider_forward.25} parent=0 // pred_fallthru
    _
  // Predicated region
  $region18: #{pose_guider_forward.25} parent=0 // pred_check
    _
  $region19: #{pose_guider_forward.25} parent=0 // pred_check_branch
    %775 = sbr.rel (0) target = $region21
  $region20: #{pose_guider_forward.25} parent=0 // pred_region
    _
  $region21: #{pose_guider_forward.25} parent=0 // pred_fallthru
    _

// kernel: pose_guider_forward.26
$region0: #{pose_guider_forward.26}
  #allocation0 [shape = 'u32[]', space=smem, size = 0x4, offset = 0x4, fixed_abs, tag = 'smem constant byte address 0x4 - core index']
  #allocation1 [shape = 'u32[144,128]{1,0:T(1,128)}', space=vmem, size = 0x12000, scoped, tag = 'internal scratch']
  %s0 = inlined_call_operand.vmem [shape: bf16[32,784], index: 0, kind: input, shape index: {}]
  %s1 = inlined_call_operand.vmem [shape: bf16[784,3], index: 1, kind: input, shape index: {}]
  %s2 = inlined_call_operand.vmem [shape: f32[1,3], index: 2, kind: input, shape index: {}]
  %s3 = inlined_call_operand.vmem [shape: f32[32,3], index: 3, kind: output, shape index: {}]
  %s4 = sld [smem:[#allocation0]]
  $region22: #{pose_guider_forward.26} parent=0
    _
  %s6 = ssub.s32 1, %s4
  %s7 = scalar_select 0, %s6, %s4
  // Predicated region
  $region2: #{pose_guider_forward.26} parent=0 // pred_check
    _
  $region3: #{pose_guider_forward.26} parent=0 // pred_check_branch
    %9 = sbr.rel (0) target = $region5
  $region4: #{pose_guider_forward.26} parent=0 // pred_region
    _
  $region5: #{pose_guider_forward.26} parent=0 // pred_fallthru
    _
  // Predicated region
  $region6: #{pose_guider_forward.26} parent=0 // pred_check
    _
  $region7: #{pose_guider_forward.26} parent=0 // pred_check_branch
    %11 = sbr.rel (0) target = $region9
  $region8: #{pose_guider_forward.26} parent=0 // pred_region
    _
  $region9: #{pose_guider_forward.26} parent=0 // pred_fallthru
    _
  // Predicated region
  $region10: #{pose_guider_forward.26} parent=0 // pred_check
    _
  $region11: #{pose_guider_forward.26} parent=0 // pred_check_branch
    %13 = sbr.rel (0) target = $region13
  $region12: #{pose_guider_forward.26} parent=0 // pred_region
    _
  $region13: #{pose_guider_forward.26} parent=0 // pred_fallthru
    _
  %v15 = vld [vmem:[%s0] sm:$0xff]
  %v16 = vld [vmem:[%s0 + $0x8] sm:$0xff]
  %v17 = vld [vmem:[%s0 + $0x10] sm:$0xff]
  %v18 = vld [vmem:[%s0 + $0x18] sm:$0xf]
  %v19 = vld [vmem:[%s0 + $0x1c] sm:$0xff]
  %v20 = vld [vmem:[%s0 + $0x24] sm:$0xff]
  %v21 = vld [vmem:[%s0 + $0x2c] sm:$0xff]
  %v22 = vld [vmem:[%s0 + $0x34] sm:$0xf]
  %v23 = vld [vmem:[%s0 + $0x38] sm:$0xff]
  %v24 = vld [vmem:[%s0 + $0x40] sm:$0xff]
  %v25 = vld [vmem:[%s0 + $0x48] sm:$0xff]
  %v26 = vld [vmem:[%s0 + $0x50] sm:$0xf]
  %v27 = vld [vmem:[%s0 + $0x54] sm:$0xff]
  %v28 = vld [vmem:[%s0 + $0x5c] sm:$0xff]
  %v29 = vld [vmem:[%s0 + $0x64] sm:$0xff]
  %v30 = vld [vmem:[%s0 + $0x6c] sm:$0xf]
  %v31 = vld [vmem:[%s1] sm:$0xf]
  %v32 = vld [vmem:[%s1 + $0x4] sm:$0xf]
  %v33 = vld [vmem:[%s1 + $0x8] sm:$0xf]
  %v34 = vld [vmem:[%s1 + $0xc] sm:$0xf]
  %v35 = vld [vmem:[%s1 + $0x10] sm:$0xf]
  %v36 = vld [vmem:[%s1 + $0x14] sm:$0xf]
  %v37 = vld [vmem:[%s1 + $0x18] sm:$0xf]
  %v38 = vld [vmem:[%s1 + $0x1c] sm:$0xf]
  %v39 = vld [vmem:[%s1 + $0x20] sm:$0xf]
  %v40 = vld [vmem:[%s1 + $0x24] sm:$0xf]
  %v41 = vld [vmem:[%s1 + $0x28] sm:$0xf]
  %v42 = vld [vmem:[%s1 + $0x2c] sm:$0xf]
  %v43 = vld [vmem:[%s1 + $0x30] sm:$0xf]
  %v44 = vld [vmem:[%s1 + $0x34] sm:$0xf]
  %v45 = vld [vmem:[%s1 + $0x38] sm:$0xf]
  %v46 = vld [vmem:[%s1 + $0x3c] sm:$0xf]
  %v47 = vld [vmem:[%s1 + $0x40] sm:$0xf]
  %v48 = vld [vmem:[%s1 + $0x44] sm:$0xf]
  %v49 = vld [vmem:[%s1 + $0x48] sm:$0xf]
  %v50 = vld [vmem:[%s1 + $0x4c] sm:$0xf]
  %v51 = vld [vmem:[%s1 + $0x50] sm:$0xf]
  %v52 = vld [vmem:[%s1 + $0x54] sm:$0xf]
  %v53 = vld [vmem:[%s1 + $0x58] sm:$0xf]
  %v54 = vld [vmem:[%s1 + $0x5c] sm:$0xf]
  %v55 = vld [vmem:[%s1 + $0x60] sm:$0xf]
  %v56 = vld [vmem:[%s1 + $0x64] sm:$0xf]
  %v57 = vld [vmem:[%s1 + $0x68] sm:$0xf]
  %v58 = vld [vmem:[%s1 + $0x6c] sm:$0xf]
  %v59 = vld [vmem:[%s1 + $0x70] sm:$0xf]
  %v60 = vld [vmem:[%s1 + $0x74] sm:$0xf]
  %v61 = vld [vmem:[%s1 + $0x78] sm:$0xf]
  %v62 = vld [vmem:[%s1 + $0x7c] sm:$0xf]
  %v63 = vld [vmem:[%s1 + $0x80] sm:$0xf]
  %v64 = vld [vmem:[%s1 + $0x84] sm:$0xf]
  %v65 = vld [vmem:[%s1 + $0x88] sm:$0xf]
  %v66 = vld [vmem:[%s1 + $0x8c] sm:$0xf]
  %v67 = vld [vmem:[%s1 + $0x90] sm:$0xf]
  %v68 = vld [vmem:[%s1 + $0x94] sm:$0xf]
  %v69 = vld [vmem:[%s1 + $0x98] sm:$0xf]
  %v70 = vld [vmem:[%s1 + $0x9c] sm:$0xf]
  %v71 = vld [vmem:[%s1 + $0xa0] sm:$0xf]
  %v72 = vld [vmem:[%s1 + $0xa4] sm:$0xf]
  %v73 = vld [vmem:[%s1 + $0xa8] sm:$0xf]
  %v74 = vld [vmem:[%s1 + $0xac] sm:$0xf]
  %v75 = vld [vmem:[%s1 + $0xb0] sm:$0xf]
  %v76 = vld [vmem:[%s1 + $0xb4] sm:$0xf]
  %v77 = vld [vmem:[%s1 + $0xb8] sm:$0xf]
  %v78 = vld [vmem:[%s1 + $0xbc] sm:$0xf]
  %v79 = vld [vmem:[%s1 + $0xc0] sm:$0xf]
  %v80 = vld [vmem:[%s1 + $0xc4] sm:$0xf]
  %v81 = vld [vmem:[%s1 + $0xc8] sm:$0xf]
  %v82 = vld [vmem:[%s1 + $0xcc] sm:$0xf]
  %v83 = vld [vmem:[%s1 + $0xd0] sm:$0xf]
  %v84 = vld [vmem:[%s1 + $0xd4] sm:$0xf]
  %v85 = vld [vmem:[%s1 + $0xd8] sm:$0xf]
  %v86 = vld [vmem:[%s1 + $0xdc] sm:$0xf]
  %v87 = vld [vmem:[%s1 + $0xe0] sm:$0xf]
  %v88 = vld [vmem:[%s1 + $0xe4] sm:$0xf]
  %v89 = vld [vmem:[%s1 + $0xe8] sm:$0xf]
  %v90 = vld [vmem:[%s1 + $0xec] sm:$0xf]
  %v91 = vld [vmem:[%s1 + $0xf0] sm:$0xf]
  %v92 = vld [vmem:[%s1 + $0xf4] sm:$0xf]
  %v93 = vld [vmem:[%s1 + $0xf8] sm:$0xf]
  %v94 = vld [vmem:[%s1 + $0xfc] sm:$0xf]
  %v95 = vld [vmem:[%s1 + $0x100] sm:$0xf]
  %v96 = vld [vmem:[%s1 + $0x104] sm:$0xf]
  %v97 = vld [vmem:[%s1 + $0x108] sm:$0xf]
  %v98 = vld [vmem:[%s1 + $0x10c] sm:$0xf]
  %v99 = vld [vmem:[%s1 + $0x110] sm:$0xf]
  %v100 = vld [vmem:[%s1 + $0x114] sm:$0xf]
  %v101 = vld [vmem:[%s1 + $0x118] sm:$0xf]
  %v102 = vld [vmem:[%s1 + $0x11c] sm:$0xf]
  %v103 = vld [vmem:[%s1 + $0x120] sm:$0xf]
  %v104 = vld [vmem:[%s1 + $0x124] sm:$0xf]
  %v105 = vld [vmem:[%s1 + $0x128] sm:$0xf]
  %v106 = vld [vmem:[%s1 + $0x12c] sm:$0xf]
  %v107 = vld [vmem:[%s1 + $0x130] sm:$0xf]
  %v108 = vld [vmem:[%s1 + $0x134] sm:$0xf]
  %v109 = vld [vmem:[%s1 + $0x138] sm:$0xf]
  %v110 = vld [vmem:[%s1 + $0x13c] sm:$0xf]
  %v111 = vld [vmem:[%s1 + $0x140] sm:$0xf]
  %v112 = vld [vmem:[%s1 + $0x144] sm:$0xf]
  %v113 = vld [vmem:[%s1 + $0x148] sm:$0xf]
  %v114 = vld [vmem:[%s1 + $0x14c] sm:$0xf]
  %v115 = vld [vmem:[%s1 + $0x150] sm:$0xf]
  %v116 = vld [vmem:[%s1 + $0x154] sm:$0xf]
  %v117 = vld [vmem:[%s1 + $0x158] sm:$0xf]
  %v118 = vld [vmem:[%s1 + $0x15c] sm:$0xf]
  %v119 = vld [vmem:[%s1 + $0x160] sm:$0xf]
  %v120 = vld [vmem:[%s1 + $0x164] sm:$0xf]
  %v121 = vld [vmem:[%s1 + $0x168] sm:$0xf]
  %v122 = vld [vmem:[%s1 + $0x16c] sm:$0xf]
  %v123 = vld [vmem:[%s1 + $0x170] sm:$0xf]
  %v124 = vld [vmem:[%s1 + $0x174] sm:$0xf]
  %v125 = vld [vmem:[%s1 + $0x178] sm:$0xf]
  %v126 = vld [vmem:[%s1 + $0x17c] sm:$0xf]
  %v127 = vld [vmem:[%s1 + $0x180] sm:$0xf]
  %v128 = vld [vmem:[%s1 + $0x184] sm:$0xf]
  %v129 = vld [vmem:[%s2] sm:$0x1]
  %v131 = vlaneseq
  %v132 = vshrl.u32 %v131, 7
  %v133 = vsub.s32 0, %v132
  %v134 = vrot.slane %v129, %v133
  %v152 = vunpack.c.l.b16 %v15
  %v153 = vunpack.c.h.b16 %v15
  %v154 = vunpack.c.l.b16 %v16
  %v155 = vunpack.c.h.b16 %v16
  %v156 = vunpack.c.l.b16 %v17
  %v157 = vunpack.c.h.b16 %v17
  %v158 = vunpack.c.l.b16 %v18
  %v159 = vunpack.c.l.b16 %v19
  %v160 = vunpack.c.h.b16 %v19
  %v161 = vunpack.c.l.b16 %v20
  %v162 = vunpack.c.h.b16 %v20
  %v163 = vunpack.c.l.b16 %v21
  %v164 = vunpack.c.h.b16 %v21
  %v165 = vunpack.c.l.b16 %v22
  %v166 = vunpack.c.l.b16 %v23
  %v167 = vunpack.c.h.b16 %v23
  %v168 = vunpack.c.l.b16 %v24
  %v169 = vunpack.c.h.b16 %v24
  %v170 = vunpack.c.l.b16 %v25
  %v171 = vunpack.c.h.b16 %v25
  %v172 = vunpack.c.l.b16 %v26
  %v173 = vunpack.c.l.b16 %v27
  %v174 = vunpack.c.h.b16 %v27
  %v175 = vunpack.c.l.b16 %v28
  %v176 = vunpack.c.h.b16 %v28
  %v177 = vunpack.c.l.b16 %v29
  %v178 = vunpack.c.h.b16 %v29
  %v179 = vunpack.c.l.b16 %v30
  %v180 = vpack.c.b16 %v159, %v152
  %v181 = vpack.c.b16 %v160, %v153
  %v182 = vpack.c.b16 %v161, %v154
  %v183 = vpack.c.b16 %v162, %v155
  %v184 = vpack.c.b16 %v163, %v156
  %v185 = vpack.c.b16 %v164, %v157
  %v186 = vpack.c.b16 %v165, %v158
  %v187 = vpack.c.b16 %v173, %v166
  %v188 = vpack.c.b16 %v174, %v167
  %v189 = vpack.c.b16 %v175, %v168
  %v190 = vpack.c.b16 %v176, %v169
  %v191 = vpack.c.b16 %v177, %v170
  %v192 = vpack.c.b16 %v178, %v171
  %v193 = vpack.c.b16 %v179, %v172
  %v304 = vunpack.c.l.b16 %v31
  %v305 = vunpack.c.l.b16 %v32
  %v306 = vunpack.c.l.b16 %v33
  %v307 = vunpack.c.l.b16 %v34
  %v308 = vunpack.c.l.b16 %v35
  %v309 = vunpack.c.l.b16 %v36
  %v310 = vunpack.c.l.b16 %v37
  %v311 = vunpack.c.l.b16 %v38
  %v312 = vunpack.c.l.b16 %v39
  %v313 = vunpack.c.l.b16 %v40
  %v314 = vunpack.c.l.b16 %v41
  %v315 = vunpack.c.l.b16 %v42
  %v316 = vunpack.c.l.b16 %v43
  %v317 = vunpack.c.l.b16 %v44
  %v318 = vunpack.c.l.b16 %v45
  %v319 = vunpack.c.l.b16 %v46
  %v320 = vunpack.c.l.b16 %v47
  %v321 = vunpack.c.l.b16 %v48
  %v322 = vunpack.c.l.b16 %v49
  %v323 = vunpack.c.l.b16 %v50
  %v324 = vunpack.c.l.b16 %v51
  %v325 = vunpack.c.l.b16 %v52
  %v326 = vunpack.c.l.b16 %v53
  %v327 = vunpack.c.l.b16 %v54
  %v328 = vunpack.c.l.b16 %v55
  %v329 = vunpack.c.l.b16 %v56
  %v330 = vunpack.c.l.b16 %v57
  %v331 = vunpack.c.l.b16 %v58
  %v332 = vunpack.c.l.b16 %v59
  %v333 = vunpack.c.l.b16 %v60
  %v334 = vunpack.c.l.b16 %v61
  %v335 = vunpack.c.l.b16 %v62
  %v336 = vunpack.c.l.b16 %v63
  %v337 = vunpack.c.l.b16 %v64
  %v338 = vunpack.c.l.b16 %v65
  %v339 = vunpack.c.l.b16 %v66
  %v340 = vunpack.c.l.b16 %v67
  %v341 = vunpack.c.l.b16 %v68
  %v342 = vunpack.c.l.b16 %v69
  %v343 = vunpack.c.l.b16 %v70
  %v344 = vunpack.c.l.b16 %v71
  %v345 = vunpack.c.l.b16 %v72
  %v346 = vunpack.c.l.b16 %v73
  %v347 = vunpack.c.l.b16 %v74
  %v348 = vunpack.c.l.b16 %v75
  %v349 = vunpack.c.l.b16 %v76
  %v350 = vunpack.c.l.b16 %v77
  %v351 = vunpack.c.l.b16 %v78
  %v352 = vunpack.c.l.b16 %v79
  %v353 = vunpack.c.l.b16 %v80
  %v354 = vunpack.c.l.b16 %v81
  %v355 = vunpack.c.l.b16 %v82
  %v356 = vunpack.c.l.b16 %v83
  %v357 = vunpack.c.l.b16 %v84
  %v358 = vunpack.c.l.b16 %v85
  %v359 = vunpack.c.l.b16 %v86
  %v360 = vunpack.c.l.b16 %v87
  %v361 = vunpack.c.l.b16 %v88
  %v362 = vunpack.c.l.b16 %v89
  %v363 = vunpack.c.l.b16 %v90
  %v364 = vunpack.c.l.b16 %v91
  %v365 = vunpack.c.l.b16 %v92
  %v366 = vunpack.c.l.b16 %v93
  %v367 = vunpack.c.l.b16 %v94
  %v368 = vunpack.c.l.b16 %v95
  %v369 = vunpack.c.l.b16 %v96
  %v370 = vunpack.c.l.b16 %v97
  %v371 = vunpack.c.l.b16 %v98
  %v372 = vunpack.c.l.b16 %v99
  %v373 = vunpack.c.l.b16 %v100
  %v374 = vunpack.c.l.b16 %v101
  %v375 = vunpack.c.l.b16 %v102
  %v376 = vunpack.c.l.b16 %v103
  %v377 = vunpack.c.l.b16 %v104
  %v378 = vunpack.c.l.b16 %v105
  %v379 = vunpack.c.l.b16 %v106
  %v380 = vunpack.c.l.b16 %v107
  %v381 = vunpack.c.l.b16 %v108
  %v382 = vunpack.c.l.b16 %v109
  %v383 = vunpack.c.l.b16 %v110
  %v384 = vunpack.c.l.b16 %v111
  %v385 = vunpack.c.l.b16 %v112
  %v386 = vunpack.c.l.b16 %v113
  %v387 = vunpack.c.l.b16 %v114
  %v388 = vunpack.c.l.b16 %v115
  %v389 = vunpack.c.l.b16 %v116
  %v390 = vunpack.c.l.b16 %v117
  %v391 = vunpack.c.l.b16 %v118
  %v392 = vunpack.c.l.b16 %v119
  %v393 = vunpack.c.l.b16 %v120
  %v394 = vunpack.c.l.b16 %v121
  %v395 = vunpack.c.l.b16 %v122
  %v396 = vunpack.c.l.b16 %v123
  %v397 = vunpack.c.l.b16 %v124
  %v398 = vunpack.c.l.b16 %v125
  %v399 = vunpack.c.l.b16 %v126
  %v400 = vunpack.c.l.b16 %v127
  %v401 = vunpack.c.l.b16 %v128
  %v402 = vpack.c.b16 %v305, %v304
  %v403 = vpack.c.b16 %v307, %v306
  %v404 = vpack.c.b16 %v309, %v308
  %v405 = vpack.c.b16 %v311, %v310
  %v406 = vpack.c.b16 %v313, %v312
  %v407 = vpack.c.b16 %v315, %v314
  %v408 = vpack.c.b16 %v317, %v316
  %v409 = vpack.c.b16 %v319, %v318
  %v410 = vpack.c.b16 %v321, %v320
  %v411 = vpack.c.b16 %v323, %v322
  %v412 = vpack.c.b16 %v325, %v324
  %v413 = vpack.c.b16 %v327, %v326
  %v414 = vpack.c.b16 %v329, %v328
  %v415 = vpack.c.b16 %v331, %v330
  %v416 = vpack.c.b16 %v333, %v332
  %v417 = vpack.c.b16 %v335, %v334
  %v418 = vpack.c.b16 %v337, %v336
  %v419 = vpack.c.b16 %v339, %v338
  %v420 = vpack.c.b16 %v341, %v340
  %v421 = vpack.c.b16 %v343, %v342
  %v422 = vpack.c.b16 %v345, %v344
  %v423 = vpack.c.b16 %v347, %v346
  %v424 = vpack.c.b16 %v349, %v348
  %v425 = vpack.c.b16 %v351, %v350
  %v426 = vpack.c.b16 %v353, %v352
  %v427 = vpack.c.b16 %v355, %v354
  %v428 = vpack.c.b16 %v357, %v356
  %v429 = vpack.c.b16 %v359, %v358
  %v430 = vpack.c.b16 %v361, %v360
  %v431 = vpack.c.b16 %v363, %v362
  %v432 = vpack.c.b16 %v365, %v364
  %v433 = vpack.c.b16 %v367, %v366
  %v434 = vpack.c.b16 %v369, %v368
  %v435 = vpack.c.b16 %v371, %v370
  %v436 = vpack.c.b16 %v373, %v372
  %v437 = vpack.c.b16 %v375, %v374
  %v438 = vpack.c.b16 %v377, %v376
  %v439 = vpack.c.b16 %v379, %v378
  %v440 = vpack.c.b16 %v381, %v380
  %v441 = vpack.c.b16 %v383, %v382
  %v442 = vpack.c.b16 %v385, %v384
  %v443 = vpack.c.b16 %v387, %v386
  %v444 = vpack.c.b16 %v389, %v388
  %v445 = vpack.c.b16 %v391, %v390
  %v446 = vpack.c.b16 %v393, %v392
  %v447 = vpack.c.b16 %v395, %v394
  %v448 = vpack.c.b16 %v397, %v396
  %v449 = vpack.c.b16 %v399, %v398
  %v450 = vpack.c.b16 %v401, %v400
  %vm500 = vcmask 130048
  %v502 = vsel %vm500, %v186, 0
  %v505 = vsel %vm500, %v193, 0
  %507 = vmatprep.subr.bf16.mxu0 0
  %508 = vmatpush1.bf16.msra.mxu0 %v409
  %509 = vmatprep.subr.bf16.mxu0 0
  %510 = vmatpush1.bf16.msra.mxu0 %v408
  %511 = vmatprep.subr.bf16.mxu0 0
  %512 = vmatpush1.bf16.msra.mxu0 %v407
  %513 = vmatprep.subr.bf16.mxu0 0
  %514 = vmatpush1.bf16.msra.mxu0 %v406
  %515 = vmatprep.subr.bf16.mxu0 0
  %516 = vmatpush1.bf16.msra.mxu0 %v405
  %517 = vmatprep.subr.bf16.mxu0 0
  %518 = vmatpush1.bf16.msra.mxu0 %v404
  %519 = vmatprep.subr.bf16.mxu0 0
  %520 = vmatpush1.bf16.msra.mxu0 %v403
  %521 = vmatprep.subr.bf16.mxu0 0
  %522 = vmatpush1.bf16.msra.mxu0 %v402
  %523 = vmatprep.subr.bf16.mxu0 0
  %524 = vmatpush2.bf16.msra.mxu0 %v417
  %525 = vmatprep.subr.bf16.mxu0 0
  %526 = vmatpush2.bf16.msra.mxu0 %v416
  %527 = vmatprep.subr.bf16.mxu0 0
  %528 = vmatpush2.bf16.msra.mxu0 %v415
  %529 = vmatprep.subr.bf16.mxu0 0
  %530 = vmatpush2.bf16.msra.mxu0 %v414
  %531 = vmatprep.subr.bf16.mxu0 0
  %532 = vmatpush2.bf16.msra.mxu0 %v413
  %533 = vmatprep.subr.bf16.mxu0 0
  %534 = vmatpush2.bf16.msra.mxu0 %v412
  %535 = vmatprep.subr.bf16.mxu0 0
  %536 = vmatpush2.bf16.msra.mxu0 %v411
  %537 = vmatprep.subr.bf16.mxu0 0
  %538 = vmatpush2.bf16.msra.mxu0 %v410
  %539 = vmatprep.mubr.bf16.mxu0 %v181
  %540 = vmatmul.mubr.bf16.gmra.mxu0 %v180
  %v541 = vpop.f32.mrf.mxu0
  %v542 = vadd.f32 %v134, %v541
  %v543 = vpop.f32.mrf.mxu0
  %v544 = vpop.f32.mrf.mxu0
  %v545 = vadd.f32 %v134, %v544
  %v546 = vpop.f32.mrf.mxu0
  %547 = vmatprep.mubr.bf16.mxu0 %v188
  %548 = vmatmul.mubr.bf16.gmra.mxu0 %v187
  %v549 = vpop.f32.mrf.mxu0
  %v550 = vadd.f32 %v134, %v549
  %v551 = vpop.f32.mrf.mxu0
  %v552 = vpop.f32.mrf.mxu0
  %v553 = vadd.f32 %v134, %v552
  %v554 = vpop.f32.mrf.mxu0
  %555 = vdwg.mxu0
  %556 = vmatprep.subr.bf16.mxu0 0
  %557 = vmatpush1.bf16.msra.mxu0 %v425
  %558 = vmatprep.subr.bf16.mxu0 0
  %559 = vmatpush1.bf16.msra.mxu0 %v424
  %560 = vmatprep.subr.bf16.mxu0 0
  %561 = vmatpush1.bf16.msra.mxu0 %v423
  %562 = vmatprep.subr.bf16.mxu0 0
  %563 = vmatpush1.bf16.msra.mxu0 %v422
  %564 = vmatprep.subr.bf16.mxu0 0
  %565 = vmatpush1.bf16.msra.mxu0 %v421
  %566 = vmatprep.subr.bf16.mxu0 0
  %567 = vmatpush1.bf16.msra.mxu0 %v420
  %568 = vmatprep.subr.bf16.mxu0 0
  %569 = vmatpush1.bf16.msra.mxu0 %v419
  %570 = vmatprep.subr.bf16.mxu0 0
  %571 = vmatpush1.bf16.msra.mxu0 %v418
  %572 = vmatprep.subr.bf16.mxu0 0
  %573 = vmatpush2.bf16.msra.mxu0 %v433
  %574 = vmatprep.subr.bf16.mxu0 0
  %575 = vmatpush2.bf16.msra.mxu0 %v432
  %576 = vmatprep.subr.bf16.mxu0 0
  %577 = vmatpush2.bf16.msra.mxu0 %v431
  %578 = vmatprep.subr.bf16.mxu0 0
  %579 = vmatpush2.bf16.msra.mxu0 %v430
  %580 = vmatprep.subr.bf16.mxu0 0
  %581 = vmatpush2.bf16.msra.mxu0 %v429
  %582 = vmatprep.subr.bf16.mxu0 0
  %583 = vmatpush2.bf16.msra.mxu0 %v428
  %584 = vmatprep.subr.bf16.mxu0 0
  %585 = vmatpush2.bf16.msra.mxu0 %v427
  %586 = vmatprep.subr.bf16.mxu0 0
  %587 = vmatpush2.bf16.msra.mxu0 %v426
  %588 = vmatprep.mubr.bf16.mxu0 %v183
  %589 = vmatmul.mubr.bf16.gmra.mxu0 %v182
  %v590 = vpop.f32.mrf.mxu0
  %v591 = vadd.f32 %v542, %v590
  %v592 = vpop.f32.mrf.mxu0
  %v593 = vpop.f32.mrf.mxu0
  %v594 = vadd.f32 %v545, %v593
  %v595 = vpop.f32.mrf.mxu0
  %596 = vmatprep.mubr.bf16.mxu0 %v190
  %597 = vmatmul.mubr.bf16.gmra.mxu0 %v189
  %v598 = vpop.f32.mrf.mxu0
  %v599 = vadd.f32 %v550, %v598
  %v600 = vpop.f32.mrf.mxu0
  %v601 = vpop.f32.mrf.mxu0
  %v602 = vadd.f32 %v553, %v601
  %v603 = vpop.f32.mrf.mxu0
  %604 = vdwg.mxu0
  %605 = vmatprep.subr.bf16.mxu0 0
  %606 = vmatpush1.bf16.msra.mxu0 %v441
  %607 = vmatprep.subr.bf16.mxu0 0
  %608 = vmatpush1.bf16.msra.mxu0 %v440
  %609 = vmatprep.subr.bf16.mxu0 0
  %610 = vmatpush1.bf16.msra.mxu0 %v439
  %611 = vmatprep.subr.bf16.mxu0 0
  %612 = vmatpush1.bf16.msra.mxu0 %v438
  %613 = vmatprep.subr.bf16.mxu0 0
  %614 = vmatpush1.bf16.msra.mxu0 %v437
  %615 = vmatprep.subr.bf16.mxu0 0
  %616 = vmatpush1.bf16.msra.mxu0 %v436
  %617 = vmatprep.subr.bf16.mxu0 0
  %618 = vmatpush1.bf16.msra.mxu0 %v435
  %619 = vmatprep.subr.bf16.mxu0 0
  %620 = vmatpush1.bf16.msra.mxu0 %v434
  %621 = vmatprep.subr.bf16.mxu0 0
  %622 = vmatpush2.bf16.msra.mxu0 %v449
  %623 = vmatprep.subr.bf16.mxu0 0
  %624 = vmatpush2.bf16.msra.mxu0 %v448
  %625 = vmatprep.subr.bf16.mxu0 0
  %626 = vmatpush2.bf16.msra.mxu0 %v447
  %627 = vmatprep.subr.bf16.mxu0 0
  %628 = vmatpush2.bf16.msra.mxu0 %v446
  %629 = vmatprep.subr.bf16.mxu0 0
  %630 = vmatpush2.bf16.msra.mxu0 %v445
  %631 = vmatprep.subr.bf16.mxu0 0
  %632 = vmatpush2.bf16.msra.mxu0 %v444
  %633 = vmatprep.subr.bf16.mxu0 0
  %634 = vmatpush2.bf16.msra.mxu0 %v443
  %635 = vmatprep.subr.bf16.mxu0 0
  %636 = vmatpush2.bf16.msra.mxu0 %v442
  %637 = vmatprep.mubr.bf16.mxu0 %v185
  %638 = vmatmul.mubr.bf16.gmra.mxu0 %v184
  %v639 = vpop.f32.mrf.mxu0
  %v640 = vadd.f32 %v591, %v639
  %v641 = vpop.f32.mrf.mxu0
  %v642 = vpop.f32.mrf.mxu0
  %v643 = vadd.f32 %v594, %v642
  %v644 = vpop.f32.mrf.mxu0
  %645 = vmatprep.mubr.bf16.mxu0 %v192
  %646 = vmatmul.mubr.bf16.gmra.mxu0 %v191
  %v647 = vpop.f32.mrf.mxu0
  %v648 = vadd.f32 %v599, %v647
  %v649 = vpop.f32.mrf.mxu0
  %v650 = vpop.f32.mrf.mxu0
  %v651 = vadd.f32 %v602, %v650
  %v652 = vpop.f32.mrf.mxu0
  %653 = vdwg.mxu0
  %654 = vmatprep.subr.bf16.mxu0 0
  %655 = vmatpush1.bf16.msra.mxu0 0
  %656 = vmatprep.subr.bf16.mxu0 0
  %657 = vmatpush1.bf16.msra.mxu0 0
  %658 = vmatprep.subr.bf16.mxu0 0
  %659 = vmatpush1.bf16.msra.mxu0 0
  %660 = vmatprep.subr.bf16.mxu0 0
  %661 = vmatpush1.bf16.msra.mxu0 0
  %662 = vmatprep.subr.bf16.mxu0 0
  %663 = vmatpush1.bf16.msra.mxu0 0
  %664 = vmatprep.subr.bf16.mxu0 0
  %665 = vmatpush1.bf16.msra.mxu0 0
  %666 = vmatprep.subr.bf16.mxu0 0
  %667 = vmatpush1.bf16.msra.mxu0 0
  %668 = vmatprep.subr.bf16.mxu0 0
  %669 = vmatpush1.bf16.msra.mxu0 %v450
  %670 = vmatprep.subr.bf16.mxu0 0
  %671 = vmatpush2.bf16.msra.mxu0 0
  %672 = vmatprep.subr.bf16.mxu0 0
  %673 = vmatpush2.bf16.msra.mxu0 0
  %674 = vmatprep.subr.bf16.mxu0 0
  %675 = vmatpush2.bf16.msra.mxu0 0
  %676 = vmatprep.subr.bf16.mxu0 0
  %677 = vmatpush2.bf16.msra.mxu0 0
  %678 = vmatprep.subr.bf16.mxu0 0
  %679 = vmatpush2.bf16.msra.mxu0 0
  %680 = vmatprep.subr.bf16.mxu0 0
  %681 = vmatpush2.bf16.msra.mxu0 0
  %682 = vmatprep.subr.bf16.mxu0 0
  %683 = vmatpush2.bf16.msra.mxu0 0
  %684 = vmatprep.subr.bf16.mxu0 0
  %685 = vmatpush2.bf16.msra.mxu0 0
  %686 = vmatprep.mubr.bf16.mxu0 0
  %687 = vmatmul.mubr.bf16.gmra.mxu0 %v502
  %v688 = vpop.f32.mrf.mxu0
  %v689 = vadd.f32 %v640, %v688
  %v690 = vpop.f32.mrf.mxu0
  %v691 = vpop.f32.mrf.mxu0
  %v692 = vadd.f32 %v643, %v691
  %v693 = vpop.f32.mrf.mxu0
  %694 = vmatprep.mubr.bf16.mxu0 0
  %695 = vmatmul.mubr.bf16.gmra.mxu0 %v505
  %v696 = vpop.f32.mrf.mxu0
  %v697 = vadd.f32 %v648, %v696
  %v698 = vpop.f32.mrf.mxu0
  %v699 = vpop.f32.mrf.mxu0
  %v700 = vadd.f32 %v651, %v699
  %v701 = vpop.f32.mrf.mxu0
  %702 = vdwg.mxu0
  %v703 = vsub.f32 0.0, %v689
  %v704 = vsub.f32 0.0, %v692
  %v705 = vsub.f32 0.0, %v697
  %v706 = vsub.f32 0.0, %v700
  %v707 = vmul.f32 %v703, 1.442695
  %v708 = vpow.pop %v707
  %v709 = vmul.f32 %v704, 1.442695
  %v710 = vpow.pop %v709
  %v711 = vmul.f32 %v705, 1.442695
  %v712 = vpow.pop %v711
  %v713 = vmul.f32 %v706, 1.442695
  %v714 = vpow.pop %v713
  %v715 = vadd.f32 %v708, 1.0
  %v716 = vadd.f32 %v710, 1.0
  %v717 = vadd.f32 %v712, 1.0
  %v718 = vadd.f32 %v714, 1.0
  %v719 = vrcp.pop %v715
  %v720 = vrcp.pop %v716
  %v721 = vrcp.pop %v717
  %v722 = vrcp.pop %v718
  %vm723 = vcmask 23552
  %724 = vst.msk [vmem:[%s3] sm:$0xff] %vm723, %v719
  %725 = vst.msk [vmem:[%s3 + $0x8] sm:$0xff] %vm723, %v720
  %726 = vst.msk [vmem:[%s3 + $0x10] sm:$0xff] %vm723, %v721
  %727 = vst.msk [vmem:[%s3 + $0x18] sm:$0xff] %vm723, %v722
  // Predicated region
  $region14: #{pose_guider_forward.26} parent=0 // pred_check
    _
  $region15: #{pose_guider_forward.26} parent=0 // pred_check_branch
    %729 = sbr.rel (0) target = $region17
  $region16: #{pose_guider_forward.26} parent=0 // pred_region
    _
  $region17: #{pose_guider_forward.26} parent=0 // pred_fallthru
    _
  // Predicated region
  $region18: #{pose_guider_forward.26} parent=0 // pred_check
    _
  $region19: #{pose_guider_forward.26} parent=0 // pred_check_branch
    %731 = sbr.rel (0) target = $region21
  $region20: #{pose_guider_forward.26} parent=0 // pred_region
    _
  $region21: #{pose_guider_forward.26} parent=0 // pred_fallthru
    _

// kernel: pose_guider_forward.27
$region0: #{pose_guider_forward.27}
  #allocation0 [shape = 'u32[]', space=smem, size = 0x4, offset = 0x4, fixed_abs, tag = 'smem constant byte address 0x4 - core index']
  #allocation1 [shape = 'u32[144,128]{1,0:T(1,128)}', space=vmem, size = 0x12000, scoped, tag = 'internal scratch']
  %s0 = inlined_call_operand.vmem [shape: f32[3,32,32], index: 0, kind: input, shape index: {}]
  %s1 = inlined_call_operand.vmem [shape: f32[32,3], index: 1, kind: input, shape index: {}]
  %s2 = inlined_call_operand.vmem [shape: bf16[3,32,16], index: 2, kind: input, shape index: {}]
  %s3 = inlined_call_operand.vmem [shape: f32[1,16], index: 3, kind: input, shape index: {}]
  %s4 = inlined_call_operand.vmem [shape: bf16[16,16], index: 4, kind: input, shape index: {}]
  %s5 = inlined_call_operand.vmem [shape: f32[1,16], index: 5, kind: input, shape index: {}]
  %s6 = inlined_call_operand.vmem [shape: f32[32,16], index: 6, kind: output, shape index: {0}]
  %s7 = inlined_call_operand.hbm [shape: f32[32,16], index: 7, kind: output, shape index: {1}]
  %8 = xla_tuple %s6, %s7
  %s9 = sld [smem:[#allocation0]]
  $region42: #{pose_guider_forward.27} parent=0
    _
  %s11 = ssub.s32 1, %s9
  %s12 = scalar_select 0, %s11, %s9
  $region1: #{pose_guider_forward.27} parent=0
    #allocation2 [shape = 'u8[16384]{0}', space=vmem, size = 0x4000, scoped, tag = 'output window, operand 1, single buffered']
    #allocation3 [shape = 's32[1]{0}', space=sflag, size = 0x4, scoped, tag = 'scoped memory for pose_guider_forward.27']
    %13 = vsyncpa [#allocation3], 0
    // Predicated region
    $region2: #{pose_guider_forward.27} parent=1 // pred_check
      _
    $region3: #{pose_guider_forward.27} parent=1 // pred_check_branch
      %15 = sbr.rel (0) target = $region5
    $region4: #{pose_guider_forward.27} parent=1 // pred_region
      _
    $region5: #{pose_guider_forward.27} parent=1 // pred_fallthru
      _
    // Predicated region
    $region6: #{pose_guider_forward.27} parent=1 // pred_check
      _
    $region7: #{pose_guider_forward.27} parent=1 // pred_check_branch
      %17 = sbr.rel (0) target = $region9
    $region8: #{pose_guider_forward.27} parent=1 // pred_region
      _
    $region9: #{pose_guider_forward.27} parent=1 // pred_fallthru
      _
    // Predicated region
    $region10: #{pose_guider_forward.27} parent=1 // pred_check
      _
    $region11: #{pose_guider_forward.27} parent=1 // pred_check_branch
      %19 = sbr.rel (0) target = $region13
    $region12: #{pose_guider_forward.27} parent=1 // pred_region
      _
    $region13: #{pose_guider_forward.27} parent=1 // pred_fallthru
      _
    // Predicated region
    $region14: #{pose_guider_forward.27} parent=1 // pred_check
      _
    $region15: #{pose_guider_forward.27} parent=1 // pred_check_branch
      %21 = sbr.rel (0) target = $region17
    $region16: #{pose_guider_forward.27} parent=1 // pred_region
      _
    $region17: #{pose_guider_forward.27} parent=1 // pred_fallthru
      _
    // Predicated region
    $region18: #{pose_guider_forward.27} parent=1 // pred_check
      _
    $region19: #{pose_guider_forward.27} parent=1 // pred_check_branch
      %23 = sbr.rel (0) target = $region21
    $region20: #{pose_guider_forward.27} parent=1 // pred_region
      _
    $region21: #{pose_guider_forward.27} parent=1 // pred_fallthru
      _
    // Predicated region
    $region22: #{pose_guider_forward.27} parent=1 // pred_check
      _
    $region23: #{pose_guider_forward.27} parent=1 // pred_check_branch
      %25 = sbr.rel (0) target = $region25
    $region24: #{pose_guider_forward.27} parent=1 // pred_region
      _
    $region25: #{pose_guider_forward.27} parent=1 // pred_fallthru
      _
    %v27 = vld [vmem:[%s0] sm:$0xff]
    %v28 = vld [vmem:[%s0 + $0x8] sm:$0xff]
    %v29 = vld [vmem:[%s0 + $0x10] sm:$0xff]
    %v30 = vld [vmem:[%s0 + $0x18] sm:$0xff]
    %v31 = vld [vmem:[%s1] sm:$0xff]
    %v32 = vld [vmem:[%s1 + $0x8] sm:$0xff]
    %v33 = vld [vmem:[%s1 + $0x10] sm:$0xff]
    %v34 = vld [vmem:[%s1 + $0x18] sm:$0xff]
    %36 = vset.pattern.permute.xlu0 0
    %37 = vperm.xlu0 %36, %v31
    %v38 = vpop.permute.xlu0 %37
    %41 = vset.pattern.permute.xlu0 0
    %42 = vperm.xlu0 %41, %v32
    %v43 = vpop.permute.xlu0 %42
    %46 = vset.pattern.permute.xlu0 0
    %47 = vperm.xlu0 %46, %v33
    %v48 = vpop.permute.xlu0 %47
    %51 = vset.pattern.permute.xlu0 0
    %52 = vperm.xlu0 %51, %v34
    %v53 = vpop.permute.xlu0 %52
    %v55 = vmul.f32 %v27, %v38
    %v56 = vmul.f32 %v28, %v43
    %v57 = vmul.f32 %v29, %v48
    %v58 = vmul.f32 %v30, %v53
    %v59 = vpack.c.bf16 %v56, %v55
    %v60 = vpack.c.bf16 %v58, %v57
    %v61 = vld [vmem:[%s2] sm:$0xf]
    %v62 = vld [vmem:[%s2 + $0x4] sm:$0xf]
    %v63 = vld [vmem:[%s2 + $0x8] sm:$0xf]
    %v64 = vld [vmem:[%s2 + $0xc] sm:$0xf]
    %s65 = scalar_lea.vmem %s0, 32
    %v66 = vld [vmem:[%s65] sm:$0xff]
    %v67 = vld [vmem:[%s65 + $0x8] sm:$0xff]
    %v68 = vld [vmem:[%s65 + $0x10] sm:$0xff]
    %v69 = vld [vmem:[%s65 + $0x18] sm:$0xff]
    %70 = vset.pattern.permute.xlu0 1
    %71 = vperm.xlu0 %70, %v31
    %v72 = vpop.permute.xlu0 %71
    %74 = vset.pattern.permute.xlu0 1
    %75 = vperm.xlu0 %74, %v32
    %v76 = vpop.permute.xlu0 %75
    %78 = vset.pattern.permute.xlu0 1
    %79 = vperm.xlu0 %78, %v33
    %v80 = vpop.permute.xlu0 %79
    %82 = vset.pattern.permute.xlu0 1
    %83 = vperm.xlu0 %82, %v34
    %v84 = vpop.permute.xlu0 %83
    %v86 = vmul.f32 %v66, %v72
    %v87 = vmul.f32 %v67, %v76
    %v88 = vmul.f32 %v68, %v80
    %v89 = vmul.f32 %v69, %v84
    %v90 = vpack.c.bf16 %v87, %v86
    %v91 = vpack.c.bf16 %v89, %v88
    %s92 = scalar_lea.vmem %s2, 16
    %v93 = vld [vmem:[%s92] sm:$0xf]
    %v94 = vld [vmem:[%s92 + $0x4] sm:$0xf]
    %v95 = vld [vmem:[%s92 + $0x8] sm:$0xf]
    %v96 = vld [vmem:[%s92 + $0xc] sm:$0xf]
    %v101 = vunpack.c.l.b16 %v93
    %v102 = vunpack.c.l.b16 %v94
    %v103 = vunpack.c.l.b16 %v95
    %v104 = vunpack.c.l.b16 %v96
    %v105 = vpack.c.b16 %v102, %v101
    %v106 = vpack.c.b16 %v104, %v103
    %vm109 = vcmask 261120
    %v111 = vsel %vm109, %v90, 0
    %v114 = vsel %vm109, %v91, 0
    %116 = vmatprep.subr.bf16.mxu0 0
    %117 = vmatpush1.bf16.msra.mxu0 0
    %118 = vmatprep.subr.bf16.mxu0 0
    %119 = vmatpush1.bf16.msra.mxu0 0
    %120 = vmatprep.subr.bf16.mxu0 0
    %121 = vmatpush1.bf16.msra.mxu0 0
    %122 = vmatprep.subr.bf16.mxu0 0
    %123 = vmatpush1.bf16.msra.mxu0 0
    %124 = vmatprep.subr.bf16.mxu0 0
    %125 = vmatpush1.bf16.msra.mxu0 0
    %126 = vmatprep.subr.bf16.mxu0 0
    %127 = vmatpush1.bf16.msra.mxu0 0
    %128 = vmatprep.subr.bf16.mxu0 0
    %129 = vmatpush1.bf16.msra.mxu0 %v106
    %130 = vmatprep.subr.bf16.mxu0 0
    %131 = vmatpush1.bf16.msra.mxu0 %v105
    %132 = vmatprep.subr.bf16.mxu0 0
    %133 = vmatpush2.bf16.msra.mxu0 0
    %134 = vmatprep.subr.bf16.mxu0 0
    %135 = vmatpush2.bf16.msra.mxu0 0
    %136 = vmatprep.subr.bf16.mxu0 0
    %137 = vmatpush2.bf16.msra.mxu0 0
    %138 = vmatprep.subr.bf16.mxu0 0
    %139 = vmatpush2.bf16.msra.mxu0 0
    %140 = vmatprep.subr.bf16.mxu0 0
    %141 = vmatpush2.bf16.msra.mxu0 0
    %142 = vmatprep.subr.bf16.mxu0 0
    %143 = vmatpush2.bf16.msra.mxu0 0
    %144 = vmatprep.subr.bf16.mxu0 0
    %145 = vmatpush2.bf16.msra.mxu0 0
    %146 = vmatprep.subr.bf16.mxu0 0
    %147 = vmatpush2.bf16.msra.mxu0 0
    %148 = vmatprep.mubr.bf16.mxu0 0
    %149 = vmatmul.mubr.bf16.gmra.mxu0 %v111
    %v150 = vpop.f32.mrf.mxu0
    %v151 = vadd.f32 0.0, %v150
    %v152 = vpop.f32.mrf.mxu0
    %v153 = vpop.f32.mrf.mxu0
    %v154 = vadd.f32 0.0, %v153
    %v155 = vpop.f32.mrf.mxu0
    %156 = vmatprep.mubr.bf16.mxu0 0
    %157 = vmatmul.mubr.bf16.gmra.mxu0 %v114
    %v158 = vpop.f32.mrf.mxu0
    %v159 = vadd.f32 0.0, %v158
    %v160 = vpop.f32.mrf.mxu0
    %v161 = vpop.f32.mrf.mxu0
    %v162 = vadd.f32 0.0, %v161
    %v163 = vpop.f32.mrf.mxu0
    %164 = vdwg.mxu0
    %v169 = vunpack.c.l.b16 %v61
    %v170 = vunpack.c.l.b16 %v62
    %v171 = vunpack.c.l.b16 %v63
    %v172 = vunpack.c.l.b16 %v64
    %v173 = vpack.c.b16 %v170, %v169
    %v174 = vpack.c.b16 %v172, %v171
    %v178 = vsel %vm109, %v59, 0
    %v181 = vsel %vm109, %v60, 0
    %183 = vmatprep.subr.bf16.mxu0 0
    %184 = vmatpush1.bf16.msra.mxu0 0
    %185 = vmatprep.subr.bf16.mxu0 0
    %186 = vmatpush1.bf16.msra.mxu0 0
    %187 = vmatprep.subr.bf16.mxu0 0
    %188 = vmatpush1.bf16.msra.mxu0 0
    %189 = vmatprep.subr.bf16.mxu0 0
    %190 = vmatpush1.bf16.msra.mxu0 0
    %191 = vmatprep.subr.bf16.mxu0 0
    %192 = vmatpush1.bf16.msra.mxu0 0
    %193 = vmatprep.subr.bf16.mxu0 0
    %194 = vmatpush1.bf16.msra.mxu0 0
    %195 = vmatprep.subr.bf16.mxu0 0
    %196 = vmatpush1.bf16.msra.mxu0 %v174
    %197 = vmatprep.subr.bf16.mxu0 0
    %198 = vmatpush1.bf16.msra.mxu0 %v173
    %199 = vmatprep.subr.bf16.mxu0 0
    %200 = vmatpush2.bf16.msra.mxu0 0
    %201 = vmatprep.subr.bf16.mxu0 0
    %202 = vmatpush2.bf16.msra.mxu0 0
    %203 = vmatprep.subr.bf16.mxu0 0
    %204 = vmatpush2.bf16.msra.mxu0 0
    %205 = vmatprep.subr.bf16.mxu0 0
    %206 = vmatpush2.bf16.msra.mxu0 0
    %207 = vmatprep.subr.bf16.mxu0 0
    %208 = vmatpush2.bf16.msra.mxu0 0
    %209 = vmatprep.subr.bf16.mxu0 0
    %210 = vmatpush2.bf16.msra.mxu0 0
    %211 = vmatprep.subr.bf16.mxu0 0
    %212 = vmatpush2.bf16.msra.mxu0 0
    %213 = vmatprep.subr.bf16.mxu0 0
    %214 = vmatpush2.bf16.msra.mxu0 0
    %215 = vmatprep.mubr.bf16.mxu0 0
    %216 = vmatmul.mubr.bf16.gmra.mxu0 %v178
    %v217 = vpop.f32.mrf.mxu0
    %v218 = vadd.f32 %v151, %v217
    %v219 = vpop.f32.mrf.mxu0
    %v220 = vpop.f32.mrf.mxu0
    %v221 = vadd.f32 %v154, %v220
    %v222 = vpop.f32.mrf.mxu0
    %223 = vmatprep.mubr.bf16.mxu0 0
    %224 = vmatmul.mubr.bf16.gmra.mxu0 %v181
    %v225 = vpop.f32.mrf.mxu0
    %v226 = vadd.f32 %v159, %v225
    %v227 = vpop.f32.mrf.mxu0
    %v228 = vpop.f32.mrf.mxu0
    %v229 = vadd.f32 %v162, %v228
    %v230 = vpop.f32.mrf.mxu0
    %231 = vdwg.mxu0
    %s232 = scalar_lea.vmem %s0, 64
    %v233 = vld [vmem:[%s232] sm:$0xff]
    %v234 = vld [vmem:[%s232 + $0x8] sm:$0xff]
    %v235 = vld [vmem:[%s232 + $0x10] sm:$0xff]
    %v236 = vld [vmem:[%s232 + $0x18] sm:$0xff]
    %237 = vset.pattern.permute.xlu0 2
    %238 = vperm.xlu0 %237, %v31
    %v239 = vpop.permute.xlu0 %238
    %241 = vset.pattern.permute.xlu0 2
    %242 = vperm.xlu0 %241, %v32
    %v243 = vpop.permute.xlu0 %242
    %245 = vset.pattern.permute.xlu0 2
    %246 = vperm.xlu0 %245, %v33
    %v247 = vpop.permute.xlu0 %246
    %249 = vset.pattern.permute.xlu0 2
    %250 = vperm.xlu0 %249, %v34
    %v251 = vpop.permute.xlu0 %250
    %v253 = vmul.f32 %v233, %v239
    %v254 = vmul.f32 %v234, %v243
    %v255 = vmul.f32 %v235, %v247
    %v256 = vmul.f32 %v236, %v251
    %v257 = vpack.c.bf16 %v254, %v253
    %v258 = vpack.c.bf16 %v256, %v255
    %s259 = scalar_lea.vmem %s2, 32
    %v260 = vld [vmem:[%s259] sm:$0xf]
    %v261 = vld [vmem:[%s259 + $0x4] sm:$0xf]
    %v262 = vld [vmem:[%s259 + $0x8] sm:$0xf]
    %v263 = vld [vmem:[%s259 + $0xc] sm:$0xf]
    %v268 = vunpack.c.l.b16 %v260
    %v269 = vunpack.c.l.b16 %v261
    %v270 = vunpack.c.l.b16 %v262
    %v271 = vunpack.c.l.b16 %v263
    %v272 = vpack.c.b16 %v269, %v268
    %v273 = vpack.c.b16 %v271, %v270
    %v277 = vsel %vm109, %v257, 0
    %v280 = vsel %vm109, %v258, 0
    %282 = vmatprep.subr.bf16.mxu0 0
    %283 = vmatpush1.bf16.msra.mxu0 0
    %284 = vmatprep.subr.bf16.mxu0 0
    %285 = vmatpush1.bf16.msra.mxu0 0
    %286 = vmatprep.subr.bf16.mxu0 0
    %287 = vmatpush1.bf16.msra.mxu0 0
    %288 = vmatprep.subr.bf16.mxu0 0
    %289 = vmatpush1.bf16.msra.mxu0 0
    %290 = vmatprep.subr.bf16.mxu0 0
    %291 = vmatpush1.bf16.msra.mxu0 0
    %292 = vmatprep.subr.bf16.mxu0 0
    %293 = vmatpush1.bf16.msra.mxu0 0
    %294 = vmatprep.subr.bf16.mxu0 0
    %295 = vmatpush1.bf16.msra.mxu0 %v273
    %296 = vmatprep.subr.bf16.mxu0 0
    %297 = vmatpush1.bf16.msra.mxu0 %v272
    %298 = vmatprep.subr.bf16.mxu0 0
    %299 = vmatpush2.bf16.msra.mxu0 0
    %300 = vmatprep.subr.bf16.mxu0 0
    %301 = vmatpush2.bf16.msra.mxu0 0
    %302 = vmatprep.subr.bf16.mxu0 0
    %303 = vmatpush2.bf16.msra.mxu0 0
    %304 = vmatprep.subr.bf16.mxu0 0
    %305 = vmatpush2.bf16.msra.mxu0 0
    %306 = vmatprep.subr.bf16.mxu0 0
    %307 = vmatpush2.bf16.msra.mxu0 0
    %308 = vmatprep.subr.bf16.mxu0 0
    %309 = vmatpush2.bf16.msra.mxu0 0
    %310 = vmatprep.subr.bf16.mxu0 0
    %311 = vmatpush2.bf16.msra.mxu0 0
    %312 = vmatprep.subr.bf16.mxu0 0
    %313 = vmatpush2.bf16.msra.mxu0 0
    %314 = vmatprep.mubr.bf16.mxu0 0
    %315 = vmatmul.mubr.bf16.gmra.mxu0 %v277
    %v316 = vpop.f32.mrf.mxu0
    %v317 = vadd.f32 0.0, %v316
    %v318 = vpop.f32.mrf.mxu0
    %v319 = vpop.f32.mrf.mxu0
    %v320 = vadd.f32 0.0, %v319
    %v321 = vpop.f32.mrf.mxu0
    %322 = vmatprep.mubr.bf16.mxu0 0
    %323 = vmatmul.mubr.bf16.gmra.mxu0 %v280
    %v324 = vpop.f32.mrf.mxu0
    %v325 = vadd.f32 0.0, %v324
    %v326 = vpop.f32.mrf.mxu0
    %v327 = vpop.f32.mrf.mxu0
    %v328 = vadd.f32 0.0, %v327
    %v329 = vpop.f32.mrf.mxu0
    %330 = vdwg.mxu0
    %v331 = vadd.f32 %v218, %v317
    %v332 = vadd.f32 %v221, %v320
    %v333 = vadd.f32 %v226, %v325
    %v334 = vadd.f32 %v229, %v328
    %v335 = vld [vmem:[%s3] sm:$0x1]
    %v337 = vlaneseq
    %v338 = vshrl.u32 %v337, 7
    %v339 = vsub.s32 0, %v338
    %v340 = vrot.slane %v335, %v339
    %v342 = vadd.f32 %v331, %v340
    %v343 = vadd.f32 %v332, %v340
    %v344 = vadd.f32 %v333, %v340
    %v345 = vadd.f32 %v334, %v340
    %v346 = vsub.f32 0.0, %v342
    %v347 = vsub.f32 0.0, %v343
    %v348 = vsub.f32 0.0, %v344
    %v349 = vsub.f32 0.0, %v345
    %v350 = vmul.f32 %v346, 1.442695
    %v351 = vpow.pop %v350
    %v352 = vmul.f32 %v347, 1.442695
    %v353 = vpow.pop %v352
    %v354 = vmul.f32 %v348, 1.442695
    %v355 = vpow.pop %v354
    %v356 = vmul.f32 %v349, 1.442695
    %v357 = vpow.pop %v356
    %v358 = vadd.f32 %v351, 1.0
    %v359 = vadd.f32 %v353, 1.0
    %v360 = vadd.f32 %v355, 1.0
    %v361 = vadd.f32 %v357, 1.0
    %v362 = vrcp.pop %v358
    %v363 = vrcp.pop %v359
    %v364 = vrcp.pop %v360
    %v365 = vrcp.pop %v361
    %v366 = vmul.f32 %v342, %v362
    %v367 = vmul.f32 %v343, %v363
    %v368 = vmul.f32 %v344, %v364
    %v369 = vmul.f32 %v345, %v365
    %vm370 = vcmask 130048
    %371 = vst.msk [vmem:[%s6] sm:$0xff] %vm370, %v366
    %372 = vst.msk [vmem:[%s6 + $0x8] sm:$0xff] %vm370, %v367
    %373 = vst.msk [vmem:[%s6 + $0x10] sm:$0xff] %vm370, %v368
    %374 = vst.msk [vmem:[%s6 + $0x18] sm:$0xff] %vm370, %v369
    %v375 = vpack.c.bf16 %v367, %v366
    %v376 = vpack.c.bf16 %v369, %v368
    %v377 = vld [vmem:[%s4] sm:$0xf]
    %v378 = vld [vmem:[%s4 + $0x4] sm:$0xf]
    %v379 = vld [vmem:[%s5] sm:$0x1]
    %v381 = vlaneseq
    %v382 = vshrl.u32 %v381, 7
    %v383 = vsub.s32 0, %v382
    %v384 = vrot.slane %v379, %v383
    %v388 = vunpack.c.l.b16 %v377
    %v389 = vunpack.c.l.b16 %v378
    %v390 = vpack.c.b16 %v389, %v388
    %v393 = vsel %vm370, %v375, 0
    %v396 = vsel %vm370, %v376, 0
    %398 = vmatprep.subr.bf16.mxu0 0
    %399 = vmatpush1.bf16.msra.mxu0 0
    %400 = vmatprep.subr.bf16.mxu0 0
    %401 = vmatpush1.bf16.msra.mxu0 0
    %402 = vmatprep.subr.bf16.mxu0 0
    %403 = vmatpush1.bf16.msra.mxu0 0
    %404 = vmatprep.subr.bf16.mxu0 0
    %405 = vmatpush1.bf16.msra.mxu0 0
    %406 = vmatprep.subr.bf16.mxu0 0
    %407 = vmatpush1.bf16.msra.mxu0 0
    %408 = vmatprep.subr.bf16.mxu0 0
    %409 = vmatpush1.bf16.msra.mxu0 0
    %410 = vmatprep.subr.bf16.mxu0 0
    %411 = vmatpush1.bf16.msra.mxu0 0
    %412 = vmatprep.subr.bf16.mxu0 0
    %413 = vmatpush1.bf16.msra.mxu0 %v390
    %414 = vmatprep.subr.bf16.mxu0 0
    %415 = vmatpush2.bf16.msra.mxu0 0
    %416 = vmatprep.subr.bf16.mxu0 0
    %417 = vmatpush2.bf16.msra.mxu0 0
    %418 = vmatprep.subr.bf16.mxu0 0
    %419 = vmatpush2.bf16.msra.mxu0 0
    %420 = vmatprep.subr.bf16.mxu0 0
    %421 = vmatpush2.bf16.msra.mxu0 0
    %422 = vmatprep.subr.bf16.mxu0 0
    %423 = vmatpush2.bf16.msra.mxu0 0
    %424 = vmatprep.subr.bf16.mxu0 0
    %425 = vmatpush2.bf16.msra.mxu0 0
    %426 = vmatprep.subr.bf16.mxu0 0
    %427 = vmatpush2.bf16.msra.mxu0 0
    %428 = vmatprep.subr.bf16.mxu0 0
    %429 = vmatpush2.bf16.msra.mxu0 0
    %430 = vmatprep.mubr.bf16.mxu0 0
    %431 = vmatmul.mubr.bf16.gmra.mxu0 %v393
    %v432 = vpop.f32.mrf.mxu0
    %v433 = vadd.f32 %v384, %v432
    %v434 = vpop.f32.mrf.mxu0
    %v435 = vpop.f32.mrf.mxu0
    %v436 = vadd.f32 %v384, %v435
    %v437 = vpop.f32.mrf.mxu0
    %438 = vmatprep.mubr.bf16.mxu0 0
    %439 = vmatmul.mubr.bf16.gmra.mxu0 %v396
    %v440 = vpop.f32.mrf.mxu0
    %v441 = vadd.f32 %v384, %v440
    %v442 = vpop.f32.mrf.mxu0
    %v443 = vpop.f32.mrf.mxu0
    %v444 = vadd.f32 %v384, %v443
    %v445 = vpop.f32.mrf.mxu0
    %446 = vdwg.mxu0
    %447 = vst.msk [vmem:[#allocation2] sm:$0xff] %vm370, %v433
    %448 = vst.msk [vmem:[#allocation2 + $0x8] sm:$0xff] %vm370, %v436
    %449 = vst.msk [vmem:[#allocation2 + $0x10] sm:$0xff] %vm370, %v441
    %450 = vst.msk [vmem:[#allocation2 + $0x18] sm:$0xff] %vm370, %v444
    // Predicated region
    $region26: #{pose_guider_forward.27} parent=1 // pred_check
      _
    $region27: #{pose_guider_forward.27} parent=1 // pred_check_branch
      %452 = sbr.rel (0) target = $region29
    $region28: #{pose_guider_forward.27} parent=1 // pred_region
      _
    $region29: #{pose_guider_forward.27} parent=1 // pred_fallthru
      _
    // Predicated region
    $region30: #{pose_guider_forward.27} parent=1 // pred_check
      _
    $region31: #{pose_guider_forward.27} parent=1 // pred_check_branch
      %454 = sbr.rel (0) target = $region33
    $region32: #{pose_guider_forward.27} parent=1 // pred_region
      %s456 = ssub.s32 512, 512
      %457 = vsyncadd [#allocation3], %s456
      %s458 = sshll.u32 [#allocation2], 4
      %s459 = int_to_ptr.vmem [resolvable:$true] %s458
      %464 = dma.vmem_to_hbm [thread:$0]  %s459, 512, %s7, [#allocation3], 128, 128, 8
    $region33: #{pose_guider_forward.27} parent=1 // pred_fallthru
      _
    // Predicated region
    $region34: #{pose_guider_forward.27} parent=1 // pred_check
      _
    $region35: #{pose_guider_forward.27} parent=1 // pred_check_branch
      %466 = sbr.rel (0) target = $region37
    $region36: #{pose_guider_forward.27} parent=1 // pred_region
      _
    $region37: #{pose_guider_forward.27} parent=1 // pred_fallthru
      _
    // Predicated region
    $region38: #{pose_guider_forward.27} parent=1 // pred_check
      _
    $region39: #{pose_guider_forward.27} parent=1 // pred_check_branch
      %468 = sbr.rel (0) target = $region41
    $region40: #{pose_guider_forward.27} parent=1 // pred_region
      %469 = dma.done [#allocation3], 512
    $region41: #{pose_guider_forward.27} parent=1 // pred_fallthru
      _
    %470 = vsyncpa [#allocation3], 1

// kernel: pose_guider_forward.28
$region0: #{pose_guider_forward.28}
  #allocation0 [shape = 'u32[]', space=smem, size = 0x4, offset = 0x4, fixed_abs, tag = 'smem constant byte address 0x4 - core index']
  #allocation1 [shape = 'u32[144,128]{1,0:T(1,128)}', space=vmem, size = 0x12000, scoped, tag = 'internal scratch']
  %s0 = inlined_call_operand.vmem [shape: bf16[8,144], index: 0, kind: input, shape index: {}]
  %s1 = inlined_call_operand.vmem [shape: bf16[144,16], index: 1, kind: input, shape index: {}]
  %s2 = inlined_call_operand.vmem [shape: f32[1,16], index: 2, kind: input, shape index: {}]
  %s3 = inlined_call_operand.vmem [shape: f32[8,16], index: 3, kind: output, shape index: {}]
  %s4 = sld [smem:[#allocation0]]
  $region22: #{pose_guider_forward.28} parent=0
    _
  %s6 = ssub.s32 1, %s4
  %s7 = scalar_select 0, %s6, %s4
  // Predicated region
  $region2: #{pose_guider_forward.28} parent=0 // pred_check
    _
  $region3: #{pose_guider_forward.28} parent=0 // pred_check_branch
    %9 = sbr.rel (0) target = $region5
  $region4: #{pose_guider_forward.28} parent=0 // pred_region
    _
  $region5: #{pose_guider_forward.28} parent=0 // pred_fallthru
    _
  // Predicated region
  $region6: #{pose_guider_forward.28} parent=0 // pred_check
    _
  $region7: #{pose_guider_forward.28} parent=0 // pred_check_branch
    %11 = sbr.rel (0) target = $region9
  $region8: #{pose_guider_forward.28} parent=0 // pred_region
    _
  $region9: #{pose_guider_forward.28} parent=0 // pred_fallthru
    _
  // Predicated region
  $region10: #{pose_guider_forward.28} parent=0 // pred_check
    _
  $region11: #{pose_guider_forward.28} parent=0 // pred_check_branch
    %13 = sbr.rel (0) target = $region13
  $region12: #{pose_guider_forward.28} parent=0 // pred_region
    _
  $region13: #{pose_guider_forward.28} parent=0 // pred_fallthru
    _
  %v15 = vld [vmem:[%s0] sm:$0xff]
  %v16 = vld [vmem:[%s1] sm:$0xf]
  %v17 = vld [vmem:[%s1 + $0x4] sm:$0xf]
  %v18 = vld [vmem:[%s1 + $0x8] sm:$0xf]
  %v19 = vld [vmem:[%s1 + $0xc] sm:$0xf]
  %v20 = vld [vmem:[%s1 + $0x10] sm:$0xf]
  %v21 = vld [vmem:[%s1 + $0x14] sm:$0xf]
  %v22 = vld [vmem:[%s1 + $0x18] sm:$0xf]
  %v23 = vld [vmem:[%s1 + $0x1c] sm:$0xf]
  %v24 = vld [vmem:[%s1 + $0x20] sm:$0xf]
  %v25 = vld [vmem:[%s1 + $0x24] sm:$0xf]
  %v26 = vld [vmem:[%s1 + $0x28] sm:$0xf]
  %v27 = vld [vmem:[%s1 + $0x2c] sm:$0xf]
  %v28 = vld [vmem:[%s1 + $0x30] sm:$0xf]
  %v29 = vld [vmem:[%s1 + $0x34] sm:$0xf]
  %v30 = vld [vmem:[%s1 + $0x38] sm:$0xf]
  %v31 = vld [vmem:[%s1 + $0x3c] sm:$0xf]
  %v32 = vld [vmem:[%s1 + $0x40] sm:$0xf]
  %v33 = vld [vmem:[%s1 + $0x44] sm:$0xf]
  %v34 = vld [vmem:[%s2] sm:$0x1]
  %v36 = vlaneseq
  %v37 = vshrl.u32 %v36, 7
  %v38 = vsub.s32 0, %v37
  %v39 = vrot.slane %v34, %v38
  %v42 = vunpack.c.l.b16 %v15
  %v43 = vunpack.c.h.b16 %v15
  %v44 = vpack.c.b16 %v42, %v42
  %v45 = vpack.c.b16 %v43, %v43
  %v65 = vunpack.c.l.b16 %v16
  %v66 = vunpack.c.l.b16 %v17
  %v67 = vunpack.c.l.b16 %v18
  %v68 = vunpack.c.l.b16 %v19
  %v69 = vunpack.c.l.b16 %v20
  %v70 = vunpack.c.l.b16 %v21
  %v71 = vunpack.c.l.b16 %v22
  %v72 = vunpack.c.l.b16 %v23
  %v73 = vunpack.c.l.b16 %v24
  %v74 = vunpack.c.l.b16 %v25
  %v75 = vunpack.c.l.b16 %v26
  %v76 = vunpack.c.l.b16 %v27
  %v77 = vunpack.c.l.b16 %v28
  %v78 = vunpack.c.l.b16 %v29
  %v79 = vunpack.c.l.b16 %v30
  %v80 = vunpack.c.l.b16 %v31
  %v81 = vunpack.c.l.b16 %v32
  %v82 = vunpack.c.l.b16 %v33
  %v83 = vpack.c.b16 %v66, %v65
  %v84 = vpack.c.b16 %v68, %v67
  %v85 = vpack.c.b16 %v70, %v69
  %v86 = vpack.c.b16 %v72, %v71
  %v87 = vpack.c.b16 %v74, %v73
  %v88 = vpack.c.b16 %v76, %v75
  %v89 = vpack.c.b16 %v78, %v77
  %v90 = vpack.c.b16 %v80, %v79
  %v91 = vpack.c.b16 %v82, %v81
  %vm101 = vcmask 130048
  %v103 = vsel %vm101, %v45, 0
  %105 = vmatprep.subr.bf16.mxu0 0
  %106 = vmatpush1.bf16.msra.mxu0 %v90
  %107 = vmatprep.subr.bf16.mxu0 0
  %108 = vmatpush1.bf16.msra.mxu0 %v89
  %109 = vmatprep.subr.bf16.mxu0 0
  %110 = vmatpush1.bf16.msra.mxu0 %v88
  %111 = vmatprep.subr.bf16.mxu0 0
  %112 = vmatpush1.bf16.msra.mxu0 %v87
  %113 = vmatprep.subr.bf16.mxu0 0
  %114 = vmatpush1.bf16.msra.mxu0 %v86
  %115 = vmatprep.subr.bf16.mxu0 0
  %116 = vmatpush1.bf16.msra.mxu0 %v85
  %117 = vmatprep.subr.bf16.mxu0 0
  %118 = vmatpush1.bf16.msra.mxu0 %v84
  %119 = vmatprep.subr.bf16.mxu0 0
  %120 = vmatpush1.bf16.msra.mxu0 %v83
  %121 = vmatprep.subr.bf16.mxu0 0
  %122 = vmatpush2.bf16.msra.mxu0 0
  %123 = vmatprep.subr.bf16.mxu0 0
  %124 = vmatpush2.bf16.msra.mxu0 0
  %125 = vmatprep.subr.bf16.mxu0 0
  %126 = vmatpush2.bf16.msra.mxu0 0
  %127 = vmatprep.subr.bf16.mxu0 0
  %128 = vmatpush2.bf16.msra.mxu0 0
  %129 = vmatprep.subr.bf16.mxu0 0
  %130 = vmatpush2.bf16.msra.mxu0 0
  %131 = vmatprep.subr.bf16.mxu0 0
  %132 = vmatpush2.bf16.msra.mxu0 0
  %133 = vmatprep.subr.bf16.mxu0 0
  %134 = vmatpush2.bf16.msra.mxu0 0
  %135 = vmatprep.subr.bf16.mxu0 0
  %136 = vmatpush2.bf16.msra.mxu0 %v91
  %137 = vmatprep.mubr.bf16.mxu0 %v103
  %138 = vmatmul.mubr.bf16.gmra.mxu0 %v44
  %v139 = vpop.f32.mrf.mxu0
  %v140 = vadd.f32 %v39, %v139
  %v141 = vpop.f32.mrf.mxu0
  %v142 = vpop.f32.mrf.mxu0
  %v143 = vpop.f32.mrf.mxu0
  %144 = vdwg.mxu0
  %v145 = vsub.f32 0.0, %v140
  %v146 = vmul.f32 %v145, 1.442695
  %v147 = vpow.pop %v146
  %v148 = vadd.f32 %v147, 1.0
  %v149 = vrcp.pop %v148
  %v150 = vmul.f32 %v140, %v149
  %151 = vst.msk [vmem:[%s3] sm:$0xff] %vm101, %v150
  // Predicated region
  $region14: #{pose_guider_forward.28} parent=0 // pred_check
    _
  $region15: #{pose_guider_forward.28} parent=0 // pred_check_branch
    %153 = sbr.rel (0) target = $region17
  $region16: #{pose_guider_forward.28} parent=0 // pred_region
    _
  $region17: #{pose_guider_forward.28} parent=0 // pred_fallthru
    _
  // Predicated region
  $region18: #{pose_guider_forward.28} parent=0 // pred_check
    _
  $region19: #{pose_guider_forward.28} parent=0 // pred_check_branch
    %155 = sbr.rel (0) target = $region21
  $region20: #{pose_guider_forward.28} parent=0 // pred_region
    _
  $region21: #{pose_guider_forward.28} parent=0 // pred_fallthru
    _

// kernel: pose_guider_forward.29
$region0: #{pose_guider_forward.29}
  #allocation0 [shape = 'u32[]', space=smem, size = 0x4, offset = 0x4, fixed_abs, tag = 'smem constant byte address 0x4 - core index']
  #allocation1 [shape = 'u32[144,128]{1,0:T(1,128)}', space=vmem, size = 0x12000, scoped, tag = 'internal scratch']
  %s0 = inlined_call_operand.vmem [shape: bf16[8,144], index: 0, kind: input, shape index: {}]
  %s1 = inlined_call_operand.vmem [shape: bf16[144,16], index: 1, kind: input, shape index: {}]
  %s2 = inlined_call_operand.vmem [shape: f32[1,16], index: 2, kind: input, shape index: {}]
  %s3 = inlined_call_operand.vmem [shape: bf16[16,16], index: 3, kind: input, shape index: {}]
  %s4 = inlined_call_operand.vmem [shape: f32[1,16], index: 4, kind: input, shape index: {}]
  %s5 = inlined_call_operand.vmem [shape: f32[8,16], index: 5, kind: output, shape index: {0}]
  %s6 = inlined_call_operand.hbm [shape: f32[8,16], index: 6, kind: output, shape index: {1}]
  %7 = xla_tuple %s5, %s6
  %s8 = sld [smem:[#allocation0]]
  $region38: #{pose_guider_forward.29} parent=0
    _
  %s10 = ssub.s32 1, %s8
  %s11 = scalar_select 0, %s10, %s8
  $region1: #{pose_guider_forward.29} parent=0
    #allocation2 [shape = 'u8[4096]{0}', space=vmem, size = 0x1000, scoped, tag = 'output window, operand 1, single buffered']
    #allocation3 [shape = 's32[1]{0}', space=sflag, size = 0x4, scoped, tag = 'scoped memory for pose_guider_forward.29']
    %12 = vsyncpa [#allocation3], 0
    // Predicated region
    $region2: #{pose_guider_forward.29} parent=1 // pred_check
      _
    $region3: #{pose_guider_forward.29} parent=1 // pred_check_branch
      %14 = sbr.rel (0) target = $region5
    $region4: #{pose_guider_forward.29} parent=1 // pred_region
      _
    $region5: #{pose_guider_forward.29} parent=1 // pred_fallthru
      _
    // Predicated region
    $region6: #{pose_guider_forward.29} parent=1 // pred_check
      _
    $region7: #{pose_guider_forward.29} parent=1 // pred_check_branch
      %16 = sbr.rel (0) target = $region9
    $region8: #{pose_guider_forward.29} parent=1 // pred_region
      _
    $region9: #{pose_guider_forward.29} parent=1 // pred_fallthru
      _
    // Predicated region
    $region10: #{pose_guider_forward.29} parent=1 // pred_check
      _
    $region11: #{pose_guider_forward.29} parent=1 // pred_check_branch
      %18 = sbr.rel (0) target = $region13
    $region12: #{pose_guider_forward.29} parent=1 // pred_region
      _
    $region13: #{pose_guider_forward.29} parent=1 // pred_fallthru
      _
    // Predicated region
    $region14: #{pose_guider_forward.29} parent=1 // pred_check
      _
    $region15: #{pose_guider_forward.29} parent=1 // pred_check_branch
      %20 = sbr.rel (0) target = $region17
    $region16: #{pose_guider_forward.29} parent=1 // pred_region
      _
    $region17: #{pose_guider_forward.29} parent=1 // pred_fallthru
      _
    // Predicated region
    $region18: #{pose_guider_forward.29} parent=1 // pred_check
      _
    $region19: #{pose_guider_forward.29} parent=1 // pred_check_branch
      %22 = sbr.rel (0) target = $region21
    $region20: #{pose_guider_forward.29} parent=1 // pred_region
      _
    $region21: #{pose_guider_forward.29} parent=1 // pred_fallthru
      _
    %v24 = vld [vmem:[%s0] sm:$0xff]
    %v25 = vld [vmem:[%s1] sm:$0xf]
    %v26 = vld [vmem:[%s1 + $0x4] sm:$0xf]
    %v27 = vld [vmem:[%s1 + $0x8] sm:$0xf]
    %v28 = vld [vmem:[%s1 + $0xc] sm:$0xf]
    %v29 = vld [vmem:[%s1 + $0x10] sm:$0xf]
    %v30 = vld [vmem:[%s1 + $0x14] sm:$0xf]
    %v31 = vld [vmem:[%s1 + $0x18] sm:$0xf]
    %v32 = vld [vmem:[%s1 + $0x1c] sm:$0xf]
    %v33 = vld [vmem:[%s1 + $0x20] sm:$0xf]
    %v34 = vld [vmem:[%s1 + $0x24] sm:$0xf]
    %v35 = vld [vmem:[%s1 + $0x28] sm:$0xf]
    %v36 = vld [vmem:[%s1 + $0x2c] sm:$0xf]
    %v37 = vld [vmem:[%s1 + $0x30] sm:$0xf]
    %v38 = vld [vmem:[%s1 + $0x34] sm:$0xf]
    %v39 = vld [vmem:[%s1 + $0x38] sm:$0xf]
    %v40 = vld [vmem:[%s1 + $0x3c] sm:$0xf]
    %v41 = vld [vmem:[%s1 + $0x40] sm:$0xf]
    %v42 = vld [vmem:[%s1 + $0x44] sm:$0xf]
    %v43 = vld [vmem:[%s2] sm:$0x1]
    %v45 = vlaneseq
    %v46 = vshrl.u32 %v45, 7
    %v47 = vsub.s32 0, %v46
    %v48 = vrot.slane %v43, %v47
    %v51 = vunpack.c.l.b16 %v24
    %v52 = vunpack.c.h.b16 %v24
    %v53 = vpack.c.b16 %v51, %v51
    %v54 = vpack.c.b16 %v52, %v52
    %v74 = vunpack.c.l.b16 %v25
    %v75 = vunpack.c.l.b16 %v26
    %v76 = vunpack.c.l.b16 %v27
    %v77 = vunpack.c.l.b16 %v28
    %v78 = vunpack.c.l.b16 %v29
    %v79 = vunpack.c.l.b16 %v30
    %v80 = vunpack.c.l.b16 %v31
    %v81 = vunpack.c.l.b16 %v32
    %v82 = vunpack.c.l.b16 %v33
    %v83 = vunpack.c.l.b16 %v34
    %v84 = vunpack.c.l.b16 %v35
    %v85 = vunpack.c.l.b16 %v36
    %v86 = vunpack.c.l.b16 %v37
    %v87 = vunpack.c.l.b16 %v38
    %v88 = vunpack.c.l.b16 %v39
    %v89 = vunpack.c.l.b16 %v40
    %v90 = vunpack.c.l.b16 %v41
    %v91 = vunpack.c.l.b16 %v42
    %v92 = vpack.c.b16 %v75, %v74
    %v93 = vpack.c.b16 %v77, %v76
    %v94 = vpack.c.b16 %v79, %v78
    %v95 = vpack.c.b16 %v81, %v80
    %v96 = vpack.c.b16 %v83, %v82
    %v97 = vpack.c.b16 %v85, %v84
    %v98 = vpack.c.b16 %v87, %v86
    %v99 = vpack.c.b16 %v89, %v88
    %v100 = vpack.c.b16 %v91, %v90
    %vm110 = vcmask 130048
    %v112 = vsel %vm110, %v54, 0
    %114 = vmatprep.subr.bf16.mxu0 0
    %115 = vmatpush1.bf16.msra.mxu0 %v99
    %116 = vmatprep.subr.bf16.mxu0 0
    %117 = vmatpush1.bf16.msra.mxu0 %v98
    %118 = vmatprep.subr.bf16.mxu0 0
    %119 = vmatpush1.bf16.msra.mxu0 %v97
    %120 = vmatprep.subr.bf16.mxu0 0
    %121 = vmatpush1.bf16.msra.mxu0 %v96
    %122 = vmatprep.subr.bf16.mxu0 0
    %123 = vmatpush1.bf16.msra.mxu0 %v95
    %124 = vmatprep.subr.bf16.mxu0 0
    %125 = vmatpush1.bf16.msra.mxu0 %v94
    %126 = vmatprep.subr.bf16.mxu0 0
    %127 = vmatpush1.bf16.msra.mxu0 %v93
    %128 = vmatprep.subr.bf16.mxu0 0
    %129 = vmatpush1.bf16.msra.mxu0 %v92
    %130 = vmatprep.subr.bf16.mxu0 0
    %131 = vmatpush2.bf16.msra.mxu0 0
    %132 = vmatprep.subr.bf16.mxu0 0
    %133 = vmatpush2.bf16.msra.mxu0 0
    %134 = vmatprep.subr.bf16.mxu0 0
    %135 = vmatpush2.bf16.msra.mxu0 0
    %136 = vmatprep.subr.bf16.mxu0 0
    %137 = vmatpush2.bf16.msra.mxu0 0
    %138 = vmatprep.subr.bf16.mxu0 0
    %139 = vmatpush2.bf16.msra.mxu0 0
    %140 = vmatprep.subr.bf16.mxu0 0
    %141 = vmatpush2.bf16.msra.mxu0 0
    %142 = vmatprep.subr.bf16.mxu0 0
    %143 = vmatpush2.bf16.msra.mxu0 0
    %144 = vmatprep.subr.bf16.mxu0 0
    %145 = vmatpush2.bf16.msra.mxu0 %v100
    %146 = vmatprep.mubr.bf16.mxu0 %v112
    %147 = vmatmul.mubr.bf16.gmra.mxu0 %v53
    %v148 = vpop.f32.mrf.mxu0
    %v149 = vadd.f32 %v48, %v148
    %v150 = vpop.f32.mrf.mxu0
    %v151 = vpop.f32.mrf.mxu0
    %v152 = vpop.f32.mrf.mxu0
    %153 = vdwg.mxu0
    %v154 = vsub.f32 0.0, %v149
    %v155 = vmul.f32 %v154, 1.442695
    %v156 = vpow.pop %v155
    %v157 = vadd.f32 %v156, 1.0
    %v158 = vrcp.pop %v157
    %v159 = vmul.f32 %v149, %v158
    %160 = vst.msk [vmem:[%s5] sm:$0xff] %vm110, %v159
    %v161 = vpack.c.bf16 %v159, %v159
    %v162 = vld [vmem:[%s3] sm:$0xf]
    %v163 = vld [vmem:[%s3 + $0x4] sm:$0xf]
    %v164 = vld [vmem:[%s4] sm:$0x1]
    %v166 = vlaneseq
    %v167 = vshrl.u32 %v166, 7
    %v168 = vsub.s32 0, %v167
    %v169 = vrot.slane %v164, %v168
    %v173 = vunpack.c.l.b16 %v162
    %v174 = vunpack.c.l.b16 %v163
    %v175 = vpack.c.b16 %v174, %v173
    %v178 = vsel %vm110, %v161, 0
    %180 = vmatprep.subr.bf16.mxu0 0
    %181 = vmatpush1.bf16.msra.mxu0 0
    %182 = vmatprep.subr.bf16.mxu0 0
    %183 = vmatpush1.bf16.msra.mxu0 0
    %184 = vmatprep.subr.bf16.mxu0 0
    %185 = vmatpush1.bf16.msra.mxu0 0
    %186 = vmatprep.subr.bf16.mxu0 0
    %187 = vmatpush1.bf16.msra.mxu0 0
    %188 = vmatprep.subr.bf16.mxu0 0
    %189 = vmatpush1.bf16.msra.mxu0 0
    %190 = vmatprep.subr.bf16.mxu0 0
    %191 = vmatpush1.bf16.msra.mxu0 0
    %192 = vmatprep.subr.bf16.mxu0 0
    %193 = vmatpush1.bf16.msra.mxu0 0
    %194 = vmatprep.subr.bf16.mxu0 0
    %195 = vmatpush1.bf16.msra.mxu0 %v175
    %196 = vmatprep.subr.bf16.mxu0 0
    %197 = vmatpush2.bf16.msra.mxu0 0
    %198 = vmatprep.subr.bf16.mxu0 0
    %199 = vmatpush2.bf16.msra.mxu0 0
    %200 = vmatprep.subr.bf16.mxu0 0
    %201 = vmatpush2.bf16.msra.mxu0 0
    %202 = vmatprep.subr.bf16.mxu0 0
    %203 = vmatpush2.bf16.msra.mxu0 0
    %204 = vmatprep.subr.bf16.mxu0 0
    %205 = vmatpush2.bf16.msra.mxu0 0
    %206 = vmatprep.subr.bf16.mxu0 0
    %207 = vmatpush2.bf16.msra.mxu0 0
    %208 = vmatprep.subr.bf16.mxu0 0
    %209 = vmatpush2.bf16.msra.mxu0 0
    %210 = vmatprep.subr.bf16.mxu0 0
    %211 = vmatpush2.bf16.msra.mxu0 0
    %212 = vmatprep.mubr.bf16.mxu0 0
    %213 = vmatmul.mubr.bf16.gmra.mxu0 %v178
    %v214 = vpop.f32.mrf.mxu0
    %v215 = vadd.f32 %v169, %v214
    %v216 = vpop.f32.mrf.mxu0
    %v217 = vpop.f32.mrf.mxu0
    %v218 = vpop.f32.mrf.mxu0
    %219 = vdwg.mxu0
    %220 = vst.msk [vmem:[#allocation2] sm:$0xff] %vm110, %v215
    // Predicated region
    $region22: #{pose_guider_forward.29} parent=1 // pred_check
      _
    $region23: #{pose_guider_forward.29} parent=1 // pred_check_branch
      %222 = sbr.rel (0) target = $region25
    $region24: #{pose_guider_forward.29} parent=1 // pred_region
      _
    $region25: #{pose_guider_forward.29} parent=1 // pred_fallthru
      _
    // Predicated region
    $region26: #{pose_guider_forward.29} parent=1 // pred_check
      _
    $region27: #{pose_guider_forward.29} parent=1 // pred_check_branch
      %224 = sbr.rel (0) target = $region29
    $region28: #{pose_guider_forward.29} parent=1 // pred_region
      %s226 = ssub.s32 128, 128
      %227 = vsyncadd [#allocation3], %s226
      %s229 = sshll.u32 [#allocation2], 4
      %s230 = int_to_ptr.vmem [resolvable:$true] %s229
      %232 = dma.vmem_to_hbm [thread:$0]  %s230, 128, %s6, [#allocation3]
    $region29: #{pose_guider_forward.29} parent=1 // pred_fallthru
      _
    // Predicated region
    $region30: #{pose_guider_forward.29} parent=1 // pred_check
      _
    $region31: #{pose_guider_forward.29} parent=1 // pred_check_branch
      %234 = sbr.rel (0) target = $region33
    $region32: #{pose_guider_forward.29} parent=1 // pred_region
      _
    $region33: #{pose_guider_forward.29} parent=1 // pred_fallthru
      _
    // Predicated region
    $region34: #{pose_guider_forward.29} parent=1 // pred_check
      _
    $region35: #{pose_guider_forward.29} parent=1 // pred_check_branch
      %236 = sbr.rel (0) target = $region37
    $region36: #{pose_guider_forward.29} parent=1 // pred_region
      %237 = dma.done [#allocation3], 128
    $region37: #{pose_guider_forward.29} parent=1 // pred_fallthru
      _
    %238 = vsyncpa [#allocation3], 1

// kernel: pose_guider_forward.30
$region0: #{pose_guider_forward.30}
  #allocation0 [shape = 'u32[]', space=smem, size = 0x4, offset = 0x4, fixed_abs, tag = 'smem constant byte address 0x4 - core index']
  #allocation1 [shape = 'u32[144,128]{1,0:T(1,128)}', space=vmem, size = 0x12000, scoped, tag = 'internal scratch']
  %s0 = inlined_call_operand.vmem [shape: bf16[2,144], index: 0, kind: input, shape index: {}]
  %s1 = inlined_call_operand.vmem [shape: bf16[144,32], index: 1, kind: input, shape index: {}]
  %s2 = inlined_call_operand.vmem [shape: f32[1,32], index: 2, kind: input, shape index: {}]
  %s3 = inlined_call_operand.vmem [shape: f32[2,32], index: 3, kind: output, shape index: {}]
  %s4 = sld [smem:[#allocation0]]
  $region22: #{pose_guider_forward.30} parent=0
    _
  %s6 = ssub.s32 1, %s4
  %s7 = scalar_select 0, %s6, %s4
  // Predicated region
  $region2: #{pose_guider_forward.30} parent=0 // pred_check
    _
  $region3: #{pose_guider_forward.30} parent=0 // pred_check_branch
    %9 = sbr.rel (0) target = $region5
  $region4: #{pose_guider_forward.30} parent=0 // pred_region
    _
  $region5: #{pose_guider_forward.30} parent=0 // pred_fallthru
    _
  // Predicated region
  $region6: #{pose_guider_forward.30} parent=0 // pred_check
    _
  $region7: #{pose_guider_forward.30} parent=0 // pred_check_branch
    %11 = sbr.rel (0) target = $region9
  $region8: #{pose_guider_forward.30} parent=0 // pred_region
    _
  $region9: #{pose_guider_forward.30} parent=0 // pred_fallthru
    _
  // Predicated region
  $region10: #{pose_guider_forward.30} parent=0 // pred_check
    _
  $region11: #{pose_guider_forward.30} parent=0 // pred_check_branch
    %13 = sbr.rel (0) target = $region13
  $region12: #{pose_guider_forward.30} parent=0 // pred_region
    _
  $region13: #{pose_guider_forward.30} parent=0 // pred_fallthru
    _
  %v15 = vld [vmem:[%s0] sm:$0x3]
  %v16 = vld [vmem:[%s1] sm:$0xf]
  %v17 = vld [vmem:[%s1 + $0x4] sm:$0xf]
  %v18 = vld [vmem:[%s1 + $0x8] sm:$0xf]
  %v19 = vld [vmem:[%s1 + $0xc] sm:$0xf]
  %v20 = vld [vmem:[%s1 + $0x10] sm:$0xf]
  %v21 = vld [vmem:[%s1 + $0x14] sm:$0xf]
  %v22 = vld [vmem:[%s1 + $0x18] sm:$0xf]
  %v23 = vld [vmem:[%s1 + $0x1c] sm:$0xf]
  %v24 = vld [vmem:[%s1 + $0x20] sm:$0xf]
  %v25 = vld [vmem:[%s1 + $0x24] sm:$0xf]
  %v26 = vld [vmem:[%s1 + $0x28] sm:$0xf]
  %v27 = vld [vmem:[%s1 + $0x2c] sm:$0xf]
  %v28 = vld [vmem:[%s1 + $0x30] sm:$0xf]
  %v29 = vld [vmem:[%s1 + $0x34] sm:$0xf]
  %v30 = vld [vmem:[%s1 + $0x38] sm:$0xf]
  %v31 = vld [vmem:[%s1 + $0x3c] sm:$0xf]
  %v32 = vld [vmem:[%s1 + $0x40] sm:$0xf]
  %v33 = vld [vmem:[%s1 + $0x44] sm:$0xf]
  %v34 = vld [vmem:[%s2] sm:$0x1]
  %v36 = vlaneseq
  %v37 = vshrl.u32 %v36, 7
  %v38 = vsub.s32 0, %v37
  %v39 = vrot.slane %v34, %v38
  %v43 = vunpack.c.l.s4 1966171168
  %v44 = vunpack.c.0.s8 %v43
  %v45 = vlaneseq
  %v46 = vshrl.u32 %v45, 7
  %v47 = vsub.s32 %v44, %v46
  %v48 = vrot.slane %v15, %v47
  %v49 = vcombine.high %v48, %v48
  %v51 = vunpack.c.l.s4 1966171168
  %v52 = vunpack.c.0.s8 %v51
  %v53 = vlaneseq
  %v54 = vshrl.u32 %v53, 7
  %v55 = vsub.s32 %v52, %v54
  %v56 = vrot.slane %v48, %v55
  %v58 = vunpack.c.l.s4 1966171168
  %v59 = vunpack.c.0.s8 %v58
  %v60 = vlaneseq
  %v61 = vshrl.u32 %v60, 7
  %v62 = vsub.s32 %v59, %v61
  %v63 = vrot.slane %v49, %v62
  %v83 = vunpack.c.l.b16 %v16
  %v84 = vunpack.c.l.b16 %v17
  %v85 = vunpack.c.l.b16 %v18
  %v86 = vunpack.c.l.b16 %v19
  %v87 = vunpack.c.l.b16 %v20
  %v88 = vunpack.c.l.b16 %v21
  %v89 = vunpack.c.l.b16 %v22
  %v90 = vunpack.c.l.b16 %v23
  %v91 = vunpack.c.l.b16 %v24
  %v92 = vunpack.c.l.b16 %v25
  %v93 = vunpack.c.l.b16 %v26
  %v94 = vunpack.c.l.b16 %v27
  %v95 = vunpack.c.l.b16 %v28
  %v96 = vunpack.c.l.b16 %v29
  %v97 = vunpack.c.l.b16 %v30
  %v98 = vunpack.c.l.b16 %v31
  %v99 = vunpack.c.l.b16 %v32
  %v100 = vunpack.c.l.b16 %v33
  %v101 = vpack.c.b16 %v84, %v83
  %v102 = vpack.c.b16 %v86, %v85
  %v103 = vpack.c.b16 %v88, %v87
  %v104 = vpack.c.b16 %v90, %v89
  %v105 = vpack.c.b16 %v92, %v91
  %v106 = vpack.c.b16 %v94, %v93
  %v107 = vpack.c.b16 %v96, %v95
  %v108 = vpack.c.b16 %v98, %v97
  %v109 = vpack.c.b16 %v100, %v99
  %vm119 = vcmask 130048
  %v121 = vsel %vm119, %v63, 0
  %123 = vmatprep.subr.bf16.mxu0 0
  %124 = vmatpush1.bf16.msra.mxu0 %v108
  %125 = vmatprep.subr.bf16.mxu0 0
  %126 = vmatpush1.bf16.msra.mxu0 %v107
  %127 = vmatprep.subr.bf16.mxu0 0
  %128 = vmatpush1.bf16.msra.mxu0 %v106
  %129 = vmatprep.subr.bf16.mxu0 0
  %130 = vmatpush1.bf16.msra.mxu0 %v105
  %131 = vmatprep.subr.bf16.mxu0 0
  %132 = vmatpush1.bf16.msra.mxu0 %v104
  %133 = vmatprep.subr.bf16.mxu0 0
  %134 = vmatpush1.bf16.msra.mxu0 %v103
  %135 = vmatprep.subr.bf16.mxu0 0
  %136 = vmatpush1.bf16.msra.mxu0 %v102
  %137 = vmatprep.subr.bf16.mxu0 0
  %138 = vmatpush1.bf16.msra.mxu0 %v101
  %139 = vmatprep.subr.bf16.mxu0 0
  %140 = vmatpush2.bf16.msra.mxu0 0
  %141 = vmatprep.subr.bf16.mxu0 0
  %142 = vmatpush2.bf16.msra.mxu0 0
  %143 = vmatprep.subr.bf16.mxu0 0
  %144 = vmatpush2.bf16.msra.mxu0 0
  %145 = vmatprep.subr.bf16.mxu0 0
  %146 = vmatpush2.bf16.msra.mxu0 0
  %147 = vmatprep.subr.bf16.mxu0 0
  %148 = vmatpush2.bf16.msra.mxu0 0
  %149 = vmatprep.subr.bf16.mxu0 0
  %150 = vmatpush2.bf16.msra.mxu0 0
  %151 = vmatprep.subr.bf16.mxu0 0
  %152 = vmatpush2.bf16.msra.mxu0 0
  %153 = vmatprep.subr.bf16.mxu0 0
  %154 = vmatpush2.bf16.msra.mxu0 %v109
  %155 = vmatprep.mubr.bf16.mxu0 %v121
  %156 = vmatmul.mubr.bf16.gmra.mxu0 %v56
  %v157 = vpop.f32.mrf.mxu0
  %v158 = vadd.f32 %v39, %v157
  %v159 = vpop.f32.mrf.mxu0
  %v160 = vpop.f32.mrf.mxu0
  %v161 = vpop.f32.mrf.mxu0
  %162 = vdwg.mxu0
  %v163 = vsub.f32 0.0, %v158
  %v164 = vmul.f32 %v163, 1.442695
  %v165 = vpow.pop %v164
  %v166 = vadd.f32 %v165, 1.0
  %v167 = vrcp.pop %v166
  %v168 = vmul.f32 %v158, %v167
  %vm169 = vcmask 254976
  %170 = vst.msk [vmem:[%s3] sm:$0x3] %vm169, %v168
  // Predicated region
  $region14: #{pose_guider_forward.30} parent=0 // pred_check
    _
  $region15: #{pose_guider_forward.30} parent=0 // pred_check_branch
    %172 = sbr.rel (0) target = $region17
  $region16: #{pose_guider_forward.30} parent=0 // pred_region
    _
  $region17: #{pose_guider_forward.30} parent=0 // pred_fallthru
    _
  // Predicated region
  $region18: #{pose_guider_forward.30} parent=0 // pred_check
    _
  $region19: #{pose_guider_forward.30} parent=0 // pred_check_branch
    %174 = sbr.rel (0) target = $region21
  $region20: #{pose_guider_forward.30} parent=0 // pred_region
    _
  $region21: #{pose_guider_forward.30} parent=0 // pred_fallthru
    _

// kernel: pose_guider_forward.32
$region0: #{pose_guider_forward.32}
  #allocation0 [shape = 'u32[]', space=smem, size = 0x4, offset = 0x4, fixed_abs, tag = 'smem constant byte address 0x4 - core index']
  #allocation1 [shape = 'u32[144,128]{1,0:T(1,128)}', space=vmem, size = 0x12000, scoped, tag = 'internal scratch']
  %s0 = inlined_call_operand.vmem [shape: bf16[2,288], index: 0, kind: input, shape index: {}]
  %s1 = inlined_call_operand.vmem [shape: bf16[288,32], index: 1, kind: input, shape index: {}]
  %s2 = inlined_call_operand.vmem [shape: f32[1,32], index: 2, kind: input, shape index: {}]
  %s3 = inlined_call_operand.vmem [shape: f32[2,32], index: 3, kind: output, shape index: {}]
  %s4 = sld [smem:[#allocation0]]
  $region22: #{pose_guider_forward.32} parent=0
    _
  %s6 = ssub.s32 1, %s4
  %s7 = scalar_select 0, %s6, %s4
  // Predicated region
  $region2: #{pose_guider_forward.32} parent=0 // pred_check
    _
  $region3: #{pose_guider_forward.32} parent=0 // pred_check_branch
    %9 = sbr.rel (0) target = $region5
  $region4: #{pose_guider_forward.32} parent=0 // pred_region
    _
  $region5: #{pose_guider_forward.32} parent=0 // pred_fallthru
    _
  // Predicated region
  $region6: #{pose_guider_forward.32} parent=0 // pred_check
    _
  $region7: #{pose_guider_forward.32} parent=0 // pred_check_branch
    %11 = sbr.rel (0) target = $region9
  $region8: #{pose_guider_forward.32} parent=0 // pred_region
    _
  $region9: #{pose_guider_forward.32} parent=0 // pred_fallthru
    _
  // Predicated region
  $region10: #{pose_guider_forward.32} parent=0 // pred_check
    _
  $region11: #{pose_guider_forward.32} parent=0 // pred_check_branch
    %13 = sbr.rel (0) target = $region13
  $region12: #{pose_guider_forward.32} parent=0 // pred_region
    _
  $region13: #{pose_guider_forward.32} parent=0 // pred_fallthru
    _
  %v15 = vld [vmem:[%s0] sm:$0x7]
  %v16 = vld [vmem:[%s1] sm:$0xf]
  %v17 = vld [vmem:[%s1 + $0x4] sm:$0xf]
  %v18 = vld [vmem:[%s1 + $0x8] sm:$0xf]
  %v19 = vld [vmem:[%s1 + $0xc] sm:$0xf]
  %v20 = vld [vmem:[%s1 + $0x10] sm:$0xf]
  %v21 = vld [vmem:[%s1 + $0x14] sm:$0xf]
  %v22 = vld [vmem:[%s1 + $0x18] sm:$0xf]
  %v23 = vld [vmem:[%s1 + $0x1c] sm:$0xf]
  %v24 = vld [vmem:[%s1 + $0x20] sm:$0xf]
  %v25 = vld [vmem:[%s1 + $0x24] sm:$0xf]
  %v26 = vld [vmem:[%s1 + $0x28] sm:$0xf]
  %v27 = vld [vmem:[%s1 + $0x2c] sm:$0xf]
  %v28 = vld [vmem:[%s1 + $0x30] sm:$0xf]
  %v29 = vld [vmem:[%s1 + $0x34] sm:$0xf]
  %v30 = vld [vmem:[%s1 + $0x38] sm:$0xf]
  %v31 = vld [vmem:[%s1 + $0x3c] sm:$0xf]
  %v32 = vld [vmem:[%s1 + $0x40] sm:$0xf]
  %v33 = vld [vmem:[%s1 + $0x44] sm:$0xf]
  %v34 = vld [vmem:[%s1 + $0x48] sm:$0xf]
  %v35 = vld [vmem:[%s1 + $0x4c] sm:$0xf]
  %v36 = vld [vmem:[%s1 + $0x50] sm:$0xf]
  %v37 = vld [vmem:[%s1 + $0x54] sm:$0xf]
  %v38 = vld [vmem:[%s1 + $0x58] sm:$0xf]
  %v39 = vld [vmem:[%s1 + $0x5c] sm:$0xf]
  %v40 = vld [vmem:[%s1 + $0x60] sm:$0xf]
  %v41 = vld [vmem:[%s1 + $0x64] sm:$0xf]
  %v42 = vld [vmem:[%s1 + $0x68] sm:$0xf]
  %v43 = vld [vmem:[%s1 + $0x6c] sm:$0xf]
  %v44 = vld [vmem:[%s1 + $0x70] sm:$0xf]
  %v45 = vld [vmem:[%s1 + $0x74] sm:$0xf]
  %v46 = vld [vmem:[%s1 + $0x78] sm:$0xf]
  %v47 = vld [vmem:[%s1 + $0x7c] sm:$0xf]
  %v48 = vld [vmem:[%s1 + $0x80] sm:$0xf]
  %v49 = vld [vmem:[%s1 + $0x84] sm:$0xf]
  %v50 = vld [vmem:[%s1 + $0x88] sm:$0xf]
  %v51 = vld [vmem:[%s1 + $0x8c] sm:$0xf]
  %v52 = vld [vmem:[%s2] sm:$0x1]
  %v54 = vlaneseq
  %v55 = vshrl.u32 %v54, 7
  %v56 = vsub.s32 0, %v55
  %v57 = vrot.slane %v52, %v56
  %v61 = vunpack.c.l.s4 1966171168
  %v62 = vunpack.c.0.s8 %v61
  %v63 = vlaneseq
  %v64 = vshrl.u32 %v63, 7
  %v65 = vsub.s32 %v62, %v64
  %v66 = vrot.slane %v15, %v65
  %v67 = vcombine.high %v66, %v66
  %v69 = vunpack.c.l.s4 1966171168
  %v70 = vunpack.c.0.s8 %v69
  %v71 = vlaneseq
  %v72 = vshrl.u32 %v71, 7
  %v73 = vsub.s32 %v70, %v72
  %v74 = vrot.slane %v66, %v73
  %v76 = vunpack.c.l.s4 1966171168
  %v77 = vunpack.c.0.s8 %v76
  %v78 = vlaneseq
  %v79 = vshrl.u32 %v78, 7
  %v80 = vsub.s32 %v77, %v79
  %v81 = vrot.slane %v67, %v80
  %v82 = vcombine.high %v74, %v74
  %v121 = vunpack.c.l.b16 %v16
  %v122 = vunpack.c.l.b16 %v17
  %v123 = vunpack.c.l.b16 %v18
  %v124 = vunpack.c.l.b16 %v19
  %v125 = vunpack.c.l.b16 %v20
  %v126 = vunpack.c.l.b16 %v21
  %v127 = vunpack.c.l.b16 %v22
  %v128 = vunpack.c.l.b16 %v23
  %v129 = vunpack.c.l.b16 %v24
  %v130 = vunpack.c.l.b16 %v25
  %v131 = vunpack.c.l.b16 %v26
  %v132 = vunpack.c.l.b16 %v27
  %v133 = vunpack.c.l.b16 %v28
  %v134 = vunpack.c.l.b16 %v29
  %v135 = vunpack.c.l.b16 %v30
  %v136 = vunpack.c.l.b16 %v31
  %v137 = vunpack.c.l.b16 %v32
  %v138 = vunpack.c.l.b16 %v33
  %v139 = vunpack.c.l.b16 %v34
  %v140 = vunpack.c.l.b16 %v35
  %v141 = vunpack.c.l.b16 %v36
  %v142 = vunpack.c.l.b16 %v37
  %v143 = vunpack.c.l.b16 %v38
  %v144 = vunpack.c.l.b16 %v39
  %v145 = vunpack.c.l.b16 %v40
  %v146 = vunpack.c.l.b16 %v41
  %v147 = vunpack.c.l.b16 %v42
  %v148 = vunpack.c.l.b16 %v43
  %v149 = vunpack.c.l.b16 %v44
  %v150 = vunpack.c.l.b16 %v45
  %v151 = vunpack.c.l.b16 %v46
  %v152 = vunpack.c.l.b16 %v47
  %v153 = vunpack.c.l.b16 %v48
  %v154 = vunpack.c.l.b16 %v49
  %v155 = vunpack.c.l.b16 %v50
  %v156 = vunpack.c.l.b16 %v51
  %v157 = vpack.c.b16 %v122, %v121
  %v158 = vpack.c.b16 %v124, %v123
  %v159 = vpack.c.b16 %v126, %v125
  %v160 = vpack.c.b16 %v128, %v127
  %v161 = vpack.c.b16 %v130, %v129
  %v162 = vpack.c.b16 %v132, %v131
  %v163 = vpack.c.b16 %v134, %v133
  %v164 = vpack.c.b16 %v136, %v135
  %v165 = vpack.c.b16 %v138, %v137
  %v166 = vpack.c.b16 %v140, %v139
  %v167 = vpack.c.b16 %v142, %v141
  %v168 = vpack.c.b16 %v144, %v143
  %v169 = vpack.c.b16 %v146, %v145
  %v170 = vpack.c.b16 %v148, %v147
  %v171 = vpack.c.b16 %v150, %v149
  %v172 = vpack.c.b16 %v152, %v151
  %v173 = vpack.c.b16 %v154, %v153
  %v174 = vpack.c.b16 %v156, %v155
  %vm193 = vcmask 261120
  %v195 = vsel %vm193, %v82, 0
  %197 = vmatprep.subr.bf16.mxu0 0
  %198 = vmatpush1.bf16.msra.mxu0 %v164
  %199 = vmatprep.subr.bf16.mxu0 0
  %200 = vmatpush1.bf16.msra.mxu0 %v163
  %201 = vmatprep.subr.bf16.mxu0 0
  %202 = vmatpush1.bf16.msra.mxu0 %v162
  %203 = vmatprep.subr.bf16.mxu0 0
  %204 = vmatpush1.bf16.msra.mxu0 %v161
  %205 = vmatprep.subr.bf16.mxu0 0
  %206 = vmatpush1.bf16.msra.mxu0 %v160
  %207 = vmatprep.subr.bf16.mxu0 0
  %208 = vmatpush1.bf16.msra.mxu0 %v159
  %209 = vmatprep.subr.bf16.mxu0 0
  %210 = vmatpush1.bf16.msra.mxu0 %v158
  %211 = vmatprep.subr.bf16.mxu0 0
  %212 = vmatpush1.bf16.msra.mxu0 %v157
  %213 = vmatprep.subr.bf16.mxu0 0
  %214 = vmatpush2.bf16.msra.mxu0 %v172
  %215 = vmatprep.subr.bf16.mxu0 0
  %216 = vmatpush2.bf16.msra.mxu0 %v171
  %217 = vmatprep.subr.bf16.mxu0 0
  %218 = vmatpush2.bf16.msra.mxu0 %v170
  %219 = vmatprep.subr.bf16.mxu0 0
  %220 = vmatpush2.bf16.msra.mxu0 %v169
  %221 = vmatprep.subr.bf16.mxu0 0
  %222 = vmatpush2.bf16.msra.mxu0 %v168
  %223 = vmatprep.subr.bf16.mxu0 0
  %224 = vmatpush2.bf16.msra.mxu0 %v167
  %225 = vmatprep.subr.bf16.mxu0 0
  %226 = vmatpush2.bf16.msra.mxu0 %v166
  %227 = vmatprep.subr.bf16.mxu0 0
  %228 = vmatpush2.bf16.msra.mxu0 %v165
  %229 = vmatprep.mubr.bf16.mxu0 %v81
  %230 = vmatmul.mubr.bf16.gmra.mxu0 %v74
  %v231 = vpop.f32.mrf.mxu0
  %v232 = vadd.f32 %v57, %v231
  %v233 = vpop.f32.mrf.mxu0
  %v234 = vpop.f32.mrf.mxu0
  %v235 = vpop.f32.mrf.mxu0
  %236 = vdwg.mxu0
  %237 = vmatprep.subr.bf16.mxu0 0
  %238 = vmatpush1.bf16.msra.mxu0 0
  %239 = vmatprep.subr.bf16.mxu0 0
  %240 = vmatpush1.bf16.msra.mxu0 0
  %241 = vmatprep.subr.bf16.mxu0 0
  %242 = vmatpush1.bf16.msra.mxu0 0
  %243 = vmatprep.subr.bf16.mxu0 0
  %244 = vmatpush1.bf16.msra.mxu0 0
  %245 = vmatprep.subr.bf16.mxu0 0
  %246 = vmatpush1.bf16.msra.mxu0 0
  %247 = vmatprep.subr.bf16.mxu0 0
  %248 = vmatpush1.bf16.msra.mxu0 0
  %249 = vmatprep.subr.bf16.mxu0 0
  %250 = vmatpush1.bf16.msra.mxu0 %v174
  %251 = vmatprep.subr.bf16.mxu0 0
  %252 = vmatpush1.bf16.msra.mxu0 %v173
  %253 = vmatprep.subr.bf16.mxu0 0
  %254 = vmatpush2.bf16.msra.mxu0 0
  %255 = vmatprep.subr.bf16.mxu0 0
  %256 = vmatpush2.bf16.msra.mxu0 0
  %257 = vmatprep.subr.bf16.mxu0 0
  %258 = vmatpush2.bf16.msra.mxu0 0
  %259 = vmatprep.subr.bf16.mxu0 0
  %260 = vmatpush2.bf16.msra.mxu0 0
  %261 = vmatprep.subr.bf16.mxu0 0
  %262 = vmatpush2.bf16.msra.mxu0 0
  %263 = vmatprep.subr.bf16.mxu0 0
  %264 = vmatpush2.bf16.msra.mxu0 0
  %265 = vmatprep.subr.bf16.mxu0 0
  %266 = vmatpush2.bf16.msra.mxu0 0
  %267 = vmatprep.subr.bf16.mxu0 0
  %268 = vmatpush2.bf16.msra.mxu0 0
  %269 = vmatprep.mubr.bf16.mxu0 0
  %270 = vmatmul.mubr.bf16.gmra.mxu0 %v195
  %v271 = vpop.f32.mrf.mxu0
  %v272 = vadd.f32 %v232, %v271
  %v273 = vpop.f32.mrf.mxu0
  %v274 = vpop.f32.mrf.mxu0
  %v275 = vpop.f32.mrf.mxu0
  %276 = vdwg.mxu0
  %v277 = vsub.f32 0.0, %v272
  %v278 = vmul.f32 %v277, 1.442695
  %v279 = vpow.pop %v278
  %v280 = vadd.f32 %v279, 1.0
  %v281 = vrcp.pop %v280
  %v282 = vmul.f32 %v272, %v281
  %vm283 = vcmask 254976
  %284 = vst.msk [vmem:[%s3] sm:$0x3] %vm283, %v282
  // Predicated region
  $region14: #{pose_guider_forward.32} parent=0 // pred_check
    _
  $region15: #{pose_guider_forward.32} parent=0 // pred_check_branch
    %286 = sbr.rel (0) target = $region17
  $region16: #{pose_guider_forward.32} parent=0 // pred_region
    _
  $region17: #{pose_guider_forward.32} parent=0 // pred_fallthru
    _
  // Predicated region
  $region18: #{pose_guider_forward.32} parent=0 // pred_check
    _
  $region19: #{pose_guider_forward.32} parent=0 // pred_check_branch
    %288 = sbr.rel (0) target = $region21
  $region20: #{pose_guider_forward.32} parent=0 // pred_region
    _
  $region21: #{pose_guider_forward.32} parent=0 // pred_fallthru
    _

// kernel: pose_guider_forward.31
$region0: #{pose_guider_forward.31}
  #allocation0 [shape = 'u32[]', space=smem, size = 0x4, offset = 0x4, fixed_abs, tag = 'smem constant byte address 0x4 - core index']
  #allocation1 [shape = 'u32[144,128]{1,0:T(1,128)}', space=vmem, size = 0x12000, scoped, tag = 'internal scratch']
  %s0 = inlined_call_operand.vmem [shape: bf16[2,288], index: 0, kind: input, shape index: {}]
  %s1 = inlined_call_operand.vmem [shape: bf16[288,32], index: 1, kind: input, shape index: {}]
  %s2 = inlined_call_operand.vmem [shape: f32[1,32], index: 2, kind: input, shape index: {}]
  %s3 = inlined_call_operand.vmem [shape: bf16[32,32], index: 3, kind: input, shape index: {}]
  %s4 = inlined_call_operand.vmem [shape: f32[1,32], index: 4, kind: input, shape index: {}]
  %s5 = inlined_call_operand.vmem [shape: f32[2,32], index: 5, kind: output, shape index: {0}]
  %s6 = inlined_call_operand.hbm [shape: f32[2,32], index: 6, kind: output, shape index: {1}]
  %7 = xla_tuple %s5, %s6
  %s8 = sld [smem:[#allocation0]]
  $region38: #{pose_guider_forward.31} parent=0
    _
  %s10 = ssub.s32 1, %s8
  %s11 = scalar_select 0, %s10, %s8
  $region1: #{pose_guider_forward.31} parent=0
    #allocation2 [shape = 'u8[1024]{0}', space=vmem, size = 0x400, scoped, tag = 'output window, operand 1, single buffered']
    #allocation3 [shape = 's32[1]{0}', space=sflag, size = 0x4, scoped, tag = 'scoped memory for pose_guider_forward.31']
    %12 = vsyncpa [#allocation3], 0
    // Predicated region
    $region2: #{pose_guider_forward.31} parent=1 // pred_check
      _
    $region3: #{pose_guider_forward.31} parent=1 // pred_check_branch
      %14 = sbr.rel (0) target = $region5
    $region4: #{pose_guider_forward.31} parent=1 // pred_region
      _
    $region5: #{pose_guider_forward.31} parent=1 // pred_fallthru
      _
    // Predicated region
    $region6: #{pose_guider_forward.31} parent=1 // pred_check
      _
    $region7: #{pose_guider_forward.31} parent=1 // pred_check_branch
      %16 = sbr.rel (0) target = $region9
    $region8: #{pose_guider_forward.31} parent=1 // pred_region
      _
    $region9: #{pose_guider_forward.31} parent=1 // pred_fallthru
      _
    // Predicated region
    $region10: #{pose_guider_forward.31} parent=1 // pred_check
      _
    $region11: #{pose_guider_forward.31} parent=1 // pred_check_branch
      %18 = sbr.rel (0) target = $region13
    $region12: #{pose_guider_forward.31} parent=1 // pred_region
      _
    $region13: #{pose_guider_forward.31} parent=1 // pred_fallthru
      _
    // Predicated region
    $region14: #{pose_guider_forward.31} parent=1 // pred_check
      _
    $region15: #{pose_guider_forward.31} parent=1 // pred_check_branch
      %20 = sbr.rel (0) target = $region17
    $region16: #{pose_guider_forward.31} parent=1 // pred_region
      _
    $region17: #{pose_guider_forward.31} parent=1 // pred_fallthru
      _
    // Predicated region
    $region18: #{pose_guider_forward.31} parent=1 // pred_check
      _
    $region19: #{pose_guider_forward.31} parent=1 // pred_check_branch
      %22 = sbr.rel (0) target = $region21
    $region20: #{pose_guider_forward.31} parent=1 // pred_region
      _
    $region21: #{pose_guider_forward.31} parent=1 // pred_fallthru
      _
    %v24 = vld [vmem:[%s0] sm:$0x7]
    %v25 = vld [vmem:[%s1] sm:$0xf]
    %v26 = vld [vmem:[%s1 + $0x4] sm:$0xf]
    %v27 = vld [vmem:[%s1 + $0x8] sm:$0xf]
    %v28 = vld [vmem:[%s1 + $0xc] sm:$0xf]
    %v29 = vld [vmem:[%s1 + $0x10] sm:$0xf]
    %v30 = vld [vmem:[%s1 + $0x14] sm:$0xf]
    %v31 = vld [vmem:[%s1 + $0x18] sm:$0xf]
    %v32 = vld [vmem:[%s1 + $0x1c] sm:$0xf]
    %v33 = vld [vmem:[%s1 + $0x20] sm:$0xf]
    %v34 = vld [vmem:[%s1 + $0x24] sm:$0xf]
    %v35 = vld [vmem:[%s1 + $0x28] sm:$0xf]
    %v36 = vld [vmem:[%s1 + $0x2c] sm:$0xf]
    %v37 = vld [vmem:[%s1 + $0x30] sm:$0xf]
    %v38 = vld [vmem:[%s1 + $0x34] sm:$0xf]
    %v39 = vld [vmem:[%s1 + $0x38] sm:$0xf]
    %v40 = vld [vmem:[%s1 + $0x3c] sm:$0xf]
    %v41 = vld [vmem:[%s1 + $0x40] sm:$0xf]
    %v42 = vld [vmem:[%s1 + $0x44] sm:$0xf]
    %v43 = vld [vmem:[%s1 + $0x48] sm:$0xf]
    %v44 = vld [vmem:[%s1 + $0x4c] sm:$0xf]
    %v45 = vld [vmem:[%s1 + $0x50] sm:$0xf]
    %v46 = vld [vmem:[%s1 + $0x54] sm:$0xf]
    %v47 = vld [vmem:[%s1 + $0x58] sm:$0xf]
    %v48 = vld [vmem:[%s1 + $0x5c] sm:$0xf]
    %v49 = vld [vmem:[%s1 + $0x60] sm:$0xf]
    %v50 = vld [vmem:[%s1 + $0x64] sm:$0xf]
    %v51 = vld [vmem:[%s1 + $0x68] sm:$0xf]
    %v52 = vld [vmem:[%s1 + $0x6c] sm:$0xf]
    %v53 = vld [vmem:[%s1 + $0x70] sm:$0xf]
    %v54 = vld [vmem:[%s1 + $0x74] sm:$0xf]
    %v55 = vld [vmem:[%s1 + $0x78] sm:$0xf]
    %v56 = vld [vmem:[%s1 + $0x7c] sm:$0xf]
    %v57 = vld [vmem:[%s1 + $0x80] sm:$0xf]
    %v58 = vld [vmem:[%s1 + $0x84] sm:$0xf]
    %v59 = vld [vmem:[%s1 + $0x88] sm:$0xf]
    %v60 = vld [vmem:[%s1 + $0x8c] sm:$0xf]
    %v61 = vld [vmem:[%s2] sm:$0x1]
    %v63 = vlaneseq
    %v64 = vshrl.u32 %v63, 7
    %v65 = vsub.s32 0, %v64
    %v66 = vrot.slane %v61, %v65
    %v70 = vunpack.c.l.s4 1966171168
    %v71 = vunpack.c.0.s8 %v70
    %v72 = vlaneseq
    %v73 = vshrl.u32 %v72, 7
    %v74 = vsub.s32 %v71, %v73
    %v75 = vrot.slane %v24, %v74
    %v76 = vcombine.high %v75, %v75
    %v78 = vunpack.c.l.s4 1966171168
    %v79 = vunpack.c.0.s8 %v78
    %v80 = vlaneseq
    %v81 = vshrl.u32 %v80, 7
    %v82 = vsub.s32 %v79, %v81
    %v83 = vrot.slane %v75, %v82
    %v85 = vunpack.c.l.s4 1966171168
    %v86 = vunpack.c.0.s8 %v85
    %v87 = vlaneseq
    %v88 = vshrl.u32 %v87, 7
    %v89 = vsub.s32 %v86, %v88
    %v90 = vrot.slane %v76, %v89
    %v91 = vcombine.high %v83, %v83
    %v130 = vunpack.c.l.b16 %v25
    %v131 = vunpack.c.l.b16 %v26
    %v132 = vunpack.c.l.b16 %v27
    %v133 = vunpack.c.l.b16 %v28
    %v134 = vunpack.c.l.b16 %v29
    %v135 = vunpack.c.l.b16 %v30
    %v136 = vunpack.c.l.b16 %v31
    %v137 = vunpack.c.l.b16 %v32
    %v138 = vunpack.c.l.b16 %v33
    %v139 = vunpack.c.l.b16 %v34
    %v140 = vunpack.c.l.b16 %v35
    %v141 = vunpack.c.l.b16 %v36
    %v142 = vunpack.c.l.b16 %v37
    %v143 = vunpack.c.l.b16 %v38
    %v144 = vunpack.c.l.b16 %v39
    %v145 = vunpack.c.l.b16 %v40
    %v146 = vunpack.c.l.b16 %v41
    %v147 = vunpack.c.l.b16 %v42
    %v148 = vunpack.c.l.b16 %v43
    %v149 = vunpack.c.l.b16 %v44
    %v150 = vunpack.c.l.b16 %v45
    %v151 = vunpack.c.l.b16 %v46
    %v152 = vunpack.c.l.b16 %v47
    %v153 = vunpack.c.l.b16 %v48
    %v154 = vunpack.c.l.b16 %v49
    %v155 = vunpack.c.l.b16 %v50
    %v156 = vunpack.c.l.b16 %v51
    %v157 = vunpack.c.l.b16 %v52
    %v158 = vunpack.c.l.b16 %v53
    %v159 = vunpack.c.l.b16 %v54
    %v160 = vunpack.c.l.b16 %v55
    %v161 = vunpack.c.l.b16 %v56
    %v162 = vunpack.c.l.b16 %v57
    %v163 = vunpack.c.l.b16 %v58
    %v164 = vunpack.c.l.b16 %v59
    %v165 = vunpack.c.l.b16 %v60
    %v166 = vpack.c.b16 %v131, %v130
    %v167 = vpack.c.b16 %v133, %v132
    %v168 = vpack.c.b16 %v135, %v134
    %v169 = vpack.c.b16 %v137, %v136
    %v170 = vpack.c.b16 %v139, %v138
    %v171 = vpack.c.b16 %v141, %v140
    %v172 = vpack.c.b16 %v143, %v142
    %v173 = vpack.c.b16 %v145, %v144
    %v174 = vpack.c.b16 %v147, %v146
    %v175 = vpack.c.b16 %v149, %v148
    %v176 = vpack.c.b16 %v151, %v150
    %v177 = vpack.c.b16 %v153, %v152
    %v178 = vpack.c.b16 %v155, %v154
    %v179 = vpack.c.b16 %v157, %v156
    %v180 = vpack.c.b16 %v159, %v158
    %v181 = vpack.c.b16 %v161, %v160
    %v182 = vpack.c.b16 %v163, %v162
    %v183 = vpack.c.b16 %v165, %v164
    %vm202 = vcmask 261120
    %v204 = vsel %vm202, %v91, 0
    %206 = vmatprep.subr.bf16.mxu0 0
    %207 = vmatpush1.bf16.msra.mxu0 %v173
    %208 = vmatprep.subr.bf16.mxu0 0
    %209 = vmatpush1.bf16.msra.mxu0 %v172
    %210 = vmatprep.subr.bf16.mxu0 0
    %211 = vmatpush1.bf16.msra.mxu0 %v171
    %212 = vmatprep.subr.bf16.mxu0 0
    %213 = vmatpush1.bf16.msra.mxu0 %v170
    %214 = vmatprep.subr.bf16.mxu0 0
    %215 = vmatpush1.bf16.msra.mxu0 %v169
    %216 = vmatprep.subr.bf16.mxu0 0
    %217 = vmatpush1.bf16.msra.mxu0 %v168
    %218 = vmatprep.subr.bf16.mxu0 0
    %219 = vmatpush1.bf16.msra.mxu0 %v167
    %220 = vmatprep.subr.bf16.mxu0 0
    %221 = vmatpush1.bf16.msra.mxu0 %v166
    %222 = vmatprep.subr.bf16.mxu0 0
    %223 = vmatpush2.bf16.msra.mxu0 %v181
    %224 = vmatprep.subr.bf16.mxu0 0
    %225 = vmatpush2.bf16.msra.mxu0 %v180
    %226 = vmatprep.subr.bf16.mxu0 0
    %227 = vmatpush2.bf16.msra.mxu0 %v179
    %228 = vmatprep.subr.bf16.mxu0 0
    %229 = vmatpush2.bf16.msra.mxu0 %v178
    %230 = vmatprep.subr.bf16.mxu0 0
    %231 = vmatpush2.bf16.msra.mxu0 %v177
    %232 = vmatprep.subr.bf16.mxu0 0
    %233 = vmatpush2.bf16.msra.mxu0 %v176
    %234 = vmatprep.subr.bf16.mxu0 0
    %235 = vmatpush2.bf16.msra.mxu0 %v175
    %236 = vmatprep.subr.bf16.mxu0 0
    %237 = vmatpush2.bf16.msra.mxu0 %v174
    %238 = vmatprep.mubr.bf16.mxu0 %v90
    %239 = vmatmul.mubr.bf16.gmra.mxu0 %v83
    %v240 = vpop.f32.mrf.mxu0
    %v241 = vadd.f32 %v66, %v240
    %v242 = vpop.f32.mrf.mxu0
    %v243 = vpop.f32.mrf.mxu0
    %v244 = vpop.f32.mrf.mxu0
    %245 = vdwg.mxu0
    %246 = vmatprep.subr.bf16.mxu0 0
    %247 = vmatpush1.bf16.msra.mxu0 0
    %248 = vmatprep.subr.bf16.mxu0 0
    %249 = vmatpush1.bf16.msra.mxu0 0
    %250 = vmatprep.subr.bf16.mxu0 0
    %251 = vmatpush1.bf16.msra.mxu0 0
    %252 = vmatprep.subr.bf16.mxu0 0
    %253 = vmatpush1.bf16.msra.mxu0 0
    %254 = vmatprep.subr.bf16.mxu0 0
    %255 = vmatpush1.bf16.msra.mxu0 0
    %256 = vmatprep.subr.bf16.mxu0 0
    %257 = vmatpush1.bf16.msra.mxu0 0
    %258 = vmatprep.subr.bf16.mxu0 0
    %259 = vmatpush1.bf16.msra.mxu0 %v183
    %260 = vmatprep.subr.bf16.mxu0 0
    %261 = vmatpush1.bf16.msra.mxu0 %v182
    %262 = vmatprep.subr.bf16.mxu0 0
    %263 = vmatpush2.bf16.msra.mxu0 0
    %264 = vmatprep.subr.bf16.mxu0 0
    %265 = vmatpush2.bf16.msra.mxu0 0
    %266 = vmatprep.subr.bf16.mxu0 0
    %267 = vmatpush2.bf16.msra.mxu0 0
    %268 = vmatprep.subr.bf16.mxu0 0
    %269 = vmatpush2.bf16.msra.mxu0 0
    %270 = vmatprep.subr.bf16.mxu0 0
    %271 = vmatpush2.bf16.msra.mxu0 0
    %272 = vmatprep.subr.bf16.mxu0 0
    %273 = vmatpush2.bf16.msra.mxu0 0
    %274 = vmatprep.subr.bf16.mxu0 0
    %275 = vmatpush2.bf16.msra.mxu0 0
    %276 = vmatprep.subr.bf16.mxu0 0
    %277 = vmatpush2.bf16.msra.mxu0 0
    %278 = vmatprep.mubr.bf16.mxu0 0
    %279 = vmatmul.mubr.bf16.gmra.mxu0 %v204
    %v280 = vpop.f32.mrf.mxu0
    %v281 = vadd.f32 %v241, %v280
    %v282 = vpop.f32.mrf.mxu0
    %v283 = vpop.f32.mrf.mxu0
    %v284 = vpop.f32.mrf.mxu0
    %285 = vdwg.mxu0
    %v286 = vsub.f32 0.0, %v281
    %v287 = vmul.f32 %v286, 1.442695
    %v288 = vpow.pop %v287
    %v289 = vadd.f32 %v288, 1.0
    %v290 = vrcp.pop %v289
    %v291 = vmul.f32 %v281, %v290
    %vm292 = vcmask 254976
    %293 = vst.msk [vmem:[%s5] sm:$0x3] %vm292, %v291
    %v294 = vpack.c.bf16 %v291, %v291
    %v295 = vld [vmem:[%s3] sm:$0xf]
    %v296 = vld [vmem:[%s3 + $0x4] sm:$0xf]
    %v297 = vld [vmem:[%s3 + $0x8] sm:$0xf]
    %v298 = vld [vmem:[%s3 + $0xc] sm:$0xf]
    %v299 = vld [vmem:[%s4] sm:$0x1]
    %v301 = vlaneseq
    %v302 = vshrl.u32 %v301, 7
    %v303 = vsub.s32 0, %v302
    %v304 = vrot.slane %v299, %v303
    %v310 = vunpack.c.l.b16 %v295
    %v311 = vunpack.c.l.b16 %v296
    %v312 = vunpack.c.l.b16 %v297
    %v313 = vunpack.c.l.b16 %v298
    %v314 = vpack.c.b16 %v311, %v310
    %v315 = vpack.c.b16 %v313, %v312
    %v319 = vsel %vm202, %v294, 0
    %321 = vmatprep.subr.bf16.mxu0 0
    %322 = vmatpush1.bf16.msra.mxu0 0
    %323 = vmatprep.subr.bf16.mxu0 0
    %324 = vmatpush1.bf16.msra.mxu0 0
    %325 = vmatprep.subr.bf16.mxu0 0
    %326 = vmatpush1.bf16.msra.mxu0 0
    %327 = vmatprep.subr.bf16.mxu0 0
    %328 = vmatpush1.bf16.msra.mxu0 0
    %329 = vmatprep.subr.bf16.mxu0 0
    %330 = vmatpush1.bf16.msra.mxu0 0
    %331 = vmatprep.subr.bf16.mxu0 0
    %332 = vmatpush1.bf16.msra.mxu0 0
    %333 = vmatprep.subr.bf16.mxu0 0
    %334 = vmatpush1.bf16.msra.mxu0 %v315
    %335 = vmatprep.subr.bf16.mxu0 0
    %336 = vmatpush1.bf16.msra.mxu0 %v314
    %337 = vmatprep.subr.bf16.mxu0 0
    %338 = vmatpush2.bf16.msra.mxu0 0
    %339 = vmatprep.subr.bf16.mxu0 0
    %340 = vmatpush2.bf16.msra.mxu0 0
    %341 = vmatprep.subr.bf16.mxu0 0
    %342 = vmatpush2.bf16.msra.mxu0 0
    %343 = vmatprep.subr.bf16.mxu0 0
    %344 = vmatpush2.bf16.msra.mxu0 0
    %345 = vmatprep.subr.bf16.mxu0 0
    %346 = vmatpush2.bf16.msra.mxu0 0
    %347 = vmatprep.subr.bf16.mxu0 0
    %348 = vmatpush2.bf16.msra.mxu0 0
    %349 = vmatprep.subr.bf16.mxu0 0
    %350 = vmatpush2.bf16.msra.mxu0 0
    %351 = vmatprep.subr.bf16.mxu0 0
    %352 = vmatpush2.bf16.msra.mxu0 0
    %353 = vmatprep.mubr.bf16.mxu0 0
    %354 = vmatmul.mubr.bf16.gmra.mxu0 %v319
    %v355 = vpop.f32.mrf.mxu0
    %v356 = vadd.f32 %v304, %v355
    %v357 = vpop.f32.mrf.mxu0
    %v358 = vpop.f32.mrf.mxu0
    %v359 = vpop.f32.mrf.mxu0
    %360 = vdwg.mxu0
    %361 = vst.msk [vmem:[#allocation2] sm:$0x3] %vm292, %v356
    // Predicated region
    $region22: #{pose_guider_forward.31} parent=1 // pred_check
      _
    $region23: #{pose_guider_forward.31} parent=1 // pred_check_branch
      %363 = sbr.rel (0) target = $region25
    $region24: #{pose_guider_forward.31} parent=1 // pred_region
      _
    $region25: #{pose_guider_forward.31} parent=1 // pred_fallthru
      _
    // Predicated region
    $region26: #{pose_guider_forward.31} parent=1 // pred_check
      _
    $region27: #{pose_guider_forward.31} parent=1 // pred_check_branch
      %365 = sbr.rel (0) target = $region29
    $region28: #{pose_guider_forward.31} parent=1 // pred_region
      %s367 = ssub.s32 32, 32
      %368 = vsyncadd [#allocation3], %s367
      %s370 = sshll.u32 [#allocation2], 4
      %s371 = int_to_ptr.vmem [resolvable:$true] %s370
      %373 = dma.vmem_to_hbm [thread:$0]  %s371, 32, %s6, [#allocation3]
    $region29: #{pose_guider_forward.31} parent=1 // pred_fallthru
      _
    // Predicated region
    $region30: #{pose_guider_forward.31} parent=1 // pred_check
      _
    $region31: #{pose_guider_forward.31} parent=1 // pred_check_branch
      %375 = sbr.rel (0) target = $region33
    $region32: #{pose_guider_forward.31} parent=1 // pred_region
      _
    $region33: #{pose_guider_forward.31} parent=1 // pred_fallthru
      _
    // Predicated region
    $region34: #{pose_guider_forward.31} parent=1 // pred_check
      _
    $region35: #{pose_guider_forward.31} parent=1 // pred_check_branch
      %377 = sbr.rel (0) target = $region37
    $region36: #{pose_guider_forward.31} parent=1 // pred_region
      %378 = dma.done [#allocation3], 32
    $region37: #{pose_guider_forward.31} parent=1 // pred_fallthru
      _
    %379 = vsyncpa [#allocation3], 1

// kernel: pose_guider_forward.35
$region0: #{pose_guider_forward.35}
  #allocation0 [shape = 'u32[]', space=smem, size = 0x4, offset = 0x4, fixed_abs, tag = 'smem constant byte address 0x4 - core index']
  #allocation1 [shape = 'u32[144,128]{1,0:T(1,128)}', space=vmem, size = 0x12000, scoped, tag = 'internal scratch']
  %s0 = inlined_call_operand.vmem [shape: bf16[2,288], index: 0, kind: input, shape index: {}]
  %s1 = inlined_call_operand.vmem [shape: bf16[288,32], index: 1, kind: input, shape index: {}]
  %s2 = inlined_call_operand.vmem [shape: f32[1,32], index: 2, kind: input, shape index: {}]
  %s3 = inlined_call_operand.vmem [shape: bf16[32,32], index: 3, kind: input, shape index: {}]
  %s4 = inlined_call_operand.vmem [shape: f32[1,32], index: 4, kind: input, shape index: {}]
  %s5 = inlined_call_operand.hbm [shape: f32[2,32], index: 5, kind: output, shape index: {0}]
  %s6 = inlined_call_operand.hbm [shape: f32[2,32], index: 6, kind: output, shape index: {1}]
  %7 = xla_tuple %s5, %s6
  %s8 = sld [smem:[#allocation0]]
  $region38: #{pose_guider_forward.35} parent=0
    _
  %s10 = ssub.s32 1, %s8
  %s11 = scalar_select 0, %s10, %s8
  $region1: #{pose_guider_forward.35} parent=0
    #allocation2 [shape = 'u8[1024]{0}', space=vmem, size = 0x400, scoped, tag = 'output window, operand 0, single buffered']
    #allocation3 [shape = 's32[1]{0}', space=sflag, size = 0x4, scoped, tag = 'scoped memory for pose_guider_forward.35']
    #allocation4 [shape = 'u8[1024]{0}', space=vmem, size = 0x400, scoped, tag = 'output window, operand 1, single buffered']
    #allocation5 [shape = 's32[1]{0}', space=sflag, size = 0x4, scoped, tag = 'scoped memory for pose_guider_forward.35']
    %12 = vsyncpa [#allocation3], 0
    %13 = vsyncpa [#allocation5], 0
    // Predicated region
    $region2: #{pose_guider_forward.35} parent=1 // pred_check
      _
    $region3: #{pose_guider_forward.35} parent=1 // pred_check_branch
      %15 = sbr.rel (0) target = $region5
    $region4: #{pose_guider_forward.35} parent=1 // pred_region
      _
    $region5: #{pose_guider_forward.35} parent=1 // pred_fallthru
      _
    // Predicated region
    $region6: #{pose_guider_forward.35} parent=1 // pred_check
      _
    $region7: #{pose_guider_forward.35} parent=1 // pred_check_branch
      %17 = sbr.rel (0) target = $region9
    $region8: #{pose_guider_forward.35} parent=1 // pred_region
      _
    $region9: #{pose_guider_forward.35} parent=1 // pred_fallthru
      _
    // Predicated region
    $region10: #{pose_guider_forward.35} parent=1 // pred_check
      _
    $region11: #{pose_guider_forward.35} parent=1 // pred_check_branch
      %19 = sbr.rel (0) target = $region13
    $region12: #{pose_guider_forward.35} parent=1 // pred_region
      _
    $region13: #{pose_guider_forward.35} parent=1 // pred_fallthru
      _
    // Predicated region
    $region14: #{pose_guider_forward.35} parent=1 // pred_check
      _
    $region15: #{pose_guider_forward.35} parent=1 // pred_check_branch
      %21 = sbr.rel (0) target = $region17
    $region16: #{pose_guider_forward.35} parent=1 // pred_region
      _
    $region17: #{pose_guider_forward.35} parent=1 // pred_fallthru
      _
    // Predicated region
    $region18: #{pose_guider_forward.35} parent=1 // pred_check
      _
    $region19: #{pose_guider_forward.35} parent=1 // pred_check_branch
      %23 = sbr.rel (0) target = $region21
    $region20: #{pose_guider_forward.35} parent=1 // pred_region
      _
    $region21: #{pose_guider_forward.35} parent=1 // pred_fallthru
      _
    %v25 = vld [vmem:[%s0] sm:$0x7]
    %v26 = vld [vmem:[%s1] sm:$0xf]
    %v27 = vld [vmem:[%s1 + $0x4] sm:$0xf]
    %v28 = vld [vmem:[%s1 + $0x8] sm:$0xf]
    %v29 = vld [vmem:[%s1 + $0xc] sm:$0xf]
    %v30 = vld [vmem:[%s1 + $0x10] sm:$0xf]
    %v31 = vld [vmem:[%s1 + $0x14] sm:$0xf]
    %v32 = vld [vmem:[%s1 + $0x18] sm:$0xf]
    %v33 = vld [vmem:[%s1 + $0x1c] sm:$0xf]
    %v34 = vld [vmem:[%s1 + $0x20] sm:$0xf]
    %v35 = vld [vmem:[%s1 + $0x24] sm:$0xf]
    %v36 = vld [vmem:[%s1 + $0x28] sm:$0xf]
    %v37 = vld [vmem:[%s1 + $0x2c] sm:$0xf]
    %v38 = vld [vmem:[%s1 + $0x30] sm:$0xf]
    %v39 = vld [vmem:[%s1 + $0x34] sm:$0xf]
    %v40 = vld [vmem:[%s1 + $0x38] sm:$0xf]
    %v41 = vld [vmem:[%s1 + $0x3c] sm:$0xf]
    %v42 = vld [vmem:[%s1 + $0x40] sm:$0xf]
    %v43 = vld [vmem:[%s1 + $0x44] sm:$0xf]
    %v44 = vld [vmem:[%s1 + $0x48] sm:$0xf]
    %v45 = vld [vmem:[%s1 + $0x4c] sm:$0xf]
    %v46 = vld [vmem:[%s1 + $0x50] sm:$0xf]
    %v47 = vld [vmem:[%s1 + $0x54] sm:$0xf]
    %v48 = vld [vmem:[%s1 + $0x58] sm:$0xf]
    %v49 = vld [vmem:[%s1 + $0x5c] sm:$0xf]
    %v50 = vld [vmem:[%s1 + $0x60] sm:$0xf]
    %v51 = vld [vmem:[%s1 + $0x64] sm:$0xf]
    %v52 = vld [vmem:[%s1 + $0x68] sm:$0xf]
    %v53 = vld [vmem:[%s1 + $0x6c] sm:$0xf]
    %v54 = vld [vmem:[%s1 + $0x70] sm:$0xf]
    %v55 = vld [vmem:[%s1 + $0x74] sm:$0xf]
    %v56 = vld [vmem:[%s1 + $0x78] sm:$0xf]
    %v57 = vld [vmem:[%s1 + $0x7c] sm:$0xf]
    %v58 = vld [vmem:[%s1 + $0x80] sm:$0xf]
    %v59 = vld [vmem:[%s1 + $0x84] sm:$0xf]
    %v60 = vld [vmem:[%s1 + $0x88] sm:$0xf]
    %v61 = vld [vmem:[%s1 + $0x8c] sm:$0xf]
    %v62 = vld [vmem:[%s2] sm:$0x1]
    %v64 = vlaneseq
    %v65 = vshrl.u32 %v64, 7
    %v66 = vsub.s32 0, %v65
    %v67 = vrot.slane %v62, %v66
    %v71 = vunpack.c.l.s4 1966171168
    %v72 = vunpack.c.0.s8 %v71
    %v73 = vlaneseq
    %v74 = vshrl.u32 %v73, 7
    %v75 = vsub.s32 %v72, %v74
    %v76 = vrot.slane %v25, %v75
    %v77 = vcombine.high %v76, %v76
    %v79 = vunpack.c.l.s4 1966171168
    %v80 = vunpack.c.0.s8 %v79
    %v81 = vlaneseq
    %v82 = vshrl.u32 %v81, 7
    %v83 = vsub.s32 %v80, %v82
    %v84 = vrot.slane %v76, %v83
    %v86 = vunpack.c.l.s4 1966171168
    %v87 = vunpack.c.0.s8 %v86
    %v88 = vlaneseq
    %v89 = vshrl.u32 %v88, 7
    %v90 = vsub.s32 %v87, %v89
    %v91 = vrot.slane %v77, %v90
    %v92 = vcombine.high %v84, %v84
    %v131 = vunpack.c.l.b16 %v26
    %v132 = vunpack.c.l.b16 %v27
    %v133 = vunpack.c.l.b16 %v28
    %v134 = vunpack.c.l.b16 %v29
    %v135 = vunpack.c.l.b16 %v30
    %v136 = vunpack.c.l.b16 %v31
    %v137 = vunpack.c.l.b16 %v32
    %v138 = vunpack.c.l.b16 %v33
    %v139 = vunpack.c.l.b16 %v34
    %v140 = vunpack.c.l.b16 %v35
    %v141 = vunpack.c.l.b16 %v36
    %v142 = vunpack.c.l.b16 %v37
    %v143 = vunpack.c.l.b16 %v38
    %v144 = vunpack.c.l.b16 %v39
    %v145 = vunpack.c.l.b16 %v40
    %v146 = vunpack.c.l.b16 %v41
    %v147 = vunpack.c.l.b16 %v42
    %v148 = vunpack.c.l.b16 %v43
    %v149 = vunpack.c.l.b16 %v44
    %v150 = vunpack.c.l.b16 %v45
    %v151 = vunpack.c.l.b16 %v46
    %v152 = vunpack.c.l.b16 %v47
    %v153 = vunpack.c.l.b16 %v48
    %v154 = vunpack.c.l.b16 %v49
    %v155 = vunpack.c.l.b16 %v50
    %v156 = vunpack.c.l.b16 %v51
    %v157 = vunpack.c.l.b16 %v52
    %v158 = vunpack.c.l.b16 %v53
    %v159 = vunpack.c.l.b16 %v54
    %v160 = vunpack.c.l.b16 %v55
    %v161 = vunpack.c.l.b16 %v56
    %v162 = vunpack.c.l.b16 %v57
    %v163 = vunpack.c.l.b16 %v58
    %v164 = vunpack.c.l.b16 %v59
    %v165 = vunpack.c.l.b16 %v60
    %v166 = vunpack.c.l.b16 %v61
    %v167 = vpack.c.b16 %v132, %v131
    %v168 = vpack.c.b16 %v134, %v133
    %v169 = vpack.c.b16 %v136, %v135
    %v170 = vpack.c.b16 %v138, %v137
    %v171 = vpack.c.b16 %v140, %v139
    %v172 = vpack.c.b16 %v142, %v141
    %v173 = vpack.c.b16 %v144, %v143
    %v174 = vpack.c.b16 %v146, %v145
    %v175 = vpack.c.b16 %v148, %v147
    %v176 = vpack.c.b16 %v150, %v149
    %v177 = vpack.c.b16 %v152, %v151
    %v178 = vpack.c.b16 %v154, %v153
    %v179 = vpack.c.b16 %v156, %v155
    %v180 = vpack.c.b16 %v158, %v157
    %v181 = vpack.c.b16 %v160, %v159
    %v182 = vpack.c.b16 %v162, %v161
    %v183 = vpack.c.b16 %v164, %v163
    %v184 = vpack.c.b16 %v166, %v165
    %vm203 = vcmask 261120
    %v205 = vsel %vm203, %v92, 0
    %207 = vmatprep.subr.bf16.mxu0 0
    %208 = vmatpush1.bf16.msra.mxu0 %v174
    %209 = vmatprep.subr.bf16.mxu0 0
    %210 = vmatpush1.bf16.msra.mxu0 %v173
    %211 = vmatprep.subr.bf16.mxu0 0
    %212 = vmatpush1.bf16.msra.mxu0 %v172
    %213 = vmatprep.subr.bf16.mxu0 0
    %214 = vmatpush1.bf16.msra.mxu0 %v171
    %215 = vmatprep.subr.bf16.mxu0 0
    %216 = vmatpush1.bf16.msra.mxu0 %v170
    %217 = vmatprep.subr.bf16.mxu0 0
    %218 = vmatpush1.bf16.msra.mxu0 %v169
    %219 = vmatprep.subr.bf16.mxu0 0
    %220 = vmatpush1.bf16.msra.mxu0 %v168
    %221 = vmatprep.subr.bf16.mxu0 0
    %222 = vmatpush1.bf16.msra.mxu0 %v167
    %223 = vmatprep.subr.bf16.mxu0 0
    %224 = vmatpush2.bf16.msra.mxu0 %v182
    %225 = vmatprep.subr.bf16.mxu0 0
    %226 = vmatpush2.bf16.msra.mxu0 %v181
    %227 = vmatprep.subr.bf16.mxu0 0
    %228 = vmatpush2.bf16.msra.mxu0 %v180
    %229 = vmatprep.subr.bf16.mxu0 0
    %230 = vmatpush2.bf16.msra.mxu0 %v179
    %231 = vmatprep.subr.bf16.mxu0 0
    %232 = vmatpush2.bf16.msra.mxu0 %v178
    %233 = vmatprep.subr.bf16.mxu0 0
    %234 = vmatpush2.bf16.msra.mxu0 %v177
    %235 = vmatprep.subr.bf16.mxu0 0
    %236 = vmatpush2.bf16.msra.mxu0 %v176
    %237 = vmatprep.subr.bf16.mxu0 0
    %238 = vmatpush2.bf16.msra.mxu0 %v175
    %239 = vmatprep.mubr.bf16.mxu0 %v91
    %240 = vmatmul.mubr.bf16.gmra.mxu0 %v84
    %v241 = vpop.f32.mrf.mxu0
    %v242 = vadd.f32 %v67, %v241
    %v243 = vpop.f32.mrf.mxu0
    %v244 = vpop.f32.mrf.mxu0
    %v245 = vpop.f32.mrf.mxu0
    %246 = vdwg.mxu0
    %247 = vmatprep.subr.bf16.mxu0 0
    %248 = vmatpush1.bf16.msra.mxu0 0
    %249 = vmatprep.subr.bf16.mxu0 0
    %250 = vmatpush1.bf16.msra.mxu0 0
    %251 = vmatprep.subr.bf16.mxu0 0
    %252 = vmatpush1.bf16.msra.mxu0 0
    %253 = vmatprep.subr.bf16.mxu0 0
    %254 = vmatpush1.bf16.msra.mxu0 0
    %255 = vmatprep.subr.bf16.mxu0 0
    %256 = vmatpush1.bf16.msra.mxu0 0
    %257 = vmatprep.subr.bf16.mxu0 0
    %258 = vmatpush1.bf16.msra.mxu0 0
    %259 = vmatprep.subr.bf16.mxu0 0
    %260 = vmatpush1.bf16.msra.mxu0 %v184
    %261 = vmatprep.subr.bf16.mxu0 0
    %262 = vmatpush1.bf16.msra.mxu0 %v183
    %263 = vmatprep.subr.bf16.mxu0 0
    %264 = vmatpush2.bf16.msra.mxu0 0
    %265 = vmatprep.subr.bf16.mxu0 0
    %266 = vmatpush2.bf16.msra.mxu0 0
    %267 = vmatprep.subr.bf16.mxu0 0
    %268 = vmatpush2.bf16.msra.mxu0 0
    %269 = vmatprep.subr.bf16.mxu0 0
    %270 = vmatpush2.bf16.msra.mxu0 0
    %271 = vmatprep.subr.bf16.mxu0 0
    %272 = vmatpush2.bf16.msra.mxu0 0
    %273 = vmatprep.subr.bf16.mxu0 0
    %274 = vmatpush2.bf16.msra.mxu0 0
    %275 = vmatprep.subr.bf16.mxu0 0
    %276 = vmatpush2.bf16.msra.mxu0 0
    %277 = vmatprep.subr.bf16.mxu0 0
    %278 = vmatpush2.bf16.msra.mxu0 0
    %279 = vmatprep.mubr.bf16.mxu0 0
    %280 = vmatmul.mubr.bf16.gmra.mxu0 %v205
    %v281 = vpop.f32.mrf.mxu0
    %v282 = vadd.f32 %v242, %v281
    %v283 = vpop.f32.mrf.mxu0
    %v284 = vpop.f32.mrf.mxu0
    %v285 = vpop.f32.mrf.mxu0
    %286 = vdwg.mxu0
    %v287 = vsub.f32 0.0, %v282
    %v288 = vmul.f32 %v287, 1.442695
    %v289 = vpow.pop %v288
    %v290 = vadd.f32 %v289, 1.0
    %v291 = vrcp.pop %v290
    %v292 = vmul.f32 %v282, %v291
    %vm293 = vcmask 254976
    %294 = vst.msk [vmem:[#allocation2] sm:$0x3] %vm293, %v292
    %v295 = vpack.c.bf16 %v292, %v292
    %v296 = vld [vmem:[%s3] sm:$0xf]
    %v297 = vld [vmem:[%s3 + $0x4] sm:$0xf]
    %v298 = vld [vmem:[%s3 + $0x8] sm:$0xf]
    %v299 = vld [vmem:[%s3 + $0xc] sm:$0xf]
    %v300 = vld [vmem:[%s4] sm:$0x1]
    %v302 = vlaneseq
    %v303 = vshrl.u32 %v302, 7
    %v304 = vsub.s32 0, %v303
    %v305 = vrot.slane %v300, %v304
    %v311 = vunpack.c.l.b16 %v296
    %v312 = vunpack.c.l.b16 %v297
    %v313 = vunpack.c.l.b16 %v298
    %v314 = vunpack.c.l.b16 %v299
    %v315 = vpack.c.b16 %v312, %v311
    %v316 = vpack.c.b16 %v314, %v313
    %v320 = vsel %vm203, %v295, 0
    %322 = vmatprep.subr.bf16.mxu0 0
    %323 = vmatpush1.bf16.msra.mxu0 0
    %324 = vmatprep.subr.bf16.mxu0 0
    %325 = vmatpush1.bf16.msra.mxu0 0
    %326 = vmatprep.subr.bf16.mxu0 0
    %327 = vmatpush1.bf16.msra.mxu0 0
    %328 = vmatprep.subr.bf16.mxu0 0
    %329 = vmatpush1.bf16.msra.mxu0 0
    %330 = vmatprep.subr.bf16.mxu0 0
    %331 = vmatpush1.bf16.msra.mxu0 0
    %332 = vmatprep.subr.bf16.mxu0 0
    %333 = vmatpush1.bf16.msra.mxu0 0
    %334 = vmatprep.subr.bf16.mxu0 0
    %335 = vmatpush1.bf16.msra.mxu0 %v316
    %336 = vmatprep.subr.bf16.mxu0 0
    %337 = vmatpush1.bf16.msra.mxu0 %v315
    %338 = vmatprep.subr.bf16.mxu0 0
    %339 = vmatpush2.bf16.msra.mxu0 0
    %340 = vmatprep.subr.bf16.mxu0 0
    %341 = vmatpush2.bf16.msra.mxu0 0
    %342 = vmatprep.subr.bf16.mxu0 0
    %343 = vmatpush2.bf16.msra.mxu0 0
    %344 = vmatprep.subr.bf16.mxu0 0
    %345 = vmatpush2.bf16.msra.mxu0 0
    %346 = vmatprep.subr.bf16.mxu0 0
    %347 = vmatpush2.bf16.msra.mxu0 0
    %348 = vmatprep.subr.bf16.mxu0 0
    %349 = vmatpush2.bf16.msra.mxu0 0
    %350 = vmatprep.subr.bf16.mxu0 0
    %351 = vmatpush2.bf16.msra.mxu0 0
    %352 = vmatprep.subr.bf16.mxu0 0
    %353 = vmatpush2.bf16.msra.mxu0 0
    %354 = vmatprep.mubr.bf16.mxu0 0
    %355 = vmatmul.mubr.bf16.gmra.mxu0 %v320
    %v356 = vpop.f32.mrf.mxu0
    %v357 = vadd.f32 %v305, %v356
    %v358 = vpop.f32.mrf.mxu0
    %v359 = vpop.f32.mrf.mxu0
    %v360 = vpop.f32.mrf.mxu0
    %361 = vdwg.mxu0
    %362 = vst.msk [vmem:[#allocation4] sm:$0x3] %vm293, %v357
    // Predicated region
    $region22: #{pose_guider_forward.35} parent=1 // pred_check
      _
    $region23: #{pose_guider_forward.35} parent=1 // pred_check_branch
      %364 = sbr.rel (0) target = $region25
    $region24: #{pose_guider_forward.35} parent=1 // pred_region
      %s366 = ssub.s32 32, 32
      %367 = vsyncadd [#allocation3], %s366
      %s369 = sshll.u32 [#allocation2], 4
      %s370 = int_to_ptr.vmem [resolvable:$true] %s369
      %372 = dma.vmem_to_hbm [thread:$0]  %s370, 32, %s5, [#allocation3]
    $region25: #{pose_guider_forward.35} parent=1 // pred_fallthru
      _
    // Predicated region
    $region26: #{pose_guider_forward.35} parent=1 // pred_check
      _
    $region27: #{pose_guider_forward.35} parent=1 // pred_check_branch
      %374 = sbr.rel (0) target = $region29
    $region28: #{pose_guider_forward.35} parent=1 // pred_region
      %s376 = ssub.s32 32, 32
      %377 = vsyncadd [#allocation5], %s376
      %s379 = sshll.u32 [#allocation4], 4
      %s380 = int_to_ptr.vmem [resolvable:$true] %s379
      %382 = dma.vmem_to_hbm [thread:$0]  %s380, 32, %s6, [#allocation5]
    $region29: #{pose_guider_forward.35} parent=1 // pred_fallthru
      _
    // Predicated region
    $region30: #{pose_guider_forward.35} parent=1 // pred_check
      _
    $region31: #{pose_guider_forward.35} parent=1 // pred_check_branch
      %384 = sbr.rel (0) target = $region33
    $region32: #{pose_guider_forward.35} parent=1 // pred_region
      %385 = dma.done [#allocation3], 32
    $region33: #{pose_guider_forward.35} parent=1 // pred_fallthru
      _
    // Predicated region
    $region34: #{pose_guider_forward.35} parent=1 // pred_check
      _
    $region35: #{pose_guider_forward.35} parent=1 // pred_check_branch
      %387 = sbr.rel (0) target = $region37
    $region36: #{pose_guider_forward.35} parent=1 // pred_region
      %388 = dma.done [#allocation5], 32
    $region37: #{pose_guider_forward.35} parent=1 // pred_fallthru
      _
    %389 = vsyncpa [#allocation3], 1
    %390 = vsyncpa [#allocation5], 1

</llo_original>
